<compile_context>
chip_gen: v7x
topology: tpu7x:2x2x1
jax: 0.10.0
libtpu: 0.0.40
codegen_flags: <defaults>
</compile_context>

<pallas_src>
import functools

import jax
import jax.numpy as jnp
import numpy as np
from jax import lax
from jax.experimental import pallas as pl
from jax.experimental.pallas import tpu as pltpu

TB = 8  # samples per grid step (batch tile); multiple of 8 keeps layouts trivial


# ---------------------------------------------------------------------------
# The single fused kernel
# ---------------------------------------------------------------------------
def _net_kernel(x_ref, w1t_ref, b1_ref, w2t_ref, b2_ref, w3r_ref, b3_ref,
                w4_ref, b4_ref, w5_ref, b5_ref, o_ref, *, tb):
    f32 = jnp.float32

    # ---- block 1: Conv2d(1, 6, 5) -> MaxPool2d(2, 2) -> ReLU ----------------
    # x_ref[0, q] : (7*tb, 56); row r*tb + b holds image row 4*r + q of sample b.
    # w1t_ref[dy] : (56, 312) width-Toeplitz matrix; column j = sx*156 + c*26 + px
    # contracts the 56 input columns into 6 channels x 2 column-pool phases x
    # 26 pooled columns, so dx-sum + channel loop + half the max-pool are one
    # matmul per (output-row parity p, row-pool tap sy, dy).
    h1 = []  # h1[p]: (6*tb, 156); row r*tb + b == pooled row 2r+p; col c*26+px
    for p in range(2):
        taps = []
        for sy in range(2):
            acc = None
            for dy in range(5):
                u = 2 * p + sy + dy                      # input row = 4*r + u
                lhs = x_ref[0, u % 4, (u // 4) * tb:(u // 4 + 6) * tb, :]
                t = jnp.dot(lhs, w1t_ref[dy], preferred_element_type=f32)
                acc = t if acc is None else acc + t
            taps.append(acc)                             # (6*tb, 312)
        m = jnp.maximum(taps[0], taps[1])                # pool over row tap sy
        m = jnp.maximum(m[:, :156], m[:, 156:])          # pool over column tap sx
        h1.append(jnp.maximum(m + b1_ref[...], 0.0))     # bias + ReLU

    # ---- block 2: Conv2d(6, 16, 5) -> MaxPool2d(2, 2) -> ReLU ---------------
    # w2t_ref[dy] : (156, 352) contracts (input channel, column) jointly
    # (K = 6*26) and emits 2 column-pool phases x 16 channels x 11 columns.
    taps2 = []
    for sy in range(2):
        acc = None
        for dy in range(5):
            u = sy + dy                                  # h1 row = 2*py2 + u
            lhs = h1[u % 2][(u // 2) * tb:(u // 2 + 4) * tb, :]   # (4*tb, 156)
            t = jnp.dot(lhs, w2t_ref[dy], preferred_element_type=f32)
            acc = t if acc is None else acc + t
        taps2.append(acc)                                # (4*tb, 352)
    m2 = jnp.maximum(taps2[0], taps2[1])
    m2 = jnp.maximum(m2[:, :176], m2[:, 176:])
    h2 = jnp.maximum(m2 + b2_ref[...], 0.0)              # (4*tb, 176); row py2*tb+b

    # ---- classifier: Linear(704,120)+ReLU -> Linear(120,84)+ReLU
    #      -> Linear(84,19) -> LogSoftmax.  The PyTorch (C,H,W) flatten is
    #      folded into w3r:  fc1 = sum_py2  h2[py2-block] @ w3r[py2].
    z = None
    for k in range(4):
        t = jnp.dot(h2[k * tb:(k + 1) * tb, :], w3r_ref[k],
                    preferred_element_type=f32)
        z = t if z is None else z + t
    z = jnp.maximum(z + b3_ref[...], 0.0)                                # (tb, 120)
    z = jnp.maximum(jnp.dot(z, w4_ref[...], preferred_element_type=f32)
                    + b4_ref[...], 0.0)                                  # (tb, 84)
    logits = jnp.dot(z, w5_ref[...], preferred_element_type=f32) + b5_ref[...]
    mx = jnp.max(logits, axis=-1, keepdims=True)
    zz = logits - mx
    lse = jnp.log(jnp.sum(jnp.exp(zz), axis=-1, keepdims=True))
    o_ref[...] = zz - lse                                                # (tb, 19)


# ---------------------------------------------------------------------------
# Weight re-layouts (pure JAX, batch-independent, trace-time constants)
# ---------------------------------------------------------------------------
def _make_w1t(w1):
    # (6,1,5,5) -> (5, 56, 312); col j = sx*156 + c*26 + px
    sel = np.zeros((2, 5, 56, 26), np.float32)
    for sx in range(2):
        for dx in range(5):
            for px in range(26):
                sel[sx, dx, 2 * px + sx + dx, px] = 1.0
    w1t = jnp.einsum("sdnp,coyd->ynscp", jnp.asarray(sel), w1.astype(jnp.float32))
    return w1t.reshape(5, 56, 2 * 6 * 26)


def _make_w2t(w2):
    # (16,6,5,5) -> (5, 156, 352); row = ic*26 + pxin, col = sx*176 + oc*11 + px
    sel = np.zeros((2, 5, 26, 11), np.float32)
    for sx in range(2):
        for dx in range(5):
            for px in range(11):
                sel[sx, dx, 2 * px + sx + dx, px] = 1.0
    w2t = jnp.einsum("sdnp,oiyd->yinsop", jnp.asarray(sel), w2.astype(jnp.float32))
    return w2t.reshape(5, 6 * 26, 2 * 16 * 11)


# ---------------------------------------------------------------------------
# Wrapper: input/weight re-layout + the single pallas_call
# ---------------------------------------------------------------------------
def net_forward(x, params):
    # x: (B, 1, 28, 56) NCHW float32 (MNIST digit pair; flatten = 16*11*4 = 704)
    B = x.shape[0]
    nb = -(-B // TB)
    b_pad = nb * TB

    x2 = x[:, 0, :, :].astype(jnp.float32)                       # (B, 28, 56)
    if b_pad != B:
        x2 = jnp.pad(x2, ((0, b_pad - B), (0, 0), (0, 0)))
    # rows phase-decomposed mod 4; (row-block r, sample b) folded: row = r*TB + b
    xk = (x2.reshape(nb, TB, 7, 4, 56)
             .transpose(0, 3, 2, 1, 4)
             .reshape(nb, 4, 7 * TB, 56))

    w1t = _make_w1t(params["w1"])                                # (5, 56, 312)
    b1r = jnp.repeat(params["b1"].astype(jnp.float32), 26)[None, :]   # (1, 156)
    w2t = _make_w2t(params["w2"])                                # (5, 156, 352)
    b2r = jnp.repeat(params["b2"].astype(jnp.float32), 11)[None, :]   # (1, 176)
    # fold the PyTorch (C=16, H=4, W=11) flatten into fc1's weight
    w3r = (params["w3"].astype(jnp.float32)
           .reshape(120, 16, 4, 11).transpose(2, 1, 3, 0).reshape(4, 176, 120))
    b3r = params["b3"].astype(jnp.float32)[None, :]
    w4t = params["w4"].astype(jnp.float32).T                     # (120, 84)
    b4r = params["b4"].astype(jnp.float32)[None, :]
    w5t = params["w5"].astype(jnp.float32).T                     # (84, 19)
    b5r = params["b5"].astype(jnp.float32)[None, :]

    out = pl.pallas_call(
        functools.partial(_net_kernel, tb=TB),
        out_shape=jax.ShapeDtypeStruct((b_pad, 19), jnp.float32),
        grid=(nb,),
        in_specs=[
            pl.BlockSpec((1, 4, 7 * TB, 56), lambda i: (i, 0, 0, 0)),
            pl.BlockSpec((5, 56, 312), lambda i: (0, 0, 0)),
            pl.BlockSpec((1, 156), lambda i: (0, 0)),
            pl.BlockSpec((5, 156, 352), lambda i: (0, 0, 0)),
            pl.BlockSpec((1, 176), lambda i: (0, 0)),
            pl.BlockSpec((4, 176, 120), lambda i: (0, 0, 0)),
            pl.BlockSpec((1, 120), lambda i: (0, 0)),
            pl.BlockSpec((120, 84), lambda i: (0, 0)),
            pl.BlockSpec((1, 84), lambda i: (0, 0)),
            pl.BlockSpec((84, 19), lambda i: (0, 0)),
            pl.BlockSpec((1, 19), lambda i: (0, 0)),
        ],
        out_specs=pl.BlockSpec((TB, 19), lambda i: (i, 0)),
        compiler_params=pltpu.CompilerParams(dimension_semantics=("parallel",)),
    )(xk, w1t, b1r, w2t, b2r, w3r, b3r, w4t, b4r, w5t, b5r)
    return out[:B]


# ---------------------------------------------------------------------------
# Pure-JAX reference (correctness check)
# ---------------------------------------------------------------------------
def ref_forward(x, params):
    dn = ("NCHW", "OIHW", "NCHW")
    hi = lax.Precision.HIGHEST
    y = lax.conv_general_dilated(x, params["w1"], (1, 1), "VALID",
                                 dimension_numbers=dn, precision=hi)
    y = y + params["b1"][None, :, None, None]
    y = lax.reduce_window(y, -jnp.inf, lax.max, (1, 1, 2, 2), (1, 1, 2, 2), "VALID")
    y = jnp.maximum(y, 0.0)
    y = lax.conv_general_dilated(y, params["w2"], (1, 1), "VALID",
                                 dimension_numbers=dn, precision=hi)
    y = y + params["b2"][None, :, None, None]
    y = lax.reduce_window(y, -jnp.inf, lax.max, (1, 1, 2, 2), (1, 1, 2, 2), "VALID")
    y = jnp.maximum(y, 0.0)
    y = y.reshape(y.shape[0], -1)
    y = jnp.maximum(jnp.dot(y, params["w3"].T, precision=hi) + params["b3"], 0.0)
    y = jnp.maximum(jnp.dot(y, params["w4"].T, precision=hi) + params["b4"], 0.0)
    y = jnp.dot(y, params["w5"].T, precision=hi) + params["b5"]
    return jax.nn.log_softmax(y, axis=-1)


if __name__ == "__main__":
    key = jax.random.PRNGKey(0)
    ks = jax.random.split(key, 11)
    s = 0.1
    params = {
        "w1": s * jax.random.normal(ks[0], (6, 1, 5, 5), jnp.float32),
        "b1": s * jax.random.normal(ks[1], (6,), jnp.float32),
        "w2": s * jax.random.normal(ks[2], (16, 6, 5, 5), jnp.float32),
        "b2": s * jax.random.normal(ks[3], (16,), jnp.float32),
        "w3": s * jax.random.normal(ks[4], (120, 16 * 11 * 4), jnp.float32),
        "b3": s * jax.random.normal(ks[5], (120,), jnp.float32),
        "w4": s * jax.random.normal(ks[6], (84, 120), jnp.float32),
        "b4": s * jax.random.normal(ks[7], (84,), jnp.float32),
        "w5": s * jax.random.normal(ks[8], (19, 84), jnp.float32),
        "b5": s * jax.random.normal(ks[9], (19,), jnp.float32),
    }
    B = 12  # deliberately not a multiple of TB: exercises the padding path + 2 grid steps
    x = jax.random.normal(ks[10], (B, 1, 28, 56), jnp.float32)

    out = jax.jit(net_forward)(x, params)
    out = jax.block_until_ready(out)

    assert out.shape == (B, 19) and out.dtype == jnp.float32
    # LogSoftmax rows must exponentiate-sum to 1
    assert bool(jnp.allclose(jnp.sum(jnp.exp(out), axis=-1), 1.0, atol=1e-4))
    ref = ref_forward(x, params)
    assert bool(jnp.allclose(out, ref, atol=5e-3, rtol=5e-3))
    print("KERNEL_OK")
</pallas_src>

<mosaic_0001>
module attributes {stable_mosaic.version = 11 : i64} {
  func.func @_net_kernel(%arg0: i32, %arg1: memref<1x4x56x56xf32, #tpu.memory_space<vmem>>, %arg2: memref<5x56x312xf32, #tpu.memory_space<vmem>>, %arg3: memref<1x156xf32, #tpu.memory_space<vmem>>, %arg4: memref<5x156x352xf32, #tpu.memory_space<vmem>>, %arg5: memref<1x176xf32, #tpu.memory_space<vmem>>, %arg6: memref<4x176x120xf32, #tpu.memory_space<vmem>>, %arg7: memref<1x120xf32, #tpu.memory_space<vmem>>, %arg8: memref<120x84xf32, #tpu.memory_space<vmem>>, %arg9: memref<1x84xf32, #tpu.memory_space<vmem>>, %arg10: memref<84x19xf32, #tpu.memory_space<vmem>>, %arg11: memref<1x19xf32, #tpu.memory_space<vmem>>, %arg12: memref<8x19xf32, #tpu.memory_space<vmem>>) attributes {dimension_semantics = [#tpu.dimension_semantics<parallel>], iteration_bounds = array<i64: 2>, scalar_prefetch = 0 : i64, scratch_operands = 0 : i64, tpu.core_type = #tpu.core_type<tc>, window_params = [{transform_indices = @transform_0, window_bounds = array<i64: 1, 4, 56, 56>}, {pipeline_mode = #tpu.pipeline_mode<synchronous>, transform_indices = @transform_1, window_bounds = array<i64: 5, 56, 312>}, {pipeline_mode = #tpu.pipeline_mode<synchronous>, transform_indices = @transform_2, window_bounds = array<i64: 1, 156>}, {pipeline_mode = #tpu.pipeline_mode<synchronous>, transform_indices = @transform_3, window_bounds = array<i64: 5, 156, 352>}, {pipeline_mode = #tpu.pipeline_mode<synchronous>, transform_indices = @transform_4, window_bounds = array<i64: 1, 176>}, {pipeline_mode = #tpu.pipeline_mode<synchronous>, transform_indices = @transform_5, window_bounds = array<i64: 4, 176, 120>}, {pipeline_mode = #tpu.pipeline_mode<synchronous>, transform_indices = @transform_6, window_bounds = array<i64: 1, 120>}, {pipeline_mode = #tpu.pipeline_mode<synchronous>, transform_indices = @transform_7, window_bounds = array<i64: 120, 84>}, {pipeline_mode = #tpu.pipeline_mode<synchronous>, transform_indices = @transform_8, window_bounds = array<i64: 1, 84>}, {pipeline_mode = #tpu.pipeline_mode<synchronous>, transform_indices = @transform_9, window_bounds = array<i64: 84, 19>}, {pipeline_mode = #tpu.pipeline_mode<synchronous>, transform_indices = @transform_10, window_bounds = array<i64: 1, 19>}, {transform_indices = @transform_11, window_bounds = array<i64: 8, 19>}]} {
    %c0 = arith.constant 0 : index
    %c0_0 = arith.constant 0 : index
    %c0_1 = arith.constant 0 : index
    %c0_2 = arith.constant 0 : index
    %0 = vector.load %arg1[%c0, %c0_0, %c0_1, %c0_2] : memref<1x4x56x56xf32, #tpu.memory_space<vmem>>, vector<1x1x48x56xf32>
    %1 = vector.shape_cast %0 : vector<1x1x48x56xf32> to vector<48x56xf32>
    %c0_3 = arith.constant 0 : index
    %c0_4 = arith.constant 0 : index
    %c0_5 = arith.constant 0 : index
    %2 = vector.load %arg2[%c0_3, %c0_4, %c0_5] : memref<5x56x312xf32, #tpu.memory_space<vmem>>, vector<1x56x312xf32>
    %3 = vector.shape_cast %2 : vector<1x56x312xf32> to vector<56x312xf32>
    %cst = arith.constant dense<0.000000e+00> : vector<48x312xf32>
    %4 = tpu.matmul %1, %3, %cst {dimension_numbers = #tpu.dot_dimension_numbers<[1], [0], [0], [1], [0, 0, 1, 1], [], []>} : vector<48x56xf32>, vector<56x312xf32>, vector<48x312xf32> -> vector<48x312xf32>
    %c0_6 = arith.constant 0 : index
    %c1 = arith.constant 1 : index
    %c0_7 = arith.constant 0 : index
    %c0_8 = arith.constant 0 : index
    %5 = vector.load %arg1[%c0_6, %c1, %c0_7, %c0_8] : memref<1x4x56x56xf32, #tpu.memory_space<vmem>>, vector<1x1x48x56xf32>
    %6 = vector.shape_cast %5 : vector<1x1x48x56xf32> to vector<48x56xf32>
    %c1_9 = arith.constant 1 : index
    %c0_10 = arith.constant 0 : index
    %c0_11 = arith.constant 0 : index
    %7 = vector.load %arg2[%c1_9, %c0_10, %c0_11] : memref<5x56x312xf32, #tpu.memory_space<vmem>>, vector<1x56x312xf32>
    %8 = vector.shape_cast %7 : vector<1x56x312xf32> to vector<56x312xf32>
    %cst_12 = arith.constant dense<0.000000e+00> : vector<48x312xf32>
    %9 = tpu.matmul %6, %8, %cst_12 {dimension_numbers = #tpu.dot_dimension_numbers<[1], [0], [0], [1], [0, 0, 1, 1], [], []>} : vector<48x56xf32>, vector<56x312xf32>, vector<48x312xf32> -> vector<48x312xf32>
    %10 = arith.addf %4, %9 : vector<48x312xf32>
    %c0_13 = arith.constant 0 : index
    %c2 = arith.constant 2 : index
    %c0_14 = arith.constant 0 : index
    %c0_15 = arith.constant 0 : index
    %11 = vector.load %arg1[%c0_13, %c2, %c0_14, %c0_15] : memref<1x4x56x56xf32, #tpu.memory_space<vmem>>, vector<1x1x48x56xf32>
    %12 = vector.shape_cast %11 : vector<1x1x48x56xf32> to vector<48x56xf32>
    %c2_16 = arith.constant 2 : index
    %c0_17 = arith.constant 0 : index
    %c0_18 = arith.constant 0 : index
    %13 = vector.load %arg2[%c2_16, %c0_17, %c0_18] : memref<5x56x312xf32, #tpu.memory_space<vmem>>, vector<1x56x312xf32>
    %14 = vector.shape_cast %13 : vector<1x56x312xf32> to vector<56x312xf32>
    %cst_19 = arith.constant dense<0.000000e+00> : vector<48x312xf32>
    %15 = tpu.matmul %12, %14, %cst_19 {dimension_numbers = #tpu.dot_dimension_numbers<[1], [0], [0], [1], [0, 0, 1, 1], [], []>} : vector<48x56xf32>, vector<56x312xf32>, vector<48x312xf32> -> vector<48x312xf32>
    %16 = arith.addf %10, %15 : vector<48x312xf32>
    %c0_20 = arith.constant 0 : index
    %c3 = arith.constant 3 : index
    %c0_21 = arith.constant 0 : index
    %c0_22 = arith.constant 0 : index
    %17 = vector.load %arg1[%c0_20, %c3, %c0_21, %c0_22] : memref<1x4x56x56xf32, #tpu.memory_space<vmem>>, vector<1x1x48x56xf32>
    %18 = vector.shape_cast %17 : vector<1x1x48x56xf32> to vector<48x56xf32>
    %c3_23 = arith.constant 3 : index
    %c0_24 = arith.constant 0 : index
    %c0_25 = arith.constant 0 : index
    %19 = vector.load %arg2[%c3_23, %c0_24, %c0_25] : memref<5x56x312xf32, #tpu.memory_space<vmem>>, vector<1x56x312xf32>
    %20 = vector.shape_cast %19 : vector<1x56x312xf32> to vector<56x312xf32>
    %cst_26 = arith.constant dense<0.000000e+00> : vector<48x312xf32>
    %21 = tpu.matmul %18, %20, %cst_26 {dimension_numbers = #tpu.dot_dimension_numbers<[1], [0], [0], [1], [0, 0, 1, 1], [], []>} : vector<48x56xf32>, vector<56x312xf32>, vector<48x312xf32> -> vector<48x312xf32>
    %22 = arith.addf %16, %21 : vector<48x312xf32>
    %c0_27 = arith.constant 0 : index
    %c0_28 = arith.constant 0 : index
    %c8 = arith.constant 8 : index
    %c0_29 = arith.constant 0 : index
    %23 = vector.load %arg1[%c0_27, %c0_28, %c8, %c0_29] : memref<1x4x56x56xf32, #tpu.memory_space<vmem>>, vector<1x1x48x56xf32>
    %24 = vector.shape_cast %23 : vector<1x1x48x56xf32> to vector<48x56xf32>
    %c4 = arith.constant 4 : index
    %c0_30 = arith.constant 0 : index
    %c0_31 = arith.constant 0 : index
    %25 = vector.load %arg2[%c4, %c0_30, %c0_31] : memref<5x56x312xf32, #tpu.memory_space<vmem>>, vector<1x56x312xf32>
    %26 = vector.shape_cast %25 : vector<1x56x312xf32> to vector<56x312xf32>
    %cst_32 = arith.constant dense<0.000000e+00> : vector<48x312xf32>
    %27 = tpu.matmul %24, %26, %cst_32 {dimension_numbers = #tpu.dot_dimension_numbers<[1], [0], [0], [1], [0, 0, 1, 1], [], []>} : vector<48x56xf32>, vector<56x312xf32>, vector<48x312xf32> -> vector<48x312xf32>
    %28 = arith.addf %22, %27 : vector<48x312xf32>
    %c0_33 = arith.constant 0 : index
    %c1_34 = arith.constant 1 : index
    %c0_35 = arith.constant 0 : index
    %c0_36 = arith.constant 0 : index
    %29 = vector.load %arg1[%c0_33, %c1_34, %c0_35, %c0_36] : memref<1x4x56x56xf32, #tpu.memory_space<vmem>>, vector<1x1x48x56xf32>
    %30 = vector.shape_cast %29 : vector<1x1x48x56xf32> to vector<48x56xf32>
    %c0_37 = arith.constant 0 : index
    %c0_38 = arith.constant 0 : index
    %c0_39 = arith.constant 0 : index
    %31 = vector.load %arg2[%c0_37, %c0_38, %c0_39] : memref<5x56x312xf32, #tpu.memory_space<vmem>>, vector<1x56x312xf32>
    %32 = vector.shape_cast %31 : vector<1x56x312xf32> to vector<56x312xf32>
    %cst_40 = arith.constant dense<0.000000e+00> : vector<48x312xf32>
    %33 = tpu.matmul %30, %32, %cst_40 {dimension_numbers = #tpu.dot_dimension_numbers<[1], [0], [0], [1], [0, 0, 1, 1], [], []>} : vector<48x56xf32>, vector<56x312xf32>, vector<48x312xf32> -> vector<48x312xf32>
    %c0_41 = arith.constant 0 : index
    %c2_42 = arith.constant 2 : index
    %c0_43 = arith.constant 0 : index
    %c0_44 = arith.constant 0 : index
    %34 = vector.load %arg1[%c0_41, %c2_42, %c0_43, %c0_44] : memref<1x4x56x56xf32, #tpu.memory_space<vmem>>, vector<1x1x48x56xf32>
    %35 = vector.shape_cast %34 : vector<1x1x48x56xf32> to vector<48x56xf32>
    %c1_45 = arith.constant 1 : index
    %c0_46 = arith.constant 0 : index
    %c0_47 = arith.constant 0 : index
    %36 = vector.load %arg2[%c1_45, %c0_46, %c0_47] : memref<5x56x312xf32, #tpu.memory_space<vmem>>, vector<1x56x312xf32>
    %37 = vector.shape_cast %36 : vector<1x56x312xf32> to vector<56x312xf32>
    %cst_48 = arith.constant dense<0.000000e+00> : vector<48x312xf32>
    %38 = tpu.matmul %35, %37, %cst_48 {dimension_numbers = #tpu.dot_dimension_numbers<[1], [0], [0], [1], [0, 0, 1, 1], [], []>} : vector<48x56xf32>, vector<56x312xf32>, vector<48x312xf32> -> vector<48x312xf32>
    %39 = arith.addf %33, %38 : vector<48x312xf32>
    %c0_49 = arith.constant 0 : index
    %c3_50 = arith.constant 3 : index
    %c0_51 = arith.constant 0 : index
    %c0_52 = arith.constant 0 : index
    %40 = vector.load %arg1[%c0_49, %c3_50, %c0_51, %c0_52] : memref<1x4x56x56xf32, #tpu.memory_space<vmem>>, vector<1x1x48x56xf32>
    %41 = vector.shape_cast %40 : vector<1x1x48x56xf32> to vector<48x56xf32>
    %c2_53 = arith.constant 2 : index
    %c0_54 = arith.constant 0 : index
    %c0_55 = arith.constant 0 : index
    %42 = vector.load %arg2[%c2_53, %c0_54, %c0_55] : memref<5x56x312xf32, #tpu.memory_space<vmem>>, vector<1x56x312xf32>
    %43 = vector.shape_cast %42 : vector<1x56x312xf32> to vector<56x312xf32>
    %cst_56 = arith.constant dense<0.000000e+00> : vector<48x312xf32>
    %44 = tpu.matmul %41, %43, %cst_56 {dimension_numbers = #tpu.dot_dimension_numbers<[1], [0], [0], [1], [0, 0, 1, 1], [], []>} : vector<48x56xf32>, vector<56x312xf32>, vector<48x312xf32> -> vector<48x312xf32>
    %45 = arith.addf %39, %44 : vector<48x312xf32>
    %c0_57 = arith.constant 0 : index
    %c0_58 = arith.constant 0 : index
    %c8_59 = arith.constant 8 : index
    %c0_60 = arith.constant 0 : index
    %46 = vector.load %arg1[%c0_57, %c0_58, %c8_59, %c0_60] : memref<1x4x56x56xf32, #tpu.memory_space<vmem>>, vector<1x1x48x56xf32>
    %47 = vector.shape_cast %46 : vector<1x1x48x56xf32> to vector<48x56xf32>
    %c3_61 = arith.constant 3 : index
    %c0_62 = arith.constant 0 : index
    %c0_63 = arith.constant 0 : index
    %48 = vector.load %arg2[%c3_61, %c0_62, %c0_63] : memref<5x56x312xf32, #tpu.memory_space<vmem>>, vector<1x56x312xf32>
    %49 = vector.shape_cast %48 : vector<1x56x312xf32> to vector<56x312xf32>
    %cst_64 = arith.constant dense<0.000000e+00> : vector<48x312xf32>
    %50 = tpu.matmul %47, %49, %cst_64 {dimension_numbers = #tpu.dot_dimension_numbers<[1], [0], [0], [1], [0, 0, 1, 1], [], []>} : vector<48x56xf32>, vector<56x312xf32>, vector<48x312xf32> -> vector<48x312xf32>
    %51 = arith.addf %45, %50 : vector<48x312xf32>
    %c0_65 = arith.constant 0 : index
    %c1_66 = arith.constant 1 : index
    %c8_67 = arith.constant 8 : index
    %c0_68 = arith.constant 0 : index
    %52 = vector.load %arg1[%c0_65, %c1_66, %c8_67, %c0_68] : memref<1x4x56x56xf32, #tpu.memory_space<vmem>>, vector<1x1x48x56xf32>
    %53 = vector.shape_cast %52 : vector<1x1x48x56xf32> to vector<48x56xf32>
    %c4_69 = arith.constant 4 : index
    %c0_70 = arith.constant 0 : index
    %c0_71 = arith.constant 0 : index
    %54 = vector.load %arg2[%c4_69, %c0_70, %c0_71] : memref<5x56x312xf32, #tpu.memory_space<vmem>>, vector<1x56x312xf32>
    %55 = vector.shape_cast %54 : vector<1x56x312xf32> to vector<56x312xf32>
    %cst_72 = arith.constant dense<0.000000e+00> : vector<48x312xf32>
    %56 = tpu.matmul %53, %55, %cst_72 {dimension_numbers = #tpu.dot_dimension_numbers<[1], [0], [0], [1], [0, 0, 1, 1], [], []>} : vector<48x56xf32>, vector<56x312xf32>, vector<48x312xf32> -> vector<48x312xf32>
    %57 = arith.addf %51, %56 : vector<48x312xf32>
    %58 = arith.maximumf %28, %57 : vector<48x312xf32>
    %59 = vector.extract_strided_slice %58 {offsets = [0, 0], sizes = [48, 156], strides = [1, 1]} : vector<48x312xf32> to vector<48x156xf32>
    %60 = vector.extract_strided_slice %58 {offsets = [0, 156], sizes = [48, 156], strides = [1, 1]} : vector<48x312xf32> to vector<48x156xf32>
    %61 = arith.maximumf %59, %60 : vector<48x156xf32>
    %c0_73 = arith.constant 0 : index
    %c0_74 = arith.constant 0 : index
    %62 = vector.load %arg3[%c0_73, %c0_74] : memref<1x156xf32, #tpu.memory_space<vmem>>, vector<1x156xf32>
    %63 = vector.broadcast %62 : vector<1x156xf32> to vector<48x156xf32>
    %64 = arith.addf %61, %63 : vector<48x156xf32>
    %cst_75 = arith.constant 0.000000e+00 : f32
    %65 = vector.broadcast %cst_75 : f32 to vector<48x156xf32>
    %66 = arith.maximumf %64, %65 : vector<48x156xf32>
    %c0_76 = arith.constant 0 : index
    %c2_77 = arith.constant 2 : index
    %c0_78 = arith.constant 0 : index
    %c0_79 = arith.constant 0 : index
    %67 = vector.load %arg1[%c0_76, %c2_77, %c0_78, %c0_79] : memref<1x4x56x56xf32, #tpu.memory_space<vmem>>, vector<1x1x48x56xf32>
    %68 = vector.shape_cast %67 : vector<1x1x48x56xf32> to vector<48x56xf32>
    %c0_80 = arith.constant 0 : index
    %c0_81 = arith.constant 0 : index
    %c0_82 = arith.constant 0 : index
    %69 = vector.load %arg2[%c0_80, %c0_81, %c0_82] : memref<5x56x312xf32, #tpu.memory_space<vmem>>, vector<1x56x312xf32>
    %70 = vector.shape_cast %69 : vector<1x56x312xf32> to vector<56x312xf32>
    %cst_83 = arith.constant dense<0.000000e+00> : vector<48x312xf32>
    %71 = tpu.matmul %68, %70, %cst_83 {dimension_numbers = #tpu.dot_dimension_numbers<[1], [0], [0], [1], [0, 0, 1, 1], [], []>} : vector<48x56xf32>, vector<56x312xf32>, vector<48x312xf32> -> vector<48x312xf32>
    %c0_84 = arith.constant 0 : index
    %c3_85 = arith.constant 3 : index
    %c0_86 = arith.constant 0 : index
    %c0_87 = arith.constant 0 : index
    %72 = vector.load %arg1[%c0_84, %c3_85, %c0_86, %c0_87] : memref<1x4x56x56xf32, #tpu.memory_space<vmem>>, vector<1x1x48x56xf32>
    %73 = vector.shape_cast %72 : vector<1x1x48x56xf32> to vector<48x56xf32>
    %c1_88 = arith.constant 1 : index
    %c0_89 = arith.constant 0 : index
    %c0_90 = arith.constant 0 : index
    %74 = vector.load %arg2[%c1_88, %c0_89, %c0_90] : memref<5x56x312xf32, #tpu.memory_space<vmem>>, vector<1x56x312xf32>
    %75 = vector.shape_cast %74 : vector<1x56x312xf32> to vector<56x312xf32>
    %cst_91 = arith.constant dense<0.000000e+00> : vector<48x312xf32>
    %76 = tpu.matmul %73, %75, %cst_91 {dimension_numbers = #tpu.dot_dimension_numbers<[1], [0], [0], [1], [0, 0, 1, 1], [], []>} : vector<48x56xf32>, vector<56x312xf32>, vector<48x312xf32> -> vector<48x312xf32>
    %77 = arith.addf %71, %76 : vector<48x312xf32>
    %c0_92 = arith.constant 0 : index
    %c0_93 = arith.constant 0 : index
    %c8_94 = arith.constant 8 : index
    %c0_95 = arith.constant 0 : index
    %78 = vector.load %arg1[%c0_92, %c0_93, %c8_94, %c0_95] : memref<1x4x56x56xf32, #tpu.memory_space<vmem>>, vector<1x1x48x56xf32>
    %79 = vector.shape_cast %78 : vector<1x1x48x56xf32> to vector<48x56xf32>
    %c2_96 = arith.constant 2 : index
    %c0_97 = arith.constant 0 : index
    %c0_98 = arith.constant 0 : index
    %80 = vector.load %arg2[%c2_96, %c0_97, %c0_98] : memref<5x56x312xf32, #tpu.memory_space<vmem>>, vector<1x56x312xf32>
    %81 = vector.shape_cast %80 : vector<1x56x312xf32> to vector<56x312xf32>
    %cst_99 = arith.constant dense<0.000000e+00> : vector<48x312xf32>
    %82 = tpu.matmul %79, %81, %cst_99 {dimension_numbers = #tpu.dot_dimension_numbers<[1], [0], [0], [1], [0, 0, 1, 1], [], []>} : vector<48x56xf32>, vector<56x312xf32>, vector<48x312xf32> -> vector<48x312xf32>
    %83 = arith.addf %77, %82 : vector<48x312xf32>
    %c0_100 = arith.constant 0 : index
    %c1_101 = arith.constant 1 : index
    %c8_102 = arith.constant 8 : index
    %c0_103 = arith.constant 0 : index
    %84 = vector.load %arg1[%c0_100, %c1_101, %c8_102, %c0_103] : memref<1x4x56x56xf32, #tpu.memory_space<vmem>>, vector<1x1x48x56xf32>
    %85 = vector.shape_cast %84 : vector<1x1x48x56xf32> to vector<48x56xf32>
    %c3_104 = arith.constant 3 : index
    %c0_105 = arith.constant 0 : index
    %c0_106 = arith.constant 0 : index
    %86 = vector.load %arg2[%c3_104, %c0_105, %c0_106] : memref<5x56x312xf32, #tpu.memory_space<vmem>>, vector<1x56x312xf32>
    %87 = vector.shape_cast %86 : vector<1x56x312xf32> to vector<56x312xf32>
    %cst_107 = arith.constant dense<0.000000e+00> : vector<48x312xf32>
    %88 = tpu.matmul %85, %87, %cst_107 {dimension_numbers = #tpu.dot_dimension_numbers<[1], [0], [0], [1], [0, 0, 1, 1], [], []>} : vector<48x56xf32>, vector<56x312xf32>, vector<48x312xf32> -> vector<48x312xf32>
    %89 = arith.addf %83, %88 : vector<48x312xf32>
    %c0_108 = arith.constant 0 : index
    %c2_109 = arith.constant 2 : index
    %c8_110 = arith.constant 8 : index
    %c0_111 = arith.constant 0 : index
    %90 = vector.load %arg1[%c0_108, %c2_109, %c8_110, %c0_111] : memref<1x4x56x56xf32, #tpu.memory_space<vmem>>, vector<1x1x48x56xf32>
    %91 = vector.shape_cast %90 : vector<1x1x48x56xf32> to vector<48x56xf32>
    %c4_112 = arith.constant 4 : index
    %c0_113 = arith.constant 0 : index
    %c0_114 = arith.constant 0 : index
    %92 = vector.load %arg2[%c4_112, %c0_113, %c0_114] : memref<5x56x312xf32, #tpu.memory_space<vmem>>, vector<1x56x312xf32>
    %93 = vector.shape_cast %92 : vector<1x56x312xf32> to vector<56x312xf32>
    %cst_115 = arith.constant dense<0.000000e+00> : vector<48x312xf32>
    %94 = tpu.matmul %91, %93, %cst_115 {dimension_numbers = #tpu.dot_dimension_numbers<[1], [0], [0], [1], [0, 0, 1, 1], [], []>} : vector<48x56xf32>, vector<56x312xf32>, vector<48x312xf32> -> vector<48x312xf32>
    %95 = arith.addf %89, %94 : vector<48x312xf32>
    %c0_116 = arith.constant 0 : index
    %c3_117 = arith.constant 3 : index
    %c0_118 = arith.constant 0 : index
    %c0_119 = arith.constant 0 : index
    %96 = vector.load %arg1[%c0_116, %c3_117, %c0_118, %c0_119] : memref<1x4x56x56xf32, #tpu.memory_space<vmem>>, vector<1x1x48x56xf32>
    %97 = vector.shape_cast %96 : vector<1x1x48x56xf32> to vector<48x56xf32>
    %c0_120 = arith.constant 0 : index
    %c0_121 = arith.constant 0 : index
    %c0_122 = arith.constant 0 : index
    %98 = vector.load %arg2[%c0_120, %c0_121, %c0_122] : memref<5x56x312xf32, #tpu.memory_space<vmem>>, vector<1x56x312xf32>
    %99 = vector.shape_cast %98 : vector<1x56x312xf32> to vector<56x312xf32>
    %cst_123 = arith.constant dense<0.000000e+00> : vector<48x312xf32>
    %100 = tpu.matmul %97, %99, %cst_123 {dimension_numbers = #tpu.dot_dimension_numbers<[1], [0], [0], [1], [0, 0, 1, 1], [], []>} : vector<48x56xf32>, vector<56x312xf32>, vector<48x312xf32> -> vector<48x312xf32>
    %c0_124 = arith.constant 0 : index
    %c0_125 = arith.constant 0 : index
    %c8_126 = arith.constant 8 : index
    %c0_127 = arith.constant 0 : index
    %101 = vector.load %arg1[%c0_124, %c0_125, %c8_126, %c0_127] : memref<1x4x56x56xf32, #tpu.memory_space<vmem>>, vector<1x1x48x56xf32>
    %102 = vector.shape_cast %101 : vector<1x1x48x56xf32> to vector<48x56xf32>
    %c1_128 = arith.constant 1 : index
    %c0_129 = arith.constant 0 : index
    %c0_130 = arith.constant 0 : index
    %103 = vector.load %arg2[%c1_128, %c0_129, %c0_130] : memref<5x56x312xf32, #tpu.memory_space<vmem>>, vector<1x56x312xf32>
    %104 = vector.shape_cast %103 : vector<1x56x312xf32> to vector<56x312xf32>
    %cst_131 = arith.constant dense<0.000000e+00> : vector<48x312xf32>
    %105 = tpu.matmul %102, %104, %cst_131 {dimension_numbers = #tpu.dot_dimension_numbers<[1], [0], [0], [1], [0, 0, 1, 1], [], []>} : vector<48x56xf32>, vector<56x312xf32>, vector<48x312xf32> -> vector<48x312xf32>
    %106 = arith.addf %100, %105 : vector<48x312xf32>
    %c0_132 = arith.constant 0 : index
    %c1_133 = arith.constant 1 : index
    %c8_134 = arith.constant 8 : index
    %c0_135 = arith.constant 0 : index
    %107 = vector.load %arg1[%c0_132, %c1_133, %c8_134, %c0_135] : memref<1x4x56x56xf32, #tpu.memory_space<vmem>>, vector<1x1x48x56xf32>
    %108 = vector.shape_cast %107 : vector<1x1x48x56xf32> to vector<48x56xf32>
    %c2_136 = arith.constant 2 : index
    %c0_137 = arith.constant 0 : index
    %c0_138 = arith.constant 0 : index
    %109 = vector.load %arg2[%c2_136, %c0_137, %c0_138] : memref<5x56x312xf32, #tpu.memory_space<vmem>>, vector<1x56x312xf32>
    %110 = vector.shape_cast %109 : vector<1x56x312xf32> to vector<56x312xf32>
    %cst_139 = arith.constant dense<0.000000e+00> : vector<48x312xf32>
    %111 = tpu.matmul %108, %110, %cst_139 {dimension_numbers = #tpu.dot_dimension_numbers<[1], [0], [0], [1], [0, 0, 1, 1], [], []>} : vector<48x56xf32>, vector<56x312xf32>, vector<48x312xf32> -> vector<48x312xf32>
    %112 = arith.addf %106, %111 : vector<48x312xf32>
    %c0_140 = arith.constant 0 : index
    %c2_141 = arith.constant 2 : index
    %c8_142 = arith.constant 8 : index
    %c0_143 = arith.constant 0 : index
    %113 = vector.load %arg1[%c0_140, %c2_141, %c8_142, %c0_143] : memref<1x4x56x56xf32, #tpu.memory_space<vmem>>, vector<1x1x48x56xf32>
    %114 = vector.shape_cast %113 : vector<1x1x48x56xf32> to vector<48x56xf32>
    %c3_144 = arith.constant 3 : index
    %c0_145 = arith.constant 0 : index
    %c0_146 = arith.constant 0 : index
    %115 = vector.load %arg2[%c3_144, %c0_145, %c0_146] : memref<5x56x312xf32, #tpu.memory_space<vmem>>, vector<1x56x312xf32>
    %116 = vector.shape_cast %115 : vector<1x56x312xf32> to vector<56x312xf32>
    %cst_147 = arith.constant dense<0.000000e+00> : vector<48x312xf32>
    %117 = tpu.matmul %114, %116, %cst_147 {dimension_numbers = #tpu.dot_dimension_numbers<[1], [0], [0], [1], [0, 0, 1, 1], [], []>} : vector<48x56xf32>, vector<56x312xf32>, vector<48x312xf32> -> vector<48x312xf32>
    %118 = arith.addf %112, %117 : vector<48x312xf32>
    %c0_148 = arith.constant 0 : index
    %c3_149 = arith.constant 3 : index
    %c8_150 = arith.constant 8 : index
    %c0_151 = arith.constant 0 : index
    %119 = vector.load %arg1[%c0_148, %c3_149, %c8_150, %c0_151] : memref<1x4x56x56xf32, #tpu.memory_space<vmem>>, vector<1x1x48x56xf32>
    %120 = vector.shape_cast %119 : vector<1x1x48x56xf32> to vector<48x56xf32>
    %c4_152 = arith.constant 4 : index
    %c0_153 = arith.constant 0 : index
    %c0_154 = arith.constant 0 : index
    %121 = vector.load %arg2[%c4_152, %c0_153, %c0_154] : memref<5x56x312xf32, #tpu.memory_space<vmem>>, vector<1x56x312xf32>
    %122 = vector.shape_cast %121 : vector<1x56x312xf32> to vector<56x312xf32>
    %cst_155 = arith.constant dense<0.000000e+00> : vector<48x312xf32>
    %123 = tpu.matmul %120, %122, %cst_155 {dimension_numbers = #tpu.dot_dimension_numbers<[1], [0], [0], [1], [0, 0, 1, 1], [], []>} : vector<48x56xf32>, vector<56x312xf32>, vector<48x312xf32> -> vector<48x312xf32>
    %124 = arith.addf %118, %123 : vector<48x312xf32>
    %125 = arith.maximumf %95, %124 : vector<48x312xf32>
    %126 = vector.extract_strided_slice %125 {offsets = [0, 0], sizes = [48, 156], strides = [1, 1]} : vector<48x312xf32> to vector<48x156xf32>
    %127 = vector.extract_strided_slice %125 {offsets = [0, 156], sizes = [48, 156], strides = [1, 1]} : vector<48x312xf32> to vector<48x156xf32>
    %128 = arith.maximumf %126, %127 : vector<48x156xf32>
    %c0_156 = arith.constant 0 : index
    %c0_157 = arith.constant 0 : index
    %129 = vector.load %arg3[%c0_156, %c0_157] : memref<1x156xf32, #tpu.memory_space<vmem>>, vector<1x156xf32>
    %130 = vector.broadcast %129 : vector<1x156xf32> to vector<48x156xf32>
    %131 = arith.addf %128, %130 : vector<48x156xf32>
    %cst_158 = arith.constant 0.000000e+00 : f32
    %132 = vector.broadcast %cst_158 : f32 to vector<48x156xf32>
    %133 = arith.maximumf %131, %132 : vector<48x156xf32>
    %134 = vector.extract_strided_slice %66 {offsets = [0, 0], sizes = [32, 156], strides = [1, 1]} : vector<48x156xf32> to vector<32x156xf32>
    %c0_159 = arith.constant 0 : index
    %c0_160 = arith.constant 0 : index
    %c0_161 = arith.constant 0 : index
    %135 = vector.load %arg4[%c0_159, %c0_160, %c0_161] : memref<5x156x352xf32, #tpu.memory_space<vmem>>, vector<1x156x352xf32>
    %136 = vector.shape_cast %135 : vector<1x156x352xf32> to vector<156x352xf32>
    %cst_162 = arith.constant dense<0.000000e+00> : vector<32x352xf32>
    %137 = tpu.matmul %134, %136, %cst_162 {dimension_numbers = #tpu.dot_dimension_numbers<[1], [0], [0], [1], [0, 0, 1, 1], [], []>} : vector<32x156xf32>, vector<156x352xf32>, vector<32x352xf32> -> vector<32x352xf32>
    %138 = vector.extract_strided_slice %133 {offsets = [0, 0], sizes = [32, 156], strides = [1, 1]} : vector<48x156xf32> to vector<32x156xf32>
    %c1_163 = arith.constant 1 : index
    %c0_164 = arith.constant 0 : index
    %c0_165 = arith.constant 0 : index
    %139 = vector.load %arg4[%c1_163, %c0_164, %c0_165] : memref<5x156x352xf32, #tpu.memory_space<vmem>>, vector<1x156x352xf32>
    %140 = vector.shape_cast %139 : vector<1x156x352xf32> to vector<156x352xf32>
    %cst_166 = arith.constant dense<0.000000e+00> : vector<32x352xf32>
    %141 = tpu.matmul %138, %140, %cst_166 {dimension_numbers = #tpu.dot_dimension_numbers<[1], [0], [0], [1], [0, 0, 1, 1], [], []>} : vector<32x156xf32>, vector<156x352xf32>, vector<32x352xf32> -> vector<32x352xf32>
    %142 = arith.addf %137, %141 : vector<32x352xf32>
    %143 = vector.extract_strided_slice %66 {offsets = [8, 0], sizes = [32, 156], strides = [1, 1]} : vector<48x156xf32> to vector<32x156xf32>
    %c2_167 = arith.constant 2 : index
    %c0_168 = arith.constant 0 : index
    %c0_169 = arith.constant 0 : index
    %144 = vector.load %arg4[%c2_167, %c0_168, %c0_169] : memref<5x156x352xf32, #tpu.memory_space<vmem>>, vector<1x156x352xf32>
    %145 = vector.shape_cast %144 : vector<1x156x352xf32> to vector<156x352xf32>
    %cst_170 = arith.constant dense<0.000000e+00> : vector<32x352xf32>
    %146 = tpu.matmul %143, %145, %cst_170 {dimension_numbers = #tpu.dot_dimension_numbers<[1], [0], [0], [1], [0, 0, 1, 1], [], []>} : vector<32x156xf32>, vector<156x352xf32>, vector<32x352xf32> -> vector<32x352xf32>
    %147 = arith.addf %142, %146 : vector<32x352xf32>
    %148 = vector.extract_strided_slice %133 {offsets = [8, 0], sizes = [32, 156], strides = [1, 1]} : vector<48x156xf32> to vector<32x156xf32>
    %c3_171 = arith.constant 3 : index
    %c0_172 = arith.constant 0 : index
    %c0_173 = arith.constant 0 : index
    %149 = vector.load %arg4[%c3_171, %c0_172, %c0_173] : memref<5x156x352xf32, #tpu.memory_space<vmem>>, vector<1x156x352xf32>
    %150 = vector.shape_cast %149 : vector<1x156x352xf32> to vector<156x352xf32>
    %cst_174 = arith.constant dense<0.000000e+00> : vector<32x352xf32>
    %151 = tpu.matmul %148, %150, %cst_174 {dimension_numbers = #tpu.dot_dimension_numbers<[1], [0], [0], [1], [0, 0, 1, 1], [], []>} : vector<32x156xf32>, vector<156x352xf32>, vector<32x352xf32> -> vector<32x352xf32>
    %152 = arith.addf %147, %151 : vector<32x352xf32>
    %153 = vector.extract_strided_slice %66 {offsets = [16, 0], sizes = [32, 156], strides = [1, 1]} : vector<48x156xf32> to vector<32x156xf32>
    %c4_175 = arith.constant 4 : index
    %c0_176 = arith.constant 0 : index
    %c0_177 = arith.constant 0 : index
    %154 = vector.load %arg4[%c4_175, %c0_176, %c0_177] : memref<5x156x352xf32, #tpu.memory_space<vmem>>, vector<1x156x352xf32>
    %155 = vector.shape_cast %154 : vector<1x156x352xf32> to vector<156x352xf32>
    %cst_178 = arith.constant dense<0.000000e+00> : vector<32x352xf32>
    %156 = tpu.matmul %153, %155, %cst_178 {dimension_numbers = #tpu.dot_dimension_numbers<[1], [0], [0], [1], [0, 0, 1, 1], [], []>} : vector<32x156xf32>, vector<156x352xf32>, vector<32x352xf32> -> vector<32x352xf32>
    %157 = arith.addf %152, %156 : vector<32x352xf32>
    %158 = vector.extract_strided_slice %133 {offsets = [0, 0], sizes = [32, 156], strides = [1, 1]} : vector<48x156xf32> to vector<32x156xf32>
    %c0_179 = arith.constant 0 : index
    %c0_180 = arith.constant 0 : index
    %c0_181 = arith.constant 0 : index
    %159 = vector.load %arg4[%c0_179, %c0_180, %c0_181] : memref<5x156x352xf32, #tpu.memory_space<vmem>>, vector<1x156x352xf32>
    %160 = vector.shape_cast %159 : vector<1x156x352xf32> to vector<156x352xf32>
    %cst_182 = arith.constant dense<0.000000e+00> : vector<32x352xf32>
    %161 = tpu.matmul %158, %160, %cst_182 {dimension_numbers = #tpu.dot_dimension_numbers<[1], [0], [0], [1], [0, 0, 1, 1], [], []>} : vector<32x156xf32>, vector<156x352xf32>, vector<32x352xf32> -> vector<32x352xf32>
    %162 = vector.extract_strided_slice %66 {offsets = [8, 0], sizes = [32, 156], strides = [1, 1]} : vector<48x156xf32> to vector<32x156xf32>
    %c1_183 = arith.constant 1 : index
    %c0_184 = arith.constant 0 : index
    %c0_185 = arith.constant 0 : index
    %163 = vector.load %arg4[%c1_183, %c0_184, %c0_185] : memref<5x156x352xf32, #tpu.memory_space<vmem>>, vector<1x156x352xf32>
    %164 = vector.shape_cast %163 : vector<1x156x352xf32> to vector<156x352xf32>
    %cst_186 = arith.constant dense<0.000000e+00> : vector<32x352xf32>
    %165 = tpu.matmul %162, %164, %cst_186 {dimension_numbers = #tpu.dot_dimension_numbers<[1], [0], [0], [1], [0, 0, 1, 1], [], []>} : vector<32x156xf32>, vector<156x352xf32>, vector<32x352xf32> -> vector<32x352xf32>
    %166 = arith.addf %161, %165 : vector<32x352xf32>
    %167 = vector.extract_strided_slice %133 {offsets = [8, 0], sizes = [32, 156], strides = [1, 1]} : vector<48x156xf32> to vector<32x156xf32>
    %c2_187 = arith.constant 2 : index
    %c0_188 = arith.constant 0 : index
    %c0_189 = arith.constant 0 : index
    %168 = vector.load %arg4[%c2_187, %c0_188, %c0_189] : memref<5x156x352xf32, #tpu.memory_space<vmem>>, vector<1x156x352xf32>
    %169 = vector.shape_cast %168 : vector<1x156x352xf32> to vector<156x352xf32>
    %cst_190 = arith.constant dense<0.000000e+00> : vector<32x352xf32>
    %170 = tpu.matmul %167, %169, %cst_190 {dimension_numbers = #tpu.dot_dimension_numbers<[1], [0], [0], [1], [0, 0, 1, 1], [], []>} : vector<32x156xf32>, vector<156x352xf32>, vector<32x352xf32> -> vector<32x352xf32>
    %171 = arith.addf %166, %170 : vector<32x352xf32>
    %172 = vector.extract_strided_slice %66 {offsets = [16, 0], sizes = [32, 156], strides = [1, 1]} : vector<48x156xf32> to vector<32x156xf32>
    %c3_191 = arith.constant 3 : index
    %c0_192 = arith.constant 0 : index
    %c0_193 = arith.constant 0 : index
    %173 = vector.load %arg4[%c3_191, %c0_192, %c0_193] : memref<5x156x352xf32, #tpu.memory_space<vmem>>, vector<1x156x352xf32>
    %174 = vector.shape_cast %173 : vector<1x156x352xf32> to vector<156x352xf32>
    %cst_194 = arith.constant dense<0.000000e+00> : vector<32x352xf32>
    %175 = tpu.matmul %172, %174, %cst_194 {dimension_numbers = #tpu.dot_dimension_numbers<[1], [0], [0], [1], [0, 0, 1, 1], [], []>} : vector<32x156xf32>, vector<156x352xf32>, vector<32x352xf32> -> vector<32x352xf32>
    %176 = arith.addf %171, %175 : vector<32x352xf32>
    %177 = vector.extract_strided_slice %133 {offsets = [16, 0], sizes = [32, 156], strides = [1, 1]} : vector<48x156xf32> to vector<32x156xf32>
    %c4_195 = arith.constant 4 : index
    %c0_196 = arith.constant 0 : index
    %c0_197 = arith.constant 0 : index
    %178 = vector.load %arg4[%c4_195, %c0_196, %c0_197] : memref<5x156x352xf32, #tpu.memory_space<vmem>>, vector<1x156x352xf32>
    %179 = vector.shape_cast %178 : vector<1x156x352xf32> to vector<156x352xf32>
    %cst_198 = arith.constant dense<0.000000e+00> : vector<32x352xf32>
    %180 = tpu.matmul %177, %179, %cst_198 {dimension_numbers = #tpu.dot_dimension_numbers<[1], [0], [0], [1], [0, 0, 1, 1], [], []>} : vector<32x156xf32>, vector<156x352xf32>, vector<32x352xf32> -> vector<32x352xf32>
    %181 = arith.addf %176, %180 : vector<32x352xf32>
    %182 = arith.maximumf %157, %181 : vector<32x352xf32>
    %183 = vector.extract_strided_slice %182 {offsets = [0, 0], sizes = [32, 176], strides = [1, 1]} : vector<32x352xf32> to vector<32x176xf32>
    %184 = vector.extract_strided_slice %182 {offsets = [0, 176], sizes = [32, 176], strides = [1, 1]} : vector<32x352xf32> to vector<32x176xf32>
    %185 = arith.maximumf %183, %184 : vector<32x176xf32>
    %c0_199 = arith.constant 0 : index
    %c0_200 = arith.constant 0 : index
    %186 = vector.load %arg5[%c0_199, %c0_200] : memref<1x176xf32, #tpu.memory_space<vmem>>, vector<1x176xf32>
    %187 = vector.broadcast %186 : vector<1x176xf32> to vector<32x176xf32>
    %188 = arith.addf %185, %187 : vector<32x176xf32>
    %cst_201 = arith.constant 0.000000e+00 : f32
    %189 = vector.broadcast %cst_201 : f32 to vector<32x176xf32>
    %190 = arith.maximumf %188, %189 : vector<32x176xf32>
    %191 = vector.extract_strided_slice %190 {offsets = [0, 0], sizes = [8, 176], strides = [1, 1]} : vector<32x176xf32> to vector<8x176xf32>
    %c0_202 = arith.constant 0 : index
    %c0_203 = arith.constant 0 : index
    %c0_204 = arith.constant 0 : index
    %192 = vector.load %arg6[%c0_202, %c0_203, %c0_204] : memref<4x176x120xf32, #tpu.memory_space<vmem>>, vector<1x176x120xf32>
    %193 = vector.shape_cast %192 : vector<1x176x120xf32> to vector<176x120xf32>
    %cst_205 = arith.constant dense<0.000000e+00> : vector<8x120xf32>
    %194 = tpu.matmul %191, %193, %cst_205 {dimension_numbers = #tpu.dot_dimension_numbers<[1], [0], [0], [1], [0, 0, 1, 1], [], []>} : vector<8x176xf32>, vector<176x120xf32>, vector<8x120xf32> -> vector<8x120xf32>
    %195 = vector.extract_strided_slice %190 {offsets = [8, 0], sizes = [8, 176], strides = [1, 1]} : vector<32x176xf32> to vector<8x176xf32>
    %c1_206 = arith.constant 1 : index
    %c0_207 = arith.constant 0 : index
    %c0_208 = arith.constant 0 : index
    %196 = vector.load %arg6[%c1_206, %c0_207, %c0_208] : memref<4x176x120xf32, #tpu.memory_space<vmem>>, vector<1x176x120xf32>
    %197 = vector.shape_cast %196 : vector<1x176x120xf32> to vector<176x120xf32>
    %cst_209 = arith.constant dense<0.000000e+00> : vector<8x120xf32>
    %198 = tpu.matmul %195, %197, %cst_209 {dimension_numbers = #tpu.dot_dimension_numbers<[1], [0], [0], [1], [0, 0, 1, 1], [], []>} : vector<8x176xf32>, vector<176x120xf32>, vector<8x120xf32> -> vector<8x120xf32>
    %199 = arith.addf %194, %198 : vector<8x120xf32>
    %200 = vector.extract_strided_slice %190 {offsets = [16, 0], sizes = [8, 176], strides = [1, 1]} : vector<32x176xf32> to vector<8x176xf32>
    %c2_210 = arith.constant 2 : index
    %c0_211 = arith.constant 0 : index
    %c0_212 = arith.constant 0 : index
    %201 = vector.load %arg6[%c2_210, %c0_211, %c0_212] : memref<4x176x120xf32, #tpu.memory_space<vmem>>, vector<1x176x120xf32>
    %202 = vector.shape_cast %201 : vector<1x176x120xf32> to vector<176x120xf32>
    %cst_213 = arith.constant dense<0.000000e+00> : vector<8x120xf32>
    %203 = tpu.matmul %200, %202, %cst_213 {dimension_numbers = #tpu.dot_dimension_numbers<[1], [0], [0], [1], [0, 0, 1, 1], [], []>} : vector<8x176xf32>, vector<176x120xf32>, vector<8x120xf32> -> vector<8x120xf32>
    %204 = arith.addf %199, %203 : vector<8x120xf32>
    %205 = vector.extract_strided_slice %190 {offsets = [24, 0], sizes = [8, 176], strides = [1, 1]} : vector<32x176xf32> to vector<8x176xf32>
    %c3_214 = arith.constant 3 : index
    %c0_215 = arith.constant 0 : index
    %c0_216 = arith.constant 0 : index
    %206 = vector.load %arg6[%c3_214, %c0_215, %c0_216] : memref<4x176x120xf32, #tpu.memory_space<vmem>>, vector<1x176x120xf32>
    %207 = vector.shape_cast %206 : vector<1x176x120xf32> to vector<176x120xf32>
    %cst_217 = arith.constant dense<0.000000e+00> : vector<8x120xf32>
    %208 = tpu.matmul %205, %207, %cst_217 {dimension_numbers = #tpu.dot_dimension_numbers<[1], [0], [0], [1], [0, 0, 1, 1], [], []>} : vector<8x176xf32>, vector<176x120xf32>, vector<8x120xf32> -> vector<8x120xf32>
    %209 = arith.addf %204, %208 : vector<8x120xf32>
    %c0_218 = arith.constant 0 : index
    %c0_219 = arith.constant 0 : index
    %210 = vector.load %arg7[%c0_218, %c0_219] : memref<1x120xf32, #tpu.memory_space<vmem>>, vector<1x120xf32>
    %211 = vector.broadcast %210 : vector<1x120xf32> to vector<8x120xf32>
    %212 = arith.addf %209, %211 : vector<8x120xf32>
    %cst_220 = arith.constant 0.000000e+00 : f32
    %213 = vector.broadcast %cst_220 : f32 to vector<8x120xf32>
    %214 = arith.maximumf %212, %213 : vector<8x120xf32>
    %c0_221 = arith.constant 0 : index
    %c0_222 = arith.constant 0 : index
    %215 = vector.load %arg8[%c0_221, %c0_222] : memref<120x84xf32, #tpu.memory_space<vmem>>, vector<120x84xf32>
    %cst_223 = arith.constant dense<0.000000e+00> : vector<8x84xf32>
    %216 = tpu.matmul %214, %215, %cst_223 {dimension_numbers = #tpu.dot_dimension_numbers<[1], [0], [0], [1], [0, 0, 1, 1], [], []>} : vector<8x120xf32>, vector<120x84xf32>, vector<8x84xf32> -> vector<8x84xf32>
    %c0_224 = arith.constant 0 : index
    %c0_225 = arith.constant 0 : index
    %217 = vector.load %arg9[%c0_224, %c0_225] : memref<1x84xf32, #tpu.memory_space<vmem>>, vector<1x84xf32>
    %218 = vector.broadcast %217 : vector<1x84xf32> to vector<8x84xf32>
    %219 = arith.addf %216, %218 : vector<8x84xf32>
    %cst_226 = arith.constant 0.000000e+00 : f32
    %220 = vector.broadcast %cst_226 : f32 to vector<8x84xf32>
    %221 = arith.maximumf %219, %220 : vector<8x84xf32>
    %c0_227 = arith.constant 0 : index
    %c0_228 = arith.constant 0 : index
    %222 = vector.load %arg10[%c0_227, %c0_228] : memref<84x19xf32, #tpu.memory_space<vmem>>, vector<84x19xf32>
    %cst_229 = arith.constant dense<0.000000e+00> : vector<8x19xf32>
    %223 = tpu.matmul %221, %222, %cst_229 {dimension_numbers = #tpu.dot_dimension_numbers<[1], [0], [0], [1], [0, 0, 1, 1], [], []>} : vector<8x84xf32>, vector<84x19xf32>, vector<8x19xf32> -> vector<8x19xf32>
    %c0_230 = arith.constant 0 : index
    %c0_231 = arith.constant 0 : index
    %224 = vector.load %arg11[%c0_230, %c0_231] : memref<1x19xf32, #tpu.memory_space<vmem>>, vector<1x19xf32>
    %225 = vector.broadcast %224 : vector<1x19xf32> to vector<8x19xf32>
    %226 = arith.addf %223, %225 : vector<8x19xf32>
    %cst_232 = arith.constant dense<0xFF800000> : vector<8xf32>
    %227 = vector.multi_reduction <maximumf>, %226, %cst_232 [1] : vector<8x19xf32> to vector<8xf32>
    %228 = vector.shape_cast %227 : vector<8xf32> to vector<8x1xf32>
    %229 = vector.broadcast %228 : vector<8x1xf32> to vector<8x19xf32>
    %230 = arith.subf %226, %229 : vector<8x19xf32>
    %231 = math.exp %230 : vector<8x19xf32>
    %cst_233 = arith.constant dense<0.000000e+00> : vector<8xf32>
    %232 = vector.multi_reduction <add>, %231, %cst_233 [1] : vector<8x19xf32> to vector<8xf32>
    %233 = vector.shape_cast %232 : vector<8xf32> to vector<8x1xf32>
    %234 = math.log %233 : vector<8x1xf32>
    %235 = vector.broadcast %234 : vector<8x1xf32> to vector<8x19xf32>
    %236 = arith.subf %230, %235 : vector<8x19xf32>
    %c0_234 = arith.constant 0 : index
    %c0_235 = arith.constant 0 : index
    %237 = vector.load %arg12[%c0_234, %c0_235] : memref<8x19xf32, #tpu.memory_space<vmem>>, vector<8x19xf32>
    tpu.vector_store %arg12[%c0_234, %c0_235], %236 {strides = array<i32>} : memref<8x19xf32, #tpu.memory_space<vmem>>, vector<8x19xf32>,
    return
  }
  func.func @transform_0(%arg0: i32) -> (i32, i32, i32, i32) {
    %c0_i32 = arith.constant 0 : i32
    %c0_i32_0 = arith.constant 0 : i32
    %c0_i32_1 = arith.constant 0 : i32
    %c0_i32_2 = arith.constant 0 : i32
    return %arg0, %c0_i32, %c0_i32_0, %c0_i32_1 : i32, i32, i32, i32
  }
  func.func @transform_1(%arg0: i32) -> (i32, i32, i32) {
    %c0_i32 = arith.constant 0 : i32
    %c0_i32_0 = arith.constant 0 : i32
    %c0_i32_1 = arith.constant 0 : i32
    %c0_i32_2 = arith.constant 0 : i32
    return %c0_i32, %c0_i32_0, %c0_i32_1 : i32, i32, i32
  }
  func.func @transform_2(%arg0: i32) -> (i32, i32) {
    %c0_i32 = arith.constant 0 : i32
    %c0_i32_0 = arith.constant 0 : i32
    %c0_i32_1 = arith.constant 0 : i32
    return %c0_i32, %c0_i32_0 : i32, i32
  }
  func.func @transform_3(%arg0: i32) -> (i32, i32, i32) {
    %c0_i32 = arith.constant 0 : i32
    %c0_i32_0 = arith.constant 0 : i32
    %c0_i32_1 = arith.constant 0 : i32
    %c0_i32_2 = arith.constant 0 : i32
    return %c0_i32, %c0_i32_0, %c0_i32_1 : i32, i32, i32
  }
  func.func @transform_4(%arg0: i32) -> (i32, i32) {
    %c0_i32 = arith.constant 0 : i32
    %c0_i32_0 = arith.constant 0 : i32
    %c0_i32_1 = arith.constant 0 : i32
    return %c0_i32, %c0_i32_0 : i32, i32
  }
  func.func @transform_5(%arg0: i32) -> (i32, i32, i32) {
    %c0_i32 = arith.constant 0 : i32
    %c0_i32_0 = arith.constant 0 : i32
    %c0_i32_1 = arith.constant 0 : i32
    %c0_i32_2 = arith.constant 0 : i32
    return %c0_i32, %c0_i32_0, %c0_i32_1 : i32, i32, i32
  }
  func.func @transform_6(%arg0: i32) -> (i32, i32) {
    %c0_i32 = arith.constant 0 : i32
    %c0_i32_0 = arith.constant 0 : i32
    %c0_i32_1 = arith.constant 0 : i32
    return %c0_i32, %c0_i32_0 : i32, i32
  }
  func.func @transform_7(%arg0: i32) -> (i32, i32) {
    %c0_i32 = arith.constant 0 : i32
    %c0_i32_0 = arith.constant 0 : i32
    %c0_i32_1 = arith.constant 0 : i32
    return %c0_i32, %c0_i32_0 : i32, i32
  }
  func.func @transform_8(%arg0: i32) -> (i32, i32) {
    %c0_i32 = arith.constant 0 : i32
    %c0_i32_0 = arith.constant 0 : i32
    %c0_i32_1 = arith.constant 0 : i32
    return %c0_i32, %c0_i32_0 : i32, i32
  }
  func.func @transform_9(%arg0: i32) -> (i32, i32) {
    %c0_i32 = arith.constant 0 : i32
    %c0_i32_0 = arith.constant 0 : i32
    %c0_i32_1 = arith.constant 0 : i32
    return %c0_i32, %c0_i32_0 : i32, i32
  }
  func.func @transform_10(%arg0: i32) -> (i32, i32) {
    %c0_i32 = arith.constant 0 : i32
    %c0_i32_0 = arith.constant 0 : i32
    %c0_i32_1 = arith.constant 0 : i32
    return %c0_i32, %c0_i32_0 : i32, i32
  }
  func.func @transform_11(%arg0: i32) -> (i32, i32) {
    %c0_i32 = arith.constant 0 : i32
    %c0_i32_0 = arith.constant 0 : i32
    return %arg0, %c0_i32 : i32, i32
  }
}

</mosaic_0001>

<llo_original>
// kernel: net_forward.1
$region0: #{net_forward.1}
  #allocation0 [shape = 'u32[]', space=smem, size = 0x4, offset = 0x4, fixed_abs, tag = 'smem constant byte address 0x4 - core index']
  #allocation1 [shape = 'u32[144,128]{1,0:T(1,128)}', space=vmem, size = 0x12000, scoped, tag = 'internal scratch']
  %s0 = inlined_call_operand.vmem [shape: f32[2,4,56,56], index: 0, kind: input, shape index: {}]
  %s1 = inlined_call_operand.vmem [shape: f32[5,56,312], index: 1, kind: input, shape index: {}]
  %s2 = inlined_call_operand.vmem [shape: f32[1,156], index: 2, kind: input, shape index: {}]
  %s3 = inlined_call_operand.vmem [shape: f32[5,156,352], index: 3, kind: input, shape index: {}]
  %s4 = inlined_call_operand.vmem [shape: f32[1,176], index: 4, kind: input, shape index: {}]
  %s5 = inlined_call_operand.vmem [shape: f32[4,176,120], index: 5, kind: input, shape index: {}]
  %s6 = inlined_call_operand.vmem [shape: f32[1,120], index: 6, kind: input, shape index: {}]
  %s7 = inlined_call_operand.vmem [shape: f32[120,84], index: 7, kind: input, shape index: {}]
  %s8 = inlined_call_operand.vmem [shape: f32[1,84], index: 8, kind: input, shape index: {}]
  %s9 = inlined_call_operand.vmem [shape: f32[84,19], index: 9, kind: input, shape index: {}]
  %s10 = inlined_call_operand.vmem [shape: f32[1,19], index: 10, kind: input, shape index: {}]
  %s11 = inlined_call_operand.hbm [shape: f32[16,19], index: 11, kind: output, shape index: {}]
  %s12 = sld [smem:[#allocation0]]
  $region77: #{net_forward.1} parent=0
    _
  %s14 = ssub.s32 1, %s12
  %s15 = scalar_select 0, %s14, %s12
  $region1: #{net_forward.1} parent=0
    #allocation2 [shape = 'u8[8192]{0}', space=vmem, size = 0x2000, scoped, tag = 'output window, operand 0']
    #allocation3 [shape = 's32[2]{0}', space=sflag, size = 0x8, scoped, tag = 'scoped memory for net_forward.1']
    %16 = vsyncpa [#allocation3], 0
    %s17 = scalar_lea.sflag [#allocation3], 1
    %18 = vsyncpa %s17, 0
    loop: start=0, step=1, limit=4
    $region2: #{net_forward.1} parent=1 // loop_pre_header
      _
    $region3: #{net_forward.1} parent=1 // loop_header
      %s20 = sphi 0, %s24
      %p21 = scmp.ge.s32.totalorder %s20, 4
      %s30 = sphi 0, %s32
      %s33 = sphi 0, %s30
      %s34 = sphi 0, %s33
      %s50 = sphi 0, %s34
      %s54 = sphi 0, %s54
      %s56 = sphi 0, %s54
      %s57 = sphi 0, %s56
      %s71 = sphi 0, %s57
      %s75 = sphi 0, %s75
      %s77 = sphi 0, %s75
      %s78 = sphi 0, %s77
      %s92 = sphi 0, %s78
      %s96 = sphi 0, %s96
      %s98 = sphi 0, %s96
      %s99 = sphi 0, %s98
      %s113 = sphi 0, %s99
      %s117 = sphi 0, %s117
      %s119 = sphi 0, %s117
      %s120 = sphi 0, %s119
      %s134 = sphi 0, %s120
      %s138 = sphi 0, %s138
      %s140 = sphi 0, %s138
      %s141 = sphi 0, %s140
      %s155 = sphi 0, %s141
      %s159 = sphi 0, %s159
      %s161 = sphi 0, %s159
      %s162 = sphi 0, %s161
      %s176 = sphi 0, %s162
      %s180 = sphi 0, %s180
      %s182 = sphi 0, %s180
      %s183 = sphi 0, %s182
      %s197 = sphi 0, %s183
      %s201 = sphi 0, %s201
      %s203 = sphi 0, %s201
      %s204 = sphi 0, %s203
      %s218 = sphi 0, %s204
      %s222 = sphi 0, %s222
      %s224 = sphi 0, %s222
      %s225 = sphi 0, %s224
      %s239 = sphi 0, %s225
      %s243 = sphi 0, %s243
      %s245 = sphi 0, %s243
      %s246 = sphi 0, %s245
      %s260 = sphi 0, %s246
      %s266 = sphi 0, %s268
      %s269 = sphi 0, %s266
      %s270 = sphi 0, %s269
      %s286 = sphi 0, %s270
    $region4: #{net_forward.1} parent=1 // loop_header_branch
      %23 = sbr.rel (%p21) target = $region8
    $region5: #{net_forward.1} parent=1 // loop_body
      %s25 = ssub.s32 %s20, 1
      %s26 = ssub.s32 %s20, 2
      %s27 = sadd.s32 %s20, 1
      %s28 = ssub.s32 %s20, %s27
      %p29 = scmp.eq.s32.totalorder %s28, 0
      %s31 = sadd.s32 %s30, 1
      %s32 = scalar_select %p29, %s30, %s31
      %p35 = pneg %p29
      %p36 = scmp.eq.s32.totalorder %s20, 1
      %p37 = por %p35, %p36
      %p38 = scmp.ne.s32.totalorder %s30, %s33
      %p39 = scmp.eq.s32.totalorder %s20, 0
      %p40 = por %p38, %p39
      %p41 = scmp.ne.s32.totalorder %s30, %s33
      %p42 = scmp.eq.s32.totalorder %s25, 1
      %p43 = por %p41, %p42
      %p44 = scmp.ne.s32.totalorder %s33, %s34
      %p45 = scmp.eq.s32.totalorder %s25, 0
      %p46 = por %p44, %p45
      %p47 = scmp.ne.s32.totalorder %s33, %s34
      %p48 = scmp.eq.s32.totalorder %s26, 1
      %p49 = por %p47, %p48
      %p51 = scmp.ne.s32.totalorder %s34, %s50
      %p52 = scmp.eq.s32.totalorder %s26, 0
      %p53 = por %p51, %p52
      %s55 = sadd.s32 %s54, 1
      %p58 = scmp.eq.s32.totalorder %s20, 1
      %p59 = scmp.ne.s32.totalorder %s54, %s56
      %p60 = scmp.eq.s32.totalorder %s20, 0
      %p61 = por %p59, %p60
      %p62 = scmp.ne.s32.totalorder %s54, %s56
      %p63 = scmp.eq.s32.totalorder %s25, 1
      %p64 = por %p62, %p63
      %p65 = scmp.ne.s32.totalorder %s56, %s57
      %p66 = scmp.eq.s32.totalorder %s25, 0
      %p67 = por %p65, %p66
      %p68 = scmp.ne.s32.totalorder %s56, %s57
      %p69 = scmp.eq.s32.totalorder %s26, 1
      %p70 = por %p68, %p69
      %p72 = scmp.ne.s32.totalorder %s57, %s71
      %p73 = scmp.eq.s32.totalorder %s26, 0
      %p74 = por %p72, %p73
      %s76 = sadd.s32 %s75, 1
      %p79 = scmp.eq.s32.totalorder %s20, 1
      %p80 = scmp.ne.s32.totalorder %s75, %s77
      %p81 = scmp.eq.s32.totalorder %s20, 0
      %p82 = por %p80, %p81
      %p83 = scmp.ne.s32.totalorder %s75, %s77
      %p84 = scmp.eq.s32.totalorder %s25, 1
      %p85 = por %p83, %p84
      %p86 = scmp.ne.s32.totalorder %s77, %s78
      %p87 = scmp.eq.s32.totalorder %s25, 0
      %p88 = por %p86, %p87
      %p89 = scmp.ne.s32.totalorder %s77, %s78
      %p90 = scmp.eq.s32.totalorder %s26, 1
      %p91 = por %p89, %p90
      %p93 = scmp.ne.s32.totalorder %s78, %s92
      %p94 = scmp.eq.s32.totalorder %s26, 0
      %p95 = por %p93, %p94
      %s97 = sadd.s32 %s96, 1
      %p100 = scmp.eq.s32.totalorder %s20, 1
      %p101 = scmp.ne.s32.totalorder %s96, %s98
      %p102 = scmp.eq.s32.totalorder %s20, 0
      %p103 = por %p101, %p102
      %p104 = scmp.ne.s32.totalorder %s96, %s98
      %p105 = scmp.eq.s32.totalorder %s25, 1
      %p106 = por %p104, %p105
      %p107 = scmp.ne.s32.totalorder %s98, %s99
      %p108 = scmp.eq.s32.totalorder %s25, 0
      %p109 = por %p107, %p108
      %p110 = scmp.ne.s32.totalorder %s98, %s99
      %p111 = scmp.eq.s32.totalorder %s26, 1
      %p112 = por %p110, %p111
      %p114 = scmp.ne.s32.totalorder %s99, %s113
      %p115 = scmp.eq.s32.totalorder %s26, 0
      %p116 = por %p114, %p115
      %s118 = sadd.s32 %s117, 1
      %p121 = scmp.eq.s32.totalorder %s20, 1
      %p122 = scmp.ne.s32.totalorder %s117, %s119
      %p123 = scmp.eq.s32.totalorder %s20, 0
      %p124 = por %p122, %p123
      %p125 = scmp.ne.s32.totalorder %s117, %s119
      %p126 = scmp.eq.s32.totalorder %s25, 1
      %p127 = por %p125, %p126
      %p128 = scmp.ne.s32.totalorder %s119, %s120
      %p129 = scmp.eq.s32.totalorder %s25, 0
      %p130 = por %p128, %p129
      %p131 = scmp.ne.s32.totalorder %s119, %s120
      %p132 = scmp.eq.s32.totalorder %s26, 1
      %p133 = por %p131, %p132
      %p135 = scmp.ne.s32.totalorder %s120, %s134
      %p136 = scmp.eq.s32.totalorder %s26, 0
      %p137 = por %p135, %p136
      %s139 = sadd.s32 %s138, 1
      %p142 = scmp.eq.s32.totalorder %s20, 1
      %p143 = scmp.ne.s32.totalorder %s138, %s140
      %p144 = scmp.eq.s32.totalorder %s20, 0
      %p145 = por %p143, %p144
      %p146 = scmp.ne.s32.totalorder %s138, %s140
      %p147 = scmp.eq.s32.totalorder %s25, 1
      %p148 = por %p146, %p147
      %p149 = scmp.ne.s32.totalorder %s140, %s141
      %p150 = scmp.eq.s32.totalorder %s25, 0
      %p151 = por %p149, %p150
      %p152 = scmp.ne.s32.totalorder %s140, %s141
      %p153 = scmp.eq.s32.totalorder %s26, 1
      %p154 = por %p152, %p153
      %p156 = scmp.ne.s32.totalorder %s141, %s155
      %p157 = scmp.eq.s32.totalorder %s26, 0
      %p158 = por %p156, %p157
      %s160 = sadd.s32 %s159, 1
      %p163 = scmp.eq.s32.totalorder %s20, 1
      %p164 = scmp.ne.s32.totalorder %s159, %s161
      %p165 = scmp.eq.s32.totalorder %s20, 0
      %p166 = por %p164, %p165
      %p167 = scmp.ne.s32.totalorder %s159, %s161
      %p168 = scmp.eq.s32.totalorder %s25, 1
      %p169 = por %p167, %p168
      %p170 = scmp.ne.s32.totalorder %s161, %s162
      %p171 = scmp.eq.s32.totalorder %s25, 0
      %p172 = por %p170, %p171
      %p173 = scmp.ne.s32.totalorder %s161, %s162
      %p174 = scmp.eq.s32.totalorder %s26, 1
      %p175 = por %p173, %p174
      %p177 = scmp.ne.s32.totalorder %s162, %s176
      %p178 = scmp.eq.s32.totalorder %s26, 0
      %p179 = por %p177, %p178
      %s181 = sadd.s32 %s180, 1
      %p184 = scmp.eq.s32.totalorder %s20, 1
      %p185 = scmp.ne.s32.totalorder %s180, %s182
      %p186 = scmp.eq.s32.totalorder %s20, 0
      %p187 = por %p185, %p186
      %p188 = scmp.ne.s32.totalorder %s180, %s182
      %p189 = scmp.eq.s32.totalorder %s25, 1
      %p190 = por %p188, %p189
      %p191 = scmp.ne.s32.totalorder %s182, %s183
      %p192 = scmp.eq.s32.totalorder %s25, 0
      %p193 = por %p191, %p192
      %p194 = scmp.ne.s32.totalorder %s182, %s183
      %p195 = scmp.eq.s32.totalorder %s26, 1
      %p196 = por %p194, %p195
      %p198 = scmp.ne.s32.totalorder %s183, %s197
      %p199 = scmp.eq.s32.totalorder %s26, 0
      %p200 = por %p198, %p199
      %s202 = sadd.s32 %s201, 1
      %p205 = scmp.eq.s32.totalorder %s20, 1
      %p206 = scmp.ne.s32.totalorder %s201, %s203
      %p207 = scmp.eq.s32.totalorder %s20, 0
      %p208 = por %p206, %p207
      %p209 = scmp.ne.s32.totalorder %s201, %s203
      %p210 = scmp.eq.s32.totalorder %s25, 1
      %p211 = por %p209, %p210
      %p212 = scmp.ne.s32.totalorder %s203, %s204
      %p213 = scmp.eq.s32.totalorder %s25, 0
      %p214 = por %p212, %p213
      %p215 = scmp.ne.s32.totalorder %s203, %s204
      %p216 = scmp.eq.s32.totalorder %s26, 1
      %p217 = por %p215, %p216
      %p219 = scmp.ne.s32.totalorder %s204, %s218
      %p220 = scmp.eq.s32.totalorder %s26, 0
      %p221 = por %p219, %p220
      %s223 = sadd.s32 %s222, 1
      %p226 = scmp.eq.s32.totalorder %s20, 1
      %p227 = scmp.ne.s32.totalorder %s222, %s224
      %p228 = scmp.eq.s32.totalorder %s20, 0
      %p229 = por %p227, %p228
      %p230 = scmp.ne.s32.totalorder %s222, %s224
      %p231 = scmp.eq.s32.totalorder %s25, 1
      %p232 = por %p230, %p231
      %p233 = scmp.ne.s32.totalorder %s224, %s225
      %p234 = scmp.eq.s32.totalorder %s25, 0
      %p235 = por %p233, %p234
      %p236 = scmp.ne.s32.totalorder %s224, %s225
      %p237 = scmp.eq.s32.totalorder %s26, 1
      %p238 = por %p236, %p237
      %p240 = scmp.ne.s32.totalorder %s225, %s239
      %p241 = scmp.eq.s32.totalorder %s26, 0
      %p242 = por %p240, %p241
      %s244 = sadd.s32 %s243, 1
      %p247 = scmp.eq.s32.totalorder %s20, 1
      %p248 = scmp.ne.s32.totalorder %s243, %s245
      %p249 = scmp.eq.s32.totalorder %s20, 0
      %p250 = por %p248, %p249
      %p251 = scmp.ne.s32.totalorder %s243, %s245
      %p252 = scmp.eq.s32.totalorder %s25, 1
      %p253 = por %p251, %p252
      %p254 = scmp.ne.s32.totalorder %s245, %s246
      %p255 = scmp.eq.s32.totalorder %s25, 0
      %p256 = por %p254, %p255
      %p257 = scmp.ne.s32.totalorder %s245, %s246
      %p258 = scmp.eq.s32.totalorder %s26, 1
      %p259 = por %p257, %p258
      %p261 = scmp.ne.s32.totalorder %s246, %s260
      %p262 = scmp.eq.s32.totalorder %s26, 0
      %p263 = por %p261, %p262
      %s264 = ssub.s32 %s20, %s27
      %p265 = scmp.eq.s32.totalorder %s264, 0
      %s267 = sadd.s32 %s266, 1
      %s268 = scalar_select %p265, %s266, %s267
      %p271 = pneg %p265
      %p272 = scmp.eq.s32.totalorder %s20, 1
      %p273 = por %p271, %p272
      %p274 = scmp.ne.s32.totalorder %s266, %s269
      %p275 = scmp.eq.s32.totalorder %s20, 0
      %p276 = por %p274, %p275
      %p277 = scmp.ne.s32.totalorder %s266, %s269
      %p278 = scmp.eq.s32.totalorder %s25, 1
      %p279 = por %p277, %p278
      %p280 = scmp.ne.s32.totalorder %s269, %s270
      %p281 = scmp.eq.s32.totalorder %s25, 0
      %p282 = por %p280, %p281
      %p283 = scmp.ne.s32.totalorder %s269, %s270
      %p284 = scmp.eq.s32.totalorder %s26, 1
      %p285 = por %p283, %p284
      %p287 = scmp.ne.s32.totalorder %s270, %s286
      %p288 = scmp.eq.s32.totalorder %s26, 0
      %p289 = por %p287, %p288
      %p290 = scmp.le.s32.totalorder 1, %s20
      %p291 = scmp.lt.s32.totalorder %s20, 3
      %p292 = pnand %p290, %p291
      %p293 = pneg %p292
      // Predicated region
      $region9: #{net_forward.1} parent=5 // pred_check
        _
      $region10: #{net_forward.1} parent=5 // pred_check_branch
        %295 = sbr.rel (%p292) target = $region12
      $region11: #{net_forward.1} parent=5 // pred_region
        %s296 = ssub.s32 %s20, 1
        // Predicated region
        $region13: #{net_forward.1} parent=11 // pred_check
          %p297 = pneg %p67
        $region14: #{net_forward.1} parent=11 // pred_check_branch
          %299 = sbr.rel (%p297) target = $region16
        $region15: #{net_forward.1} parent=11 // pred_region
          _
        $region16: #{net_forward.1} parent=11 // pred_fallthru
          _
        // Predicated region
        $region17: #{net_forward.1} parent=11 // pred_check
          %p300 = pneg %p88
        $region18: #{net_forward.1} parent=11 // pred_check_branch
          %302 = sbr.rel (%p300) target = $region20
        $region19: #{net_forward.1} parent=11 // pred_region
          _
        $region20: #{net_forward.1} parent=11 // pred_fallthru
          _
        // Predicated region
        $region21: #{net_forward.1} parent=11 // pred_check
          %p303 = pneg %p109
        $region22: #{net_forward.1} parent=11 // pred_check_branch
          %305 = sbr.rel (%p303) target = $region24
        $region23: #{net_forward.1} parent=11 // pred_region
          _
        $region24: #{net_forward.1} parent=11 // pred_fallthru
          _
        // Predicated region
        $region25: #{net_forward.1} parent=11 // pred_check
          %p306 = pneg %p130
        $region26: #{net_forward.1} parent=11 // pred_check_branch
          %308 = sbr.rel (%p306) target = $region28
        $region27: #{net_forward.1} parent=11 // pred_region
          _
        $region28: #{net_forward.1} parent=11 // pred_fallthru
          _
        // Predicated region
        $region29: #{net_forward.1} parent=11 // pred_check
          %p309 = pneg %p151
        $region30: #{net_forward.1} parent=11 // pred_check_branch
          %311 = sbr.rel (%p309) target = $region32
        $region31: #{net_forward.1} parent=11 // pred_region
          _
        $region32: #{net_forward.1} parent=11 // pred_fallthru
          _
        // Predicated region
        $region33: #{net_forward.1} parent=11 // pred_check
          %p312 = pneg %p172
        $region34: #{net_forward.1} parent=11 // pred_check_branch
          %314 = sbr.rel (%p312) target = $region36
        $region35: #{net_forward.1} parent=11 // pred_region
          _
        $region36: #{net_forward.1} parent=11 // pred_fallthru
          _
        // Predicated region
        $region37: #{net_forward.1} parent=11 // pred_check
          %p315 = pneg %p193
        $region38: #{net_forward.1} parent=11 // pred_check_branch
          %317 = sbr.rel (%p315) target = $region40
        $region39: #{net_forward.1} parent=11 // pred_region
          _
        $region40: #{net_forward.1} parent=11 // pred_fallthru
          _
        // Predicated region
        $region41: #{net_forward.1} parent=11 // pred_check
          %p318 = pneg %p214
        $region42: #{net_forward.1} parent=11 // pred_check_branch
          %320 = sbr.rel (%p318) target = $region44
        $region43: #{net_forward.1} parent=11 // pred_region
          _
        $region44: #{net_forward.1} parent=11 // pred_fallthru
          _
        // Predicated region
        $region45: #{net_forward.1} parent=11 // pred_check
          %p321 = pneg %p235
        $region46: #{net_forward.1} parent=11 // pred_check_branch
          %323 = sbr.rel (%p321) target = $region48
        $region47: #{net_forward.1} parent=11 // pred_region
          _
        $region48: #{net_forward.1} parent=11 // pred_fallthru
          _
        // Predicated region
        $region49: #{net_forward.1} parent=11 // pred_check
          %p324 = pneg %p256
        $region50: #{net_forward.1} parent=11 // pred_check_branch
          %326 = sbr.rel (%p324) target = $region52
        $region51: #{net_forward.1} parent=11 // pred_region
          _
        $region52: #{net_forward.1} parent=11 // pred_fallthru
          _
      $region12: #{net_forward.1} parent=5 // pred_fallthru
        _
      %p327 = scmp.lt.s32.totalorder %s20, 2
      // Predicated region
      $region53: #{net_forward.1} parent=5 // pred_check
        %p328 = pneg %p327
      $region54: #{net_forward.1} parent=5 // pred_check_branch
        %330 = sbr.rel (%p328) target = $region56
      $region55: #{net_forward.1} parent=5 // pred_region
        // Predicated region
        $region57: #{net_forward.1} parent=55 // pred_check
          %p331 = pneg %p40
        $region58: #{net_forward.1} parent=55 // pred_check_branch
          %333 = sbr.rel (%p331) target = $region60
        $region59: #{net_forward.1} parent=55 // pred_region
          %p334 = scmp.lt.s32.totalorder %s20, 1
          %s335 = scalar_select %p334, %s20, 1
          %s336 = smul.addr %s335, 28
          %s337 = smul.addr %s336, 8
          %s338 = scalar_lea.vmem %s0, %s337
        $region60: #{net_forward.1} parent=55 // pred_fallthru
          _
      $region56: #{net_forward.1} parent=5 // pred_fallthru
        _
      %p339 = scmp.le.s32.totalorder 1, %s20
      %p340 = scmp.lt.s32.totalorder %s20, 3
      %p341 = pnand %p339, %p340
      %p342 = pneg %p341
      // Predicated region
      $region61: #{net_forward.1} parent=5 // pred_check
        _
      $region62: #{net_forward.1} parent=5 // pred_check_branch
        %344 = sbr.rel (%p341) target = $region64
      $region63: #{net_forward.1} parent=5 // pred_region
        %s345 = ssub.s32 %s20, 1
        %p346 = scmp.lt.s32.totalorder %s25, 1
        %s347 = scalar_select %p346, %s25, 1
        %s348 = smul.addr %s347, 28
        %s349 = smul.addr %s348, 8
        %s350 = scalar_lea.vmem %s0, %s349
        %p351 = pneg %p46
        %p352 = pneg %p43
        %p353 = pneg %p67
        %p354 = pneg %p64
        %p355 = pneg %p88
        %p356 = pneg %p85
        %p357 = pneg %p109
        %p358 = pneg %p106
        %p359 = pneg %p130
        %p360 = pneg %p127
        %p361 = pneg %p151
        %p362 = pneg %p148
        %p363 = pneg %p172
        %p364 = pneg %p169
        %p365 = pneg %p193
        %p366 = pneg %p190
        %p367 = pneg %p214
        %p368 = pneg %p211
        %p369 = pneg %p235
        %p370 = pneg %p232
        %p371 = pneg %p256
        %p372 = pneg %p253
        %p373 = pneg %p282
        %p374 = pneg %p279
        %s375 = sand.u32 %s269, 1
        %s376 = scalar_lea.sflag [#allocation3], %s375
        %s377 = sand.u32 %s269, 1
        %s378 = smul.addr %s377, 8
        %s379 = scalar_lea.vmem [#allocation2], %s378
        %p380 = scmp.lt.s32.totalorder %s25, 1
        %s381 = scalar_select %p380, %s25, 1
        %s382 = smul.addr %s381, 28
        %s383 = smul.addr %s382, 8
        %s384 = scalar_lea.vmem %s0, %s383
        %v385 = vld [vmem:[%s384] sm:$0xff]
        %v386 = vld [vmem:[%s384 + $0x8] sm:$0xff]
        %v387 = vld [vmem:[%s384 + $0x10] sm:$0xff]
        %v388 = vld [vmem:[%s384 + $0x18] sm:$0xff]
        %v389 = vld [vmem:[%s384 + $0x20] sm:$0xff]
        %v390 = vld [vmem:[%s384 + $0x28] sm:$0xff]
        %v391 = vld [vmem:[%s1] sm:$0xff]
        %v392 = vld [vmem:[%s1 + $0x8] sm:$0xff]
        %v393 = vld [vmem:[%s1 + $0x10] sm:$0xff]
        %v394 = vld [vmem:[%s1 + $0x18] sm:$0xff]
        %v395 = vld [vmem:[%s1 + $0x20] sm:$0xff]
        %v396 = vld [vmem:[%s1 + $0x28] sm:$0xff]
        %v397 = vld [vmem:[%s1 + $0x30] sm:$0xff]
        %v398 = vld [vmem:[%s1 + $0x38] sm:$0xff]
        %v399 = vld [vmem:[%s1 + $0x40] sm:$0xff]
        %v400 = vld [vmem:[%s1 + $0x48] sm:$0xff]
        %v401 = vld [vmem:[%s1 + $0x50] sm:$0xff]
        %v402 = vld [vmem:[%s1 + $0x58] sm:$0xff]
        %v403 = vld [vmem:[%s1 + $0x60] sm:$0xff]
        %v404 = vld [vmem:[%s1 + $0x68] sm:$0xff]
        %v405 = vld [vmem:[%s1 + $0x70] sm:$0xff]
        %v406 = vld [vmem:[%s1 + $0x78] sm:$0xff]
        %v407 = vld [vmem:[%s1 + $0x80] sm:$0xff]
        %v408 = vld [vmem:[%s1 + $0x88] sm:$0xff]
        %v409 = vld [vmem:[%s1 + $0x90] sm:$0xff]
        %v410 = vld [vmem:[%s1 + $0x98] sm:$0xff]
        %v411 = vld [vmem:[%s1 + $0xa0] sm:$0xff]
        %s412 = scalar_lea.vmem %s384, 56
        %v413 = vld [vmem:[%s412] sm:$0xff]
        %v414 = vld [vmem:[%s412 + $0x8] sm:$0xff]
        %v415 = vld [vmem:[%s412 + $0x10] sm:$0xff]
        %v416 = vld [vmem:[%s412 + $0x18] sm:$0xff]
        %v417 = vld [vmem:[%s412 + $0x20] sm:$0xff]
        %v418 = vld [vmem:[%s412 + $0x28] sm:$0xff]
        %s419 = scalar_lea.vmem %s1, 168
        %v420 = vld [vmem:[%s419] sm:$0xff]
        %v421 = vld [vmem:[%s419 + $0x8] sm:$0xff]
        %v422 = vld [vmem:[%s419 + $0x10] sm:$0xff]
        %v423 = vld [vmem:[%s419 + $0x18] sm:$0xff]
        %v424 = vld [vmem:[%s419 + $0x20] sm:$0xff]
        %v425 = vld [vmem:[%s419 + $0x28] sm:$0xff]
        %v426 = vld [vmem:[%s419 + $0x30] sm:$0xff]
        %v427 = vld [vmem:[%s419 + $0x38] sm:$0xff]
        %v428 = vld [vmem:[%s419 + $0x40] sm:$0xff]
        %v429 = vld [vmem:[%s419 + $0x48] sm:$0xff]
        %v430 = vld [vmem:[%s419 + $0x50] sm:$0xff]
        %v431 = vld [vmem:[%s419 + $0x58] sm:$0xff]
        %v432 = vld [vmem:[%s419 + $0x60] sm:$0xff]
        %v433 = vld [vmem:[%s419 + $0x68] sm:$0xff]
        %v434 = vld [vmem:[%s419 + $0x70] sm:$0xff]
        %v435 = vld [vmem:[%s419 + $0x78] sm:$0xff]
        %v436 = vld [vmem:[%s419 + $0x80] sm:$0xff]
        %v437 = vld [vmem:[%s419 + $0x88] sm:$0xff]
        %v438 = vld [vmem:[%s419 + $0x90] sm:$0xff]
        %v439 = vld [vmem:[%s419 + $0x98] sm:$0xff]
        %v440 = vld [vmem:[%s419 + $0xa0] sm:$0xff]
        %vm441 = vcmask 457728
        %v443 = vsel %vm441, %v413, 0
        %v446 = vsel %vm441, %v414, 0
        %v449 = vsel %vm441, %v415, 0
        %v452 = vsel %vm441, %v416, 0
        %v455 = vsel %vm441, %v417, 0
        %v458 = vsel %vm441, %v418, 0
        %460 = vmatprep.subr.mxu0 %v421
        %461 = vmatpush1.msra.mxu0 %v420
        %462 = vmatprep.subr.mxu0 %v424
        %463 = vmatpush1.msra.mxu0 %v423
        %464 = vmatprep.subr.mxu0 %v427
        %465 = vmatpush1.msra.mxu0 %v426
        %466 = vmatprep.subr.mxu0 %v430
        %467 = vmatpush1.msra.mxu0 %v429
        %468 = vmatprep.subr.mxu0 %v433
        %469 = vmatpush1.msra.mxu0 %v432
        %470 = vmatprep.subr.mxu0 %v436
        %471 = vmatpush1.msra.mxu0 %v435
        %472 = vmatprep.subr.mxu0 %v439
        %473 = vmatpush1.msra.mxu0 %v438
        %474 = vmatprep.subr.mxu0 0.0
        %475 = vmatpush1.msra.mxu0 0.0
        %476 = vmatprep.subr.mxu0 0.0
        %477 = vmatpush1.msra.mxu0 0.0
        %478 = vmatprep.subr.mxu0 0.0
        %479 = vmatpush1.msra.mxu0 0.0
        %480 = vmatprep.subr.mxu0 0.0
        %481 = vmatpush1.msra.mxu0 0.0
        %482 = vmatprep.subr.mxu0 0.0
        %483 = vmatpush1.msra.mxu0 0.0
        %484 = vmatprep.subr.mxu0 0.0
        %485 = vmatpush1.msra.mxu0 0.0
        %486 = vmatprep.subr.mxu0 0.0
        %487 = vmatpush1.msra.mxu0 0.0
        %488 = vmatprep.subr.mxu0 0.0
        %489 = vmatpush1.msra.mxu0 0.0
        %490 = vmatprep.subr.mxu0 0.0
        %491 = vmatpush1.msra.mxu0 0.0
        %492 = vmatprep.subr.mxu0 0.0
        %493 = vmatpush1.msra.mxu0 0.0
        %494 = vmatprep.subr.mxu0 0.0
        %495 = vmatpush1.msra.mxu0 0.0
        %496 = vmatprep.subr.mxu0 0.0
        %497 = vmatpush1.msra.mxu0 0.0
        %498 = vmatprep.subr.mxu0 0.0
        %499 = vmatpush1.msra.mxu0 0.0
        %500 = vmatprep.subr.mxu0 0.0
        %501 = vmatpush1.msra.mxu0 0.0
        %502 = vmatprep.subr.mxu0 0.0
        %503 = vmatpush1.msra.mxu0 0.0
        %504 = vmatprep.subr.mxu0 0.0
        %505 = vmatpush1.msra.mxu0 0.0
        %506 = vmatprep.subr.mxu0 0.0
        %507 = vmatpush1.msra.mxu0 0.0
        %508 = vmatprep.subr.mxu0 0.0
        %509 = vmatpush1.msra.mxu0 0.0
        %510 = vmatprep.subr.mxu0 0.0
        %511 = vmatpush1.msra.mxu0 0.0
        %512 = vmatprep.subr.mxu0 0.0
        %513 = vmatpush1.msra.mxu0 0.0
        %514 = vmatprep.subr.mxu0 0.0
        %515 = vmatpush1.msra.mxu0 0.0
        %516 = vmatprep.subr.mxu0 0.0
        %517 = vmatpush1.msra.mxu0 0.0
        %518 = vmatprep.subr.mxu0 0.0
        %519 = vmatpush1.msra.mxu0 0.0
        %520 = vmatprep.subr.mxu0 0.0
        %521 = vmatpush1.msra.mxu0 0.0
        %522 = vmatprep.subr.mxu0 0.0
        %523 = vmatpush1.msra.mxu0 0.0
        %524 = vmatprep.mubr.f32.mxu0 0.0
        %525 = vmatmul.mubr.f32.gmra.mrb[0].mxu0 %v443
        %v526 = vpop.f32.mrb[0].mxu0
        %v527 = vadd.f32 0.0, %v526
        %v528 = vpop.f32.mrb[0].mxu0
        %v529 = vadd.f32 0.0, %v528
        %530 = vmatprep.mubr.f32.mxu0 0.0
        %531 = vmatmul.mubr.f32.gmra.mrb[0].mxu0 %v446
        %v532 = vpop.f32.mrb[0].mxu0
        %v533 = vadd.f32 0.0, %v532
        %v534 = vpop.f32.mrb[0].mxu0
        %v535 = vadd.f32 0.0, %v534
        %536 = vmatprep.mubr.f32.mxu0 0.0
        %537 = vmatmul.mubr.f32.gmra.mrb[0].mxu0 %v449
        %v538 = vpop.f32.mrb[0].mxu0
        %v539 = vadd.f32 0.0, %v538
        %v540 = vpop.f32.mrb[0].mxu0
        %v541 = vadd.f32 0.0, %v540
        %542 = vmatprep.mubr.f32.mxu0 0.0
        %543 = vmatmul.mubr.f32.gmra.mrb[0].mxu0 %v452
        %v544 = vpop.f32.mrb[0].mxu0
        %v545 = vadd.f32 0.0, %v544
        %v546 = vpop.f32.mrb[0].mxu0
        %v547 = vadd.f32 0.0, %v546
        %548 = vmatprep.mubr.f32.mxu0 0.0
        %549 = vmatmul.mubr.f32.gmra.mrb[0].mxu0 %v455
        %v550 = vpop.f32.mrb[0].mxu0
        %v551 = vadd.f32 0.0, %v550
        %v552 = vpop.f32.mrb[0].mxu0
        %v553 = vadd.f32 0.0, %v552
        %554 = vmatprep.mubr.f32.mxu0 0.0
        %555 = vmatmul.mubr.f32.gmra.mrb[0].mxu0 %v458
        %v556 = vpop.f32.mrb[0].mxu0
        %v557 = vadd.f32 0.0, %v556
        %v558 = vpop.f32.mrb[0].mxu0
        %v559 = vadd.f32 0.0, %v558
        %560 = vdwg.mxu0
        %561 = vmatprep.subr.mxu0 0.0
        %562 = vmatpush1.msra.mxu0 %v422
        %563 = vmatprep.subr.mxu0 0.0
        %564 = vmatpush1.msra.mxu0 %v425
        %565 = vmatprep.subr.mxu0 0.0
        %566 = vmatpush1.msra.mxu0 %v428
        %567 = vmatprep.subr.mxu0 0.0
        %568 = vmatpush1.msra.mxu0 %v431
        %569 = vmatprep.subr.mxu0 0.0
        %570 = vmatpush1.msra.mxu0 %v434
        %571 = vmatprep.subr.mxu0 0.0
        %572 = vmatpush1.msra.mxu0 %v437
        %573 = vmatprep.subr.mxu0 0.0
        %574 = vmatpush1.msra.mxu0 %v440
        %575 = vmatprep.subr.mxu0 0.0
        %576 = vmatpush1.msra.mxu0 0.0
        %577 = vmatprep.subr.mxu0 0.0
        %578 = vmatpush1.msra.mxu0 0.0
        %579 = vmatprep.subr.mxu0 0.0
        %580 = vmatpush1.msra.mxu0 0.0
        %581 = vmatprep.subr.mxu0 0.0
        %582 = vmatpush1.msra.mxu0 0.0
        %583 = vmatprep.subr.mxu0 0.0
        %584 = vmatpush1.msra.mxu0 0.0
        %585 = vmatprep.subr.mxu0 0.0
        %586 = vmatpush1.msra.mxu0 0.0
        %587 = vmatprep.subr.mxu0 0.0
        %588 = vmatpush1.msra.mxu0 0.0
        %589 = vmatprep.subr.mxu0 0.0
        %590 = vmatpush1.msra.mxu0 0.0
        %591 = vmatprep.subr.mxu0 0.0
        %592 = vmatpush1.msra.mxu0 0.0
        %593 = vmatprep.subr.mxu0 0.0
        %594 = vmatpush1.msra.mxu0 0.0
        %595 = vmatprep.subr.mxu0 0.0
        %596 = vmatpush1.msra.mxu0 0.0
        %597 = vmatprep.subr.mxu0 0.0
        %598 = vmatpush1.msra.mxu0 0.0
        %599 = vmatprep.subr.mxu0 0.0
        %600 = vmatpush1.msra.mxu0 0.0
        %601 = vmatprep.subr.mxu0 0.0
        %602 = vmatpush1.msra.mxu0 0.0
        %603 = vmatprep.subr.mxu0 0.0
        %604 = vmatpush1.msra.mxu0 0.0
        %605 = vmatprep.subr.mxu0 0.0
        %606 = vmatpush1.msra.mxu0 0.0
        %607 = vmatprep.subr.mxu0 0.0
        %608 = vmatpush1.msra.mxu0 0.0
        %609 = vmatprep.subr.mxu0 0.0
        %610 = vmatpush1.msra.mxu0 0.0
        %611 = vmatprep.subr.mxu0 0.0
        %612 = vmatpush1.msra.mxu0 0.0
        %613 = vmatprep.subr.mxu0 0.0
        %614 = vmatpush1.msra.mxu0 0.0
        %615 = vmatprep.subr.mxu0 0.0
        %616 = vmatpush1.msra.mxu0 0.0
        %617 = vmatprep.subr.mxu0 0.0
        %618 = vmatpush1.msra.mxu0 0.0
        %619 = vmatprep.subr.mxu0 0.0
        %620 = vmatpush1.msra.mxu0 0.0
        %621 = vmatprep.subr.mxu0 0.0
        %622 = vmatpush1.msra.mxu0 0.0
        %623 = vmatprep.subr.mxu0 0.0
        %624 = vmatpush1.msra.mxu0 0.0
        %625 = vmatprep.mubr.f32.mxu0 0.0
        %626 = vmatmul.mubr.f32.gmra.mrb[0].mxu0 %v443
        %v627 = vpop.f32.mrb[0].mxu0
        %v628 = vadd.f32 0.0, %v627
        %v629 = vpop.f32.mrb[0].mxu0
        %630 = vmatprep.mubr.f32.mxu0 0.0
        %631 = vmatmul.mubr.f32.gmra.mrb[0].mxu0 %v446
        %v632 = vpop.f32.mrb[0].mxu0
        %v633 = vadd.f32 0.0, %v632
        %v634 = vpop.f32.mrb[0].mxu0
        %635 = vmatprep.mubr.f32.mxu0 0.0
        %636 = vmatmul.mubr.f32.gmra.mrb[0].mxu0 %v449
        %v637 = vpop.f32.mrb[0].mxu0
        %v638 = vadd.f32 0.0, %v637
        %v639 = vpop.f32.mrb[0].mxu0
        %640 = vmatprep.mubr.f32.mxu0 0.0
        %641 = vmatmul.mubr.f32.gmra.mrb[0].mxu0 %v452
        %v642 = vpop.f32.mrb[0].mxu0
        %v643 = vadd.f32 0.0, %v642
        %v644 = vpop.f32.mrb[0].mxu0
        %645 = vmatprep.mubr.f32.mxu0 0.0
        %646 = vmatmul.mubr.f32.gmra.mrb[0].mxu0 %v455
        %v647 = vpop.f32.mrb[0].mxu0
        %v648 = vadd.f32 0.0, %v647
        %v649 = vpop.f32.mrb[0].mxu0
        %650 = vmatprep.mubr.f32.mxu0 0.0
        %651 = vmatmul.mubr.f32.gmra.mrb[0].mxu0 %v458
        %v652 = vpop.f32.mrb[0].mxu0
        %v653 = vadd.f32 0.0, %v652
        %v654 = vpop.f32.mrb[0].mxu0
        %655 = vdwg.mxu0
        %v657 = vsel %vm441, %v385, 0
        %v660 = vsel %vm441, %v386, 0
        %v663 = vsel %vm441, %v387, 0
        %v666 = vsel %vm441, %v388, 0
        %v669 = vsel %vm441, %v389, 0
        %v672 = vsel %vm441, %v390, 0
        %674 = vmatprep.subr.mxu0 %v392
        %675 = vmatpush1.msra.mxu0 %v391
        %676 = vmatprep.subr.mxu0 %v395
        %677 = vmatpush1.msra.mxu0 %v394
        %678 = vmatprep.subr.mxu0 %v398
        %679 = vmatpush1.msra.mxu0 %v397
        %680 = vmatprep.subr.mxu0 %v401
        %681 = vmatpush1.msra.mxu0 %v400
        %682 = vmatprep.subr.mxu0 %v404
        %683 = vmatpush1.msra.mxu0 %v403
        %684 = vmatprep.subr.mxu0 %v407
        %685 = vmatpush1.msra.mxu0 %v406
        %686 = vmatprep.subr.mxu0 %v410
        %687 = vmatpush1.msra.mxu0 %v409
        %688 = vmatprep.subr.mxu0 0.0
        %689 = vmatpush1.msra.mxu0 0.0
        %690 = vmatprep.subr.mxu0 0.0
        %691 = vmatpush1.msra.mxu0 0.0
        %692 = vmatprep.subr.mxu0 0.0
        %693 = vmatpush1.msra.mxu0 0.0
        %694 = vmatprep.subr.mxu0 0.0
        %695 = vmatpush1.msra.mxu0 0.0
        %696 = vmatprep.subr.mxu0 0.0
        %697 = vmatpush1.msra.mxu0 0.0
        %698 = vmatprep.subr.mxu0 0.0
        %699 = vmatpush1.msra.mxu0 0.0
        %700 = vmatprep.subr.mxu0 0.0
        %701 = vmatpush1.msra.mxu0 0.0
        %702 = vmatprep.subr.mxu0 0.0
        %703 = vmatpush1.msra.mxu0 0.0
        %704 = vmatprep.subr.mxu0 0.0
        %705 = vmatpush1.msra.mxu0 0.0
        %706 = vmatprep.subr.mxu0 0.0
        %707 = vmatpush1.msra.mxu0 0.0
        %708 = vmatprep.subr.mxu0 0.0
        %709 = vmatpush1.msra.mxu0 0.0
        %710 = vmatprep.subr.mxu0 0.0
        %711 = vmatpush1.msra.mxu0 0.0
        %712 = vmatprep.subr.mxu0 0.0
        %713 = vmatpush1.msra.mxu0 0.0
        %714 = vmatprep.subr.mxu0 0.0
        %715 = vmatpush1.msra.mxu0 0.0
        %716 = vmatprep.subr.mxu0 0.0
        %717 = vmatpush1.msra.mxu0 0.0
        %718 = vmatprep.subr.mxu0 0.0
        %719 = vmatpush1.msra.mxu0 0.0
        %720 = vmatprep.subr.mxu0 0.0
        %721 = vmatpush1.msra.mxu0 0.0
        %722 = vmatprep.subr.mxu0 0.0
        %723 = vmatpush1.msra.mxu0 0.0
        %724 = vmatprep.subr.mxu0 0.0
        %725 = vmatpush1.msra.mxu0 0.0
        %726 = vmatprep.subr.mxu0 0.0
        %727 = vmatpush1.msra.mxu0 0.0
        %728 = vmatprep.subr.mxu0 0.0
        %729 = vmatpush1.msra.mxu0 0.0
        %730 = vmatprep.subr.mxu0 0.0
        %731 = vmatpush1.msra.mxu0 0.0
        %732 = vmatprep.subr.mxu0 0.0
        %733 = vmatpush1.msra.mxu0 0.0
        %734 = vmatprep.subr.mxu0 0.0
        %735 = vmatpush1.msra.mxu0 0.0
        %736 = vmatprep.subr.mxu0 0.0
        %737 = vmatpush1.msra.mxu0 0.0
        %738 = vmatprep.mubr.f32.mxu0 0.0
        %739 = vmatmul.mubr.f32.gmra.mrb[0].mxu0 %v657
        %v740 = vpop.f32.mrb[0].mxu0
        %v741 = vadd.f32 %v527, %v740
        %v742 = vpop.f32.mrb[0].mxu0
        %v743 = vadd.f32 %v529, %v742
        %744 = vmatprep.mubr.f32.mxu0 0.0
        %745 = vmatmul.mubr.f32.gmra.mrb[0].mxu0 %v660
        %v746 = vpop.f32.mrb[0].mxu0
        %v747 = vadd.f32 %v533, %v746
        %v748 = vpop.f32.mrb[0].mxu0
        %v749 = vadd.f32 %v535, %v748
        %750 = vmatprep.mubr.f32.mxu0 0.0
        %751 = vmatmul.mubr.f32.gmra.mrb[0].mxu0 %v663
        %v752 = vpop.f32.mrb[0].mxu0
        %v753 = vadd.f32 %v539, %v752
        %v754 = vpop.f32.mrb[0].mxu0
        %v755 = vadd.f32 %v541, %v754
        %756 = vmatprep.mubr.f32.mxu0 0.0
        %757 = vmatmul.mubr.f32.gmra.mrb[0].mxu0 %v666
        %v758 = vpop.f32.mrb[0].mxu0
        %v759 = vadd.f32 %v545, %v758
        %v760 = vpop.f32.mrb[0].mxu0
        %v761 = vadd.f32 %v547, %v760
        %762 = vmatprep.mubr.f32.mxu0 0.0
        %763 = vmatmul.mubr.f32.gmra.mrb[0].mxu0 %v669
        %v764 = vpop.f32.mrb[0].mxu0
        %v765 = vadd.f32 %v551, %v764
        %v766 = vpop.f32.mrb[0].mxu0
        %v767 = vadd.f32 %v553, %v766
        %768 = vmatprep.mubr.f32.mxu0 0.0
        %769 = vmatmul.mubr.f32.gmra.mrb[0].mxu0 %v672
        %v770 = vpop.f32.mrb[0].mxu0
        %v771 = vadd.f32 %v557, %v770
        %v772 = vpop.f32.mrb[0].mxu0
        %v773 = vadd.f32 %v559, %v772
        %774 = vdwg.mxu0
        %775 = vmatprep.subr.mxu0 0.0
        %776 = vmatpush1.msra.mxu0 %v393
        %777 = vmatprep.subr.mxu0 0.0
        %778 = vmatpush1.msra.mxu0 %v396
        %779 = vmatprep.subr.mxu0 0.0
        %780 = vmatpush1.msra.mxu0 %v399
        %781 = vmatprep.subr.mxu0 0.0
        %782 = vmatpush1.msra.mxu0 %v402
        %783 = vmatprep.subr.mxu0 0.0
        %784 = vmatpush1.msra.mxu0 %v405
        %785 = vmatprep.subr.mxu0 0.0
        %786 = vmatpush1.msra.mxu0 %v408
        %787 = vmatprep.subr.mxu0 0.0
        %788 = vmatpush1.msra.mxu0 %v411
        %789 = vmatprep.subr.mxu0 0.0
        %790 = vmatpush1.msra.mxu0 0.0
        %791 = vmatprep.subr.mxu0 0.0
        %792 = vmatpush1.msra.mxu0 0.0
        %793 = vmatprep.subr.mxu0 0.0
        %794 = vmatpush1.msra.mxu0 0.0
        %795 = vmatprep.subr.mxu0 0.0
        %796 = vmatpush1.msra.mxu0 0.0
        %797 = vmatprep.subr.mxu0 0.0
        %798 = vmatpush1.msra.mxu0 0.0
        %799 = vmatprep.subr.mxu0 0.0
        %800 = vmatpush1.msra.mxu0 0.0
        %801 = vmatprep.subr.mxu0 0.0
        %802 = vmatpush1.msra.mxu0 0.0
        %803 = vmatprep.subr.mxu0 0.0
        %804 = vmatpush1.msra.mxu0 0.0
        %805 = vmatprep.subr.mxu0 0.0
        %806 = vmatpush1.msra.mxu0 0.0
        %807 = vmatprep.subr.mxu0 0.0
        %808 = vmatpush1.msra.mxu0 0.0
        %809 = vmatprep.subr.mxu0 0.0
        %810 = vmatpush1.msra.mxu0 0.0
        %811 = vmatprep.subr.mxu0 0.0
        %812 = vmatpush1.msra.mxu0 0.0
        %813 = vmatprep.subr.mxu0 0.0
        %814 = vmatpush1.msra.mxu0 0.0
        %815 = vmatprep.subr.mxu0 0.0
        %816 = vmatpush1.msra.mxu0 0.0
        %817 = vmatprep.subr.mxu0 0.0
        %818 = vmatpush1.msra.mxu0 0.0
        %819 = vmatprep.subr.mxu0 0.0
        %820 = vmatpush1.msra.mxu0 0.0
        %821 = vmatprep.subr.mxu0 0.0
        %822 = vmatpush1.msra.mxu0 0.0
        %823 = vmatprep.subr.mxu0 0.0
        %824 = vmatpush1.msra.mxu0 0.0
        %825 = vmatprep.subr.mxu0 0.0
        %826 = vmatpush1.msra.mxu0 0.0
        %827 = vmatprep.subr.mxu0 0.0
        %828 = vmatpush1.msra.mxu0 0.0
        %829 = vmatprep.subr.mxu0 0.0
        %830 = vmatpush1.msra.mxu0 0.0
        %831 = vmatprep.subr.mxu0 0.0
        %832 = vmatpush1.msra.mxu0 0.0
        %833 = vmatprep.subr.mxu0 0.0
        %834 = vmatpush1.msra.mxu0 0.0
        %835 = vmatprep.subr.mxu0 0.0
        %836 = vmatpush1.msra.mxu0 0.0
        %837 = vmatprep.subr.mxu0 0.0
        %838 = vmatpush1.msra.mxu0 0.0
        %839 = vmatprep.mubr.f32.mxu0 0.0
        %840 = vmatmul.mubr.f32.gmra.mrb[0].mxu0 %v657
        %v841 = vpop.f32.mrb[0].mxu0
        %v842 = vadd.f32 %v628, %v841
        %v843 = vpop.f32.mrb[0].mxu0
        %844 = vmatprep.mubr.f32.mxu0 0.0
        %845 = vmatmul.mubr.f32.gmra.mrb[0].mxu0 %v660
        %v846 = vpop.f32.mrb[0].mxu0
        %v847 = vadd.f32 %v633, %v846
        %v848 = vpop.f32.mrb[0].mxu0
        %849 = vmatprep.mubr.f32.mxu0 0.0
        %850 = vmatmul.mubr.f32.gmra.mrb[0].mxu0 %v663
        %v851 = vpop.f32.mrb[0].mxu0
        %v852 = vadd.f32 %v638, %v851
        %v853 = vpop.f32.mrb[0].mxu0
        %854 = vmatprep.mubr.f32.mxu0 0.0
        %855 = vmatmul.mubr.f32.gmra.mrb[0].mxu0 %v666
        %v856 = vpop.f32.mrb[0].mxu0
        %v857 = vadd.f32 %v643, %v856
        %v858 = vpop.f32.mrb[0].mxu0
        %859 = vmatprep.mubr.f32.mxu0 0.0
        %860 = vmatmul.mubr.f32.gmra.mrb[0].mxu0 %v669
        %v861 = vpop.f32.mrb[0].mxu0
        %v862 = vadd.f32 %v648, %v861
        %v863 = vpop.f32.mrb[0].mxu0
        %864 = vmatprep.mubr.f32.mxu0 0.0
        %865 = vmatmul.mubr.f32.gmra.mrb[0].mxu0 %v672
        %v866 = vpop.f32.mrb[0].mxu0
        %v867 = vadd.f32 %v653, %v866
        %v868 = vpop.f32.mrb[0].mxu0
        %869 = vdwg.mxu0
        %s870 = scalar_lea.vmem %s384, 112
        %v871 = vld [vmem:[%s870] sm:$0xff]
        %v872 = vld [vmem:[%s870 + $0x8] sm:$0xff]
        %v873 = vld [vmem:[%s870 + $0x10] sm:$0xff]
        %v874 = vld [vmem:[%s870 + $0x18] sm:$0xff]
        %v875 = vld [vmem:[%s870 + $0x20] sm:$0xff]
        %v876 = vld [vmem:[%s870 + $0x28] sm:$0xff]
        %s877 = scalar_lea.vmem %s1, 336
        %v878 = vld [vmem:[%s877] sm:$0xff]
        %v879 = vld [vmem:[%s877 + $0x8] sm:$0xff]
        %v880 = vld [vmem:[%s877 + $0x10] sm:$0xff]
        %v881 = vld [vmem:[%s877 + $0x18] sm:$0xff]
        %v882 = vld [vmem:[%s877 + $0x20] sm:$0xff]
        %v883 = vld [vmem:[%s877 + $0x28] sm:$0xff]
        %v884 = vld [vmem:[%s877 + $0x30] sm:$0xff]
        %v885 = vld [vmem:[%s877 + $0x38] sm:$0xff]
        %v886 = vld [vmem:[%s877 + $0x40] sm:$0xff]
        %v887 = vld [vmem:[%s877 + $0x48] sm:$0xff]
        %v888 = vld [vmem:[%s877 + $0x50] sm:$0xff]
        %v889 = vld [vmem:[%s877 + $0x58] sm:$0xff]
        %v890 = vld [vmem:[%s877 + $0x60] sm:$0xff]
        %v891 = vld [vmem:[%s877 + $0x68] sm:$0xff]
        %v892 = vld [vmem:[%s877 + $0x70] sm:$0xff]
        %v893 = vld [vmem:[%s877 + $0x78] sm:$0xff]
        %v894 = vld [vmem:[%s877 + $0x80] sm:$0xff]
        %v895 = vld [vmem:[%s877 + $0x88] sm:$0xff]
        %v896 = vld [vmem:[%s877 + $0x90] sm:$0xff]
        %v897 = vld [vmem:[%s877 + $0x98] sm:$0xff]
        %v898 = vld [vmem:[%s877 + $0xa0] sm:$0xff]
        %v900 = vsel %vm441, %v871, 0
        %v903 = vsel %vm441, %v872, 0
        %v906 = vsel %vm441, %v873, 0
        %v909 = vsel %vm441, %v874, 0
        %v912 = vsel %vm441, %v875, 0
        %v915 = vsel %vm441, %v876, 0
        %917 = vmatprep.subr.mxu0 %v879
        %918 = vmatpush1.msra.mxu0 %v878
        %919 = vmatprep.subr.mxu0 %v882
        %920 = vmatpush1.msra.mxu0 %v881
        %921 = vmatprep.subr.mxu0 %v885
        %922 = vmatpush1.msra.mxu0 %v884
        %923 = vmatprep.subr.mxu0 %v888
        %924 = vmatpush1.msra.mxu0 %v887
        %925 = vmatprep.subr.mxu0 %v891
        %926 = vmatpush1.msra.mxu0 %v890
        %927 = vmatprep.subr.mxu0 %v894
        %928 = vmatpush1.msra.mxu0 %v893
        %929 = vmatprep.subr.mxu0 %v897
        %930 = vmatpush1.msra.mxu0 %v896
        %931 = vmatprep.subr.mxu0 0.0
        %932 = vmatpush1.msra.mxu0 0.0
        %933 = vmatprep.subr.mxu0 0.0
        %934 = vmatpush1.msra.mxu0 0.0
        %935 = vmatprep.subr.mxu0 0.0
        %936 = vmatpush1.msra.mxu0 0.0
        %937 = vmatprep.subr.mxu0 0.0
        %938 = vmatpush1.msra.mxu0 0.0
        %939 = vmatprep.subr.mxu0 0.0
        %940 = vmatpush1.msra.mxu0 0.0
        %941 = vmatprep.subr.mxu0 0.0
        %942 = vmatpush1.msra.mxu0 0.0
        %943 = vmatprep.subr.mxu0 0.0
        %944 = vmatpush1.msra.mxu0 0.0
        %945 = vmatprep.subr.mxu0 0.0
        %946 = vmatpush1.msra.mxu0 0.0
        %947 = vmatprep.subr.mxu0 0.0
        %948 = vmatpush1.msra.mxu0 0.0
        %949 = vmatprep.subr.mxu0 0.0
        %950 = vmatpush1.msra.mxu0 0.0
        %951 = vmatprep.subr.mxu0 0.0
        %952 = vmatpush1.msra.mxu0 0.0
        %953 = vmatprep.subr.mxu0 0.0
        %954 = vmatpush1.msra.mxu0 0.0
        %955 = vmatprep.subr.mxu0 0.0
        %956 = vmatpush1.msra.mxu0 0.0
        %957 = vmatprep.subr.mxu0 0.0
        %958 = vmatpush1.msra.mxu0 0.0
        %959 = vmatprep.subr.mxu0 0.0
        %960 = vmatpush1.msra.mxu0 0.0
        %961 = vmatprep.subr.mxu0 0.0
        %962 = vmatpush1.msra.mxu0 0.0
        %963 = vmatprep.subr.mxu0 0.0
        %964 = vmatpush1.msra.mxu0 0.0
        %965 = vmatprep.subr.mxu0 0.0
        %966 = vmatpush1.msra.mxu0 0.0
        %967 = vmatprep.subr.mxu0 0.0
        %968 = vmatpush1.msra.mxu0 0.0
        %969 = vmatprep.subr.mxu0 0.0
        %970 = vmatpush1.msra.mxu0 0.0
        %971 = vmatprep.subr.mxu0 0.0
        %972 = vmatpush1.msra.mxu0 0.0
        %973 = vmatprep.subr.mxu0 0.0
        %974 = vmatpush1.msra.mxu0 0.0
        %975 = vmatprep.subr.mxu0 0.0
        %976 = vmatpush1.msra.mxu0 0.0
        %977 = vmatprep.subr.mxu0 0.0
        %978 = vmatpush1.msra.mxu0 0.0
        %979 = vmatprep.subr.mxu0 0.0
        %980 = vmatpush1.msra.mxu0 0.0
        %981 = vmatprep.mubr.f32.mxu0 0.0
        %982 = vmatmul.mubr.f32.gmra.mrb[0].mxu0 %v900
        %v983 = vpop.f32.mrb[0].mxu0
        %v984 = vadd.f32 0.0, %v983
        %v985 = vpop.f32.mrb[0].mxu0
        %v986 = vadd.f32 0.0, %v985
        %987 = vmatprep.mubr.f32.mxu0 0.0
        %988 = vmatmul.mubr.f32.gmra.mrb[0].mxu0 %v903
        %v989 = vpop.f32.mrb[0].mxu0
        %v990 = vadd.f32 0.0, %v989
        %v991 = vpop.f32.mrb[0].mxu0
        %v992 = vadd.f32 0.0, %v991
        %993 = vmatprep.mubr.f32.mxu0 0.0
        %994 = vmatmul.mubr.f32.gmra.mrb[0].mxu0 %v906
        %v995 = vpop.f32.mrb[0].mxu0
        %v996 = vadd.f32 0.0, %v995
        %v997 = vpop.f32.mrb[0].mxu0
        %v998 = vadd.f32 0.0, %v997
        %999 = vmatprep.mubr.f32.mxu0 0.0
        %1000 = vmatmul.mubr.f32.gmra.mrb[0].mxu0 %v909
        %v1001 = vpop.f32.mrb[0].mxu0
        %v1002 = vadd.f32 0.0, %v1001
        %v1003 = vpop.f32.mrb[0].mxu0
        %v1004 = vadd.f32 0.0, %v1003
        %1005 = vmatprep.mubr.f32.mxu0 0.0
        %1006 = vmatmul.mubr.f32.gmra.mrb[0].mxu0 %v912
        %v1007 = vpop.f32.mrb[0].mxu0
        %v1008 = vadd.f32 0.0, %v1007
        %v1009 = vpop.f32.mrb[0].mxu0
        %v1010 = vadd.f32 0.0, %v1009
        %1011 = vmatprep.mubr.f32.mxu0 0.0
        %1012 = vmatmul.mubr.f32.gmra.mrb[0].mxu0 %v915
        %v1013 = vpop.f32.mrb[0].mxu0
        %v1014 = vadd.f32 0.0, %v1013
        %v1015 = vpop.f32.mrb[0].mxu0
        %v1016 = vadd.f32 0.0, %v1015
        %1017 = vdwg.mxu0
        %1018 = vmatprep.subr.mxu0 0.0
        %1019 = vmatpush1.msra.mxu0 %v880
        %1020 = vmatprep.subr.mxu0 0.0
        %1021 = vmatpush1.msra.mxu0 %v883
        %1022 = vmatprep.subr.mxu0 0.0
        %1023 = vmatpush1.msra.mxu0 %v886
        %1024 = vmatprep.subr.mxu0 0.0
        %1025 = vmatpush1.msra.mxu0 %v889
        %1026 = vmatprep.subr.mxu0 0.0
        %1027 = vmatpush1.msra.mxu0 %v892
        %1028 = vmatprep.subr.mxu0 0.0
        %1029 = vmatpush1.msra.mxu0 %v895
        %1030 = vmatprep.subr.mxu0 0.0
        %1031 = vmatpush1.msra.mxu0 %v898
        %1032 = vmatprep.subr.mxu0 0.0
        %1033 = vmatpush1.msra.mxu0 0.0
        %1034 = vmatprep.subr.mxu0 0.0
        %1035 = vmatpush1.msra.mxu0 0.0
        %1036 = vmatprep.subr.mxu0 0.0
        %1037 = vmatpush1.msra.mxu0 0.0
        %1038 = vmatprep.subr.mxu0 0.0
        %1039 = vmatpush1.msra.mxu0 0.0
        %1040 = vmatprep.subr.mxu0 0.0
        %1041 = vmatpush1.msra.mxu0 0.0
        %1042 = vmatprep.subr.mxu0 0.0
        %1043 = vmatpush1.msra.mxu0 0.0
        %1044 = vmatprep.subr.mxu0 0.0
        %1045 = vmatpush1.msra.mxu0 0.0
        %1046 = vmatprep.subr.mxu0 0.0
        %1047 = vmatpush1.msra.mxu0 0.0
        %1048 = vmatprep.subr.mxu0 0.0
        %1049 = vmatpush1.msra.mxu0 0.0
        %1050 = vmatprep.subr.mxu0 0.0
        %1051 = vmatpush1.msra.mxu0 0.0
        %1052 = vmatprep.subr.mxu0 0.0
        %1053 = vmatpush1.msra.mxu0 0.0
        %1054 = vmatprep.subr.mxu0 0.0
        %1055 = vmatpush1.msra.mxu0 0.0
        %1056 = vmatprep.subr.mxu0 0.0
        %1057 = vmatpush1.msra.mxu0 0.0
        %1058 = vmatprep.subr.mxu0 0.0
        %1059 = vmatpush1.msra.mxu0 0.0
        %1060 = vmatprep.subr.mxu0 0.0
        %1061 = vmatpush1.msra.mxu0 0.0
        %1062 = vmatprep.subr.mxu0 0.0
        %1063 = vmatpush1.msra.mxu0 0.0
        %1064 = vmatprep.subr.mxu0 0.0
        %1065 = vmatpush1.msra.mxu0 0.0
        %1066 = vmatprep.subr.mxu0 0.0
        %1067 = vmatpush1.msra.mxu0 0.0
        %1068 = vmatprep.subr.mxu0 0.0
        %1069 = vmatpush1.msra.mxu0 0.0
        %1070 = vmatprep.subr.mxu0 0.0
        %1071 = vmatpush1.msra.mxu0 0.0
        %1072 = vmatprep.subr.mxu0 0.0
        %1073 = vmatpush1.msra.mxu0 0.0
        %1074 = vmatprep.subr.mxu0 0.0
        %1075 = vmatpush1.msra.mxu0 0.0
        %1076 = vmatprep.subr.mxu0 0.0
        %1077 = vmatpush1.msra.mxu0 0.0
        %1078 = vmatprep.subr.mxu0 0.0
        %1079 = vmatpush1.msra.mxu0 0.0
        %1080 = vmatprep.subr.mxu0 0.0
        %1081 = vmatpush1.msra.mxu0 0.0
        %1082 = vmatprep.mubr.f32.mxu0 0.0
        %1083 = vmatmul.mubr.f32.gmra.mrb[0].mxu0 %v900
        %v1084 = vpop.f32.mrb[0].mxu0
        %v1085 = vadd.f32 0.0, %v1084
        %v1086 = vpop.f32.mrb[0].mxu0
        %1087 = vmatprep.mubr.f32.mxu0 0.0
        %1088 = vmatmul.mubr.f32.gmra.mrb[0].mxu0 %v903
        %v1089 = vpop.f32.mrb[0].mxu0
        %v1090 = vadd.f32 0.0, %v1089
        %v1091 = vpop.f32.mrb[0].mxu0
        %1092 = vmatprep.mubr.f32.mxu0 0.0
        %1093 = vmatmul.mubr.f32.gmra.mrb[0].mxu0 %v906
        %v1094 = vpop.f32.mrb[0].mxu0
        %v1095 = vadd.f32 0.0, %v1094
        %v1096 = vpop.f32.mrb[0].mxu0
        %1097 = vmatprep.mubr.f32.mxu0 0.0
        %1098 = vmatmul.mubr.f32.gmra.mrb[0].mxu0 %v909
        %v1099 = vpop.f32.mrb[0].mxu0
        %v1100 = vadd.f32 0.0, %v1099
        %v1101 = vpop.f32.mrb[0].mxu0
        %1102 = vmatprep.mubr.f32.mxu0 0.0
        %1103 = vmatmul.mubr.f32.gmra.mrb[0].mxu0 %v912
        %v1104 = vpop.f32.mrb[0].mxu0
        %v1105 = vadd.f32 0.0, %v1104
        %v1106 = vpop.f32.mrb[0].mxu0
        %1107 = vmatprep.mubr.f32.mxu0 0.0
        %1108 = vmatmul.mubr.f32.gmra.mrb[0].mxu0 %v915
        %v1109 = vpop.f32.mrb[0].mxu0
        %v1110 = vadd.f32 0.0, %v1109
        %v1111 = vpop.f32.mrb[0].mxu0
        %1112 = vdwg.mxu0
        %v1113 = vadd.f32 %v741, %v984
        %v1114 = vadd.f32 %v743, %v986
        %v1115 = vadd.f32 %v842, %v1085
        %v1116 = vadd.f32 %v747, %v990
        %v1117 = vadd.f32 %v749, %v992
        %v1118 = vadd.f32 %v847, %v1090
        %v1119 = vadd.f32 %v753, %v996
        %v1120 = vadd.f32 %v755, %v998
        %v1121 = vadd.f32 %v852, %v1095
        %v1122 = vadd.f32 %v759, %v1002
        %v1123 = vadd.f32 %v761, %v1004
        %v1124 = vadd.f32 %v857, %v1100
        %v1125 = vadd.f32 %v765, %v1008
        %v1126 = vadd.f32 %v767, %v1010
        %v1127 = vadd.f32 %v862, %v1105
        %v1128 = vadd.f32 %v771, %v1014
        %v1129 = vadd.f32 %v773, %v1016
        %v1130 = vadd.f32 %v867, %v1110
        %s1131 = scalar_lea.vmem %s384, 168
        %v1132 = vld [vmem:[%s1131] sm:$0xff]
        %v1133 = vld [vmem:[%s1131 + $0x8] sm:$0xff]
        %v1134 = vld [vmem:[%s1131 + $0x10] sm:$0xff]
        %v1135 = vld [vmem:[%s1131 + $0x18] sm:$0xff]
        %v1136 = vld [vmem:[%s1131 + $0x20] sm:$0xff]
        %v1137 = vld [vmem:[%s1131 + $0x28] sm:$0xff]
        %s1138 = scalar_lea.vmem %s1, 504
        %v1139 = vld [vmem:[%s1138] sm:$0xff]
        %v1140 = vld [vmem:[%s1138 + $0x8] sm:$0xff]
        %v1141 = vld [vmem:[%s1138 + $0x10] sm:$0xff]
        %v1142 = vld [vmem:[%s1138 + $0x18] sm:$0xff]
        %v1143 = vld [vmem:[%s1138 + $0x20] sm:$0xff]
        %v1144 = vld [vmem:[%s1138 + $0x28] sm:$0xff]
        %v1145 = vld [vmem:[%s1138 + $0x30] sm:$0xff]
        %v1146 = vld [vmem:[%s1138 + $0x38] sm:$0xff]
        %v1147 = vld [vmem:[%s1138 + $0x40] sm:$0xff]
        %v1148 = vld [vmem:[%s1138 + $0x48] sm:$0xff]
        %v1149 = vld [vmem:[%s1138 + $0x50] sm:$0xff]
        %v1150 = vld [vmem:[%s1138 + $0x58] sm:$0xff]
        %v1151 = vld [vmem:[%s1138 + $0x60] sm:$0xff]
        %v1152 = vld [vmem:[%s1138 + $0x68] sm:$0xff]
        %v1153 = vld [vmem:[%s1138 + $0x70] sm:$0xff]
        %v1154 = vld [vmem:[%s1138 + $0x78] sm:$0xff]
        %v1155 = vld [vmem:[%s1138 + $0x80] sm:$0xff]
        %v1156 = vld [vmem:[%s1138 + $0x88] sm:$0xff]
        %v1157 = vld [vmem:[%s1138 + $0x90] sm:$0xff]
        %v1158 = vld [vmem:[%s1138 + $0x98] sm:$0xff]
        %v1159 = vld [vmem:[%s1138 + $0xa0] sm:$0xff]
        %v1161 = vsel %vm441, %v1132, 0
        %v1164 = vsel %vm441, %v1133, 0
        %v1167 = vsel %vm441, %v1134, 0
        %v1170 = vsel %vm441, %v1135, 0
        %v1173 = vsel %vm441, %v1136, 0
        %v1176 = vsel %vm441, %v1137, 0
        %1178 = vmatprep.subr.mxu0 %v1140
        %1179 = vmatpush1.msra.mxu0 %v1139
        %1180 = vmatprep.subr.mxu0 %v1143
        %1181 = vmatpush1.msra.mxu0 %v1142
        %1182 = vmatprep.subr.mxu0 %v1146
        %1183 = vmatpush1.msra.mxu0 %v1145
        %1184 = vmatprep.subr.mxu0 %v1149
        %1185 = vmatpush1.msra.mxu0 %v1148
        %1186 = vmatprep.subr.mxu0 %v1152
        %1187 = vmatpush1.msra.mxu0 %v1151
        %1188 = vmatprep.subr.mxu0 %v1155
        %1189 = vmatpush1.msra.mxu0 %v1154
        %1190 = vmatprep.subr.mxu0 %v1158
        %1191 = vmatpush1.msra.mxu0 %v1157
        %1192 = vmatprep.subr.mxu0 0.0
        %1193 = vmatpush1.msra.mxu0 0.0
        %1194 = vmatprep.subr.mxu0 0.0
        %1195 = vmatpush1.msra.mxu0 0.0
        %1196 = vmatprep.subr.mxu0 0.0
        %1197 = vmatpush1.msra.mxu0 0.0
        %1198 = vmatprep.subr.mxu0 0.0
        %1199 = vmatpush1.msra.mxu0 0.0
        %1200 = vmatprep.subr.mxu0 0.0
        %1201 = vmatpush1.msra.mxu0 0.0
        %1202 = vmatprep.subr.mxu0 0.0
        %1203 = vmatpush1.msra.mxu0 0.0
        %1204 = vmatprep.subr.mxu0 0.0
        %1205 = vmatpush1.msra.mxu0 0.0
        %1206 = vmatprep.subr.mxu0 0.0
        %1207 = vmatpush1.msra.mxu0 0.0
        %1208 = vmatprep.subr.mxu0 0.0
        %1209 = vmatpush1.msra.mxu0 0.0
        %1210 = vmatprep.subr.mxu0 0.0
        %1211 = vmatpush1.msra.mxu0 0.0
        %1212 = vmatprep.subr.mxu0 0.0
        %1213 = vmatpush1.msra.mxu0 0.0
        %1214 = vmatprep.subr.mxu0 0.0
        %1215 = vmatpush1.msra.mxu0 0.0
        %1216 = vmatprep.subr.mxu0 0.0
        %1217 = vmatpush1.msra.mxu0 0.0
        %1218 = vmatprep.subr.mxu0 0.0
        %1219 = vmatpush1.msra.mxu0 0.0
        %1220 = vmatprep.subr.mxu0 0.0
        %1221 = vmatpush1.msra.mxu0 0.0
        %1222 = vmatprep.subr.mxu0 0.0
        %1223 = vmatpush1.msra.mxu0 0.0
        %1224 = vmatprep.subr.mxu0 0.0
        %1225 = vmatpush1.msra.mxu0 0.0
        %1226 = vmatprep.subr.mxu0 0.0
        %1227 = vmatpush1.msra.mxu0 0.0
        %1228 = vmatprep.subr.mxu0 0.0
        %1229 = vmatpush1.msra.mxu0 0.0
        %1230 = vmatprep.subr.mxu0 0.0
        %1231 = vmatpush1.msra.mxu0 0.0
        %1232 = vmatprep.subr.mxu0 0.0
        %1233 = vmatpush1.msra.mxu0 0.0
        %1234 = vmatprep.subr.mxu0 0.0
        %1235 = vmatpush1.msra.mxu0 0.0
        %1236 = vmatprep.subr.mxu0 0.0
        %1237 = vmatpush1.msra.mxu0 0.0
        %1238 = vmatprep.subr.mxu0 0.0
        %1239 = vmatpush1.msra.mxu0 0.0
        %1240 = vmatprep.subr.mxu0 0.0
        %1241 = vmatpush1.msra.mxu0 0.0
        %1242 = vmatprep.mubr.f32.mxu0 0.0
        %1243 = vmatmul.mubr.f32.gmra.mrb[0].mxu0 %v1161
        %v1244 = vpop.f32.mrb[0].mxu0
        %v1245 = vadd.f32 0.0, %v1244
        %v1246 = vpop.f32.mrb[0].mxu0
        %v1247 = vadd.f32 0.0, %v1246
        %1248 = vmatprep.mubr.f32.mxu0 0.0
        %1249 = vmatmul.mubr.f32.gmra.mrb[0].mxu0 %v1164
        %v1250 = vpop.f32.mrb[0].mxu0
        %v1251 = vadd.f32 0.0, %v1250
        %v1252 = vpop.f32.mrb[0].mxu0
        %v1253 = vadd.f32 0.0, %v1252
        %1254 = vmatprep.mubr.f32.mxu0 0.0
        %1255 = vmatmul.mubr.f32.gmra.mrb[0].mxu0 %v1167
        %v1256 = vpop.f32.mrb[0].mxu0
        %v1257 = vadd.f32 0.0, %v1256
        %v1258 = vpop.f32.mrb[0].mxu0
        %v1259 = vadd.f32 0.0, %v1258
        %1260 = vmatprep.mubr.f32.mxu0 0.0
        %1261 = vmatmul.mubr.f32.gmra.mrb[0].mxu0 %v1170
        %v1262 = vpop.f32.mrb[0].mxu0
        %v1263 = vadd.f32 0.0, %v1262
        %v1264 = vpop.f32.mrb[0].mxu0
        %v1265 = vadd.f32 0.0, %v1264
        %1266 = vmatprep.mubr.f32.mxu0 0.0
        %1267 = vmatmul.mubr.f32.gmra.mrb[0].mxu0 %v1173
        %v1268 = vpop.f32.mrb[0].mxu0
        %v1269 = vadd.f32 0.0, %v1268
        %v1270 = vpop.f32.mrb[0].mxu0
        %v1271 = vadd.f32 0.0, %v1270
        %1272 = vmatprep.mubr.f32.mxu0 0.0
        %1273 = vmatmul.mubr.f32.gmra.mrb[0].mxu0 %v1176
        %v1274 = vpop.f32.mrb[0].mxu0
        %v1275 = vadd.f32 0.0, %v1274
        %v1276 = vpop.f32.mrb[0].mxu0
        %v1277 = vadd.f32 0.0, %v1276
        %1278 = vdwg.mxu0
        %1279 = vmatprep.subr.mxu0 0.0
        %1280 = vmatpush1.msra.mxu0 %v1141
        %1281 = vmatprep.subr.mxu0 0.0
        %1282 = vmatpush1.msra.mxu0 %v1144
        %1283 = vmatprep.subr.mxu0 0.0
        %1284 = vmatpush1.msra.mxu0 %v1147
        %1285 = vmatprep.subr.mxu0 0.0
        %1286 = vmatpush1.msra.mxu0 %v1150
        %1287 = vmatprep.subr.mxu0 0.0
        %1288 = vmatpush1.msra.mxu0 %v1153
        %1289 = vmatprep.subr.mxu0 0.0
        %1290 = vmatpush1.msra.mxu0 %v1156
        %1291 = vmatprep.subr.mxu0 0.0
        %1292 = vmatpush1.msra.mxu0 %v1159
        %1293 = vmatprep.subr.mxu0 0.0
        %1294 = vmatpush1.msra.mxu0 0.0
        %1295 = vmatprep.subr.mxu0 0.0
        %1296 = vmatpush1.msra.mxu0 0.0
        %1297 = vmatprep.subr.mxu0 0.0
        %1298 = vmatpush1.msra.mxu0 0.0
        %1299 = vmatprep.subr.mxu0 0.0
        %1300 = vmatpush1.msra.mxu0 0.0
        %1301 = vmatprep.subr.mxu0 0.0
        %1302 = vmatpush1.msra.mxu0 0.0
        %1303 = vmatprep.subr.mxu0 0.0
        %1304 = vmatpush1.msra.mxu0 0.0
        %1305 = vmatprep.subr.mxu0 0.0
        %1306 = vmatpush1.msra.mxu0 0.0
        %1307 = vmatprep.subr.mxu0 0.0
        %1308 = vmatpush1.msra.mxu0 0.0
        %1309 = vmatprep.subr.mxu0 0.0
        %1310 = vmatpush1.msra.mxu0 0.0
        %1311 = vmatprep.subr.mxu0 0.0
        %1312 = vmatpush1.msra.mxu0 0.0
        %1313 = vmatprep.subr.mxu0 0.0
        %1314 = vmatpush1.msra.mxu0 0.0
        %1315 = vmatprep.subr.mxu0 0.0
        %1316 = vmatpush1.msra.mxu0 0.0
        %1317 = vmatprep.subr.mxu0 0.0
        %1318 = vmatpush1.msra.mxu0 0.0
        %1319 = vmatprep.subr.mxu0 0.0
        %1320 = vmatpush1.msra.mxu0 0.0
        %1321 = vmatprep.subr.mxu0 0.0
        %1322 = vmatpush1.msra.mxu0 0.0
        %1323 = vmatprep.subr.mxu0 0.0
        %1324 = vmatpush1.msra.mxu0 0.0
        %1325 = vmatprep.subr.mxu0 0.0
        %1326 = vmatpush1.msra.mxu0 0.0
        %1327 = vmatprep.subr.mxu0 0.0
        %1328 = vmatpush1.msra.mxu0 0.0
        %1329 = vmatprep.subr.mxu0 0.0
        %1330 = vmatpush1.msra.mxu0 0.0
        %1331 = vmatprep.subr.mxu0 0.0
        %1332 = vmatpush1.msra.mxu0 0.0
        %1333 = vmatprep.subr.mxu0 0.0
        %1334 = vmatpush1.msra.mxu0 0.0
        %1335 = vmatprep.subr.mxu0 0.0
        %1336 = vmatpush1.msra.mxu0 0.0
        %1337 = vmatprep.subr.mxu0 0.0
        %1338 = vmatpush1.msra.mxu0 0.0
        %1339 = vmatprep.subr.mxu0 0.0
        %1340 = vmatpush1.msra.mxu0 0.0
        %1341 = vmatprep.subr.mxu0 0.0
        %1342 = vmatpush1.msra.mxu0 0.0
        %1343 = vmatprep.mubr.f32.mxu0 0.0
        %1344 = vmatmul.mubr.f32.gmra.mrb[0].mxu0 %v1161
        %v1345 = vpop.f32.mrb[0].mxu0
        %v1346 = vadd.f32 0.0, %v1345
        %v1347 = vpop.f32.mrb[0].mxu0
        %1348 = vmatprep.mubr.f32.mxu0 0.0
        %1349 = vmatmul.mubr.f32.gmra.mrb[0].mxu0 %v1164
        %v1350 = vpop.f32.mrb[0].mxu0
        %v1351 = vadd.f32 0.0, %v1350
        %v1352 = vpop.f32.mrb[0].mxu0
        %1353 = vmatprep.mubr.f32.mxu0 0.0
        %1354 = vmatmul.mubr.f32.gmra.mrb[0].mxu0 %v1167
        %v1355 = vpop.f32.mrb[0].mxu0
        %v1356 = vadd.f32 0.0, %v1355
        %v1357 = vpop.f32.mrb[0].mxu0
        %1358 = vmatprep.mubr.f32.mxu0 0.0
        %1359 = vmatmul.mubr.f32.gmra.mrb[0].mxu0 %v1170
        %v1360 = vpop.f32.mrb[0].mxu0
        %v1361 = vadd.f32 0.0, %v1360
        %v1362 = vpop.f32.mrb[0].mxu0
        %1363 = vmatprep.mubr.f32.mxu0 0.0
        %1364 = vmatmul.mubr.f32.gmra.mrb[0].mxu0 %v1173
        %v1365 = vpop.f32.mrb[0].mxu0
        %v1366 = vadd.f32 0.0, %v1365
        %v1367 = vpop.f32.mrb[0].mxu0
        %1368 = vmatprep.mubr.f32.mxu0 0.0
        %1369 = vmatmul.mubr.f32.gmra.mrb[0].mxu0 %v1176
        %v1370 = vpop.f32.mrb[0].mxu0
        %v1371 = vadd.f32 0.0, %v1370
        %v1372 = vpop.f32.mrb[0].mxu0
        %1373 = vdwg.mxu0
        %v1374 = vadd.f32 %v1113, %v1245
        %v1375 = vadd.f32 %v1114, %v1247
        %v1376 = vadd.f32 %v1115, %v1346
        %v1377 = vadd.f32 %v1116, %v1251
        %v1378 = vadd.f32 %v1117, %v1253
        %v1379 = vadd.f32 %v1118, %v1351
        %v1380 = vadd.f32 %v1119, %v1257
        %v1381 = vadd.f32 %v1120, %v1259
        %v1382 = vadd.f32 %v1121, %v1356
        %v1383 = vadd.f32 %v1122, %v1263
        %v1384 = vadd.f32 %v1123, %v1265
        %v1385 = vadd.f32 %v1124, %v1361
        %v1386 = vadd.f32 %v1125, %v1269
        %v1387 = vadd.f32 %v1126, %v1271
        %v1388 = vadd.f32 %v1127, %v1366
        %v1389 = vadd.f32 %v1128, %v1275
        %v1390 = vadd.f32 %v1129, %v1277
        %v1391 = vadd.f32 %v1130, %v1371
        %v1392 = vld [vmem:[%s384 + $0x8] sm:$0xff]
        %v1393 = vld [vmem:[%s384 + $0x10] sm:$0xff]
        %v1394 = vld [vmem:[%s384 + $0x18] sm:$0xff]
        %v1395 = vld [vmem:[%s384 + $0x20] sm:$0xff]
        %v1396 = vld [vmem:[%s384 + $0x28] sm:$0xff]
        %v1397 = vld [vmem:[%s384 + $0x30] sm:$0xff]
        %s1398 = scalar_lea.vmem %s1, 672
        %v1399 = vld [vmem:[%s1398] sm:$0xff]
        %v1400 = vld [vmem:[%s1398 + $0x8] sm:$0xff]
        %v1401 = vld [vmem:[%s1398 + $0x10] sm:$0xff]
        %v1402 = vld [vmem:[%s1398 + $0x18] sm:$0xff]
        %v1403 = vld [vmem:[%s1398 + $0x20] sm:$0xff]
        %v1404 = vld [vmem:[%s1398 + $0x28] sm:$0xff]
        %v1405 = vld [vmem:[%s1398 + $0x30] sm:$0xff]
        %v1406 = vld [vmem:[%s1398 + $0x38] sm:$0xff]
        %v1407 = vld [vmem:[%s1398 + $0x40] sm:$0xff]
        %v1408 = vld [vmem:[%s1398 + $0x48] sm:$0xff]
        %v1409 = vld [vmem:[%s1398 + $0x50] sm:$0xff]
        %v1410 = vld [vmem:[%s1398 + $0x58] sm:$0xff]
        %v1411 = vld [vmem:[%s1398 + $0x60] sm:$0xff]
        %v1412 = vld [vmem:[%s1398 + $0x68] sm:$0xff]
        %v1413 = vld [vmem:[%s1398 + $0x70] sm:$0xff]
        %v1414 = vld [vmem:[%s1398 + $0x78] sm:$0xff]
        %v1415 = vld [vmem:[%s1398 + $0x80] sm:$0xff]
        %v1416 = vld [vmem:[%s1398 + $0x88] sm:$0xff]
        %v1417 = vld [vmem:[%s1398 + $0x90] sm:$0xff]
        %v1418 = vld [vmem:[%s1398 + $0x98] sm:$0xff]
        %v1419 = vld [vmem:[%s1398 + $0xa0] sm:$0xff]
        %v1421 = vsel %vm441, %v1392, 0
        %v1424 = vsel %vm441, %v1393, 0
        %v1427 = vsel %vm441, %v1394, 0
        %v1430 = vsel %vm441, %v1395, 0
        %v1433 = vsel %vm441, %v1396, 0
        %v1436 = vsel %vm441, %v1397, 0
        %1438 = vmatprep.subr.mxu0 %v1400
        %1439 = vmatpush1.msra.mxu0 %v1399
        %1440 = vmatprep.subr.mxu0 %v1403
        %1441 = vmatpush1.msra.mxu0 %v1402
        %1442 = vmatprep.subr.mxu0 %v1406
        %1443 = vmatpush1.msra.mxu0 %v1405
        %1444 = vmatprep.subr.mxu0 %v1409
        %1445 = vmatpush1.msra.mxu0 %v1408
        %1446 = vmatprep.subr.mxu0 %v1412
        %1447 = vmatpush1.msra.mxu0 %v1411
        %1448 = vmatprep.subr.mxu0 %v1415
        %1449 = vmatpush1.msra.mxu0 %v1414
        %1450 = vmatprep.subr.mxu0 %v1418
        %1451 = vmatpush1.msra.mxu0 %v1417
        %1452 = vmatprep.subr.mxu0 0.0
        %1453 = vmatpush1.msra.mxu0 0.0
        %1454 = vmatprep.subr.mxu0 0.0
        %1455 = vmatpush1.msra.mxu0 0.0
        %1456 = vmatprep.subr.mxu0 0.0
        %1457 = vmatpush1.msra.mxu0 0.0
        %1458 = vmatprep.subr.mxu0 0.0
        %1459 = vmatpush1.msra.mxu0 0.0
        %1460 = vmatprep.subr.mxu0 0.0
        %1461 = vmatpush1.msra.mxu0 0.0
        %1462 = vmatprep.subr.mxu0 0.0
        %1463 = vmatpush1.msra.mxu0 0.0
        %1464 = vmatprep.subr.mxu0 0.0
        %1465 = vmatpush1.msra.mxu0 0.0
        %1466 = vmatprep.subr.mxu0 0.0
        %1467 = vmatpush1.msra.mxu0 0.0
        %1468 = vmatprep.subr.mxu0 0.0
        %1469 = vmatpush1.msra.mxu0 0.0
        %1470 = vmatprep.subr.mxu0 0.0
        %1471 = vmatpush1.msra.mxu0 0.0
        %1472 = vmatprep.subr.mxu0 0.0
        %1473 = vmatpush1.msra.mxu0 0.0
        %1474 = vmatprep.subr.mxu0 0.0
        %1475 = vmatpush1.msra.mxu0 0.0
        %1476 = vmatprep.subr.mxu0 0.0
        %1477 = vmatpush1.msra.mxu0 0.0
        %1478 = vmatprep.subr.mxu0 0.0
        %1479 = vmatpush1.msra.mxu0 0.0
        %1480 = vmatprep.subr.mxu0 0.0
        %1481 = vmatpush1.msra.mxu0 0.0
        %1482 = vmatprep.subr.mxu0 0.0
        %1483 = vmatpush1.msra.mxu0 0.0
        %1484 = vmatprep.subr.mxu0 0.0
        %1485 = vmatpush1.msra.mxu0 0.0
        %1486 = vmatprep.subr.mxu0 0.0
        %1487 = vmatpush1.msra.mxu0 0.0
        %1488 = vmatprep.subr.mxu0 0.0
        %1489 = vmatpush1.msra.mxu0 0.0
        %1490 = vmatprep.subr.mxu0 0.0
        %1491 = vmatpush1.msra.mxu0 0.0
        %1492 = vmatprep.subr.mxu0 0.0
        %1493 = vmatpush1.msra.mxu0 0.0
        %1494 = vmatprep.subr.mxu0 0.0
        %1495 = vmatpush1.msra.mxu0 0.0
        %1496 = vmatprep.subr.mxu0 0.0
        %1497 = vmatpush1.msra.mxu0 0.0
        %1498 = vmatprep.subr.mxu0 0.0
        %1499 = vmatpush1.msra.mxu0 0.0
        %1500 = vmatprep.subr.mxu0 0.0
        %1501 = vmatpush1.msra.mxu0 0.0
        %1502 = vmatprep.mubr.f32.mxu0 0.0
        %1503 = vmatmul.mubr.f32.gmra.mrb[0].mxu0 %v1421
        %v1504 = vpop.f32.mrb[0].mxu0
        %v1505 = vadd.f32 0.0, %v1504
        %v1506 = vpop.f32.mrb[0].mxu0
        %v1507 = vadd.f32 0.0, %v1506
        %1508 = vmatprep.mubr.f32.mxu0 0.0
        %1509 = vmatmul.mubr.f32.gmra.mrb[0].mxu0 %v1424
        %v1510 = vpop.f32.mrb[0].mxu0
        %v1511 = vadd.f32 0.0, %v1510
        %v1512 = vpop.f32.mrb[0].mxu0
        %v1513 = vadd.f32 0.0, %v1512
        %1514 = vmatprep.mubr.f32.mxu0 0.0
        %1515 = vmatmul.mubr.f32.gmra.mrb[0].mxu0 %v1427
        %v1516 = vpop.f32.mrb[0].mxu0
        %v1517 = vadd.f32 0.0, %v1516
        %v1518 = vpop.f32.mrb[0].mxu0
        %v1519 = vadd.f32 0.0, %v1518
        %1520 = vmatprep.mubr.f32.mxu0 0.0
        %1521 = vmatmul.mubr.f32.gmra.mrb[0].mxu0 %v1430
        %v1522 = vpop.f32.mrb[0].mxu0
        %v1523 = vadd.f32 0.0, %v1522
        %v1524 = vpop.f32.mrb[0].mxu0
        %v1525 = vadd.f32 0.0, %v1524
        %1526 = vmatprep.mubr.f32.mxu0 0.0
        %1527 = vmatmul.mubr.f32.gmra.mrb[0].mxu0 %v1433
        %v1528 = vpop.f32.mrb[0].mxu0
        %v1529 = vadd.f32 0.0, %v1528
        %v1530 = vpop.f32.mrb[0].mxu0
        %v1531 = vadd.f32 0.0, %v1530
        %1532 = vmatprep.mubr.f32.mxu0 0.0
        %1533 = vmatmul.mubr.f32.gmra.mrb[0].mxu0 %v1436
        %v1534 = vpop.f32.mrb[0].mxu0
        %v1535 = vadd.f32 0.0, %v1534
        %v1536 = vpop.f32.mrb[0].mxu0
        %v1537 = vadd.f32 0.0, %v1536
        %1538 = vdwg.mxu0
        %1539 = vmatprep.subr.mxu0 0.0
        %1540 = vmatpush1.msra.mxu0 %v1401
        %1541 = vmatprep.subr.mxu0 0.0
        %1542 = vmatpush1.msra.mxu0 %v1404
        %1543 = vmatprep.subr.mxu0 0.0
        %1544 = vmatpush1.msra.mxu0 %v1407
        %1545 = vmatprep.subr.mxu0 0.0
        %1546 = vmatpush1.msra.mxu0 %v1410
        %1547 = vmatprep.subr.mxu0 0.0
        %1548 = vmatpush1.msra.mxu0 %v1413
        %1549 = vmatprep.subr.mxu0 0.0
        %1550 = vmatpush1.msra.mxu0 %v1416
        %1551 = vmatprep.subr.mxu0 0.0
        %1552 = vmatpush1.msra.mxu0 %v1419
        %1553 = vmatprep.subr.mxu0 0.0
        %1554 = vmatpush1.msra.mxu0 0.0
        %1555 = vmatprep.subr.mxu0 0.0
        %1556 = vmatpush1.msra.mxu0 0.0
        %1557 = vmatprep.subr.mxu0 0.0
        %1558 = vmatpush1.msra.mxu0 0.0
        %1559 = vmatprep.subr.mxu0 0.0
        %1560 = vmatpush1.msra.mxu0 0.0
        %1561 = vmatprep.subr.mxu0 0.0
        %1562 = vmatpush1.msra.mxu0 0.0
        %1563 = vmatprep.subr.mxu0 0.0
        %1564 = vmatpush1.msra.mxu0 0.0
        %1565 = vmatprep.subr.mxu0 0.0
        %1566 = vmatpush1.msra.mxu0 0.0
        %1567 = vmatprep.subr.mxu0 0.0
        %1568 = vmatpush1.msra.mxu0 0.0
        %1569 = vmatprep.subr.mxu0 0.0
        %1570 = vmatpush1.msra.mxu0 0.0
        %1571 = vmatprep.subr.mxu0 0.0
        %1572 = vmatpush1.msra.mxu0 0.0
        %1573 = vmatprep.subr.mxu0 0.0
        %1574 = vmatpush1.msra.mxu0 0.0
        %1575 = vmatprep.subr.mxu0 0.0
        %1576 = vmatpush1.msra.mxu0 0.0
        %1577 = vmatprep.subr.mxu0 0.0
        %1578 = vmatpush1.msra.mxu0 0.0
        %1579 = vmatprep.subr.mxu0 0.0
        %1580 = vmatpush1.msra.mxu0 0.0
        %1581 = vmatprep.subr.mxu0 0.0
        %1582 = vmatpush1.msra.mxu0 0.0
        %1583 = vmatprep.subr.mxu0 0.0
        %1584 = vmatpush1.msra.mxu0 0.0
        %1585 = vmatprep.subr.mxu0 0.0
        %1586 = vmatpush1.msra.mxu0 0.0
        %1587 = vmatprep.subr.mxu0 0.0
        %1588 = vmatpush1.msra.mxu0 0.0
        %1589 = vmatprep.subr.mxu0 0.0
        %1590 = vmatpush1.msra.mxu0 0.0
        %1591 = vmatprep.subr.mxu0 0.0
        %1592 = vmatpush1.msra.mxu0 0.0
        %1593 = vmatprep.subr.mxu0 0.0
        %1594 = vmatpush1.msra.mxu0 0.0
        %1595 = vmatprep.subr.mxu0 0.0
        %1596 = vmatpush1.msra.mxu0 0.0
        %1597 = vmatprep.subr.mxu0 0.0
        %1598 = vmatpush1.msra.mxu0 0.0
        %1599 = vmatprep.subr.mxu0 0.0
        %1600 = vmatpush1.msra.mxu0 0.0
        %1601 = vmatprep.subr.mxu0 0.0
        %1602 = vmatpush1.msra.mxu0 0.0
        %1603 = vmatprep.mubr.f32.mxu0 0.0
        %1604 = vmatmul.mubr.f32.gmra.mrb[0].mxu0 %v1421
        %v1605 = vpop.f32.mrb[0].mxu0
        %v1606 = vadd.f32 0.0, %v1605
        %v1607 = vpop.f32.mrb[0].mxu0
        %1608 = vmatprep.mubr.f32.mxu0 0.0
        %1609 = vmatmul.mubr.f32.gmra.mrb[0].mxu0 %v1424
        %v1610 = vpop.f32.mrb[0].mxu0
        %v1611 = vadd.f32 0.0, %v1610
        %v1612 = vpop.f32.mrb[0].mxu0
        %1613 = vmatprep.mubr.f32.mxu0 0.0
        %1614 = vmatmul.mubr.f32.gmra.mrb[0].mxu0 %v1427
        %v1615 = vpop.f32.mrb[0].mxu0
        %v1616 = vadd.f32 0.0, %v1615
        %v1617 = vpop.f32.mrb[0].mxu0
        %1618 = vmatprep.mubr.f32.mxu0 0.0
        %1619 = vmatmul.mubr.f32.gmra.mrb[0].mxu0 %v1430
        %v1620 = vpop.f32.mrb[0].mxu0
        %v1621 = vadd.f32 0.0, %v1620
        %v1622 = vpop.f32.mrb[0].mxu0
        %1623 = vmatprep.mubr.f32.mxu0 0.0
        %1624 = vmatmul.mubr.f32.gmra.mrb[0].mxu0 %v1433
        %v1625 = vpop.f32.mrb[0].mxu0
        %v1626 = vadd.f32 0.0, %v1625
        %v1627 = vpop.f32.mrb[0].mxu0
        %1628 = vmatprep.mubr.f32.mxu0 0.0
        %1629 = vmatmul.mubr.f32.gmra.mrb[0].mxu0 %v1436
        %v1630 = vpop.f32.mrb[0].mxu0
        %v1631 = vadd.f32 0.0, %v1630
        %v1632 = vpop.f32.mrb[0].mxu0
        %1633 = vdwg.mxu0
        %v1634 = vadd.f32 %v1374, %v1505
        %v1635 = vadd.f32 %v1375, %v1507
        %v1636 = vadd.f32 %v1376, %v1606
        %v1637 = vadd.f32 %v1377, %v1511
        %v1638 = vadd.f32 %v1378, %v1513
        %v1639 = vadd.f32 %v1379, %v1611
        %v1640 = vadd.f32 %v1380, %v1517
        %v1641 = vadd.f32 %v1381, %v1519
        %v1642 = vadd.f32 %v1382, %v1616
        %v1643 = vadd.f32 %v1383, %v1523
        %v1644 = vadd.f32 %v1384, %v1525
        %v1645 = vadd.f32 %v1385, %v1621
        %v1646 = vadd.f32 %v1386, %v1529
        %v1647 = vadd.f32 %v1387, %v1531
        %v1648 = vadd.f32 %v1388, %v1626
        %v1649 = vadd.f32 %v1389, %v1535
        %v1650 = vadd.f32 %v1390, %v1537
        %v1651 = vadd.f32 %v1391, %v1631
        %1652 = vmatprep.subr.mxu0 %v421
        %1653 = vmatpush1.msra.mxu0 %v420
        %1654 = vmatprep.subr.mxu0 %v424
        %1655 = vmatpush1.msra.mxu0 %v423
        %1656 = vmatprep.subr.mxu0 %v427
        %1657 = vmatpush1.msra.mxu0 %v426
        %1658 = vmatprep.subr.mxu0 %v430
        %1659 = vmatpush1.msra.mxu0 %v429
        %1660 = vmatprep.subr.mxu0 %v433
        %1661 = vmatpush1.msra.mxu0 %v432
        %1662 = vmatprep.subr.mxu0 %v436
        %1663 = vmatpush1.msra.mxu0 %v435
        %1664 = vmatprep.subr.mxu0 %v439
        %1665 = vmatpush1.msra.mxu0 %v438
        %1666 = vmatprep.subr.mxu0 0.0
        %1667 = vmatpush1.msra.mxu0 0.0
        %1668 = vmatprep.subr.mxu0 0.0
        %1669 = vmatpush1.msra.mxu0 0.0
        %1670 = vmatprep.subr.mxu0 0.0
        %1671 = vmatpush1.msra.mxu0 0.0
        %1672 = vmatprep.subr.mxu0 0.0
        %1673 = vmatpush1.msra.mxu0 0.0
        %1674 = vmatprep.subr.mxu0 0.0
        %1675 = vmatpush1.msra.mxu0 0.0
        %1676 = vmatprep.subr.mxu0 0.0
        %1677 = vmatpush1.msra.mxu0 0.0
        %1678 = vmatprep.subr.mxu0 0.0
        %1679 = vmatpush1.msra.mxu0 0.0
        %1680 = vmatprep.subr.mxu0 0.0
        %1681 = vmatpush1.msra.mxu0 0.0
        %1682 = vmatprep.subr.mxu0 0.0
        %1683 = vmatpush1.msra.mxu0 0.0
        %1684 = vmatprep.subr.mxu0 0.0
        %1685 = vmatpush1.msra.mxu0 0.0
        %1686 = vmatprep.subr.mxu0 0.0
        %1687 = vmatpush1.msra.mxu0 0.0
        %1688 = vmatprep.subr.mxu0 0.0
        %1689 = vmatpush1.msra.mxu0 0.0
        %1690 = vmatprep.subr.mxu0 0.0
        %1691 = vmatpush1.msra.mxu0 0.0
        %1692 = vmatprep.subr.mxu0 0.0
        %1693 = vmatpush1.msra.mxu0 0.0
        %1694 = vmatprep.subr.mxu0 0.0
        %1695 = vmatpush1.msra.mxu0 0.0
        %1696 = vmatprep.subr.mxu0 0.0
        %1697 = vmatpush1.msra.mxu0 0.0
        %1698 = vmatprep.subr.mxu0 0.0
        %1699 = vmatpush1.msra.mxu0 0.0
        %1700 = vmatprep.subr.mxu0 0.0
        %1701 = vmatpush1.msra.mxu0 0.0
        %1702 = vmatprep.subr.mxu0 0.0
        %1703 = vmatpush1.msra.mxu0 0.0
        %1704 = vmatprep.subr.mxu0 0.0
        %1705 = vmatpush1.msra.mxu0 0.0
        %1706 = vmatprep.subr.mxu0 0.0
        %1707 = vmatpush1.msra.mxu0 0.0
        %1708 = vmatprep.subr.mxu0 0.0
        %1709 = vmatpush1.msra.mxu0 0.0
        %1710 = vmatprep.subr.mxu0 0.0
        %1711 = vmatpush1.msra.mxu0 0.0
        %1712 = vmatprep.subr.mxu0 0.0
        %1713 = vmatpush1.msra.mxu0 0.0
        %1714 = vmatprep.subr.mxu0 0.0
        %1715 = vmatpush1.msra.mxu0 0.0
        %1716 = vmatprep.mubr.f32.mxu0 0.0
        %1717 = vmatmul.mubr.f32.gmra.mrb[0].mxu0 %v900
        %v1718 = vpop.f32.mrb[0].mxu0
        %v1719 = vadd.f32 0.0, %v1718
        %v1720 = vpop.f32.mrb[0].mxu0
        %v1721 = vadd.f32 0.0, %v1720
        %1722 = vmatprep.mubr.f32.mxu0 0.0
        %1723 = vmatmul.mubr.f32.gmra.mrb[0].mxu0 %v903
        %v1724 = vpop.f32.mrb[0].mxu0
        %v1725 = vadd.f32 0.0, %v1724
        %v1726 = vpop.f32.mrb[0].mxu0
        %v1727 = vadd.f32 0.0, %v1726
        %1728 = vmatprep.mubr.f32.mxu0 0.0
        %1729 = vmatmul.mubr.f32.gmra.mrb[0].mxu0 %v906
        %v1730 = vpop.f32.mrb[0].mxu0
        %v1731 = vadd.f32 0.0, %v1730
        %v1732 = vpop.f32.mrb[0].mxu0
        %v1733 = vadd.f32 0.0, %v1732
        %1734 = vmatprep.mubr.f32.mxu0 0.0
        %1735 = vmatmul.mubr.f32.gmra.mrb[0].mxu0 %v909
        %v1736 = vpop.f32.mrb[0].mxu0
        %v1737 = vadd.f32 0.0, %v1736
        %v1738 = vpop.f32.mrb[0].mxu0
        %v1739 = vadd.f32 0.0, %v1738
        %1740 = vmatprep.mubr.f32.mxu0 0.0
        %1741 = vmatmul.mubr.f32.gmra.mrb[0].mxu0 %v912
        %v1742 = vpop.f32.mrb[0].mxu0
        %v1743 = vadd.f32 0.0, %v1742
        %v1744 = vpop.f32.mrb[0].mxu0
        %v1745 = vadd.f32 0.0, %v1744
        %1746 = vmatprep.mubr.f32.mxu0 0.0
        %1747 = vmatmul.mubr.f32.gmra.mrb[0].mxu0 %v915
        %v1748 = vpop.f32.mrb[0].mxu0
        %v1749 = vadd.f32 0.0, %v1748
        %v1750 = vpop.f32.mrb[0].mxu0
        %v1751 = vadd.f32 0.0, %v1750
        %1752 = vdwg.mxu0
        %1753 = vmatprep.subr.mxu0 0.0
        %1754 = vmatpush1.msra.mxu0 %v422
        %1755 = vmatprep.subr.mxu0 0.0
        %1756 = vmatpush1.msra.mxu0 %v425
        %1757 = vmatprep.subr.mxu0 0.0
        %1758 = vmatpush1.msra.mxu0 %v428
        %1759 = vmatprep.subr.mxu0 0.0
        %1760 = vmatpush1.msra.mxu0 %v431
        %1761 = vmatprep.subr.mxu0 0.0
        %1762 = vmatpush1.msra.mxu0 %v434
        %1763 = vmatprep.subr.mxu0 0.0
        %1764 = vmatpush1.msra.mxu0 %v437
        %1765 = vmatprep.subr.mxu0 0.0
        %1766 = vmatpush1.msra.mxu0 %v440
        %1767 = vmatprep.subr.mxu0 0.0
        %1768 = vmatpush1.msra.mxu0 0.0
        %1769 = vmatprep.subr.mxu0 0.0
        %1770 = vmatpush1.msra.mxu0 0.0
        %1771 = vmatprep.subr.mxu0 0.0
        %1772 = vmatpush1.msra.mxu0 0.0
        %1773 = vmatprep.subr.mxu0 0.0
        %1774 = vmatpush1.msra.mxu0 0.0
        %1775 = vmatprep.subr.mxu0 0.0
        %1776 = vmatpush1.msra.mxu0 0.0
        %1777 = vmatprep.subr.mxu0 0.0
        %1778 = vmatpush1.msra.mxu0 0.0
        %1779 = vmatprep.subr.mxu0 0.0
        %1780 = vmatpush1.msra.mxu0 0.0
        %1781 = vmatprep.subr.mxu0 0.0
        %1782 = vmatpush1.msra.mxu0 0.0
        %1783 = vmatprep.subr.mxu0 0.0
        %1784 = vmatpush1.msra.mxu0 0.0
        %1785 = vmatprep.subr.mxu0 0.0
        %1786 = vmatpush1.msra.mxu0 0.0
        %1787 = vmatprep.subr.mxu0 0.0
        %1788 = vmatpush1.msra.mxu0 0.0
        %1789 = vmatprep.subr.mxu0 0.0
        %1790 = vmatpush1.msra.mxu0 0.0
        %1791 = vmatprep.subr.mxu0 0.0
        %1792 = vmatpush1.msra.mxu0 0.0
        %1793 = vmatprep.subr.mxu0 0.0
        %1794 = vmatpush1.msra.mxu0 0.0
        %1795 = vmatprep.subr.mxu0 0.0
        %1796 = vmatpush1.msra.mxu0 0.0
        %1797 = vmatprep.subr.mxu0 0.0
        %1798 = vmatpush1.msra.mxu0 0.0
        %1799 = vmatprep.subr.mxu0 0.0
        %1800 = vmatpush1.msra.mxu0 0.0
        %1801 = vmatprep.subr.mxu0 0.0
        %1802 = vmatpush1.msra.mxu0 0.0
        %1803 = vmatprep.subr.mxu0 0.0
        %1804 = vmatpush1.msra.mxu0 0.0
        %1805 = vmatprep.subr.mxu0 0.0
        %1806 = vmatpush1.msra.mxu0 0.0
        %1807 = vmatprep.subr.mxu0 0.0
        %1808 = vmatpush1.msra.mxu0 0.0
        %1809 = vmatprep.subr.mxu0 0.0
        %1810 = vmatpush1.msra.mxu0 0.0
        %1811 = vmatprep.subr.mxu0 0.0
        %1812 = vmatpush1.msra.mxu0 0.0
        %1813 = vmatprep.subr.mxu0 0.0
        %1814 = vmatpush1.msra.mxu0 0.0
        %1815 = vmatprep.subr.mxu0 0.0
        %1816 = vmatpush1.msra.mxu0 0.0
        %1817 = vmatprep.mubr.f32.mxu0 0.0
        %1818 = vmatmul.mubr.f32.gmra.mrb[0].mxu0 %v900
        %v1819 = vpop.f32.mrb[0].mxu0
        %v1820 = vadd.f32 0.0, %v1819
        %v1821 = vpop.f32.mrb[0].mxu0
        %1822 = vmatprep.mubr.f32.mxu0 0.0
        %1823 = vmatmul.mubr.f32.gmra.mrb[0].mxu0 %v903
        %v1824 = vpop.f32.mrb[0].mxu0
        %v1825 = vadd.f32 0.0, %v1824
        %v1826 = vpop.f32.mrb[0].mxu0
        %1827 = vmatprep.mubr.f32.mxu0 0.0
        %1828 = vmatmul.mubr.f32.gmra.mrb[0].mxu0 %v906
        %v1829 = vpop.f32.mrb[0].mxu0
        %v1830 = vadd.f32 0.0, %v1829
        %v1831 = vpop.f32.mrb[0].mxu0
        %1832 = vmatprep.mubr.f32.mxu0 0.0
        %1833 = vmatmul.mubr.f32.gmra.mrb[0].mxu0 %v909
        %v1834 = vpop.f32.mrb[0].mxu0
        %v1835 = vadd.f32 0.0, %v1834
        %v1836 = vpop.f32.mrb[0].mxu0
        %1837 = vmatprep.mubr.f32.mxu0 0.0
        %1838 = vmatmul.mubr.f32.gmra.mrb[0].mxu0 %v912
        %v1839 = vpop.f32.mrb[0].mxu0
        %v1840 = vadd.f32 0.0, %v1839
        %v1841 = vpop.f32.mrb[0].mxu0
        %1842 = vmatprep.mubr.f32.mxu0 0.0
        %1843 = vmatmul.mubr.f32.gmra.mrb[0].mxu0 %v915
        %v1844 = vpop.f32.mrb[0].mxu0
        %v1845 = vadd.f32 0.0, %v1844
        %v1846 = vpop.f32.mrb[0].mxu0
        %1847 = vdwg.mxu0
        %1848 = vmatprep.subr.mxu0 %v392
        %1849 = vmatpush1.msra.mxu0 %v391
        %1850 = vmatprep.subr.mxu0 %v395
        %1851 = vmatpush1.msra.mxu0 %v394
        %1852 = vmatprep.subr.mxu0 %v398
        %1853 = vmatpush1.msra.mxu0 %v397
        %1854 = vmatprep.subr.mxu0 %v401
        %1855 = vmatpush1.msra.mxu0 %v400
        %1856 = vmatprep.subr.mxu0 %v404
        %1857 = vmatpush1.msra.mxu0 %v403
        %1858 = vmatprep.subr.mxu0 %v407
        %1859 = vmatpush1.msra.mxu0 %v406
        %1860 = vmatprep.subr.mxu0 %v410
        %1861 = vmatpush1.msra.mxu0 %v409
        %1862 = vmatprep.subr.mxu0 0.0
        %1863 = vmatpush1.msra.mxu0 0.0
        %1864 = vmatprep.subr.mxu0 0.0
        %1865 = vmatpush1.msra.mxu0 0.0
        %1866 = vmatprep.subr.mxu0 0.0
        %1867 = vmatpush1.msra.mxu0 0.0
        %1868 = vmatprep.subr.mxu0 0.0
        %1869 = vmatpush1.msra.mxu0 0.0
        %1870 = vmatprep.subr.mxu0 0.0
        %1871 = vmatpush1.msra.mxu0 0.0
        %1872 = vmatprep.subr.mxu0 0.0
        %1873 = vmatpush1.msra.mxu0 0.0
        %1874 = vmatprep.subr.mxu0 0.0
        %1875 = vmatpush1.msra.mxu0 0.0
        %1876 = vmatprep.subr.mxu0 0.0
        %1877 = vmatpush1.msra.mxu0 0.0
        %1878 = vmatprep.subr.mxu0 0.0
        %1879 = vmatpush1.msra.mxu0 0.0
        %1880 = vmatprep.subr.mxu0 0.0
        %1881 = vmatpush1.msra.mxu0 0.0
        %1882 = vmatprep.subr.mxu0 0.0
        %1883 = vmatpush1.msra.mxu0 0.0
        %1884 = vmatprep.subr.mxu0 0.0
        %1885 = vmatpush1.msra.mxu0 0.0
        %1886 = vmatprep.subr.mxu0 0.0
        %1887 = vmatpush1.msra.mxu0 0.0
        %1888 = vmatprep.subr.mxu0 0.0
        %1889 = vmatpush1.msra.mxu0 0.0
        %1890 = vmatprep.subr.mxu0 0.0
        %1891 = vmatpush1.msra.mxu0 0.0
        %1892 = vmatprep.subr.mxu0 0.0
        %1893 = vmatpush1.msra.mxu0 0.0
        %1894 = vmatprep.subr.mxu0 0.0
        %1895 = vmatpush1.msra.mxu0 0.0
        %1896 = vmatprep.subr.mxu0 0.0
        %1897 = vmatpush1.msra.mxu0 0.0
        %1898 = vmatprep.subr.mxu0 0.0
        %1899 = vmatpush1.msra.mxu0 0.0
        %1900 = vmatprep.subr.mxu0 0.0
        %1901 = vmatpush1.msra.mxu0 0.0
        %1902 = vmatprep.subr.mxu0 0.0
        %1903 = vmatpush1.msra.mxu0 0.0
        %1904 = vmatprep.subr.mxu0 0.0
        %1905 = vmatpush1.msra.mxu0 0.0
        %1906 = vmatprep.subr.mxu0 0.0
        %1907 = vmatpush1.msra.mxu0 0.0
        %1908 = vmatprep.subr.mxu0 0.0
        %1909 = vmatpush1.msra.mxu0 0.0
        %1910 = vmatprep.subr.mxu0 0.0
        %1911 = vmatpush1.msra.mxu0 0.0
        %1912 = vmatprep.mubr.f32.mxu0 0.0
        %1913 = vmatmul.mubr.f32.gmra.mrb[0].mxu0 %v443
        %v1914 = vpop.f32.mrb[0].mxu0
        %v1915 = vadd.f32 %v1719, %v1914
        %v1916 = vpop.f32.mrb[0].mxu0
        %v1917 = vadd.f32 %v1721, %v1916
        %1918 = vmatprep.mubr.f32.mxu0 0.0
        %1919 = vmatmul.mubr.f32.gmra.mrb[0].mxu0 %v446
        %v1920 = vpop.f32.mrb[0].mxu0
        %v1921 = vadd.f32 %v1725, %v1920
        %v1922 = vpop.f32.mrb[0].mxu0
        %v1923 = vadd.f32 %v1727, %v1922
        %1924 = vmatprep.mubr.f32.mxu0 0.0
        %1925 = vmatmul.mubr.f32.gmra.mrb[0].mxu0 %v449
        %v1926 = vpop.f32.mrb[0].mxu0
        %v1927 = vadd.f32 %v1731, %v1926
        %v1928 = vpop.f32.mrb[0].mxu0
        %v1929 = vadd.f32 %v1733, %v1928
        %1930 = vmatprep.mubr.f32.mxu0 0.0
        %1931 = vmatmul.mubr.f32.gmra.mrb[0].mxu0 %v452
        %v1932 = vpop.f32.mrb[0].mxu0
        %v1933 = vadd.f32 %v1737, %v1932
        %v1934 = vpop.f32.mrb[0].mxu0
        %v1935 = vadd.f32 %v1739, %v1934
        %1936 = vmatprep.mubr.f32.mxu0 0.0
        %1937 = vmatmul.mubr.f32.gmra.mrb[0].mxu0 %v455
        %v1938 = vpop.f32.mrb[0].mxu0
        %v1939 = vadd.f32 %v1743, %v1938
        %v1940 = vpop.f32.mrb[0].mxu0
        %v1941 = vadd.f32 %v1745, %v1940
        %1942 = vmatprep.mubr.f32.mxu0 0.0
        %1943 = vmatmul.mubr.f32.gmra.mrb[0].mxu0 %v458
        %v1944 = vpop.f32.mrb[0].mxu0
        %v1945 = vadd.f32 %v1749, %v1944
        %v1946 = vpop.f32.mrb[0].mxu0
        %v1947 = vadd.f32 %v1751, %v1946
        %1948 = vdwg.mxu0
        %1949 = vmatprep.subr.mxu0 0.0
        %1950 = vmatpush1.msra.mxu0 %v393
        %1951 = vmatprep.subr.mxu0 0.0
        %1952 = vmatpush1.msra.mxu0 %v396
        %1953 = vmatprep.subr.mxu0 0.0
        %1954 = vmatpush1.msra.mxu0 %v399
        %1955 = vmatprep.subr.mxu0 0.0
        %1956 = vmatpush1.msra.mxu0 %v402
        %1957 = vmatprep.subr.mxu0 0.0
        %1958 = vmatpush1.msra.mxu0 %v405
        %1959 = vmatprep.subr.mxu0 0.0
        %1960 = vmatpush1.msra.mxu0 %v408
        %1961 = vmatprep.subr.mxu0 0.0
        %1962 = vmatpush1.msra.mxu0 %v411
        %1963 = vmatprep.subr.mxu0 0.0
        %1964 = vmatpush1.msra.mxu0 0.0
        %1965 = vmatprep.subr.mxu0 0.0
        %1966 = vmatpush1.msra.mxu0 0.0
        %1967 = vmatprep.subr.mxu0 0.0
        %1968 = vmatpush1.msra.mxu0 0.0
        %1969 = vmatprep.subr.mxu0 0.0
        %1970 = vmatpush1.msra.mxu0 0.0
        %1971 = vmatprep.subr.mxu0 0.0
        %1972 = vmatpush1.msra.mxu0 0.0
        %1973 = vmatprep.subr.mxu0 0.0
        %1974 = vmatpush1.msra.mxu0 0.0
        %1975 = vmatprep.subr.mxu0 0.0
        %1976 = vmatpush1.msra.mxu0 0.0
        %1977 = vmatprep.subr.mxu0 0.0
        %1978 = vmatpush1.msra.mxu0 0.0
        %1979 = vmatprep.subr.mxu0 0.0
        %1980 = vmatpush1.msra.mxu0 0.0
        %1981 = vmatprep.subr.mxu0 0.0
        %1982 = vmatpush1.msra.mxu0 0.0
        %1983 = vmatprep.subr.mxu0 0.0
        %1984 = vmatpush1.msra.mxu0 0.0
        %1985 = vmatprep.subr.mxu0 0.0
        %1986 = vmatpush1.msra.mxu0 0.0
        %1987 = vmatprep.subr.mxu0 0.0
        %1988 = vmatpush1.msra.mxu0 0.0
        %1989 = vmatprep.subr.mxu0 0.0
        %1990 = vmatpush1.msra.mxu0 0.0
        %1991 = vmatprep.subr.mxu0 0.0
        %1992 = vmatpush1.msra.mxu0 0.0
        %1993 = vmatprep.subr.mxu0 0.0
        %1994 = vmatpush1.msra.mxu0 0.0
        %1995 = vmatprep.subr.mxu0 0.0
        %1996 = vmatpush1.msra.mxu0 0.0
        %1997 = vmatprep.subr.mxu0 0.0
        %1998 = vmatpush1.msra.mxu0 0.0
        %1999 = vmatprep.subr.mxu0 0.0
        %2000 = vmatpush1.msra.mxu0 0.0
        %2001 = vmatprep.subr.mxu0 0.0
        %2002 = vmatpush1.msra.mxu0 0.0
        %2003 = vmatprep.subr.mxu0 0.0
        %2004 = vmatpush1.msra.mxu0 0.0
        %2005 = vmatprep.subr.mxu0 0.0
        %2006 = vmatpush1.msra.mxu0 0.0
        %2007 = vmatprep.subr.mxu0 0.0
        %2008 = vmatpush1.msra.mxu0 0.0
        %2009 = vmatprep.subr.mxu0 0.0
        %2010 = vmatpush1.msra.mxu0 0.0
        %2011 = vmatprep.subr.mxu0 0.0
        %2012 = vmatpush1.msra.mxu0 0.0
        %2013 = vmatprep.mubr.f32.mxu0 0.0
        %2014 = vmatmul.mubr.f32.gmra.mrb[0].mxu0 %v443
        %v2015 = vpop.f32.mrb[0].mxu0
        %v2016 = vadd.f32 %v1820, %v2015
        %v2017 = vpop.f32.mrb[0].mxu0
        %2018 = vmatprep.mubr.f32.mxu0 0.0
        %2019 = vmatmul.mubr.f32.gmra.mrb[0].mxu0 %v446
        %v2020 = vpop.f32.mrb[0].mxu0
        %v2021 = vadd.f32 %v1825, %v2020
        %v2022 = vpop.f32.mrb[0].mxu0
        %2023 = vmatprep.mubr.f32.mxu0 0.0
        %2024 = vmatmul.mubr.f32.gmra.mrb[0].mxu0 %v449
        %v2025 = vpop.f32.mrb[0].mxu0
        %v2026 = vadd.f32 %v1830, %v2025
        %v2027 = vpop.f32.mrb[0].mxu0
        %2028 = vmatprep.mubr.f32.mxu0 0.0
        %2029 = vmatmul.mubr.f32.gmra.mrb[0].mxu0 %v452
        %v2030 = vpop.f32.mrb[0].mxu0
        %v2031 = vadd.f32 %v1835, %v2030
        %v2032 = vpop.f32.mrb[0].mxu0
        %2033 = vmatprep.mubr.f32.mxu0 0.0
        %2034 = vmatmul.mubr.f32.gmra.mrb[0].mxu0 %v455
        %v2035 = vpop.f32.mrb[0].mxu0
        %v2036 = vadd.f32 %v1840, %v2035
        %v2037 = vpop.f32.mrb[0].mxu0
        %2038 = vmatprep.mubr.f32.mxu0 0.0
        %2039 = vmatmul.mubr.f32.gmra.mrb[0].mxu0 %v458
        %v2040 = vpop.f32.mrb[0].mxu0
        %v2041 = vadd.f32 %v1845, %v2040
        %v2042 = vpop.f32.mrb[0].mxu0
        %2043 = vdwg.mxu0
        %2044 = vmatprep.subr.mxu0 %v879
        %2045 = vmatpush1.msra.mxu0 %v878
        %2046 = vmatprep.subr.mxu0 %v882
        %2047 = vmatpush1.msra.mxu0 %v881
        %2048 = vmatprep.subr.mxu0 %v885
        %2049 = vmatpush1.msra.mxu0 %v884
        %2050 = vmatprep.subr.mxu0 %v888
        %2051 = vmatpush1.msra.mxu0 %v887
        %2052 = vmatprep.subr.mxu0 %v891
        %2053 = vmatpush1.msra.mxu0 %v890
        %2054 = vmatprep.subr.mxu0 %v894
        %2055 = vmatpush1.msra.mxu0 %v893
        %2056 = vmatprep.subr.mxu0 %v897
        %2057 = vmatpush1.msra.mxu0 %v896
        %2058 = vmatprep.subr.mxu0 0.0
        %2059 = vmatpush1.msra.mxu0 0.0
        %2060 = vmatprep.subr.mxu0 0.0
        %2061 = vmatpush1.msra.mxu0 0.0
        %2062 = vmatprep.subr.mxu0 0.0
        %2063 = vmatpush1.msra.mxu0 0.0
        %2064 = vmatprep.subr.mxu0 0.0
        %2065 = vmatpush1.msra.mxu0 0.0
        %2066 = vmatprep.subr.mxu0 0.0
        %2067 = vmatpush1.msra.mxu0 0.0
        %2068 = vmatprep.subr.mxu0 0.0
        %2069 = vmatpush1.msra.mxu0 0.0
        %2070 = vmatprep.subr.mxu0 0.0
        %2071 = vmatpush1.msra.mxu0 0.0
        %2072 = vmatprep.subr.mxu0 0.0
        %2073 = vmatpush1.msra.mxu0 0.0
        %2074 = vmatprep.subr.mxu0 0.0
        %2075 = vmatpush1.msra.mxu0 0.0
        %2076 = vmatprep.subr.mxu0 0.0
        %2077 = vmatpush1.msra.mxu0 0.0
        %2078 = vmatprep.subr.mxu0 0.0
        %2079 = vmatpush1.msra.mxu0 0.0
        %2080 = vmatprep.subr.mxu0 0.0
        %2081 = vmatpush1.msra.mxu0 0.0
        %2082 = vmatprep.subr.mxu0 0.0
        %2083 = vmatpush1.msra.mxu0 0.0
        %2084 = vmatprep.subr.mxu0 0.0
        %2085 = vmatpush1.msra.mxu0 0.0
        %2086 = vmatprep.subr.mxu0 0.0
        %2087 = vmatpush1.msra.mxu0 0.0
        %2088 = vmatprep.subr.mxu0 0.0
        %2089 = vmatpush1.msra.mxu0 0.0
        %2090 = vmatprep.subr.mxu0 0.0
        %2091 = vmatpush1.msra.mxu0 0.0
        %2092 = vmatprep.subr.mxu0 0.0
        %2093 = vmatpush1.msra.mxu0 0.0
        %2094 = vmatprep.subr.mxu0 0.0
        %2095 = vmatpush1.msra.mxu0 0.0
        %2096 = vmatprep.subr.mxu0 0.0
        %2097 = vmatpush1.msra.mxu0 0.0
        %2098 = vmatprep.subr.mxu0 0.0
        %2099 = vmatpush1.msra.mxu0 0.0
        %2100 = vmatprep.subr.mxu0 0.0
        %2101 = vmatpush1.msra.mxu0 0.0
        %2102 = vmatprep.subr.mxu0 0.0
        %2103 = vmatpush1.msra.mxu0 0.0
        %2104 = vmatprep.subr.mxu0 0.0
        %2105 = vmatpush1.msra.mxu0 0.0
        %2106 = vmatprep.subr.mxu0 0.0
        %2107 = vmatpush1.msra.mxu0 0.0
        %2108 = vmatprep.mubr.f32.mxu0 0.0
        %2109 = vmatmul.mubr.f32.gmra.mrb[0].mxu0 %v1161
        %v2110 = vpop.f32.mrb[0].mxu0
        %v2111 = vadd.f32 0.0, %v2110
        %v2112 = vpop.f32.mrb[0].mxu0
        %v2113 = vadd.f32 0.0, %v2112
        %2114 = vmatprep.mubr.f32.mxu0 0.0
        %2115 = vmatmul.mubr.f32.gmra.mrb[0].mxu0 %v1164
        %v2116 = vpop.f32.mrb[0].mxu0
        %v2117 = vadd.f32 0.0, %v2116
        %v2118 = vpop.f32.mrb[0].mxu0
        %v2119 = vadd.f32 0.0, %v2118
        %2120 = vmatprep.mubr.f32.mxu0 0.0
        %2121 = vmatmul.mubr.f32.gmra.mrb[0].mxu0 %v1167
        %v2122 = vpop.f32.mrb[0].mxu0
        %v2123 = vadd.f32 0.0, %v2122
        %v2124 = vpop.f32.mrb[0].mxu0
        %v2125 = vadd.f32 0.0, %v2124
        %2126 = vmatprep.mubr.f32.mxu0 0.0
        %2127 = vmatmul.mubr.f32.gmra.mrb[0].mxu0 %v1170
        %v2128 = vpop.f32.mrb[0].mxu0
        %v2129 = vadd.f32 0.0, %v2128
        %v2130 = vpop.f32.mrb[0].mxu0
        %v2131 = vadd.f32 0.0, %v2130
        %2132 = vmatprep.mubr.f32.mxu0 0.0
        %2133 = vmatmul.mubr.f32.gmra.mrb[0].mxu0 %v1173
        %v2134 = vpop.f32.mrb[0].mxu0
        %v2135 = vadd.f32 0.0, %v2134
        %v2136 = vpop.f32.mrb[0].mxu0
        %v2137 = vadd.f32 0.0, %v2136
        %2138 = vmatprep.mubr.f32.mxu0 0.0
        %2139 = vmatmul.mubr.f32.gmra.mrb[0].mxu0 %v1176
        %v2140 = vpop.f32.mrb[0].mxu0
        %v2141 = vadd.f32 0.0, %v2140
        %v2142 = vpop.f32.mrb[0].mxu0
        %v2143 = vadd.f32 0.0, %v2142
        %2144 = vdwg.mxu0
        %2145 = vmatprep.subr.mxu0 0.0
        %2146 = vmatpush1.msra.mxu0 %v880
        %2147 = vmatprep.subr.mxu0 0.0
        %2148 = vmatpush1.msra.mxu0 %v883
        %2149 = vmatprep.subr.mxu0 0.0
        %2150 = vmatpush1.msra.mxu0 %v886
        %2151 = vmatprep.subr.mxu0 0.0
        %2152 = vmatpush1.msra.mxu0 %v889
        %2153 = vmatprep.subr.mxu0 0.0
        %2154 = vmatpush1.msra.mxu0 %v892
        %2155 = vmatprep.subr.mxu0 0.0
        %2156 = vmatpush1.msra.mxu0 %v895
        %2157 = vmatprep.subr.mxu0 0.0
        %2158 = vmatpush1.msra.mxu0 %v898
        %2159 = vmatprep.subr.mxu0 0.0
        %2160 = vmatpush1.msra.mxu0 0.0
        %2161 = vmatprep.subr.mxu0 0.0
        %2162 = vmatpush1.msra.mxu0 0.0
        %2163 = vmatprep.subr.mxu0 0.0
        %2164 = vmatpush1.msra.mxu0 0.0
        %2165 = vmatprep.subr.mxu0 0.0
        %2166 = vmatpush1.msra.mxu0 0.0
        %2167 = vmatprep.subr.mxu0 0.0
        %2168 = vmatpush1.msra.mxu0 0.0
        %2169 = vmatprep.subr.mxu0 0.0
        %2170 = vmatpush1.msra.mxu0 0.0
        %2171 = vmatprep.subr.mxu0 0.0
        %2172 = vmatpush1.msra.mxu0 0.0
        %2173 = vmatprep.subr.mxu0 0.0
        %2174 = vmatpush1.msra.mxu0 0.0
        %2175 = vmatprep.subr.mxu0 0.0
        %2176 = vmatpush1.msra.mxu0 0.0
        %2177 = vmatprep.subr.mxu0 0.0
        %2178 = vmatpush1.msra.mxu0 0.0
        %2179 = vmatprep.subr.mxu0 0.0
        %2180 = vmatpush1.msra.mxu0 0.0
        %2181 = vmatprep.subr.mxu0 0.0
        %2182 = vmatpush1.msra.mxu0 0.0
        %2183 = vmatprep.subr.mxu0 0.0
        %2184 = vmatpush1.msra.mxu0 0.0
        %2185 = vmatprep.subr.mxu0 0.0
        %2186 = vmatpush1.msra.mxu0 0.0
        %2187 = vmatprep.subr.mxu0 0.0
        %2188 = vmatpush1.msra.mxu0 0.0
        %2189 = vmatprep.subr.mxu0 0.0
        %2190 = vmatpush1.msra.mxu0 0.0
        %2191 = vmatprep.subr.mxu0 0.0
        %2192 = vmatpush1.msra.mxu0 0.0
        %2193 = vmatprep.subr.mxu0 0.0
        %2194 = vmatpush1.msra.mxu0 0.0
        %2195 = vmatprep.subr.mxu0 0.0
        %2196 = vmatpush1.msra.mxu0 0.0
        %2197 = vmatprep.subr.mxu0 0.0
        %2198 = vmatpush1.msra.mxu0 0.0
        %2199 = vmatprep.subr.mxu0 0.0
        %2200 = vmatpush1.msra.mxu0 0.0
        %2201 = vmatprep.subr.mxu0 0.0
        %2202 = vmatpush1.msra.mxu0 0.0
        %2203 = vmatprep.subr.mxu0 0.0
        %2204 = vmatpush1.msra.mxu0 0.0
        %2205 = vmatprep.subr.mxu0 0.0
        %2206 = vmatpush1.msra.mxu0 0.0
        %2207 = vmatprep.subr.mxu0 0.0
        %2208 = vmatpush1.msra.mxu0 0.0
        %2209 = vmatprep.mubr.f32.mxu0 0.0
        %2210 = vmatmul.mubr.f32.gmra.mrb[0].mxu0 %v1161
        %v2211 = vpop.f32.mrb[0].mxu0
        %v2212 = vadd.f32 0.0, %v2211
        %v2213 = vpop.f32.mrb[0].mxu0
        %2214 = vmatprep.mubr.f32.mxu0 0.0
        %2215 = vmatmul.mubr.f32.gmra.mrb[0].mxu0 %v1164
        %v2216 = vpop.f32.mrb[0].mxu0
        %v2217 = vadd.f32 0.0, %v2216
        %v2218 = vpop.f32.mrb[0].mxu0
        %2219 = vmatprep.mubr.f32.mxu0 0.0
        %2220 = vmatmul.mubr.f32.gmra.mrb[0].mxu0 %v1167
        %v2221 = vpop.f32.mrb[0].mxu0
        %v2222 = vadd.f32 0.0, %v2221
        %v2223 = vpop.f32.mrb[0].mxu0
        %2224 = vmatprep.mubr.f32.mxu0 0.0
        %2225 = vmatmul.mubr.f32.gmra.mrb[0].mxu0 %v1170
        %v2226 = vpop.f32.mrb[0].mxu0
        %v2227 = vadd.f32 0.0, %v2226
        %v2228 = vpop.f32.mrb[0].mxu0
        %2229 = vmatprep.mubr.f32.mxu0 0.0
        %2230 = vmatmul.mubr.f32.gmra.mrb[0].mxu0 %v1173
        %v2231 = vpop.f32.mrb[0].mxu0
        %v2232 = vadd.f32 0.0, %v2231
        %v2233 = vpop.f32.mrb[0].mxu0
        %2234 = vmatprep.mubr.f32.mxu0 0.0
        %2235 = vmatmul.mubr.f32.gmra.mrb[0].mxu0 %v1176
        %v2236 = vpop.f32.mrb[0].mxu0
        %v2237 = vadd.f32 0.0, %v2236
        %v2238 = vpop.f32.mrb[0].mxu0
        %2239 = vdwg.mxu0
        %v2240 = vadd.f32 %v1915, %v2111
        %v2241 = vadd.f32 %v1917, %v2113
        %v2242 = vadd.f32 %v2016, %v2212
        %v2243 = vadd.f32 %v1921, %v2117
        %v2244 = vadd.f32 %v1923, %v2119
        %v2245 = vadd.f32 %v2021, %v2217
        %v2246 = vadd.f32 %v1927, %v2123
        %v2247 = vadd.f32 %v1929, %v2125
        %v2248 = vadd.f32 %v2026, %v2222
        %v2249 = vadd.f32 %v1933, %v2129
        %v2250 = vadd.f32 %v1935, %v2131
        %v2251 = vadd.f32 %v2031, %v2227
        %v2252 = vadd.f32 %v1939, %v2135
        %v2253 = vadd.f32 %v1941, %v2137
        %v2254 = vadd.f32 %v2036, %v2232
        %v2255 = vadd.f32 %v1945, %v2141
        %v2256 = vadd.f32 %v1947, %v2143
        %v2257 = vadd.f32 %v2041, %v2237
        %2258 = vmatprep.subr.mxu0 %v1140
        %2259 = vmatpush1.msra.mxu0 %v1139
        %2260 = vmatprep.subr.mxu0 %v1143
        %2261 = vmatpush1.msra.mxu0 %v1142
        %2262 = vmatprep.subr.mxu0 %v1146
        %2263 = vmatpush1.msra.mxu0 %v1145
        %2264 = vmatprep.subr.mxu0 %v1149
        %2265 = vmatpush1.msra.mxu0 %v1148
        %2266 = vmatprep.subr.mxu0 %v1152
        %2267 = vmatpush1.msra.mxu0 %v1151
        %2268 = vmatprep.subr.mxu0 %v1155
        %2269 = vmatpush1.msra.mxu0 %v1154
        %2270 = vmatprep.subr.mxu0 %v1158
        %2271 = vmatpush1.msra.mxu0 %v1157
        %2272 = vmatprep.subr.mxu0 0.0
        %2273 = vmatpush1.msra.mxu0 0.0
        %2274 = vmatprep.subr.mxu0 0.0
        %2275 = vmatpush1.msra.mxu0 0.0
        %2276 = vmatprep.subr.mxu0 0.0
        %2277 = vmatpush1.msra.mxu0 0.0
        %2278 = vmatprep.subr.mxu0 0.0
        %2279 = vmatpush1.msra.mxu0 0.0
        %2280 = vmatprep.subr.mxu0 0.0
        %2281 = vmatpush1.msra.mxu0 0.0
        %2282 = vmatprep.subr.mxu0 0.0
        %2283 = vmatpush1.msra.mxu0 0.0
        %2284 = vmatprep.subr.mxu0 0.0
        %2285 = vmatpush1.msra.mxu0 0.0
        %2286 = vmatprep.subr.mxu0 0.0
        %2287 = vmatpush1.msra.mxu0 0.0
        %2288 = vmatprep.subr.mxu0 0.0
        %2289 = vmatpush1.msra.mxu0 0.0
        %2290 = vmatprep.subr.mxu0 0.0
        %2291 = vmatpush1.msra.mxu0 0.0
        %2292 = vmatprep.subr.mxu0 0.0
        %2293 = vmatpush1.msra.mxu0 0.0
        %2294 = vmatprep.subr.mxu0 0.0
        %2295 = vmatpush1.msra.mxu0 0.0
        %2296 = vmatprep.subr.mxu0 0.0
        %2297 = vmatpush1.msra.mxu0 0.0
        %2298 = vmatprep.subr.mxu0 0.0
        %2299 = vmatpush1.msra.mxu0 0.0
        %2300 = vmatprep.subr.mxu0 0.0
        %2301 = vmatpush1.msra.mxu0 0.0
        %2302 = vmatprep.subr.mxu0 0.0
        %2303 = vmatpush1.msra.mxu0 0.0
        %2304 = vmatprep.subr.mxu0 0.0
        %2305 = vmatpush1.msra.mxu0 0.0
        %2306 = vmatprep.subr.mxu0 0.0
        %2307 = vmatpush1.msra.mxu0 0.0
        %2308 = vmatprep.subr.mxu0 0.0
        %2309 = vmatpush1.msra.mxu0 0.0
        %2310 = vmatprep.subr.mxu0 0.0
        %2311 = vmatpush1.msra.mxu0 0.0
        %2312 = vmatprep.subr.mxu0 0.0
        %2313 = vmatpush1.msra.mxu0 0.0
        %2314 = vmatprep.subr.mxu0 0.0
        %2315 = vmatpush1.msra.mxu0 0.0
        %2316 = vmatprep.subr.mxu0 0.0
        %2317 = vmatpush1.msra.mxu0 0.0
        %2318 = vmatprep.subr.mxu0 0.0
        %2319 = vmatpush1.msra.mxu0 0.0
        %2320 = vmatprep.subr.mxu0 0.0
        %2321 = vmatpush1.msra.mxu0 0.0
        %2322 = vmatprep.mubr.f32.mxu0 0.0
        %2323 = vmatmul.mubr.f32.gmra.mrb[0].mxu0 %v1421
        %v2324 = vpop.f32.mrb[0].mxu0
        %v2325 = vadd.f32 0.0, %v2324
        %v2326 = vpop.f32.mrb[0].mxu0
        %v2327 = vadd.f32 0.0, %v2326
        %2328 = vmatprep.mubr.f32.mxu0 0.0
        %2329 = vmatmul.mubr.f32.gmra.mrb[0].mxu0 %v1424
        %v2330 = vpop.f32.mrb[0].mxu0
        %v2331 = vadd.f32 0.0, %v2330
        %v2332 = vpop.f32.mrb[0].mxu0
        %v2333 = vadd.f32 0.0, %v2332
        %2334 = vmatprep.mubr.f32.mxu0 0.0
        %2335 = vmatmul.mubr.f32.gmra.mrb[0].mxu0 %v1427
        %v2336 = vpop.f32.mrb[0].mxu0
        %v2337 = vadd.f32 0.0, %v2336
        %v2338 = vpop.f32.mrb[0].mxu0
        %v2339 = vadd.f32 0.0, %v2338
        %2340 = vmatprep.mubr.f32.mxu0 0.0
        %2341 = vmatmul.mubr.f32.gmra.mrb[0].mxu0 %v1430
        %v2342 = vpop.f32.mrb[0].mxu0
        %v2343 = vadd.f32 0.0, %v2342
        %v2344 = vpop.f32.mrb[0].mxu0
        %v2345 = vadd.f32 0.0, %v2344
        %2346 = vmatprep.mubr.f32.mxu0 0.0
        %2347 = vmatmul.mubr.f32.gmra.mrb[0].mxu0 %v1433
        %v2348 = vpop.f32.mrb[0].mxu0
        %v2349 = vadd.f32 0.0, %v2348
        %v2350 = vpop.f32.mrb[0].mxu0
        %v2351 = vadd.f32 0.0, %v2350
        %2352 = vmatprep.mubr.f32.mxu0 0.0
        %2353 = vmatmul.mubr.f32.gmra.mrb[0].mxu0 %v1436
        %v2354 = vpop.f32.mrb[0].mxu0
        %v2355 = vadd.f32 0.0, %v2354
        %v2356 = vpop.f32.mrb[0].mxu0
        %v2357 = vadd.f32 0.0, %v2356
        %2358 = vdwg.mxu0
        %2359 = vmatprep.subr.mxu0 0.0
        %2360 = vmatpush1.msra.mxu0 %v1141
        %2361 = vmatprep.subr.mxu0 0.0
        %2362 = vmatpush1.msra.mxu0 %v1144
        %2363 = vmatprep.subr.mxu0 0.0
        %2364 = vmatpush1.msra.mxu0 %v1147
        %2365 = vmatprep.subr.mxu0 0.0
        %2366 = vmatpush1.msra.mxu0 %v1150
        %2367 = vmatprep.subr.mxu0 0.0
        %2368 = vmatpush1.msra.mxu0 %v1153
        %2369 = vmatprep.subr.mxu0 0.0
        %2370 = vmatpush1.msra.mxu0 %v1156
        %2371 = vmatprep.subr.mxu0 0.0
        %2372 = vmatpush1.msra.mxu0 %v1159
        %2373 = vmatprep.subr.mxu0 0.0
        %2374 = vmatpush1.msra.mxu0 0.0
        %2375 = vmatprep.subr.mxu0 0.0
        %2376 = vmatpush1.msra.mxu0 0.0
        %2377 = vmatprep.subr.mxu0 0.0
        %2378 = vmatpush1.msra.mxu0 0.0
        %2379 = vmatprep.subr.mxu0 0.0
        %2380 = vmatpush1.msra.mxu0 0.0
        %2381 = vmatprep.subr.mxu0 0.0
        %2382 = vmatpush1.msra.mxu0 0.0
        %2383 = vmatprep.subr.mxu0 0.0
        %2384 = vmatpush1.msra.mxu0 0.0
        %2385 = vmatprep.subr.mxu0 0.0
        %2386 = vmatpush1.msra.mxu0 0.0
        %2387 = vmatprep.subr.mxu0 0.0
        %2388 = vmatpush1.msra.mxu0 0.0
        %2389 = vmatprep.subr.mxu0 0.0
        %2390 = vmatpush1.msra.mxu0 0.0
        %2391 = vmatprep.subr.mxu0 0.0
        %2392 = vmatpush1.msra.mxu0 0.0
        %2393 = vmatprep.subr.mxu0 0.0
        %2394 = vmatpush1.msra.mxu0 0.0
        %2395 = vmatprep.subr.mxu0 0.0
        %2396 = vmatpush1.msra.mxu0 0.0
        %2397 = vmatprep.subr.mxu0 0.0
        %2398 = vmatpush1.msra.mxu0 0.0
        %2399 = vmatprep.subr.mxu0 0.0
        %2400 = vmatpush1.msra.mxu0 0.0
        %2401 = vmatprep.subr.mxu0 0.0
        %2402 = vmatpush1.msra.mxu0 0.0
        %2403 = vmatprep.subr.mxu0 0.0
        %2404 = vmatpush1.msra.mxu0 0.0
        %2405 = vmatprep.subr.mxu0 0.0
        %2406 = vmatpush1.msra.mxu0 0.0
        %2407 = vmatprep.subr.mxu0 0.0
        %2408 = vmatpush1.msra.mxu0 0.0
        %2409 = vmatprep.subr.mxu0 0.0
        %2410 = vmatpush1.msra.mxu0 0.0
        %2411 = vmatprep.subr.mxu0 0.0
        %2412 = vmatpush1.msra.mxu0 0.0
        %2413 = vmatprep.subr.mxu0 0.0
        %2414 = vmatpush1.msra.mxu0 0.0
        %2415 = vmatprep.subr.mxu0 0.0
        %2416 = vmatpush1.msra.mxu0 0.0
        %2417 = vmatprep.subr.mxu0 0.0
        %2418 = vmatpush1.msra.mxu0 0.0
        %2419 = vmatprep.subr.mxu0 0.0
        %2420 = vmatpush1.msra.mxu0 0.0
        %2421 = vmatprep.subr.mxu0 0.0
        %2422 = vmatpush1.msra.mxu0 0.0
        %2423 = vmatprep.mubr.f32.mxu0 0.0
        %2424 = vmatmul.mubr.f32.gmra.mrb[0].mxu0 %v1421
        %v2425 = vpop.f32.mrb[0].mxu0
        %v2426 = vadd.f32 0.0, %v2425
        %v2427 = vpop.f32.mrb[0].mxu0
        %2428 = vmatprep.mubr.f32.mxu0 0.0
        %2429 = vmatmul.mubr.f32.gmra.mrb[0].mxu0 %v1424
        %v2430 = vpop.f32.mrb[0].mxu0
        %v2431 = vadd.f32 0.0, %v2430
        %v2432 = vpop.f32.mrb[0].mxu0
        %2433 = vmatprep.mubr.f32.mxu0 0.0
        %2434 = vmatmul.mubr.f32.gmra.mrb[0].mxu0 %v1427
        %v2435 = vpop.f32.mrb[0].mxu0
        %v2436 = vadd.f32 0.0, %v2435
        %v2437 = vpop.f32.mrb[0].mxu0
        %2438 = vmatprep.mubr.f32.mxu0 0.0
        %2439 = vmatmul.mubr.f32.gmra.mrb[0].mxu0 %v1430
        %v2440 = vpop.f32.mrb[0].mxu0
        %v2441 = vadd.f32 0.0, %v2440
        %v2442 = vpop.f32.mrb[0].mxu0
        %2443 = vmatprep.mubr.f32.mxu0 0.0
        %2444 = vmatmul.mubr.f32.gmra.mrb[0].mxu0 %v1433
        %v2445 = vpop.f32.mrb[0].mxu0
        %v2446 = vadd.f32 0.0, %v2445
        %v2447 = vpop.f32.mrb[0].mxu0
        %2448 = vmatprep.mubr.f32.mxu0 0.0
        %2449 = vmatmul.mubr.f32.gmra.mrb[0].mxu0 %v1436
        %v2450 = vpop.f32.mrb[0].mxu0
        %v2451 = vadd.f32 0.0, %v2450
        %v2452 = vpop.f32.mrb[0].mxu0
        %2453 = vdwg.mxu0
        %v2454 = vadd.f32 %v2240, %v2325
        %v2455 = vadd.f32 %v2241, %v2327
        %v2456 = vadd.f32 %v2242, %v2426
        %v2457 = vadd.f32 %v2243, %v2331
        %v2458 = vadd.f32 %v2244, %v2333
        %v2459 = vadd.f32 %v2245, %v2431
        %v2460 = vadd.f32 %v2246, %v2337
        %v2461 = vadd.f32 %v2247, %v2339
        %v2462 = vadd.f32 %v2248, %v2436
        %v2463 = vadd.f32 %v2249, %v2343
        %v2464 = vadd.f32 %v2250, %v2345
        %v2465 = vadd.f32 %v2251, %v2441
        %v2466 = vadd.f32 %v2252, %v2349
        %v2467 = vadd.f32 %v2253, %v2351
        %v2468 = vadd.f32 %v2254, %v2446
        %v2469 = vadd.f32 %v2255, %v2355
        %v2470 = vadd.f32 %v2256, %v2357
        %v2471 = vadd.f32 %v2257, %v2451
        %v2472 = vld [vmem:[%s412 + $0x8] sm:$0xff]
        %v2473 = vld [vmem:[%s412 + $0x10] sm:$0xff]
        %v2474 = vld [vmem:[%s412 + $0x18] sm:$0xff]
        %v2475 = vld [vmem:[%s412 + $0x20] sm:$0xff]
        %v2476 = vld [vmem:[%s412 + $0x28] sm:$0xff]
        %v2477 = vld [vmem:[%s412 + $0x30] sm:$0xff]
        %v2479 = vsel %vm441, %v2472, 0
        %v2482 = vsel %vm441, %v2473, 0
        %v2485 = vsel %vm441, %v2474, 0
        %v2488 = vsel %vm441, %v2475, 0
        %v2491 = vsel %vm441, %v2476, 0
        %v2494 = vsel %vm441, %v2477, 0
        %2496 = vmatprep.subr.mxu0 %v1400
        %2497 = vmatpush1.msra.mxu0 %v1399
        %2498 = vmatprep.subr.mxu0 %v1403
        %2499 = vmatpush1.msra.mxu0 %v1402
        %2500 = vmatprep.subr.mxu0 %v1406
        %2501 = vmatpush1.msra.mxu0 %v1405
        %2502 = vmatprep.subr.mxu0 %v1409
        %2503 = vmatpush1.msra.mxu0 %v1408
        %2504 = vmatprep.subr.mxu0 %v1412
        %2505 = vmatpush1.msra.mxu0 %v1411
        %2506 = vmatprep.subr.mxu0 %v1415
        %2507 = vmatpush1.msra.mxu0 %v1414
        %2508 = vmatprep.subr.mxu0 %v1418
        %2509 = vmatpush1.msra.mxu0 %v1417
        %2510 = vmatprep.subr.mxu0 0.0
        %2511 = vmatpush1.msra.mxu0 0.0
        %2512 = vmatprep.subr.mxu0 0.0
        %2513 = vmatpush1.msra.mxu0 0.0
        %2514 = vmatprep.subr.mxu0 0.0
        %2515 = vmatpush1.msra.mxu0 0.0
        %2516 = vmatprep.subr.mxu0 0.0
        %2517 = vmatpush1.msra.mxu0 0.0
        %2518 = vmatprep.subr.mxu0 0.0
        %2519 = vmatpush1.msra.mxu0 0.0
        %2520 = vmatprep.subr.mxu0 0.0
        %2521 = vmatpush1.msra.mxu0 0.0
        %2522 = vmatprep.subr.mxu0 0.0
        %2523 = vmatpush1.msra.mxu0 0.0
        %2524 = vmatprep.subr.mxu0 0.0
        %2525 = vmatpush1.msra.mxu0 0.0
        %2526 = vmatprep.subr.mxu0 0.0
        %2527 = vmatpush1.msra.mxu0 0.0
        %2528 = vmatprep.subr.mxu0 0.0
        %2529 = vmatpush1.msra.mxu0 0.0
        %2530 = vmatprep.subr.mxu0 0.0
        %2531 = vmatpush1.msra.mxu0 0.0
        %2532 = vmatprep.subr.mxu0 0.0
        %2533 = vmatpush1.msra.mxu0 0.0
        %2534 = vmatprep.subr.mxu0 0.0
        %2535 = vmatpush1.msra.mxu0 0.0
        %2536 = vmatprep.subr.mxu0 0.0
        %2537 = vmatpush1.msra.mxu0 0.0
        %2538 = vmatprep.subr.mxu0 0.0
        %2539 = vmatpush1.msra.mxu0 0.0
        %2540 = vmatprep.subr.mxu0 0.0
        %2541 = vmatpush1.msra.mxu0 0.0
        %2542 = vmatprep.subr.mxu0 0.0
        %2543 = vmatpush1.msra.mxu0 0.0
        %2544 = vmatprep.subr.mxu0 0.0
        %2545 = vmatpush1.msra.mxu0 0.0
        %2546 = vmatprep.subr.mxu0 0.0
        %2547 = vmatpush1.msra.mxu0 0.0
        %2548 = vmatprep.subr.mxu0 0.0
        %2549 = vmatpush1.msra.mxu0 0.0
        %2550 = vmatprep.subr.mxu0 0.0
        %2551 = vmatpush1.msra.mxu0 0.0
        %2552 = vmatprep.subr.mxu0 0.0
        %2553 = vmatpush1.msra.mxu0 0.0
        %2554 = vmatprep.subr.mxu0 0.0
        %2555 = vmatpush1.msra.mxu0 0.0
        %2556 = vmatprep.subr.mxu0 0.0
        %2557 = vmatpush1.msra.mxu0 0.0
        %2558 = vmatprep.subr.mxu0 0.0
        %2559 = vmatpush1.msra.mxu0 0.0
        %2560 = vmatprep.mubr.f32.mxu0 0.0
        %2561 = vmatmul.mubr.f32.gmra.mrb[0].mxu0 %v2479
        %v2562 = vpop.f32.mrb[0].mxu0
        %v2563 = vadd.f32 0.0, %v2562
        %v2564 = vpop.f32.mrb[0].mxu0
        %v2565 = vadd.f32 0.0, %v2564
        %2566 = vmatprep.mubr.f32.mxu0 0.0
        %2567 = vmatmul.mubr.f32.gmra.mrb[0].mxu0 %v2482
        %v2568 = vpop.f32.mrb[0].mxu0
        %v2569 = vadd.f32 0.0, %v2568
        %v2570 = vpop.f32.mrb[0].mxu0
        %v2571 = vadd.f32 0.0, %v2570
        %2572 = vmatprep.mubr.f32.mxu0 0.0
        %2573 = vmatmul.mubr.f32.gmra.mrb[0].mxu0 %v2485
        %v2574 = vpop.f32.mrb[0].mxu0
        %v2575 = vadd.f32 0.0, %v2574
        %v2576 = vpop.f32.mrb[0].mxu0
        %v2577 = vadd.f32 0.0, %v2576
        %2578 = vmatprep.mubr.f32.mxu0 0.0
        %2579 = vmatmul.mubr.f32.gmra.mrb[0].mxu0 %v2488
        %v2580 = vpop.f32.mrb[0].mxu0
        %v2581 = vadd.f32 0.0, %v2580
        %v2582 = vpop.f32.mrb[0].mxu0
        %v2583 = vadd.f32 0.0, %v2582
        %2584 = vmatprep.mubr.f32.mxu0 0.0
        %2585 = vmatmul.mubr.f32.gmra.mrb[0].mxu0 %v2491
        %v2586 = vpop.f32.mrb[0].mxu0
        %v2587 = vadd.f32 0.0, %v2586
        %v2588 = vpop.f32.mrb[0].mxu0
        %v2589 = vadd.f32 0.0, %v2588
        %2590 = vmatprep.mubr.f32.mxu0 0.0
        %2591 = vmatmul.mubr.f32.gmra.mrb[0].mxu0 %v2494
        %v2592 = vpop.f32.mrb[0].mxu0
        %v2593 = vadd.f32 0.0, %v2592
        %v2594 = vpop.f32.mrb[0].mxu0
        %v2595 = vadd.f32 0.0, %v2594
        %2596 = vdwg.mxu0
        %2597 = vmatprep.subr.mxu0 0.0
        %2598 = vmatpush1.msra.mxu0 %v1401
        %2599 = vmatprep.subr.mxu0 0.0
        %2600 = vmatpush1.msra.mxu0 %v1404
        %2601 = vmatprep.subr.mxu0 0.0
        %2602 = vmatpush1.msra.mxu0 %v1407
        %2603 = vmatprep.subr.mxu0 0.0
        %2604 = vmatpush1.msra.mxu0 %v1410
        %2605 = vmatprep.subr.mxu0 0.0
        %2606 = vmatpush1.msra.mxu0 %v1413
        %2607 = vmatprep.subr.mxu0 0.0
        %2608 = vmatpush1.msra.mxu0 %v1416
        %2609 = vmatprep.subr.mxu0 0.0
        %2610 = vmatpush1.msra.mxu0 %v1419
        %2611 = vmatprep.subr.mxu0 0.0
        %2612 = vmatpush1.msra.mxu0 0.0
        %2613 = vmatprep.subr.mxu0 0.0
        %2614 = vmatpush1.msra.mxu0 0.0
        %2615 = vmatprep.subr.mxu0 0.0
        %2616 = vmatpush1.msra.mxu0 0.0
        %2617 = vmatprep.subr.mxu0 0.0
        %2618 = vmatpush1.msra.mxu0 0.0
        %2619 = vmatprep.subr.mxu0 0.0
        %2620 = vmatpush1.msra.mxu0 0.0
        %2621 = vmatprep.subr.mxu0 0.0
        %2622 = vmatpush1.msra.mxu0 0.0
        %2623 = vmatprep.subr.mxu0 0.0
        %2624 = vmatpush1.msra.mxu0 0.0
        %2625 = vmatprep.subr.mxu0 0.0
        %2626 = vmatpush1.msra.mxu0 0.0
        %2627 = vmatprep.subr.mxu0 0.0
        %2628 = vmatpush1.msra.mxu0 0.0
        %2629 = vmatprep.subr.mxu0 0.0
        %2630 = vmatpush1.msra.mxu0 0.0
        %2631 = vmatprep.subr.mxu0 0.0
        %2632 = vmatpush1.msra.mxu0 0.0
        %2633 = vmatprep.subr.mxu0 0.0
        %2634 = vmatpush1.msra.mxu0 0.0
        %2635 = vmatprep.subr.mxu0 0.0
        %2636 = vmatpush1.msra.mxu0 0.0
        %2637 = vmatprep.subr.mxu0 0.0
        %2638 = vmatpush1.msra.mxu0 0.0
        %2639 = vmatprep.subr.mxu0 0.0
        %2640 = vmatpush1.msra.mxu0 0.0
        %2641 = vmatprep.subr.mxu0 0.0
        %2642 = vmatpush1.msra.mxu0 0.0
        %2643 = vmatprep.subr.mxu0 0.0
        %2644 = vmatpush1.msra.mxu0 0.0
        %2645 = vmatprep.subr.mxu0 0.0
        %2646 = vmatpush1.msra.mxu0 0.0
        %2647 = vmatprep.subr.mxu0 0.0
        %2648 = vmatpush1.msra.mxu0 0.0
        %2649 = vmatprep.subr.mxu0 0.0
        %2650 = vmatpush1.msra.mxu0 0.0
        %2651 = vmatprep.subr.mxu0 0.0
        %2652 = vmatpush1.msra.mxu0 0.0
        %2653 = vmatprep.subr.mxu0 0.0
        %2654 = vmatpush1.msra.mxu0 0.0
        %2655 = vmatprep.subr.mxu0 0.0
        %2656 = vmatpush1.msra.mxu0 0.0
        %2657 = vmatprep.subr.mxu0 0.0
        %2658 = vmatpush1.msra.mxu0 0.0
        %2659 = vmatprep.subr.mxu0 0.0
        %2660 = vmatpush1.msra.mxu0 0.0
        %2661 = vmatprep.mubr.f32.mxu0 0.0
        %2662 = vmatmul.mubr.f32.gmra.mrb[0].mxu0 %v2479
        %v2663 = vpop.f32.mrb[0].mxu0
        %v2664 = vadd.f32 0.0, %v2663
        %v2665 = vpop.f32.mrb[0].mxu0
        %2666 = vmatprep.mubr.f32.mxu0 0.0
        %2667 = vmatmul.mubr.f32.gmra.mrb[0].mxu0 %v2482
        %v2668 = vpop.f32.mrb[0].mxu0
        %v2669 = vadd.f32 0.0, %v2668
        %v2670 = vpop.f32.mrb[0].mxu0
        %2671 = vmatprep.mubr.f32.mxu0 0.0
        %2672 = vmatmul.mubr.f32.gmra.mrb[0].mxu0 %v2485
        %v2673 = vpop.f32.mrb[0].mxu0
        %v2674 = vadd.f32 0.0, %v2673
        %v2675 = vpop.f32.mrb[0].mxu0
        %2676 = vmatprep.mubr.f32.mxu0 0.0
        %2677 = vmatmul.mubr.f32.gmra.mrb[0].mxu0 %v2488
        %v2678 = vpop.f32.mrb[0].mxu0
        %v2679 = vadd.f32 0.0, %v2678
        %v2680 = vpop.f32.mrb[0].mxu0
        %2681 = vmatprep.mubr.f32.mxu0 0.0
        %2682 = vmatmul.mubr.f32.gmra.mrb[0].mxu0 %v2491
        %v2683 = vpop.f32.mrb[0].mxu0
        %v2684 = vadd.f32 0.0, %v2683
        %v2685 = vpop.f32.mrb[0].mxu0
        %2686 = vmatprep.mubr.f32.mxu0 0.0
        %2687 = vmatmul.mubr.f32.gmra.mrb[0].mxu0 %v2494
        %v2688 = vpop.f32.mrb[0].mxu0
        %v2689 = vadd.f32 0.0, %v2688
        %v2690 = vpop.f32.mrb[0].mxu0
        %2691 = vdwg.mxu0
        %v2692 = vadd.f32 %v2454, %v2563
        %v2693 = vadd.f32 %v2455, %v2565
        %v2694 = vadd.f32 %v2456, %v2664
        %v2695 = vadd.f32 %v2457, %v2569
        %v2696 = vadd.f32 %v2458, %v2571
        %v2697 = vadd.f32 %v2459, %v2669
        %v2698 = vadd.f32 %v2460, %v2575
        %v2699 = vadd.f32 %v2461, %v2577
        %v2700 = vadd.f32 %v2462, %v2674
        %v2701 = vadd.f32 %v2463, %v2581
        %v2702 = vadd.f32 %v2464, %v2583
        %v2703 = vadd.f32 %v2465, %v2679
        %v2704 = vadd.f32 %v2466, %v2587
        %v2705 = vadd.f32 %v2467, %v2589
        %v2706 = vadd.f32 %v2468, %v2684
        %v2707 = vadd.f32 %v2469, %v2593
        %v2708 = vadd.f32 %v2470, %v2595
        %v2709 = vadd.f32 %v2471, %v2689
        %v2710 = vmax.f32 %v1634, %v2692
        %v2711 = vmax.f32 %v1635, %v2693
        %v2712 = vmax.f32 %v1636, %v2694
        %v2713 = vmax.f32 %v1637, %v2695
        %v2714 = vmax.f32 %v1638, %v2696
        %v2715 = vmax.f32 %v1639, %v2697
        %v2716 = vmax.f32 %v1640, %v2698
        %v2717 = vmax.f32 %v1641, %v2699
        %v2718 = vmax.f32 %v1642, %v2700
        %v2719 = vmax.f32 %v1643, %v2701
        %v2720 = vmax.f32 %v1644, %v2702
        %v2721 = vmax.f32 %v1645, %v2703
        %v2722 = vmax.f32 %v1646, %v2704
        %v2723 = vmax.f32 %v1647, %v2705
        %v2724 = vmax.f32 %v1648, %v2706
        %v2725 = vmax.f32 %v1649, %v2707
        %v2726 = vmax.f32 %v1650, %v2708
        %v2727 = vmax.f32 %v1651, %v2709
        %2740 = vrot.lane.b32.xlu0 %v2711, 100
        %v2741 = vpop.permute.xlu0 %2740
        %2742 = vrot.lane.b32.xlu0 %v2712, 100
        %v2743 = vpop.permute.xlu0 %2742
        %2744 = vrot.lane.b32.xlu0 %v2714, 100
        %v2745 = vpop.permute.xlu0 %2744
        %2746 = vrot.lane.b32.xlu0 %v2715, 100
        %v2747 = vpop.permute.xlu0 %2746
        %2748 = vrot.lane.b32.xlu0 %v2717, 100
        %v2749 = vpop.permute.xlu0 %2748
        %2750 = vrot.lane.b32.xlu0 %v2718, 100
        %v2751 = vpop.permute.xlu0 %2750
        %2752 = vrot.lane.b32.xlu0 %v2720, 100
        %v2753 = vpop.permute.xlu0 %2752
        %2754 = vrot.lane.b32.xlu0 %v2721, 100
        %v2755 = vpop.permute.xlu0 %2754
        %2756 = vrot.lane.b32.xlu0 %v2723, 100
        %v2757 = vpop.permute.xlu0 %2756
        %2758 = vrot.lane.b32.xlu0 %v2724, 100
        %v2759 = vpop.permute.xlu0 %2758
        %2760 = vrot.lane.b32.xlu0 %v2726, 100
        %v2761 = vpop.permute.xlu0 %2760
        %2762 = vrot.lane.b32.xlu0 %v2727, 100
        %v2763 = vpop.permute.xlu0 %2762
        %vm2764 = vcmask 818176
        %v2765 = vsel %vm2764, %v2741, %v2743
        %v2766 = vsel %vm2764, %v2745, %v2747
        %v2767 = vsel %vm2764, %v2749, %v2751
        %v2768 = vsel %vm2764, %v2753, %v2755
        %v2769 = vsel %vm2764, %v2757, %v2759
        %v2770 = vsel %vm2764, %v2761, %v2763
        %v2783 = vmax.f32 %v2710, %v2765
        %v2784 = vmax.f32 %v2711, %v2743
        %v2785 = vmax.f32 %v2713, %v2766
        %v2786 = vmax.f32 %v2714, %v2747
        %v2787 = vmax.f32 %v2716, %v2767
        %v2788 = vmax.f32 %v2717, %v2751
        %v2789 = vmax.f32 %v2719, %v2768
        %v2790 = vmax.f32 %v2720, %v2755
        %v2791 = vmax.f32 %v2722, %v2769
        %v2792 = vmax.f32 %v2723, %v2759
        %v2793 = vmax.f32 %v2725, %v2770
        %v2794 = vmax.f32 %v2726, %v2763
        %v2795 = vld [vmem:[%s2] sm:$0x3]
        %v2797 = vlaneseq
        %v2798 = vshrl.u32 %v2797, 7
        %v2799 = vsub.s32 0, %v2798
        %v2800 = vrot.slane %v2795, %v2799
        %v2801 = vlaneseq
        %v2802 = vshrl.u32 %v2801, 7
        %v2803 = vsub.s32 1, %v2802
        %v2804 = vrot.slane %v2795, %v2803
        %v2807 = vadd.f32 %v2783, %v2800
        %v2808 = vadd.f32 %v2784, %v2804
        %v2809 = vadd.f32 %v2785, %v2800
        %v2810 = vadd.f32 %v2786, %v2804
        %v2811 = vadd.f32 %v2787, %v2800
        %v2812 = vadd.f32 %v2788, %v2804
        %v2813 = vadd.f32 %v2789, %v2800
        %v2814 = vadd.f32 %v2790, %v2804
        %v2815 = vadd.f32 %v2791, %v2800
        %v2816 = vadd.f32 %v2792, %v2804
        %v2817 = vadd.f32 %v2793, %v2800
        %v2818 = vadd.f32 %v2794, %v2804
        %v2819 = vmax.f32 %v2807, 0.0
        %v2820 = vmax.f32 %v2808, 0.0
        %v2821 = vmax.f32 %v2809, 0.0
        %v2822 = vmax.f32 %v2810, 0.0
        %v2823 = vmax.f32 %v2811, 0.0
        %v2824 = vmax.f32 %v2812, 0.0
        %v2825 = vmax.f32 %v2813, 0.0
        %v2826 = vmax.f32 %v2814, 0.0
        %v2827 = vmax.f32 %v2815, 0.0
        %v2828 = vmax.f32 %v2816, 0.0
        %v2829 = vmax.f32 %v2817, 0.0
        %v2830 = vmax.f32 %v2818, 0.0
        %2831 = vmatprep.subr.mxu0 %v421
        %2832 = vmatpush1.msra.mxu0 %v420
        %2833 = vmatprep.subr.mxu0 %v424
        %2834 = vmatpush1.msra.mxu0 %v423
        %2835 = vmatprep.subr.mxu0 %v427
        %2836 = vmatpush1.msra.mxu0 %v426
        %2837 = vmatprep.subr.mxu0 %v430
        %2838 = vmatpush1.msra.mxu0 %v429
        %2839 = vmatprep.subr.mxu0 %v433
        %2840 = vmatpush1.msra.mxu0 %v432
        %2841 = vmatprep.subr.mxu0 %v436
        %2842 = vmatpush1.msra.mxu0 %v435
        %2843 = vmatprep.subr.mxu0 %v439
        %2844 = vmatpush1.msra.mxu0 %v438
        %2845 = vmatprep.subr.mxu0 0.0
        %2846 = vmatpush1.msra.mxu0 0.0
        %2847 = vmatprep.subr.mxu0 0.0
        %2848 = vmatpush1.msra.mxu0 0.0
        %2849 = vmatprep.subr.mxu0 0.0
        %2850 = vmatpush1.msra.mxu0 0.0
        %2851 = vmatprep.subr.mxu0 0.0
        %2852 = vmatpush1.msra.mxu0 0.0
        %2853 = vmatprep.subr.mxu0 0.0
        %2854 = vmatpush1.msra.mxu0 0.0
        %2855 = vmatprep.subr.mxu0 0.0
        %2856 = vmatpush1.msra.mxu0 0.0
        %2857 = vmatprep.subr.mxu0 0.0
        %2858 = vmatpush1.msra.mxu0 0.0
        %2859 = vmatprep.subr.mxu0 0.0
        %2860 = vmatpush1.msra.mxu0 0.0
        %2861 = vmatprep.subr.mxu0 0.0
        %2862 = vmatpush1.msra.mxu0 0.0
        %2863 = vmatprep.subr.mxu0 0.0
        %2864 = vmatpush1.msra.mxu0 0.0
        %2865 = vmatprep.subr.mxu0 0.0
        %2866 = vmatpush1.msra.mxu0 0.0
        %2867 = vmatprep.subr.mxu0 0.0
        %2868 = vmatpush1.msra.mxu0 0.0
        %2869 = vmatprep.subr.mxu0 0.0
        %2870 = vmatpush1.msra.mxu0 0.0
        %2871 = vmatprep.subr.mxu0 0.0
        %2872 = vmatpush1.msra.mxu0 0.0
        %2873 = vmatprep.subr.mxu0 0.0
        %2874 = vmatpush1.msra.mxu0 0.0
        %2875 = vmatprep.subr.mxu0 0.0
        %2876 = vmatpush1.msra.mxu0 0.0
        %2877 = vmatprep.subr.mxu0 0.0
        %2878 = vmatpush1.msra.mxu0 0.0
        %2879 = vmatprep.subr.mxu0 0.0
        %2880 = vmatpush1.msra.mxu0 0.0
        %2881 = vmatprep.subr.mxu0 0.0
        %2882 = vmatpush1.msra.mxu0 0.0
        %2883 = vmatprep.subr.mxu0 0.0
        %2884 = vmatpush1.msra.mxu0 0.0
        %2885 = vmatprep.subr.mxu0 0.0
        %2886 = vmatpush1.msra.mxu0 0.0
        %2887 = vmatprep.subr.mxu0 0.0
        %2888 = vmatpush1.msra.mxu0 0.0
        %2889 = vmatprep.subr.mxu0 0.0
        %2890 = vmatpush1.msra.mxu0 0.0
        %2891 = vmatprep.subr.mxu0 0.0
        %2892 = vmatpush1.msra.mxu0 0.0
        %2893 = vmatprep.subr.mxu0 0.0
        %2894 = vmatpush1.msra.mxu0 0.0
        %2895 = vmatprep.mubr.f32.mxu0 0.0
        %2896 = vmatmul.mubr.f32.gmra.mrb[0].mxu0 %v1161
        %v2897 = vpop.f32.mrb[0].mxu0
        %v2898 = vadd.f32 0.0, %v2897
        %v2899 = vpop.f32.mrb[0].mxu0
        %v2900 = vadd.f32 0.0, %v2899
        %2901 = vmatprep.mubr.f32.mxu0 0.0
        %2902 = vmatmul.mubr.f32.gmra.mrb[0].mxu0 %v1164
        %v2903 = vpop.f32.mrb[0].mxu0
        %v2904 = vadd.f32 0.0, %v2903
        %v2905 = vpop.f32.mrb[0].mxu0
        %v2906 = vadd.f32 0.0, %v2905
        %2907 = vmatprep.mubr.f32.mxu0 0.0
        %2908 = vmatmul.mubr.f32.gmra.mrb[0].mxu0 %v1167
        %v2909 = vpop.f32.mrb[0].mxu0
        %v2910 = vadd.f32 0.0, %v2909
        %v2911 = vpop.f32.mrb[0].mxu0
        %v2912 = vadd.f32 0.0, %v2911
        %2913 = vmatprep.mubr.f32.mxu0 0.0
        %2914 = vmatmul.mubr.f32.gmra.mrb[0].mxu0 %v1170
        %v2915 = vpop.f32.mrb[0].mxu0
        %v2916 = vadd.f32 0.0, %v2915
        %v2917 = vpop.f32.mrb[0].mxu0
        %v2918 = vadd.f32 0.0, %v2917
        %2919 = vmatprep.mubr.f32.mxu0 0.0
        %2920 = vmatmul.mubr.f32.gmra.mrb[0].mxu0 %v1173
        %v2921 = vpop.f32.mrb[0].mxu0
        %v2922 = vadd.f32 0.0, %v2921
        %v2923 = vpop.f32.mrb[0].mxu0
        %v2924 = vadd.f32 0.0, %v2923
        %2925 = vmatprep.mubr.f32.mxu0 0.0
        %2926 = vmatmul.mubr.f32.gmra.mrb[0].mxu0 %v1176
        %v2927 = vpop.f32.mrb[0].mxu0
        %v2928 = vadd.f32 0.0, %v2927
        %v2929 = vpop.f32.mrb[0].mxu0
        %v2930 = vadd.f32 0.0, %v2929
        %2931 = vdwg.mxu0
        %2932 = vmatprep.subr.mxu0 0.0
        %2933 = vmatpush1.msra.mxu0 %v422
        %2934 = vmatprep.subr.mxu0 0.0
        %2935 = vmatpush1.msra.mxu0 %v425
        %2936 = vmatprep.subr.mxu0 0.0
        %2937 = vmatpush1.msra.mxu0 %v428
        %2938 = vmatprep.subr.mxu0 0.0
        %2939 = vmatpush1.msra.mxu0 %v431
        %2940 = vmatprep.subr.mxu0 0.0
        %2941 = vmatpush1.msra.mxu0 %v434
        %2942 = vmatprep.subr.mxu0 0.0
        %2943 = vmatpush1.msra.mxu0 %v437
        %2944 = vmatprep.subr.mxu0 0.0
        %2945 = vmatpush1.msra.mxu0 %v440
        %2946 = vmatprep.subr.mxu0 0.0
        %2947 = vmatpush1.msra.mxu0 0.0
        %2948 = vmatprep.subr.mxu0 0.0
        %2949 = vmatpush1.msra.mxu0 0.0
        %2950 = vmatprep.subr.mxu0 0.0
        %2951 = vmatpush1.msra.mxu0 0.0
        %2952 = vmatprep.subr.mxu0 0.0
        %2953 = vmatpush1.msra.mxu0 0.0
        %2954 = vmatprep.subr.mxu0 0.0
        %2955 = vmatpush1.msra.mxu0 0.0
        %2956 = vmatprep.subr.mxu0 0.0
        %2957 = vmatpush1.msra.mxu0 0.0
        %2958 = vmatprep.subr.mxu0 0.0
        %2959 = vmatpush1.msra.mxu0 0.0
        %2960 = vmatprep.subr.mxu0 0.0
        %2961 = vmatpush1.msra.mxu0 0.0
        %2962 = vmatprep.subr.mxu0 0.0
        %2963 = vmatpush1.msra.mxu0 0.0
        %2964 = vmatprep.subr.mxu0 0.0
        %2965 = vmatpush1.msra.mxu0 0.0
        %2966 = vmatprep.subr.mxu0 0.0
        %2967 = vmatpush1.msra.mxu0 0.0
        %2968 = vmatprep.subr.mxu0 0.0
        %2969 = vmatpush1.msra.mxu0 0.0
        %2970 = vmatprep.subr.mxu0 0.0
        %2971 = vmatpush1.msra.mxu0 0.0
        %2972 = vmatprep.subr.mxu0 0.0
        %2973 = vmatpush1.msra.mxu0 0.0
        %2974 = vmatprep.subr.mxu0 0.0
        %2975 = vmatpush1.msra.mxu0 0.0
        %2976 = vmatprep.subr.mxu0 0.0
        %2977 = vmatpush1.msra.mxu0 0.0
        %2978 = vmatprep.subr.mxu0 0.0
        %2979 = vmatpush1.msra.mxu0 0.0
        %2980 = vmatprep.subr.mxu0 0.0
        %2981 = vmatpush1.msra.mxu0 0.0
        %2982 = vmatprep.subr.mxu0 0.0
        %2983 = vmatpush1.msra.mxu0 0.0
        %2984 = vmatprep.subr.mxu0 0.0
        %2985 = vmatpush1.msra.mxu0 0.0
        %2986 = vmatprep.subr.mxu0 0.0
        %2987 = vmatpush1.msra.mxu0 0.0
        %2988 = vmatprep.subr.mxu0 0.0
        %2989 = vmatpush1.msra.mxu0 0.0
        %2990 = vmatprep.subr.mxu0 0.0
        %2991 = vmatpush1.msra.mxu0 0.0
        %2992 = vmatprep.subr.mxu0 0.0
        %2993 = vmatpush1.msra.mxu0 0.0
        %2994 = vmatprep.subr.mxu0 0.0
        %2995 = vmatpush1.msra.mxu0 0.0
        %2996 = vmatprep.mubr.f32.mxu0 0.0
        %2997 = vmatmul.mubr.f32.gmra.mrb[0].mxu0 %v1161
        %v2998 = vpop.f32.mrb[0].mxu0
        %v2999 = vadd.f32 0.0, %v2998
        %v3000 = vpop.f32.mrb[0].mxu0
        %3001 = vmatprep.mubr.f32.mxu0 0.0
        %3002 = vmatmul.mubr.f32.gmra.mrb[0].mxu0 %v1164
        %v3003 = vpop.f32.mrb[0].mxu0
        %v3004 = vadd.f32 0.0, %v3003
        %v3005 = vpop.f32.mrb[0].mxu0
        %3006 = vmatprep.mubr.f32.mxu0 0.0
        %3007 = vmatmul.mubr.f32.gmra.mrb[0].mxu0 %v1167
        %v3008 = vpop.f32.mrb[0].mxu0
        %v3009 = vadd.f32 0.0, %v3008
        %v3010 = vpop.f32.mrb[0].mxu0
        %3011 = vmatprep.mubr.f32.mxu0 0.0
        %3012 = vmatmul.mubr.f32.gmra.mrb[0].mxu0 %v1170
        %v3013 = vpop.f32.mrb[0].mxu0
        %v3014 = vadd.f32 0.0, %v3013
        %v3015 = vpop.f32.mrb[0].mxu0
        %3016 = vmatprep.mubr.f32.mxu0 0.0
        %3017 = vmatmul.mubr.f32.gmra.mrb[0].mxu0 %v1173
        %v3018 = vpop.f32.mrb[0].mxu0
        %v3019 = vadd.f32 0.0, %v3018
        %v3020 = vpop.f32.mrb[0].mxu0
        %3021 = vmatprep.mubr.f32.mxu0 0.0
        %3022 = vmatmul.mubr.f32.gmra.mrb[0].mxu0 %v1176
        %v3023 = vpop.f32.mrb[0].mxu0
        %v3024 = vadd.f32 0.0, %v3023
        %v3025 = vpop.f32.mrb[0].mxu0
        %3026 = vdwg.mxu0
        %3027 = vmatprep.subr.mxu0 %v392
        %3028 = vmatpush1.msra.mxu0 %v391
        %3029 = vmatprep.subr.mxu0 %v395
        %3030 = vmatpush1.msra.mxu0 %v394
        %3031 = vmatprep.subr.mxu0 %v398
        %3032 = vmatpush1.msra.mxu0 %v397
        %3033 = vmatprep.subr.mxu0 %v401
        %3034 = vmatpush1.msra.mxu0 %v400
        %3035 = vmatprep.subr.mxu0 %v404
        %3036 = vmatpush1.msra.mxu0 %v403
        %3037 = vmatprep.subr.mxu0 %v407
        %3038 = vmatpush1.msra.mxu0 %v406
        %3039 = vmatprep.subr.mxu0 %v410
        %3040 = vmatpush1.msra.mxu0 %v409
        %3041 = vmatprep.subr.mxu0 0.0
        %3042 = vmatpush1.msra.mxu0 0.0
        %3043 = vmatprep.subr.mxu0 0.0
        %3044 = vmatpush1.msra.mxu0 0.0
        %3045 = vmatprep.subr.mxu0 0.0
        %3046 = vmatpush1.msra.mxu0 0.0
        %3047 = vmatprep.subr.mxu0 0.0
        %3048 = vmatpush1.msra.mxu0 0.0
        %3049 = vmatprep.subr.mxu0 0.0
        %3050 = vmatpush1.msra.mxu0 0.0
        %3051 = vmatprep.subr.mxu0 0.0
        %3052 = vmatpush1.msra.mxu0 0.0
        %3053 = vmatprep.subr.mxu0 0.0
        %3054 = vmatpush1.msra.mxu0 0.0
        %3055 = vmatprep.subr.mxu0 0.0
        %3056 = vmatpush1.msra.mxu0 0.0
        %3057 = vmatprep.subr.mxu0 0.0
        %3058 = vmatpush1.msra.mxu0 0.0
        %3059 = vmatprep.subr.mxu0 0.0
        %3060 = vmatpush1.msra.mxu0 0.0
        %3061 = vmatprep.subr.mxu0 0.0
        %3062 = vmatpush1.msra.mxu0 0.0
        %3063 = vmatprep.subr.mxu0 0.0
        %3064 = vmatpush1.msra.mxu0 0.0
        %3065 = vmatprep.subr.mxu0 0.0
        %3066 = vmatpush1.msra.mxu0 0.0
        %3067 = vmatprep.subr.mxu0 0.0
        %3068 = vmatpush1.msra.mxu0 0.0
        %3069 = vmatprep.subr.mxu0 0.0
        %3070 = vmatpush1.msra.mxu0 0.0
        %3071 = vmatprep.subr.mxu0 0.0
        %3072 = vmatpush1.msra.mxu0 0.0
        %3073 = vmatprep.subr.mxu0 0.0
        %3074 = vmatpush1.msra.mxu0 0.0
        %3075 = vmatprep.subr.mxu0 0.0
        %3076 = vmatpush1.msra.mxu0 0.0
        %3077 = vmatprep.subr.mxu0 0.0
        %3078 = vmatpush1.msra.mxu0 0.0
        %3079 = vmatprep.subr.mxu0 0.0
        %3080 = vmatpush1.msra.mxu0 0.0
        %3081 = vmatprep.subr.mxu0 0.0
        %3082 = vmatpush1.msra.mxu0 0.0
        %3083 = vmatprep.subr.mxu0 0.0
        %3084 = vmatpush1.msra.mxu0 0.0
        %3085 = vmatprep.subr.mxu0 0.0
        %3086 = vmatpush1.msra.mxu0 0.0
        %3087 = vmatprep.subr.mxu0 0.0
        %3088 = vmatpush1.msra.mxu0 0.0
        %3089 = vmatprep.subr.mxu0 0.0
        %3090 = vmatpush1.msra.mxu0 0.0
        %3091 = vmatprep.mubr.f32.mxu0 0.0
        %3092 = vmatmul.mubr.f32.gmra.mrb[0].mxu0 %v900
        %v3093 = vpop.f32.mrb[0].mxu0
        %v3094 = vadd.f32 %v2898, %v3093
        %v3095 = vpop.f32.mrb[0].mxu0
        %v3096 = vadd.f32 %v2900, %v3095
        %3097 = vmatprep.mubr.f32.mxu0 0.0
        %3098 = vmatmul.mubr.f32.gmra.mrb[0].mxu0 %v903
        %v3099 = vpop.f32.mrb[0].mxu0
        %v3100 = vadd.f32 %v2904, %v3099
        %v3101 = vpop.f32.mrb[0].mxu0
        %v3102 = vadd.f32 %v2906, %v3101
        %3103 = vmatprep.mubr.f32.mxu0 0.0
        %3104 = vmatmul.mubr.f32.gmra.mrb[0].mxu0 %v906
        %v3105 = vpop.f32.mrb[0].mxu0
        %v3106 = vadd.f32 %v2910, %v3105
        %v3107 = vpop.f32.mrb[0].mxu0
        %v3108 = vadd.f32 %v2912, %v3107
        %3109 = vmatprep.mubr.f32.mxu0 0.0
        %3110 = vmatmul.mubr.f32.gmra.mrb[0].mxu0 %v909
        %v3111 = vpop.f32.mrb[0].mxu0
        %v3112 = vadd.f32 %v2916, %v3111
        %v3113 = vpop.f32.mrb[0].mxu0
        %v3114 = vadd.f32 %v2918, %v3113
        %3115 = vmatprep.mubr.f32.mxu0 0.0
        %3116 = vmatmul.mubr.f32.gmra.mrb[0].mxu0 %v912
        %v3117 = vpop.f32.mrb[0].mxu0
        %v3118 = vadd.f32 %v2922, %v3117
        %v3119 = vpop.f32.mrb[0].mxu0
        %v3120 = vadd.f32 %v2924, %v3119
        %3121 = vmatprep.mubr.f32.mxu0 0.0
        %3122 = vmatmul.mubr.f32.gmra.mrb[0].mxu0 %v915
        %v3123 = vpop.f32.mrb[0].mxu0
        %v3124 = vadd.f32 %v2928, %v3123
        %v3125 = vpop.f32.mrb[0].mxu0
        %v3126 = vadd.f32 %v2930, %v3125
        %3127 = vdwg.mxu0
        %3128 = vmatprep.subr.mxu0 0.0
        %3129 = vmatpush1.msra.mxu0 %v393
        %3130 = vmatprep.subr.mxu0 0.0
        %3131 = vmatpush1.msra.mxu0 %v396
        %3132 = vmatprep.subr.mxu0 0.0
        %3133 = vmatpush1.msra.mxu0 %v399
        %3134 = vmatprep.subr.mxu0 0.0
        %3135 = vmatpush1.msra.mxu0 %v402
        %3136 = vmatprep.subr.mxu0 0.0
        %3137 = vmatpush1.msra.mxu0 %v405
        %3138 = vmatprep.subr.mxu0 0.0
        %3139 = vmatpush1.msra.mxu0 %v408
        %3140 = vmatprep.subr.mxu0 0.0
        %3141 = vmatpush1.msra.mxu0 %v411
        %3142 = vmatprep.subr.mxu0 0.0
        %3143 = vmatpush1.msra.mxu0 0.0
        %3144 = vmatprep.subr.mxu0 0.0
        %3145 = vmatpush1.msra.mxu0 0.0
        %3146 = vmatprep.subr.mxu0 0.0
        %3147 = vmatpush1.msra.mxu0 0.0
        %3148 = vmatprep.subr.mxu0 0.0
        %3149 = vmatpush1.msra.mxu0 0.0
        %3150 = vmatprep.subr.mxu0 0.0
        %3151 = vmatpush1.msra.mxu0 0.0
        %3152 = vmatprep.subr.mxu0 0.0
        %3153 = vmatpush1.msra.mxu0 0.0
        %3154 = vmatprep.subr.mxu0 0.0
        %3155 = vmatpush1.msra.mxu0 0.0
        %3156 = vmatprep.subr.mxu0 0.0
        %3157 = vmatpush1.msra.mxu0 0.0
        %3158 = vmatprep.subr.mxu0 0.0
        %3159 = vmatpush1.msra.mxu0 0.0
        %3160 = vmatprep.subr.mxu0 0.0
        %3161 = vmatpush1.msra.mxu0 0.0
        %3162 = vmatprep.subr.mxu0 0.0
        %3163 = vmatpush1.msra.mxu0 0.0
        %3164 = vmatprep.subr.mxu0 0.0
        %3165 = vmatpush1.msra.mxu0 0.0
        %3166 = vmatprep.subr.mxu0 0.0
        %3167 = vmatpush1.msra.mxu0 0.0
        %3168 = vmatprep.subr.mxu0 0.0
        %3169 = vmatpush1.msra.mxu0 0.0
        %3170 = vmatprep.subr.mxu0 0.0
        %3171 = vmatpush1.msra.mxu0 0.0
        %3172 = vmatprep.subr.mxu0 0.0
        %3173 = vmatpush1.msra.mxu0 0.0
        %3174 = vmatprep.subr.mxu0 0.0
        %3175 = vmatpush1.msra.mxu0 0.0
        %3176 = vmatprep.subr.mxu0 0.0
        %3177 = vmatpush1.msra.mxu0 0.0
        %3178 = vmatprep.subr.mxu0 0.0
        %3179 = vmatpush1.msra.mxu0 0.0
        %3180 = vmatprep.subr.mxu0 0.0
        %3181 = vmatpush1.msra.mxu0 0.0
        %3182 = vmatprep.subr.mxu0 0.0
        %3183 = vmatpush1.msra.mxu0 0.0
        %3184 = vmatprep.subr.mxu0 0.0
        %3185 = vmatpush1.msra.mxu0 0.0
        %3186 = vmatprep.subr.mxu0 0.0
        %3187 = vmatpush1.msra.mxu0 0.0
        %3188 = vmatprep.subr.mxu0 0.0
        %3189 = vmatpush1.msra.mxu0 0.0
        %3190 = vmatprep.subr.mxu0 0.0
        %3191 = vmatpush1.msra.mxu0 0.0
        %3192 = vmatprep.mubr.f32.mxu0 0.0
        %3193 = vmatmul.mubr.f32.gmra.mrb[0].mxu0 %v900
        %v3194 = vpop.f32.mrb[0].mxu0
        %v3195 = vadd.f32 %v2999, %v3194
        %v3196 = vpop.f32.mrb[0].mxu0
        %3197 = vmatprep.mubr.f32.mxu0 0.0
        %3198 = vmatmul.mubr.f32.gmra.mrb[0].mxu0 %v903
        %v3199 = vpop.f32.mrb[0].mxu0
        %v3200 = vadd.f32 %v3004, %v3199
        %v3201 = vpop.f32.mrb[0].mxu0
        %3202 = vmatprep.mubr.f32.mxu0 0.0
        %3203 = vmatmul.mubr.f32.gmra.mrb[0].mxu0 %v906
        %v3204 = vpop.f32.mrb[0].mxu0
        %v3205 = vadd.f32 %v3009, %v3204
        %v3206 = vpop.f32.mrb[0].mxu0
        %3207 = vmatprep.mubr.f32.mxu0 0.0
        %3208 = vmatmul.mubr.f32.gmra.mrb[0].mxu0 %v909
        %v3209 = vpop.f32.mrb[0].mxu0
        %v3210 = vadd.f32 %v3014, %v3209
        %v3211 = vpop.f32.mrb[0].mxu0
        %3212 = vmatprep.mubr.f32.mxu0 0.0
        %3213 = vmatmul.mubr.f32.gmra.mrb[0].mxu0 %v912
        %v3214 = vpop.f32.mrb[0].mxu0
        %v3215 = vadd.f32 %v3019, %v3214
        %v3216 = vpop.f32.mrb[0].mxu0
        %3217 = vmatprep.mubr.f32.mxu0 0.0
        %3218 = vmatmul.mubr.f32.gmra.mrb[0].mxu0 %v915
        %v3219 = vpop.f32.mrb[0].mxu0
        %v3220 = vadd.f32 %v3024, %v3219
        %v3221 = vpop.f32.mrb[0].mxu0
        %3222 = vdwg.mxu0
        %3223 = vmatprep.subr.mxu0 %v879
        %3224 = vmatpush1.msra.mxu0 %v878
        %3225 = vmatprep.subr.mxu0 %v882
        %3226 = vmatpush1.msra.mxu0 %v881
        %3227 = vmatprep.subr.mxu0 %v885
        %3228 = vmatpush1.msra.mxu0 %v884
        %3229 = vmatprep.subr.mxu0 %v888
        %3230 = vmatpush1.msra.mxu0 %v887
        %3231 = vmatprep.subr.mxu0 %v891
        %3232 = vmatpush1.msra.mxu0 %v890
        %3233 = vmatprep.subr.mxu0 %v894
        %3234 = vmatpush1.msra.mxu0 %v893
        %3235 = vmatprep.subr.mxu0 %v897
        %3236 = vmatpush1.msra.mxu0 %v896
        %3237 = vmatprep.subr.mxu0 0.0
        %3238 = vmatpush1.msra.mxu0 0.0
        %3239 = vmatprep.subr.mxu0 0.0
        %3240 = vmatpush1.msra.mxu0 0.0
        %3241 = vmatprep.subr.mxu0 0.0
        %3242 = vmatpush1.msra.mxu0 0.0
        %3243 = vmatprep.subr.mxu0 0.0
        %3244 = vmatpush1.msra.mxu0 0.0
        %3245 = vmatprep.subr.mxu0 0.0
        %3246 = vmatpush1.msra.mxu0 0.0
        %3247 = vmatprep.subr.mxu0 0.0
        %3248 = vmatpush1.msra.mxu0 0.0
        %3249 = vmatprep.subr.mxu0 0.0
        %3250 = vmatpush1.msra.mxu0 0.0
        %3251 = vmatprep.subr.mxu0 0.0
        %3252 = vmatpush1.msra.mxu0 0.0
        %3253 = vmatprep.subr.mxu0 0.0
        %3254 = vmatpush1.msra.mxu0 0.0
        %3255 = vmatprep.subr.mxu0 0.0
        %3256 = vmatpush1.msra.mxu0 0.0
        %3257 = vmatprep.subr.mxu0 0.0
        %3258 = vmatpush1.msra.mxu0 0.0
        %3259 = vmatprep.subr.mxu0 0.0
        %3260 = vmatpush1.msra.mxu0 0.0
        %3261 = vmatprep.subr.mxu0 0.0
        %3262 = vmatpush1.msra.mxu0 0.0
        %3263 = vmatprep.subr.mxu0 0.0
        %3264 = vmatpush1.msra.mxu0 0.0
        %3265 = vmatprep.subr.mxu0 0.0
        %3266 = vmatpush1.msra.mxu0 0.0
        %3267 = vmatprep.subr.mxu0 0.0
        %3268 = vmatpush1.msra.mxu0 0.0
        %3269 = vmatprep.subr.mxu0 0.0
        %3270 = vmatpush1.msra.mxu0 0.0
        %3271 = vmatprep.subr.mxu0 0.0
        %3272 = vmatpush1.msra.mxu0 0.0
        %3273 = vmatprep.subr.mxu0 0.0
        %3274 = vmatpush1.msra.mxu0 0.0
        %3275 = vmatprep.subr.mxu0 0.0
        %3276 = vmatpush1.msra.mxu0 0.0
        %3277 = vmatprep.subr.mxu0 0.0
        %3278 = vmatpush1.msra.mxu0 0.0
        %3279 = vmatprep.subr.mxu0 0.0
        %3280 = vmatpush1.msra.mxu0 0.0
        %3281 = vmatprep.subr.mxu0 0.0
        %3282 = vmatpush1.msra.mxu0 0.0
        %3283 = vmatprep.subr.mxu0 0.0
        %3284 = vmatpush1.msra.mxu0 0.0
        %3285 = vmatprep.subr.mxu0 0.0
        %3286 = vmatpush1.msra.mxu0 0.0
        %3287 = vmatprep.mubr.f32.mxu0 0.0
        %3288 = vmatmul.mubr.f32.gmra.mrb[0].mxu0 %v1421
        %v3289 = vpop.f32.mrb[0].mxu0
        %v3290 = vadd.f32 0.0, %v3289
        %v3291 = vpop.f32.mrb[0].mxu0
        %v3292 = vadd.f32 0.0, %v3291
        %3293 = vmatprep.mubr.f32.mxu0 0.0
        %3294 = vmatmul.mubr.f32.gmra.mrb[0].mxu0 %v1424
        %v3295 = vpop.f32.mrb[0].mxu0
        %v3296 = vadd.f32 0.0, %v3295
        %v3297 = vpop.f32.mrb[0].mxu0
        %v3298 = vadd.f32 0.0, %v3297
        %3299 = vmatprep.mubr.f32.mxu0 0.0
        %3300 = vmatmul.mubr.f32.gmra.mrb[0].mxu0 %v1427
        %v3301 = vpop.f32.mrb[0].mxu0
        %v3302 = vadd.f32 0.0, %v3301
        %v3303 = vpop.f32.mrb[0].mxu0
        %v3304 = vadd.f32 0.0, %v3303
        %3305 = vmatprep.mubr.f32.mxu0 0.0
        %3306 = vmatmul.mubr.f32.gmra.mrb[0].mxu0 %v1430
        %v3307 = vpop.f32.mrb[0].mxu0
        %v3308 = vadd.f32 0.0, %v3307
        %v3309 = vpop.f32.mrb[0].mxu0
        %v3310 = vadd.f32 0.0, %v3309
        %3311 = vmatprep.mubr.f32.mxu0 0.0
        %3312 = vmatmul.mubr.f32.gmra.mrb[0].mxu0 %v1433
        %v3313 = vpop.f32.mrb[0].mxu0
        %v3314 = vadd.f32 0.0, %v3313
        %v3315 = vpop.f32.mrb[0].mxu0
        %v3316 = vadd.f32 0.0, %v3315
        %3317 = vmatprep.mubr.f32.mxu0 0.0
        %3318 = vmatmul.mubr.f32.gmra.mrb[0].mxu0 %v1436
        %v3319 = vpop.f32.mrb[0].mxu0
        %v3320 = vadd.f32 0.0, %v3319
        %v3321 = vpop.f32.mrb[0].mxu0
        %v3322 = vadd.f32 0.0, %v3321
        %3323 = vdwg.mxu0
        %3324 = vmatprep.subr.mxu0 0.0
        %3325 = vmatpush1.msra.mxu0 %v880
        %3326 = vmatprep.subr.mxu0 0.0
        %3327 = vmatpush1.msra.mxu0 %v883
        %3328 = vmatprep.subr.mxu0 0.0
        %3329 = vmatpush1.msra.mxu0 %v886
        %3330 = vmatprep.subr.mxu0 0.0
        %3331 = vmatpush1.msra.mxu0 %v889
        %3332 = vmatprep.subr.mxu0 0.0
        %3333 = vmatpush1.msra.mxu0 %v892
        %3334 = vmatprep.subr.mxu0 0.0
        %3335 = vmatpush1.msra.mxu0 %v895
        %3336 = vmatprep.subr.mxu0 0.0
        %3337 = vmatpush1.msra.mxu0 %v898
        %3338 = vmatprep.subr.mxu0 0.0
        %3339 = vmatpush1.msra.mxu0 0.0
        %3340 = vmatprep.subr.mxu0 0.0
        %3341 = vmatpush1.msra.mxu0 0.0
        %3342 = vmatprep.subr.mxu0 0.0
        %3343 = vmatpush1.msra.mxu0 0.0
        %3344 = vmatprep.subr.mxu0 0.0
        %3345 = vmatpush1.msra.mxu0 0.0
        %3346 = vmatprep.subr.mxu0 0.0
        %3347 = vmatpush1.msra.mxu0 0.0
        %3348 = vmatprep.subr.mxu0 0.0
        %3349 = vmatpush1.msra.mxu0 0.0
        %3350 = vmatprep.subr.mxu0 0.0
        %3351 = vmatpush1.msra.mxu0 0.0
        %3352 = vmatprep.subr.mxu0 0.0
        %3353 = vmatpush1.msra.mxu0 0.0
        %3354 = vmatprep.subr.mxu0 0.0
        %3355 = vmatpush1.msra.mxu0 0.0
        %3356 = vmatprep.subr.mxu0 0.0
        %3357 = vmatpush1.msra.mxu0 0.0
        %3358 = vmatprep.subr.mxu0 0.0
        %3359 = vmatpush1.msra.mxu0 0.0
        %3360 = vmatprep.subr.mxu0 0.0
        %3361 = vmatpush1.msra.mxu0 0.0
        %3362 = vmatprep.subr.mxu0 0.0
        %3363 = vmatpush1.msra.mxu0 0.0
        %3364 = vmatprep.subr.mxu0 0.0
        %3365 = vmatpush1.msra.mxu0 0.0
        %3366 = vmatprep.subr.mxu0 0.0
        %3367 = vmatpush1.msra.mxu0 0.0
        %3368 = vmatprep.subr.mxu0 0.0
        %3369 = vmatpush1.msra.mxu0 0.0
        %3370 = vmatprep.subr.mxu0 0.0
        %3371 = vmatpush1.msra.mxu0 0.0
        %3372 = vmatprep.subr.mxu0 0.0
        %3373 = vmatpush1.msra.mxu0 0.0
        %3374 = vmatprep.subr.mxu0 0.0
        %3375 = vmatpush1.msra.mxu0 0.0
        %3376 = vmatprep.subr.mxu0 0.0
        %3377 = vmatpush1.msra.mxu0 0.0
        %3378 = vmatprep.subr.mxu0 0.0
        %3379 = vmatpush1.msra.mxu0 0.0
        %3380 = vmatprep.subr.mxu0 0.0
        %3381 = vmatpush1.msra.mxu0 0.0
        %3382 = vmatprep.subr.mxu0 0.0
        %3383 = vmatpush1.msra.mxu0 0.0
        %3384 = vmatprep.subr.mxu0 0.0
        %3385 = vmatpush1.msra.mxu0 0.0
        %3386 = vmatprep.subr.mxu0 0.0
        %3387 = vmatpush1.msra.mxu0 0.0
        %3388 = vmatprep.mubr.f32.mxu0 0.0
        %3389 = vmatmul.mubr.f32.gmra.mrb[0].mxu0 %v1421
        %v3390 = vpop.f32.mrb[0].mxu0
        %v3391 = vadd.f32 0.0, %v3390
        %v3392 = vpop.f32.mrb[0].mxu0
        %3393 = vmatprep.mubr.f32.mxu0 0.0
        %3394 = vmatmul.mubr.f32.gmra.mrb[0].mxu0 %v1424
        %v3395 = vpop.f32.mrb[0].mxu0
        %v3396 = vadd.f32 0.0, %v3395
        %v3397 = vpop.f32.mrb[0].mxu0
        %3398 = vmatprep.mubr.f32.mxu0 0.0
        %3399 = vmatmul.mubr.f32.gmra.mrb[0].mxu0 %v1427
        %v3400 = vpop.f32.mrb[0].mxu0
        %v3401 = vadd.f32 0.0, %v3400
        %v3402 = vpop.f32.mrb[0].mxu0
        %3403 = vmatprep.mubr.f32.mxu0 0.0
        %3404 = vmatmul.mubr.f32.gmra.mrb[0].mxu0 %v1430
        %v3405 = vpop.f32.mrb[0].mxu0
        %v3406 = vadd.f32 0.0, %v3405
        %v3407 = vpop.f32.mrb[0].mxu0
        %3408 = vmatprep.mubr.f32.mxu0 0.0
        %3409 = vmatmul.mubr.f32.gmra.mrb[0].mxu0 %v1433
        %v3410 = vpop.f32.mrb[0].mxu0
        %v3411 = vadd.f32 0.0, %v3410
        %v3412 = vpop.f32.mrb[0].mxu0
        %3413 = vmatprep.mubr.f32.mxu0 0.0
        %3414 = vmatmul.mubr.f32.gmra.mrb[0].mxu0 %v1436
        %v3415 = vpop.f32.mrb[0].mxu0
        %v3416 = vadd.f32 0.0, %v3415
        %v3417 = vpop.f32.mrb[0].mxu0
        %3418 = vdwg.mxu0
        %v3419 = vadd.f32 %v3094, %v3290
        %v3420 = vadd.f32 %v3096, %v3292
        %v3421 = vadd.f32 %v3195, %v3391
        %v3422 = vadd.f32 %v3100, %v3296
        %v3423 = vadd.f32 %v3102, %v3298
        %v3424 = vadd.f32 %v3200, %v3396
        %v3425 = vadd.f32 %v3106, %v3302
        %v3426 = vadd.f32 %v3108, %v3304
        %v3427 = vadd.f32 %v3205, %v3401
        %v3428 = vadd.f32 %v3112, %v3308
        %v3429 = vadd.f32 %v3114, %v3310
        %v3430 = vadd.f32 %v3210, %v3406
        %v3431 = vadd.f32 %v3118, %v3314
        %v3432 = vadd.f32 %v3120, %v3316
        %v3433 = vadd.f32 %v3215, %v3411
        %v3434 = vadd.f32 %v3124, %v3320
        %v3435 = vadd.f32 %v3126, %v3322
        %v3436 = vadd.f32 %v3220, %v3416
        %3437 = vmatprep.subr.mxu0 %v1140
        %3438 = vmatpush1.msra.mxu0 %v1139
        %3439 = vmatprep.subr.mxu0 %v1143
        %3440 = vmatpush1.msra.mxu0 %v1142
        %3441 = vmatprep.subr.mxu0 %v1146
        %3442 = vmatpush1.msra.mxu0 %v1145
        %3443 = vmatprep.subr.mxu0 %v1149
        %3444 = vmatpush1.msra.mxu0 %v1148
        %3445 = vmatprep.subr.mxu0 %v1152
        %3446 = vmatpush1.msra.mxu0 %v1151
        %3447 = vmatprep.subr.mxu0 %v1155
        %3448 = vmatpush1.msra.mxu0 %v1154
        %3449 = vmatprep.subr.mxu0 %v1158
        %3450 = vmatpush1.msra.mxu0 %v1157
        %3451 = vmatprep.subr.mxu0 0.0
        %3452 = vmatpush1.msra.mxu0 0.0
        %3453 = vmatprep.subr.mxu0 0.0
        %3454 = vmatpush1.msra.mxu0 0.0
        %3455 = vmatprep.subr.mxu0 0.0
        %3456 = vmatpush1.msra.mxu0 0.0
        %3457 = vmatprep.subr.mxu0 0.0
        %3458 = vmatpush1.msra.mxu0 0.0
        %3459 = vmatprep.subr.mxu0 0.0
        %3460 = vmatpush1.msra.mxu0 0.0
        %3461 = vmatprep.subr.mxu0 0.0
        %3462 = vmatpush1.msra.mxu0 0.0
        %3463 = vmatprep.subr.mxu0 0.0
        %3464 = vmatpush1.msra.mxu0 0.0
        %3465 = vmatprep.subr.mxu0 0.0
        %3466 = vmatpush1.msra.mxu0 0.0
        %3467 = vmatprep.subr.mxu0 0.0
        %3468 = vmatpush1.msra.mxu0 0.0
        %3469 = vmatprep.subr.mxu0 0.0
        %3470 = vmatpush1.msra.mxu0 0.0
        %3471 = vmatprep.subr.mxu0 0.0
        %3472 = vmatpush1.msra.mxu0 0.0
        %3473 = vmatprep.subr.mxu0 0.0
        %3474 = vmatpush1.msra.mxu0 0.0
        %3475 = vmatprep.subr.mxu0 0.0
        %3476 = vmatpush1.msra.mxu0 0.0
        %3477 = vmatprep.subr.mxu0 0.0
        %3478 = vmatpush1.msra.mxu0 0.0
        %3479 = vmatprep.subr.mxu0 0.0
        %3480 = vmatpush1.msra.mxu0 0.0
        %3481 = vmatprep.subr.mxu0 0.0
        %3482 = vmatpush1.msra.mxu0 0.0
        %3483 = vmatprep.subr.mxu0 0.0
        %3484 = vmatpush1.msra.mxu0 0.0
        %3485 = vmatprep.subr.mxu0 0.0
        %3486 = vmatpush1.msra.mxu0 0.0
        %3487 = vmatprep.subr.mxu0 0.0
        %3488 = vmatpush1.msra.mxu0 0.0
        %3489 = vmatprep.subr.mxu0 0.0
        %3490 = vmatpush1.msra.mxu0 0.0
        %3491 = vmatprep.subr.mxu0 0.0
        %3492 = vmatpush1.msra.mxu0 0.0
        %3493 = vmatprep.subr.mxu0 0.0
        %3494 = vmatpush1.msra.mxu0 0.0
        %3495 = vmatprep.subr.mxu0 0.0
        %3496 = vmatpush1.msra.mxu0 0.0
        %3497 = vmatprep.subr.mxu0 0.0
        %3498 = vmatpush1.msra.mxu0 0.0
        %3499 = vmatprep.subr.mxu0 0.0
        %3500 = vmatpush1.msra.mxu0 0.0
        %3501 = vmatprep.mubr.f32.mxu0 0.0
        %3502 = vmatmul.mubr.f32.gmra.mrb[0].mxu0 %v2479
        %v3503 = vpop.f32.mrb[0].mxu0
        %v3504 = vadd.f32 0.0, %v3503
        %v3505 = vpop.f32.mrb[0].mxu0
        %v3506 = vadd.f32 0.0, %v3505
        %3507 = vmatprep.mubr.f32.mxu0 0.0
        %3508 = vmatmul.mubr.f32.gmra.mrb[0].mxu0 %v2482
        %v3509 = vpop.f32.mrb[0].mxu0
        %v3510 = vadd.f32 0.0, %v3509
        %v3511 = vpop.f32.mrb[0].mxu0
        %v3512 = vadd.f32 0.0, %v3511
        %3513 = vmatprep.mubr.f32.mxu0 0.0
        %3514 = vmatmul.mubr.f32.gmra.mrb[0].mxu0 %v2485
        %v3515 = vpop.f32.mrb[0].mxu0
        %v3516 = vadd.f32 0.0, %v3515
        %v3517 = vpop.f32.mrb[0].mxu0
        %v3518 = vadd.f32 0.0, %v3517
        %3519 = vmatprep.mubr.f32.mxu0 0.0
        %3520 = vmatmul.mubr.f32.gmra.mrb[0].mxu0 %v2488
        %v3521 = vpop.f32.mrb[0].mxu0
        %v3522 = vadd.f32 0.0, %v3521
        %v3523 = vpop.f32.mrb[0].mxu0
        %v3524 = vadd.f32 0.0, %v3523
        %3525 = vmatprep.mubr.f32.mxu0 0.0
        %3526 = vmatmul.mubr.f32.gmra.mrb[0].mxu0 %v2491
        %v3527 = vpop.f32.mrb[0].mxu0
        %v3528 = vadd.f32 0.0, %v3527
        %v3529 = vpop.f32.mrb[0].mxu0
        %v3530 = vadd.f32 0.0, %v3529
        %3531 = vmatprep.mubr.f32.mxu0 0.0
        %3532 = vmatmul.mubr.f32.gmra.mrb[0].mxu0 %v2494
        %v3533 = vpop.f32.mrb[0].mxu0
        %v3534 = vadd.f32 0.0, %v3533
        %v3535 = vpop.f32.mrb[0].mxu0
        %v3536 = vadd.f32 0.0, %v3535
        %3537 = vdwg.mxu0
        %3538 = vmatprep.subr.mxu0 0.0
        %3539 = vmatpush1.msra.mxu0 %v1141
        %3540 = vmatprep.subr.mxu0 0.0
        %3541 = vmatpush1.msra.mxu0 %v1144
        %3542 = vmatprep.subr.mxu0 0.0
        %3543 = vmatpush1.msra.mxu0 %v1147
        %3544 = vmatprep.subr.mxu0 0.0
        %3545 = vmatpush1.msra.mxu0 %v1150
        %3546 = vmatprep.subr.mxu0 0.0
        %3547 = vmatpush1.msra.mxu0 %v1153
        %3548 = vmatprep.subr.mxu0 0.0
        %3549 = vmatpush1.msra.mxu0 %v1156
        %3550 = vmatprep.subr.mxu0 0.0
        %3551 = vmatpush1.msra.mxu0 %v1159
        %3552 = vmatprep.subr.mxu0 0.0
        %3553 = vmatpush1.msra.mxu0 0.0
        %3554 = vmatprep.subr.mxu0 0.0
        %3555 = vmatpush1.msra.mxu0 0.0
        %3556 = vmatprep.subr.mxu0 0.0
        %3557 = vmatpush1.msra.mxu0 0.0
        %3558 = vmatprep.subr.mxu0 0.0
        %3559 = vmatpush1.msra.mxu0 0.0
        %3560 = vmatprep.subr.mxu0 0.0
        %3561 = vmatpush1.msra.mxu0 0.0
        %3562 = vmatprep.subr.mxu0 0.0
        %3563 = vmatpush1.msra.mxu0 0.0
        %3564 = vmatprep.subr.mxu0 0.0
        %3565 = vmatpush1.msra.mxu0 0.0
        %3566 = vmatprep.subr.mxu0 0.0
        %3567 = vmatpush1.msra.mxu0 0.0
        %3568 = vmatprep.subr.mxu0 0.0
        %3569 = vmatpush1.msra.mxu0 0.0
        %3570 = vmatprep.subr.mxu0 0.0
        %3571 = vmatpush1.msra.mxu0 0.0
        %3572 = vmatprep.subr.mxu0 0.0
        %3573 = vmatpush1.msra.mxu0 0.0
        %3574 = vmatprep.subr.mxu0 0.0
        %3575 = vmatpush1.msra.mxu0 0.0
        %3576 = vmatprep.subr.mxu0 0.0
        %3577 = vmatpush1.msra.mxu0 0.0
        %3578 = vmatprep.subr.mxu0 0.0
        %3579 = vmatpush1.msra.mxu0 0.0
        %3580 = vmatprep.subr.mxu0 0.0
        %3581 = vmatpush1.msra.mxu0 0.0
        %3582 = vmatprep.subr.mxu0 0.0
        %3583 = vmatpush1.msra.mxu0 0.0
        %3584 = vmatprep.subr.mxu0 0.0
        %3585 = vmatpush1.msra.mxu0 0.0
        %3586 = vmatprep.subr.mxu0 0.0
        %3587 = vmatpush1.msra.mxu0 0.0
        %3588 = vmatprep.subr.mxu0 0.0
        %3589 = vmatpush1.msra.mxu0 0.0
        %3590 = vmatprep.subr.mxu0 0.0
        %3591 = vmatpush1.msra.mxu0 0.0
        %3592 = vmatprep.subr.mxu0 0.0
        %3593 = vmatpush1.msra.mxu0 0.0
        %3594 = vmatprep.subr.mxu0 0.0
        %3595 = vmatpush1.msra.mxu0 0.0
        %3596 = vmatprep.subr.mxu0 0.0
        %3597 = vmatpush1.msra.mxu0 0.0
        %3598 = vmatprep.subr.mxu0 0.0
        %3599 = vmatpush1.msra.mxu0 0.0
        %3600 = vmatprep.subr.mxu0 0.0
        %3601 = vmatpush1.msra.mxu0 0.0
        %3602 = vmatprep.mubr.f32.mxu0 0.0
        %3603 = vmatmul.mubr.f32.gmra.mrb[0].mxu0 %v2479
        %v3604 = vpop.f32.mrb[0].mxu0
        %v3605 = vadd.f32 0.0, %v3604
        %v3606 = vpop.f32.mrb[0].mxu0
        %3607 = vmatprep.mubr.f32.mxu0 0.0
        %3608 = vmatmul.mubr.f32.gmra.mrb[0].mxu0 %v2482
        %v3609 = vpop.f32.mrb[0].mxu0
        %v3610 = vadd.f32 0.0, %v3609
        %v3611 = vpop.f32.mrb[0].mxu0
        %3612 = vmatprep.mubr.f32.mxu0 0.0
        %3613 = vmatmul.mubr.f32.gmra.mrb[0].mxu0 %v2485
        %v3614 = vpop.f32.mrb[0].mxu0
        %v3615 = vadd.f32 0.0, %v3614
        %v3616 = vpop.f32.mrb[0].mxu0
        %3617 = vmatprep.mubr.f32.mxu0 0.0
        %3618 = vmatmul.mubr.f32.gmra.mrb[0].mxu0 %v2488
        %v3619 = vpop.f32.mrb[0].mxu0
        %v3620 = vadd.f32 0.0, %v3619
        %v3621 = vpop.f32.mrb[0].mxu0
        %3622 = vmatprep.mubr.f32.mxu0 0.0
        %3623 = vmatmul.mubr.f32.gmra.mrb[0].mxu0 %v2491
        %v3624 = vpop.f32.mrb[0].mxu0
        %v3625 = vadd.f32 0.0, %v3624
        %v3626 = vpop.f32.mrb[0].mxu0
        %3627 = vmatprep.mubr.f32.mxu0 0.0
        %3628 = vmatmul.mubr.f32.gmra.mrb[0].mxu0 %v2494
        %v3629 = vpop.f32.mrb[0].mxu0
        %v3630 = vadd.f32 0.0, %v3629
        %v3631 = vpop.f32.mrb[0].mxu0
        %3632 = vdwg.mxu0
        %v3633 = vadd.f32 %v3419, %v3504
        %v3634 = vadd.f32 %v3420, %v3506
        %v3635 = vadd.f32 %v3421, %v3605
        %v3636 = vadd.f32 %v3422, %v3510
        %v3637 = vadd.f32 %v3423, %v3512
        %v3638 = vadd.f32 %v3424, %v3610
        %v3639 = vadd.f32 %v3425, %v3516
        %v3640 = vadd.f32 %v3426, %v3518
        %v3641 = vadd.f32 %v3427, %v3615
        %v3642 = vadd.f32 %v3428, %v3522
        %v3643 = vadd.f32 %v3429, %v3524
        %v3644 = vadd.f32 %v3430, %v3620
        %v3645 = vadd.f32 %v3431, %v3528
        %v3646 = vadd.f32 %v3432, %v3530
        %v3647 = vadd.f32 %v3433, %v3625
        %v3648 = vadd.f32 %v3434, %v3534
        %v3649 = vadd.f32 %v3435, %v3536
        %v3650 = vadd.f32 %v3436, %v3630
        %v3651 = vld [vmem:[%s870 + $0x8] sm:$0xff]
        %v3652 = vld [vmem:[%s870 + $0x10] sm:$0xff]
        %v3653 = vld [vmem:[%s870 + $0x18] sm:$0xff]
        %v3654 = vld [vmem:[%s870 + $0x20] sm:$0xff]
        %v3655 = vld [vmem:[%s870 + $0x28] sm:$0xff]
        %v3656 = vld [vmem:[%s870 + $0x30] sm:$0xff]
        %v3658 = vsel %vm441, %v3651, 0
        %v3661 = vsel %vm441, %v3652, 0
        %v3664 = vsel %vm441, %v3653, 0
        %v3667 = vsel %vm441, %v3654, 0
        %v3670 = vsel %vm441, %v3655, 0
        %v3673 = vsel %vm441, %v3656, 0
        %3675 = vmatprep.subr.mxu0 %v1400
        %3676 = vmatpush1.msra.mxu0 %v1399
        %3677 = vmatprep.subr.mxu0 %v1403
        %3678 = vmatpush1.msra.mxu0 %v1402
        %3679 = vmatprep.subr.mxu0 %v1406
        %3680 = vmatpush1.msra.mxu0 %v1405
        %3681 = vmatprep.subr.mxu0 %v1409
        %3682 = vmatpush1.msra.mxu0 %v1408
        %3683 = vmatprep.subr.mxu0 %v1412
        %3684 = vmatpush1.msra.mxu0 %v1411
        %3685 = vmatprep.subr.mxu0 %v1415
        %3686 = vmatpush1.msra.mxu0 %v1414
        %3687 = vmatprep.subr.mxu0 %v1418
        %3688 = vmatpush1.msra.mxu0 %v1417
        %3689 = vmatprep.subr.mxu0 0.0
        %3690 = vmatpush1.msra.mxu0 0.0
        %3691 = vmatprep.subr.mxu0 0.0
        %3692 = vmatpush1.msra.mxu0 0.0
        %3693 = vmatprep.subr.mxu0 0.0
        %3694 = vmatpush1.msra.mxu0 0.0
        %3695 = vmatprep.subr.mxu0 0.0
        %3696 = vmatpush1.msra.mxu0 0.0
        %3697 = vmatprep.subr.mxu0 0.0
        %3698 = vmatpush1.msra.mxu0 0.0
        %3699 = vmatprep.subr.mxu0 0.0
        %3700 = vmatpush1.msra.mxu0 0.0
        %3701 = vmatprep.subr.mxu0 0.0
        %3702 = vmatpush1.msra.mxu0 0.0
        %3703 = vmatprep.subr.mxu0 0.0
        %3704 = vmatpush1.msra.mxu0 0.0
        %3705 = vmatprep.subr.mxu0 0.0
        %3706 = vmatpush1.msra.mxu0 0.0
        %3707 = vmatprep.subr.mxu0 0.0
        %3708 = vmatpush1.msra.mxu0 0.0
        %3709 = vmatprep.subr.mxu0 0.0
        %3710 = vmatpush1.msra.mxu0 0.0
        %3711 = vmatprep.subr.mxu0 0.0
        %3712 = vmatpush1.msra.mxu0 0.0
        %3713 = vmatprep.subr.mxu0 0.0
        %3714 = vmatpush1.msra.mxu0 0.0
        %3715 = vmatprep.subr.mxu0 0.0
        %3716 = vmatpush1.msra.mxu0 0.0
        %3717 = vmatprep.subr.mxu0 0.0
        %3718 = vmatpush1.msra.mxu0 0.0
        %3719 = vmatprep.subr.mxu0 0.0
        %3720 = vmatpush1.msra.mxu0 0.0
        %3721 = vmatprep.subr.mxu0 0.0
        %3722 = vmatpush1.msra.mxu0 0.0
        %3723 = vmatprep.subr.mxu0 0.0
        %3724 = vmatpush1.msra.mxu0 0.0
        %3725 = vmatprep.subr.mxu0 0.0
        %3726 = vmatpush1.msra.mxu0 0.0
        %3727 = vmatprep.subr.mxu0 0.0
        %3728 = vmatpush1.msra.mxu0 0.0
        %3729 = vmatprep.subr.mxu0 0.0
        %3730 = vmatpush1.msra.mxu0 0.0
        %3731 = vmatprep.subr.mxu0 0.0
        %3732 = vmatpush1.msra.mxu0 0.0
        %3733 = vmatprep.subr.mxu0 0.0
        %3734 = vmatpush1.msra.mxu0 0.0
        %3735 = vmatprep.subr.mxu0 0.0
        %3736 = vmatpush1.msra.mxu0 0.0
        %3737 = vmatprep.subr.mxu0 0.0
        %3738 = vmatpush1.msra.mxu0 0.0
        %3739 = vmatprep.mubr.f32.mxu0 0.0
        %3740 = vmatmul.mubr.f32.gmra.mrb[0].mxu0 %v3658
        %v3741 = vpop.f32.mrb[0].mxu0
        %v3742 = vadd.f32 0.0, %v3741
        %v3743 = vpop.f32.mrb[0].mxu0
        %v3744 = vadd.f32 0.0, %v3743
        %3745 = vmatprep.mubr.f32.mxu0 0.0
        %3746 = vmatmul.mubr.f32.gmra.mrb[0].mxu0 %v3661
        %v3747 = vpop.f32.mrb[0].mxu0
        %v3748 = vadd.f32 0.0, %v3747
        %v3749 = vpop.f32.mrb[0].mxu0
        %v3750 = vadd.f32 0.0, %v3749
        %3751 = vmatprep.mubr.f32.mxu0 0.0
        %3752 = vmatmul.mubr.f32.gmra.mrb[0].mxu0 %v3664
        %v3753 = vpop.f32.mrb[0].mxu0
        %v3754 = vadd.f32 0.0, %v3753
        %v3755 = vpop.f32.mrb[0].mxu0
        %v3756 = vadd.f32 0.0, %v3755
        %3757 = vmatprep.mubr.f32.mxu0 0.0
        %3758 = vmatmul.mubr.f32.gmra.mrb[0].mxu0 %v3667
        %v3759 = vpop.f32.mrb[0].mxu0
        %v3760 = vadd.f32 0.0, %v3759
        %v3761 = vpop.f32.mrb[0].mxu0
        %v3762 = vadd.f32 0.0, %v3761
        %3763 = vmatprep.mubr.f32.mxu0 0.0
        %3764 = vmatmul.mubr.f32.gmra.mrb[0].mxu0 %v3670
        %v3765 = vpop.f32.mrb[0].mxu0
        %v3766 = vadd.f32 0.0, %v3765
        %v3767 = vpop.f32.mrb[0].mxu0
        %v3768 = vadd.f32 0.0, %v3767
        %3769 = vmatprep.mubr.f32.mxu0 0.0
        %3770 = vmatmul.mubr.f32.gmra.mrb[0].mxu0 %v3673
        %v3771 = vpop.f32.mrb[0].mxu0
        %v3772 = vadd.f32 0.0, %v3771
        %v3773 = vpop.f32.mrb[0].mxu0
        %v3774 = vadd.f32 0.0, %v3773
        %3775 = vdwg.mxu0
        %3776 = vmatprep.subr.mxu0 0.0
        %3777 = vmatpush1.msra.mxu0 %v1401
        %3778 = vmatprep.subr.mxu0 0.0
        %3779 = vmatpush1.msra.mxu0 %v1404
        %3780 = vmatprep.subr.mxu0 0.0
        %3781 = vmatpush1.msra.mxu0 %v1407
        %3782 = vmatprep.subr.mxu0 0.0
        %3783 = vmatpush1.msra.mxu0 %v1410
        %3784 = vmatprep.subr.mxu0 0.0
        %3785 = vmatpush1.msra.mxu0 %v1413
        %3786 = vmatprep.subr.mxu0 0.0
        %3787 = vmatpush1.msra.mxu0 %v1416
        %3788 = vmatprep.subr.mxu0 0.0
        %3789 = vmatpush1.msra.mxu0 %v1419
        %3790 = vmatprep.subr.mxu0 0.0
        %3791 = vmatpush1.msra.mxu0 0.0
        %3792 = vmatprep.subr.mxu0 0.0
        %3793 = vmatpush1.msra.mxu0 0.0
        %3794 = vmatprep.subr.mxu0 0.0
        %3795 = vmatpush1.msra.mxu0 0.0
        %3796 = vmatprep.subr.mxu0 0.0
        %3797 = vmatpush1.msra.mxu0 0.0
        %3798 = vmatprep.subr.mxu0 0.0
        %3799 = vmatpush1.msra.mxu0 0.0
        %3800 = vmatprep.subr.mxu0 0.0
        %3801 = vmatpush1.msra.mxu0 0.0
        %3802 = vmatprep.subr.mxu0 0.0
        %3803 = vmatpush1.msra.mxu0 0.0
        %3804 = vmatprep.subr.mxu0 0.0
        %3805 = vmatpush1.msra.mxu0 0.0
        %3806 = vmatprep.subr.mxu0 0.0
        %3807 = vmatpush1.msra.mxu0 0.0
        %3808 = vmatprep.subr.mxu0 0.0
        %3809 = vmatpush1.msra.mxu0 0.0
        %3810 = vmatprep.subr.mxu0 0.0
        %3811 = vmatpush1.msra.mxu0 0.0
        %3812 = vmatprep.subr.mxu0 0.0
        %3813 = vmatpush1.msra.mxu0 0.0
        %3814 = vmatprep.subr.mxu0 0.0
        %3815 = vmatpush1.msra.mxu0 0.0
        %3816 = vmatprep.subr.mxu0 0.0
        %3817 = vmatpush1.msra.mxu0 0.0
        %3818 = vmatprep.subr.mxu0 0.0
        %3819 = vmatpush1.msra.mxu0 0.0
        %3820 = vmatprep.subr.mxu0 0.0
        %3821 = vmatpush1.msra.mxu0 0.0
        %3822 = vmatprep.subr.mxu0 0.0
        %3823 = vmatpush1.msra.mxu0 0.0
        %3824 = vmatprep.subr.mxu0 0.0
        %3825 = vmatpush1.msra.mxu0 0.0
        %3826 = vmatprep.subr.mxu0 0.0
        %3827 = vmatpush1.msra.mxu0 0.0
        %3828 = vmatprep.subr.mxu0 0.0
        %3829 = vmatpush1.msra.mxu0 0.0
        %3830 = vmatprep.subr.mxu0 0.0
        %3831 = vmatpush1.msra.mxu0 0.0
        %3832 = vmatprep.subr.mxu0 0.0
        %3833 = vmatpush1.msra.mxu0 0.0
        %3834 = vmatprep.subr.mxu0 0.0
        %3835 = vmatpush1.msra.mxu0 0.0
        %3836 = vmatprep.subr.mxu0 0.0
        %3837 = vmatpush1.msra.mxu0 0.0
        %3838 = vmatprep.subr.mxu0 0.0
        %3839 = vmatpush1.msra.mxu0 0.0
        %3840 = vmatprep.mubr.f32.mxu0 0.0
        %3841 = vmatmul.mubr.f32.gmra.mrb[0].mxu0 %v3658
        %v3842 = vpop.f32.mrb[0].mxu0
        %v3843 = vadd.f32 0.0, %v3842
        %v3844 = vpop.f32.mrb[0].mxu0
        %3845 = vmatprep.mubr.f32.mxu0 0.0
        %3846 = vmatmul.mubr.f32.gmra.mrb[0].mxu0 %v3661
        %v3847 = vpop.f32.mrb[0].mxu0
        %v3848 = vadd.f32 0.0, %v3847
        %v3849 = vpop.f32.mrb[0].mxu0
        %3850 = vmatprep.mubr.f32.mxu0 0.0
        %3851 = vmatmul.mubr.f32.gmra.mrb[0].mxu0 %v3664
        %v3852 = vpop.f32.mrb[0].mxu0
        %v3853 = vadd.f32 0.0, %v3852
        %v3854 = vpop.f32.mrb[0].mxu0
        %3855 = vmatprep.mubr.f32.mxu0 0.0
        %3856 = vmatmul.mubr.f32.gmra.mrb[0].mxu0 %v3667
        %v3857 = vpop.f32.mrb[0].mxu0
        %v3858 = vadd.f32 0.0, %v3857
        %v3859 = vpop.f32.mrb[0].mxu0
        %3860 = vmatprep.mubr.f32.mxu0 0.0
        %3861 = vmatmul.mubr.f32.gmra.mrb[0].mxu0 %v3670
        %v3862 = vpop.f32.mrb[0].mxu0
        %v3863 = vadd.f32 0.0, %v3862
        %v3864 = vpop.f32.mrb[0].mxu0
        %3865 = vmatprep.mubr.f32.mxu0 0.0
        %3866 = vmatmul.mubr.f32.gmra.mrb[0].mxu0 %v3673
        %v3867 = vpop.f32.mrb[0].mxu0
        %v3868 = vadd.f32 0.0, %v3867
        %v3869 = vpop.f32.mrb[0].mxu0
        %3870 = vdwg.mxu0
        %v3871 = vadd.f32 %v3633, %v3742
        %v3872 = vadd.f32 %v3634, %v3744
        %v3873 = vadd.f32 %v3635, %v3843
        %v3874 = vadd.f32 %v3636, %v3748
        %v3875 = vadd.f32 %v3637, %v3750
        %v3876 = vadd.f32 %v3638, %v3848
        %v3877 = vadd.f32 %v3639, %v3754
        %v3878 = vadd.f32 %v3640, %v3756
        %v3879 = vadd.f32 %v3641, %v3853
        %v3880 = vadd.f32 %v3642, %v3760
        %v3881 = vadd.f32 %v3643, %v3762
        %v3882 = vadd.f32 %v3644, %v3858
        %v3883 = vadd.f32 %v3645, %v3766
        %v3884 = vadd.f32 %v3646, %v3768
        %v3885 = vadd.f32 %v3647, %v3863
        %v3886 = vadd.f32 %v3648, %v3772
        %v3887 = vadd.f32 %v3649, %v3774
        %v3888 = vadd.f32 %v3650, %v3868
        %3889 = vmatprep.subr.mxu0 %v421
        %3890 = vmatpush1.msra.mxu0 %v420
        %3891 = vmatprep.subr.mxu0 %v424
        %3892 = vmatpush1.msra.mxu0 %v423
        %3893 = vmatprep.subr.mxu0 %v427
        %3894 = vmatpush1.msra.mxu0 %v426
        %3895 = vmatprep.subr.mxu0 %v430
        %3896 = vmatpush1.msra.mxu0 %v429
        %3897 = vmatprep.subr.mxu0 %v433
        %3898 = vmatpush1.msra.mxu0 %v432
        %3899 = vmatprep.subr.mxu0 %v436
        %3900 = vmatpush1.msra.mxu0 %v435
        %3901 = vmatprep.subr.mxu0 %v439
        %3902 = vmatpush1.msra.mxu0 %v438
        %3903 = vmatprep.subr.mxu0 0.0
        %3904 = vmatpush1.msra.mxu0 0.0
        %3905 = vmatprep.subr.mxu0 0.0
        %3906 = vmatpush1.msra.mxu0 0.0
        %3907 = vmatprep.subr.mxu0 0.0
        %3908 = vmatpush1.msra.mxu0 0.0
        %3909 = vmatprep.subr.mxu0 0.0
        %3910 = vmatpush1.msra.mxu0 0.0
        %3911 = vmatprep.subr.mxu0 0.0
        %3912 = vmatpush1.msra.mxu0 0.0
        %3913 = vmatprep.subr.mxu0 0.0
        %3914 = vmatpush1.msra.mxu0 0.0
        %3915 = vmatprep.subr.mxu0 0.0
        %3916 = vmatpush1.msra.mxu0 0.0
        %3917 = vmatprep.subr.mxu0 0.0
        %3918 = vmatpush1.msra.mxu0 0.0
        %3919 = vmatprep.subr.mxu0 0.0
        %3920 = vmatpush1.msra.mxu0 0.0
        %3921 = vmatprep.subr.mxu0 0.0
        %3922 = vmatpush1.msra.mxu0 0.0
        %3923 = vmatprep.subr.mxu0 0.0
        %3924 = vmatpush1.msra.mxu0 0.0
        %3925 = vmatprep.subr.mxu0 0.0
        %3926 = vmatpush1.msra.mxu0 0.0
        %3927 = vmatprep.subr.mxu0 0.0
        %3928 = vmatpush1.msra.mxu0 0.0
        %3929 = vmatprep.subr.mxu0 0.0
        %3930 = vmatpush1.msra.mxu0 0.0
        %3931 = vmatprep.subr.mxu0 0.0
        %3932 = vmatpush1.msra.mxu0 0.0
        %3933 = vmatprep.subr.mxu0 0.0
        %3934 = vmatpush1.msra.mxu0 0.0
        %3935 = vmatprep.subr.mxu0 0.0
        %3936 = vmatpush1.msra.mxu0 0.0
        %3937 = vmatprep.subr.mxu0 0.0
        %3938 = vmatpush1.msra.mxu0 0.0
        %3939 = vmatprep.subr.mxu0 0.0
        %3940 = vmatpush1.msra.mxu0 0.0
        %3941 = vmatprep.subr.mxu0 0.0
        %3942 = vmatpush1.msra.mxu0 0.0
        %3943 = vmatprep.subr.mxu0 0.0
        %3944 = vmatpush1.msra.mxu0 0.0
        %3945 = vmatprep.subr.mxu0 0.0
        %3946 = vmatpush1.msra.mxu0 0.0
        %3947 = vmatprep.subr.mxu0 0.0
        %3948 = vmatpush1.msra.mxu0 0.0
        %3949 = vmatprep.subr.mxu0 0.0
        %3950 = vmatpush1.msra.mxu0 0.0
        %3951 = vmatprep.subr.mxu0 0.0
        %3952 = vmatpush1.msra.mxu0 0.0
        %3953 = vmatprep.mubr.f32.mxu0 0.0
        %3954 = vmatmul.mubr.f32.gmra.mrb[0].mxu0 %v1421
        %v3955 = vpop.f32.mrb[0].mxu0
        %v3956 = vadd.f32 0.0, %v3955
        %v3957 = vpop.f32.mrb[0].mxu0
        %v3958 = vadd.f32 0.0, %v3957
        %3959 = vmatprep.mubr.f32.mxu0 0.0
        %3960 = vmatmul.mubr.f32.gmra.mrb[0].mxu0 %v1424
        %v3961 = vpop.f32.mrb[0].mxu0
        %v3962 = vadd.f32 0.0, %v3961
        %v3963 = vpop.f32.mrb[0].mxu0
        %v3964 = vadd.f32 0.0, %v3963
        %3965 = vmatprep.mubr.f32.mxu0 0.0
        %3966 = vmatmul.mubr.f32.gmra.mrb[0].mxu0 %v1427
        %v3967 = vpop.f32.mrb[0].mxu0
        %v3968 = vadd.f32 0.0, %v3967
        %v3969 = vpop.f32.mrb[0].mxu0
        %v3970 = vadd.f32 0.0, %v3969
        %3971 = vmatprep.mubr.f32.mxu0 0.0
        %3972 = vmatmul.mubr.f32.gmra.mrb[0].mxu0 %v1430
        %v3973 = vpop.f32.mrb[0].mxu0
        %v3974 = vadd.f32 0.0, %v3973
        %v3975 = vpop.f32.mrb[0].mxu0
        %v3976 = vadd.f32 0.0, %v3975
        %3977 = vmatprep.mubr.f32.mxu0 0.0
        %3978 = vmatmul.mubr.f32.gmra.mrb[0].mxu0 %v1433
        %v3979 = vpop.f32.mrb[0].mxu0
        %v3980 = vadd.f32 0.0, %v3979
        %v3981 = vpop.f32.mrb[0].mxu0
        %v3982 = vadd.f32 0.0, %v3981
        %3983 = vmatprep.mubr.f32.mxu0 0.0
        %3984 = vmatmul.mubr.f32.gmra.mrb[0].mxu0 %v1436
        %v3985 = vpop.f32.mrb[0].mxu0
        %v3986 = vadd.f32 0.0, %v3985
        %v3987 = vpop.f32.mrb[0].mxu0
        %v3988 = vadd.f32 0.0, %v3987
        %3989 = vdwg.mxu0
        %3990 = vmatprep.subr.mxu0 0.0
        %3991 = vmatpush1.msra.mxu0 %v422
        %3992 = vmatprep.subr.mxu0 0.0
        %3993 = vmatpush1.msra.mxu0 %v425
        %3994 = vmatprep.subr.mxu0 0.0
        %3995 = vmatpush1.msra.mxu0 %v428
        %3996 = vmatprep.subr.mxu0 0.0
        %3997 = vmatpush1.msra.mxu0 %v431
        %3998 = vmatprep.subr.mxu0 0.0
        %3999 = vmatpush1.msra.mxu0 %v434
        %4000 = vmatprep.subr.mxu0 0.0
        %4001 = vmatpush1.msra.mxu0 %v437
        %4002 = vmatprep.subr.mxu0 0.0
        %4003 = vmatpush1.msra.mxu0 %v440
        %4004 = vmatprep.subr.mxu0 0.0
        %4005 = vmatpush1.msra.mxu0 0.0
        %4006 = vmatprep.subr.mxu0 0.0
        %4007 = vmatpush1.msra.mxu0 0.0
        %4008 = vmatprep.subr.mxu0 0.0
        %4009 = vmatpush1.msra.mxu0 0.0
        %4010 = vmatprep.subr.mxu0 0.0
        %4011 = vmatpush1.msra.mxu0 0.0
        %4012 = vmatprep.subr.mxu0 0.0
        %4013 = vmatpush1.msra.mxu0 0.0
        %4014 = vmatprep.subr.mxu0 0.0
        %4015 = vmatpush1.msra.mxu0 0.0
        %4016 = vmatprep.subr.mxu0 0.0
        %4017 = vmatpush1.msra.mxu0 0.0
        %4018 = vmatprep.subr.mxu0 0.0
        %4019 = vmatpush1.msra.mxu0 0.0
        %4020 = vmatprep.subr.mxu0 0.0
        %4021 = vmatpush1.msra.mxu0 0.0
        %4022 = vmatprep.subr.mxu0 0.0
        %4023 = vmatpush1.msra.mxu0 0.0
        %4024 = vmatprep.subr.mxu0 0.0
        %4025 = vmatpush1.msra.mxu0 0.0
        %4026 = vmatprep.subr.mxu0 0.0
        %4027 = vmatpush1.msra.mxu0 0.0
        %4028 = vmatprep.subr.mxu0 0.0
        %4029 = vmatpush1.msra.mxu0 0.0
        %4030 = vmatprep.subr.mxu0 0.0
        %4031 = vmatpush1.msra.mxu0 0.0
        %4032 = vmatprep.subr.mxu0 0.0
        %4033 = vmatpush1.msra.mxu0 0.0
        %4034 = vmatprep.subr.mxu0 0.0
        %4035 = vmatpush1.msra.mxu0 0.0
        %4036 = vmatprep.subr.mxu0 0.0
        %4037 = vmatpush1.msra.mxu0 0.0
        %4038 = vmatprep.subr.mxu0 0.0
        %4039 = vmatpush1.msra.mxu0 0.0
        %4040 = vmatprep.subr.mxu0 0.0
        %4041 = vmatpush1.msra.mxu0 0.0
        %4042 = vmatprep.subr.mxu0 0.0
        %4043 = vmatpush1.msra.mxu0 0.0
        %4044 = vmatprep.subr.mxu0 0.0
        %4045 = vmatpush1.msra.mxu0 0.0
        %4046 = vmatprep.subr.mxu0 0.0
        %4047 = vmatpush1.msra.mxu0 0.0
        %4048 = vmatprep.subr.mxu0 0.0
        %4049 = vmatpush1.msra.mxu0 0.0
        %4050 = vmatprep.subr.mxu0 0.0
        %4051 = vmatpush1.msra.mxu0 0.0
        %4052 = vmatprep.subr.mxu0 0.0
        %4053 = vmatpush1.msra.mxu0 0.0
        %4054 = vmatprep.mubr.f32.mxu0 0.0
        %4055 = vmatmul.mubr.f32.gmra.mrb[0].mxu0 %v1421
        %v4056 = vpop.f32.mrb[0].mxu0
        %v4057 = vadd.f32 0.0, %v4056
        %v4058 = vpop.f32.mrb[0].mxu0
        %4059 = vmatprep.mubr.f32.mxu0 0.0
        %4060 = vmatmul.mubr.f32.gmra.mrb[0].mxu0 %v1424
        %v4061 = vpop.f32.mrb[0].mxu0
        %v4062 = vadd.f32 0.0, %v4061
        %v4063 = vpop.f32.mrb[0].mxu0
        %4064 = vmatprep.mubr.f32.mxu0 0.0
        %4065 = vmatmul.mubr.f32.gmra.mrb[0].mxu0 %v1427
        %v4066 = vpop.f32.mrb[0].mxu0
        %v4067 = vadd.f32 0.0, %v4066
        %v4068 = vpop.f32.mrb[0].mxu0
        %4069 = vmatprep.mubr.f32.mxu0 0.0
        %4070 = vmatmul.mubr.f32.gmra.mrb[0].mxu0 %v1430
        %v4071 = vpop.f32.mrb[0].mxu0
        %v4072 = vadd.f32 0.0, %v4071
        %v4073 = vpop.f32.mrb[0].mxu0
        %4074 = vmatprep.mubr.f32.mxu0 0.0
        %4075 = vmatmul.mubr.f32.gmra.mrb[0].mxu0 %v1433
        %v4076 = vpop.f32.mrb[0].mxu0
        %v4077 = vadd.f32 0.0, %v4076
        %v4078 = vpop.f32.mrb[0].mxu0
        %4079 = vmatprep.mubr.f32.mxu0 0.0
        %4080 = vmatmul.mubr.f32.gmra.mrb[0].mxu0 %v1436
        %v4081 = vpop.f32.mrb[0].mxu0
        %v4082 = vadd.f32 0.0, %v4081
        %v4083 = vpop.f32.mrb[0].mxu0
        %4084 = vdwg.mxu0
        %4085 = vmatprep.subr.mxu0 %v392
        %4086 = vmatpush1.msra.mxu0 %v391
        %4087 = vmatprep.subr.mxu0 %v395
        %4088 = vmatpush1.msra.mxu0 %v394
        %4089 = vmatprep.subr.mxu0 %v398
        %4090 = vmatpush1.msra.mxu0 %v397
        %4091 = vmatprep.subr.mxu0 %v401
        %4092 = vmatpush1.msra.mxu0 %v400
        %4093 = vmatprep.subr.mxu0 %v404
        %4094 = vmatpush1.msra.mxu0 %v403
        %4095 = vmatprep.subr.mxu0 %v407
        %4096 = vmatpush1.msra.mxu0 %v406
        %4097 = vmatprep.subr.mxu0 %v410
        %4098 = vmatpush1.msra.mxu0 %v409
        %4099 = vmatprep.subr.mxu0 0.0
        %4100 = vmatpush1.msra.mxu0 0.0
        %4101 = vmatprep.subr.mxu0 0.0
        %4102 = vmatpush1.msra.mxu0 0.0
        %4103 = vmatprep.subr.mxu0 0.0
        %4104 = vmatpush1.msra.mxu0 0.0
        %4105 = vmatprep.subr.mxu0 0.0
        %4106 = vmatpush1.msra.mxu0 0.0
        %4107 = vmatprep.subr.mxu0 0.0
        %4108 = vmatpush1.msra.mxu0 0.0
        %4109 = vmatprep.subr.mxu0 0.0
        %4110 = vmatpush1.msra.mxu0 0.0
        %4111 = vmatprep.subr.mxu0 0.0
        %4112 = vmatpush1.msra.mxu0 0.0
        %4113 = vmatprep.subr.mxu0 0.0
        %4114 = vmatpush1.msra.mxu0 0.0
        %4115 = vmatprep.subr.mxu0 0.0
        %4116 = vmatpush1.msra.mxu0 0.0
        %4117 = vmatprep.subr.mxu0 0.0
        %4118 = vmatpush1.msra.mxu0 0.0
        %4119 = vmatprep.subr.mxu0 0.0
        %4120 = vmatpush1.msra.mxu0 0.0
        %4121 = vmatprep.subr.mxu0 0.0
        %4122 = vmatpush1.msra.mxu0 0.0
        %4123 = vmatprep.subr.mxu0 0.0
        %4124 = vmatpush1.msra.mxu0 0.0
        %4125 = vmatprep.subr.mxu0 0.0
        %4126 = vmatpush1.msra.mxu0 0.0
        %4127 = vmatprep.subr.mxu0 0.0
        %4128 = vmatpush1.msra.mxu0 0.0
        %4129 = vmatprep.subr.mxu0 0.0
        %4130 = vmatpush1.msra.mxu0 0.0
        %4131 = vmatprep.subr.mxu0 0.0
        %4132 = vmatpush1.msra.mxu0 0.0
        %4133 = vmatprep.subr.mxu0 0.0
        %4134 = vmatpush1.msra.mxu0 0.0
        %4135 = vmatprep.subr.mxu0 0.0
        %4136 = vmatpush1.msra.mxu0 0.0
        %4137 = vmatprep.subr.mxu0 0.0
        %4138 = vmatpush1.msra.mxu0 0.0
        %4139 = vmatprep.subr.mxu0 0.0
        %4140 = vmatpush1.msra.mxu0 0.0
        %4141 = vmatprep.subr.mxu0 0.0
        %4142 = vmatpush1.msra.mxu0 0.0
        %4143 = vmatprep.subr.mxu0 0.0
        %4144 = vmatpush1.msra.mxu0 0.0
        %4145 = vmatprep.subr.mxu0 0.0
        %4146 = vmatpush1.msra.mxu0 0.0
        %4147 = vmatprep.subr.mxu0 0.0
        %4148 = vmatpush1.msra.mxu0 0.0
        %4149 = vmatprep.mubr.f32.mxu0 0.0
        %4150 = vmatmul.mubr.f32.gmra.mrb[0].mxu0 %v1161
        %v4151 = vpop.f32.mrb[0].mxu0
        %v4152 = vadd.f32 %v3956, %v4151
        %v4153 = vpop.f32.mrb[0].mxu0
        %v4154 = vadd.f32 %v3958, %v4153
        %4155 = vmatprep.mubr.f32.mxu0 0.0
        %4156 = vmatmul.mubr.f32.gmra.mrb[0].mxu0 %v1164
        %v4157 = vpop.f32.mrb[0].mxu0
        %v4158 = vadd.f32 %v3962, %v4157
        %v4159 = vpop.f32.mrb[0].mxu0
        %v4160 = vadd.f32 %v3964, %v4159
        %4161 = vmatprep.mubr.f32.mxu0 0.0
        %4162 = vmatmul.mubr.f32.gmra.mrb[0].mxu0 %v1167
        %v4163 = vpop.f32.mrb[0].mxu0
        %v4164 = vadd.f32 %v3968, %v4163
        %v4165 = vpop.f32.mrb[0].mxu0
        %v4166 = vadd.f32 %v3970, %v4165
        %4167 = vmatprep.mubr.f32.mxu0 0.0
        %4168 = vmatmul.mubr.f32.gmra.mrb[0].mxu0 %v1170
        %v4169 = vpop.f32.mrb[0].mxu0
        %v4170 = vadd.f32 %v3974, %v4169
        %v4171 = vpop.f32.mrb[0].mxu0
        %v4172 = vadd.f32 %v3976, %v4171
        %4173 = vmatprep.mubr.f32.mxu0 0.0
        %4174 = vmatmul.mubr.f32.gmra.mrb[0].mxu0 %v1173
        %v4175 = vpop.f32.mrb[0].mxu0
        %v4176 = vadd.f32 %v3980, %v4175
        %v4177 = vpop.f32.mrb[0].mxu0
        %v4178 = vadd.f32 %v3982, %v4177
        %4179 = vmatprep.mubr.f32.mxu0 0.0
        %4180 = vmatmul.mubr.f32.gmra.mrb[0].mxu0 %v1176
        %v4181 = vpop.f32.mrb[0].mxu0
        %v4182 = vadd.f32 %v3986, %v4181
        %v4183 = vpop.f32.mrb[0].mxu0
        %v4184 = vadd.f32 %v3988, %v4183
        %4185 = vdwg.mxu0
        %4186 = vmatprep.subr.mxu0 0.0
        %4187 = vmatpush1.msra.mxu0 %v393
        %4188 = vmatprep.subr.mxu0 0.0
        %4189 = vmatpush1.msra.mxu0 %v396
        %4190 = vmatprep.subr.mxu0 0.0
        %4191 = vmatpush1.msra.mxu0 %v399
        %4192 = vmatprep.subr.mxu0 0.0
        %4193 = vmatpush1.msra.mxu0 %v402
        %4194 = vmatprep.subr.mxu0 0.0
        %4195 = vmatpush1.msra.mxu0 %v405
        %4196 = vmatprep.subr.mxu0 0.0
        %4197 = vmatpush1.msra.mxu0 %v408
        %4198 = vmatprep.subr.mxu0 0.0
        %4199 = vmatpush1.msra.mxu0 %v411
        %4200 = vmatprep.subr.mxu0 0.0
        %4201 = vmatpush1.msra.mxu0 0.0
        %4202 = vmatprep.subr.mxu0 0.0
        %4203 = vmatpush1.msra.mxu0 0.0
        %4204 = vmatprep.subr.mxu0 0.0
        %4205 = vmatpush1.msra.mxu0 0.0
        %4206 = vmatprep.subr.mxu0 0.0
        %4207 = vmatpush1.msra.mxu0 0.0
        %4208 = vmatprep.subr.mxu0 0.0
        %4209 = vmatpush1.msra.mxu0 0.0
        %4210 = vmatprep.subr.mxu0 0.0
        %4211 = vmatpush1.msra.mxu0 0.0
        %4212 = vmatprep.subr.mxu0 0.0
        %4213 = vmatpush1.msra.mxu0 0.0
        %4214 = vmatprep.subr.mxu0 0.0
        %4215 = vmatpush1.msra.mxu0 0.0
        %4216 = vmatprep.subr.mxu0 0.0
        %4217 = vmatpush1.msra.mxu0 0.0
        %4218 = vmatprep.subr.mxu0 0.0
        %4219 = vmatpush1.msra.mxu0 0.0
        %4220 = vmatprep.subr.mxu0 0.0
        %4221 = vmatpush1.msra.mxu0 0.0
        %4222 = vmatprep.subr.mxu0 0.0
        %4223 = vmatpush1.msra.mxu0 0.0
        %4224 = vmatprep.subr.mxu0 0.0
        %4225 = vmatpush1.msra.mxu0 0.0
        %4226 = vmatprep.subr.mxu0 0.0
        %4227 = vmatpush1.msra.mxu0 0.0
        %4228 = vmatprep.subr.mxu0 0.0
        %4229 = vmatpush1.msra.mxu0 0.0
        %4230 = vmatprep.subr.mxu0 0.0
        %4231 = vmatpush1.msra.mxu0 0.0
        %4232 = vmatprep.subr.mxu0 0.0
        %4233 = vmatpush1.msra.mxu0 0.0
        %4234 = vmatprep.subr.mxu0 0.0
        %4235 = vmatpush1.msra.mxu0 0.0
        %4236 = vmatprep.subr.mxu0 0.0
        %4237 = vmatpush1.msra.mxu0 0.0
        %4238 = vmatprep.subr.mxu0 0.0
        %4239 = vmatpush1.msra.mxu0 0.0
        %4240 = vmatprep.subr.mxu0 0.0
        %4241 = vmatpush1.msra.mxu0 0.0
        %4242 = vmatprep.subr.mxu0 0.0
        %4243 = vmatpush1.msra.mxu0 0.0
        %4244 = vmatprep.subr.mxu0 0.0
        %4245 = vmatpush1.msra.mxu0 0.0
        %4246 = vmatprep.subr.mxu0 0.0
        %4247 = vmatpush1.msra.mxu0 0.0
        %4248 = vmatprep.subr.mxu0 0.0
        %4249 = vmatpush1.msra.mxu0 0.0
        %4250 = vmatprep.mubr.f32.mxu0 0.0
        %4251 = vmatmul.mubr.f32.gmra.mrb[0].mxu0 %v1161
        %v4252 = vpop.f32.mrb[0].mxu0
        %v4253 = vadd.f32 %v4057, %v4252
        %v4254 = vpop.f32.mrb[0].mxu0
        %4255 = vmatprep.mubr.f32.mxu0 0.0
        %4256 = vmatmul.mubr.f32.gmra.mrb[0].mxu0 %v1164
        %v4257 = vpop.f32.mrb[0].mxu0
        %v4258 = vadd.f32 %v4062, %v4257
        %v4259 = vpop.f32.mrb[0].mxu0
        %4260 = vmatprep.mubr.f32.mxu0 0.0
        %4261 = vmatmul.mubr.f32.gmra.mrb[0].mxu0 %v1167
        %v4262 = vpop.f32.mrb[0].mxu0
        %v4263 = vadd.f32 %v4067, %v4262
        %v4264 = vpop.f32.mrb[0].mxu0
        %4265 = vmatprep.mubr.f32.mxu0 0.0
        %4266 = vmatmul.mubr.f32.gmra.mrb[0].mxu0 %v1170
        %v4267 = vpop.f32.mrb[0].mxu0
        %v4268 = vadd.f32 %v4072, %v4267
        %v4269 = vpop.f32.mrb[0].mxu0
        %4270 = vmatprep.mubr.f32.mxu0 0.0
        %4271 = vmatmul.mubr.f32.gmra.mrb[0].mxu0 %v1173
        %v4272 = vpop.f32.mrb[0].mxu0
        %v4273 = vadd.f32 %v4077, %v4272
        %v4274 = vpop.f32.mrb[0].mxu0
        %4275 = vmatprep.mubr.f32.mxu0 0.0
        %4276 = vmatmul.mubr.f32.gmra.mrb[0].mxu0 %v1176
        %v4277 = vpop.f32.mrb[0].mxu0
        %v4278 = vadd.f32 %v4082, %v4277
        %v4279 = vpop.f32.mrb[0].mxu0
        %4280 = vdwg.mxu0
        %4281 = vmatprep.subr.mxu0 %v879
        %4282 = vmatpush1.msra.mxu0 %v878
        %4283 = vmatprep.subr.mxu0 %v882
        %4284 = vmatpush1.msra.mxu0 %v881
        %4285 = vmatprep.subr.mxu0 %v885
        %4286 = vmatpush1.msra.mxu0 %v884
        %4287 = vmatprep.subr.mxu0 %v888
        %4288 = vmatpush1.msra.mxu0 %v887
        %4289 = vmatprep.subr.mxu0 %v891
        %4290 = vmatpush1.msra.mxu0 %v890
        %4291 = vmatprep.subr.mxu0 %v894
        %4292 = vmatpush1.msra.mxu0 %v893
        %4293 = vmatprep.subr.mxu0 %v897
        %4294 = vmatpush1.msra.mxu0 %v896
        %4295 = vmatprep.subr.mxu0 0.0
        %4296 = vmatpush1.msra.mxu0 0.0
        %4297 = vmatprep.subr.mxu0 0.0
        %4298 = vmatpush1.msra.mxu0 0.0
        %4299 = vmatprep.subr.mxu0 0.0
        %4300 = vmatpush1.msra.mxu0 0.0
        %4301 = vmatprep.subr.mxu0 0.0
        %4302 = vmatpush1.msra.mxu0 0.0
        %4303 = vmatprep.subr.mxu0 0.0
        %4304 = vmatpush1.msra.mxu0 0.0
        %4305 = vmatprep.subr.mxu0 0.0
        %4306 = vmatpush1.msra.mxu0 0.0
        %4307 = vmatprep.subr.mxu0 0.0
        %4308 = vmatpush1.msra.mxu0 0.0
        %4309 = vmatprep.subr.mxu0 0.0
        %4310 = vmatpush1.msra.mxu0 0.0
        %4311 = vmatprep.subr.mxu0 0.0
        %4312 = vmatpush1.msra.mxu0 0.0
        %4313 = vmatprep.subr.mxu0 0.0
        %4314 = vmatpush1.msra.mxu0 0.0
        %4315 = vmatprep.subr.mxu0 0.0
        %4316 = vmatpush1.msra.mxu0 0.0
        %4317 = vmatprep.subr.mxu0 0.0
        %4318 = vmatpush1.msra.mxu0 0.0
        %4319 = vmatprep.subr.mxu0 0.0
        %4320 = vmatpush1.msra.mxu0 0.0
        %4321 = vmatprep.subr.mxu0 0.0
        %4322 = vmatpush1.msra.mxu0 0.0
        %4323 = vmatprep.subr.mxu0 0.0
        %4324 = vmatpush1.msra.mxu0 0.0
        %4325 = vmatprep.subr.mxu0 0.0
        %4326 = vmatpush1.msra.mxu0 0.0
        %4327 = vmatprep.subr.mxu0 0.0
        %4328 = vmatpush1.msra.mxu0 0.0
        %4329 = vmatprep.subr.mxu0 0.0
        %4330 = vmatpush1.msra.mxu0 0.0
        %4331 = vmatprep.subr.mxu0 0.0
        %4332 = vmatpush1.msra.mxu0 0.0
        %4333 = vmatprep.subr.mxu0 0.0
        %4334 = vmatpush1.msra.mxu0 0.0
        %4335 = vmatprep.subr.mxu0 0.0
        %4336 = vmatpush1.msra.mxu0 0.0
        %4337 = vmatprep.subr.mxu0 0.0
        %4338 = vmatpush1.msra.mxu0 0.0
        %4339 = vmatprep.subr.mxu0 0.0
        %4340 = vmatpush1.msra.mxu0 0.0
        %4341 = vmatprep.subr.mxu0 0.0
        %4342 = vmatpush1.msra.mxu0 0.0
        %4343 = vmatprep.subr.mxu0 0.0
        %4344 = vmatpush1.msra.mxu0 0.0
        %4345 = vmatprep.mubr.f32.mxu0 0.0
        %4346 = vmatmul.mubr.f32.gmra.mrb[0].mxu0 %v2479
        %v4347 = vpop.f32.mrb[0].mxu0
        %v4348 = vadd.f32 0.0, %v4347
        %v4349 = vpop.f32.mrb[0].mxu0
        %v4350 = vadd.f32 0.0, %v4349
        %4351 = vmatprep.mubr.f32.mxu0 0.0
        %4352 = vmatmul.mubr.f32.gmra.mrb[0].mxu0 %v2482
        %v4353 = vpop.f32.mrb[0].mxu0
        %v4354 = vadd.f32 0.0, %v4353
        %v4355 = vpop.f32.mrb[0].mxu0
        %v4356 = vadd.f32 0.0, %v4355
        %4357 = vmatprep.mubr.f32.mxu0 0.0
        %4358 = vmatmul.mubr.f32.gmra.mrb[0].mxu0 %v2485
        %v4359 = vpop.f32.mrb[0].mxu0
        %v4360 = vadd.f32 0.0, %v4359
        %v4361 = vpop.f32.mrb[0].mxu0
        %v4362 = vadd.f32 0.0, %v4361
        %4363 = vmatprep.mubr.f32.mxu0 0.0
        %4364 = vmatmul.mubr.f32.gmra.mrb[0].mxu0 %v2488
        %v4365 = vpop.f32.mrb[0].mxu0
        %v4366 = vadd.f32 0.0, %v4365
        %v4367 = vpop.f32.mrb[0].mxu0
        %v4368 = vadd.f32 0.0, %v4367
        %4369 = vmatprep.mubr.f32.mxu0 0.0
        %4370 = vmatmul.mubr.f32.gmra.mrb[0].mxu0 %v2491
        %v4371 = vpop.f32.mrb[0].mxu0
        %v4372 = vadd.f32 0.0, %v4371
        %v4373 = vpop.f32.mrb[0].mxu0
        %v4374 = vadd.f32 0.0, %v4373
        %4375 = vmatprep.mubr.f32.mxu0 0.0
        %4376 = vmatmul.mubr.f32.gmra.mrb[0].mxu0 %v2494
        %v4377 = vpop.f32.mrb[0].mxu0
        %v4378 = vadd.f32 0.0, %v4377
        %v4379 = vpop.f32.mrb[0].mxu0
        %v4380 = vadd.f32 0.0, %v4379
        %4381 = vdwg.mxu0
        %4382 = vmatprep.subr.mxu0 0.0
        %4383 = vmatpush1.msra.mxu0 %v880
        %4384 = vmatprep.subr.mxu0 0.0
        %4385 = vmatpush1.msra.mxu0 %v883
        %4386 = vmatprep.subr.mxu0 0.0
        %4387 = vmatpush1.msra.mxu0 %v886
        %4388 = vmatprep.subr.mxu0 0.0
        %4389 = vmatpush1.msra.mxu0 %v889
        %4390 = vmatprep.subr.mxu0 0.0
        %4391 = vmatpush1.msra.mxu0 %v892
        %4392 = vmatprep.subr.mxu0 0.0
        %4393 = vmatpush1.msra.mxu0 %v895
        %4394 = vmatprep.subr.mxu0 0.0
        %4395 = vmatpush1.msra.mxu0 %v898
        %4396 = vmatprep.subr.mxu0 0.0
        %4397 = vmatpush1.msra.mxu0 0.0
        %4398 = vmatprep.subr.mxu0 0.0
        %4399 = vmatpush1.msra.mxu0 0.0
        %4400 = vmatprep.subr.mxu0 0.0
        %4401 = vmatpush1.msra.mxu0 0.0
        %4402 = vmatprep.subr.mxu0 0.0
        %4403 = vmatpush1.msra.mxu0 0.0
        %4404 = vmatprep.subr.mxu0 0.0
        %4405 = vmatpush1.msra.mxu0 0.0
        %4406 = vmatprep.subr.mxu0 0.0
        %4407 = vmatpush1.msra.mxu0 0.0
        %4408 = vmatprep.subr.mxu0 0.0
        %4409 = vmatpush1.msra.mxu0 0.0
        %4410 = vmatprep.subr.mxu0 0.0
        %4411 = vmatpush1.msra.mxu0 0.0
        %4412 = vmatprep.subr.mxu0 0.0
        %4413 = vmatpush1.msra.mxu0 0.0
        %4414 = vmatprep.subr.mxu0 0.0
        %4415 = vmatpush1.msra.mxu0 0.0
        %4416 = vmatprep.subr.mxu0 0.0
        %4417 = vmatpush1.msra.mxu0 0.0
        %4418 = vmatprep.subr.mxu0 0.0
        %4419 = vmatpush1.msra.mxu0 0.0
        %4420 = vmatprep.subr.mxu0 0.0
        %4421 = vmatpush1.msra.mxu0 0.0
        %4422 = vmatprep.subr.mxu0 0.0
        %4423 = vmatpush1.msra.mxu0 0.0
        %4424 = vmatprep.subr.mxu0 0.0
        %4425 = vmatpush1.msra.mxu0 0.0
        %4426 = vmatprep.subr.mxu0 0.0
        %4427 = vmatpush1.msra.mxu0 0.0
        %4428 = vmatprep.subr.mxu0 0.0
        %4429 = vmatpush1.msra.mxu0 0.0
        %4430 = vmatprep.subr.mxu0 0.0
        %4431 = vmatpush1.msra.mxu0 0.0
        %4432 = vmatprep.subr.mxu0 0.0
        %4433 = vmatpush1.msra.mxu0 0.0
        %4434 = vmatprep.subr.mxu0 0.0
        %4435 = vmatpush1.msra.mxu0 0.0
        %4436 = vmatprep.subr.mxu0 0.0
        %4437 = vmatpush1.msra.mxu0 0.0
        %4438 = vmatprep.subr.mxu0 0.0
        %4439 = vmatpush1.msra.mxu0 0.0
        %4440 = vmatprep.subr.mxu0 0.0
        %4441 = vmatpush1.msra.mxu0 0.0
        %4442 = vmatprep.subr.mxu0 0.0
        %4443 = vmatpush1.msra.mxu0 0.0
        %4444 = vmatprep.subr.mxu0 0.0
        %4445 = vmatpush1.msra.mxu0 0.0
        %4446 = vmatprep.mubr.f32.mxu0 0.0
        %4447 = vmatmul.mubr.f32.gmra.mrb[0].mxu0 %v2479
        %v4448 = vpop.f32.mrb[0].mxu0
        %v4449 = vadd.f32 0.0, %v4448
        %v4450 = vpop.f32.mrb[0].mxu0
        %4451 = vmatprep.mubr.f32.mxu0 0.0
        %4452 = vmatmul.mubr.f32.gmra.mrb[0].mxu0 %v2482
        %v4453 = vpop.f32.mrb[0].mxu0
        %v4454 = vadd.f32 0.0, %v4453
        %v4455 = vpop.f32.mrb[0].mxu0
        %4456 = vmatprep.mubr.f32.mxu0 0.0
        %4457 = vmatmul.mubr.f32.gmra.mrb[0].mxu0 %v2485
        %v4458 = vpop.f32.mrb[0].mxu0
        %v4459 = vadd.f32 0.0, %v4458
        %v4460 = vpop.f32.mrb[0].mxu0
        %4461 = vmatprep.mubr.f32.mxu0 0.0
        %4462 = vmatmul.mubr.f32.gmra.mrb[0].mxu0 %v2488
        %v4463 = vpop.f32.mrb[0].mxu0
        %v4464 = vadd.f32 0.0, %v4463
        %v4465 = vpop.f32.mrb[0].mxu0
        %4466 = vmatprep.mubr.f32.mxu0 0.0
        %4467 = vmatmul.mubr.f32.gmra.mrb[0].mxu0 %v2491
        %v4468 = vpop.f32.mrb[0].mxu0
        %v4469 = vadd.f32 0.0, %v4468
        %v4470 = vpop.f32.mrb[0].mxu0
        %4471 = vmatprep.mubr.f32.mxu0 0.0
        %4472 = vmatmul.mubr.f32.gmra.mrb[0].mxu0 %v2494
        %v4473 = vpop.f32.mrb[0].mxu0
        %v4474 = vadd.f32 0.0, %v4473
        %v4475 = vpop.f32.mrb[0].mxu0
        %4476 = vdwg.mxu0
        %v4477 = vadd.f32 %v4152, %v4348
        %v4478 = vadd.f32 %v4154, %v4350
        %v4479 = vadd.f32 %v4253, %v4449
        %v4480 = vadd.f32 %v4158, %v4354
        %v4481 = vadd.f32 %v4160, %v4356
        %v4482 = vadd.f32 %v4258, %v4454
        %v4483 = vadd.f32 %v4164, %v4360
        %v4484 = vadd.f32 %v4166, %v4362
        %v4485 = vadd.f32 %v4263, %v4459
        %v4486 = vadd.f32 %v4170, %v4366
        %v4487 = vadd.f32 %v4172, %v4368
        %v4488 = vadd.f32 %v4268, %v4464
        %v4489 = vadd.f32 %v4176, %v4372
        %v4490 = vadd.f32 %v4178, %v4374
        %v4491 = vadd.f32 %v4273, %v4469
        %v4492 = vadd.f32 %v4182, %v4378
        %v4493 = vadd.f32 %v4184, %v4380
        %v4494 = vadd.f32 %v4278, %v4474
        %4495 = vmatprep.subr.mxu0 %v1140
        %4496 = vmatpush1.msra.mxu0 %v1139
        %4497 = vmatprep.subr.mxu0 %v1143
        %4498 = vmatpush1.msra.mxu0 %v1142
        %4499 = vmatprep.subr.mxu0 %v1146
        %4500 = vmatpush1.msra.mxu0 %v1145
        %4501 = vmatprep.subr.mxu0 %v1149
        %4502 = vmatpush1.msra.mxu0 %v1148
        %4503 = vmatprep.subr.mxu0 %v1152
        %4504 = vmatpush1.msra.mxu0 %v1151
        %4505 = vmatprep.subr.mxu0 %v1155
        %4506 = vmatpush1.msra.mxu0 %v1154
        %4507 = vmatprep.subr.mxu0 %v1158
        %4508 = vmatpush1.msra.mxu0 %v1157
        %4509 = vmatprep.subr.mxu0 0.0
        %4510 = vmatpush1.msra.mxu0 0.0
        %4511 = vmatprep.subr.mxu0 0.0
        %4512 = vmatpush1.msra.mxu0 0.0
        %4513 = vmatprep.subr.mxu0 0.0
        %4514 = vmatpush1.msra.mxu0 0.0
        %4515 = vmatprep.subr.mxu0 0.0
        %4516 = vmatpush1.msra.mxu0 0.0
        %4517 = vmatprep.subr.mxu0 0.0
        %4518 = vmatpush1.msra.mxu0 0.0
        %4519 = vmatprep.subr.mxu0 0.0
        %4520 = vmatpush1.msra.mxu0 0.0
        %4521 = vmatprep.subr.mxu0 0.0
        %4522 = vmatpush1.msra.mxu0 0.0
        %4523 = vmatprep.subr.mxu0 0.0
        %4524 = vmatpush1.msra.mxu0 0.0
        %4525 = vmatprep.subr.mxu0 0.0
        %4526 = vmatpush1.msra.mxu0 0.0
        %4527 = vmatprep.subr.mxu0 0.0
        %4528 = vmatpush1.msra.mxu0 0.0
        %4529 = vmatprep.subr.mxu0 0.0
        %4530 = vmatpush1.msra.mxu0 0.0
        %4531 = vmatprep.subr.mxu0 0.0
        %4532 = vmatpush1.msra.mxu0 0.0
        %4533 = vmatprep.subr.mxu0 0.0
        %4534 = vmatpush1.msra.mxu0 0.0
        %4535 = vmatprep.subr.mxu0 0.0
        %4536 = vmatpush1.msra.mxu0 0.0
        %4537 = vmatprep.subr.mxu0 0.0
        %4538 = vmatpush1.msra.mxu0 0.0
        %4539 = vmatprep.subr.mxu0 0.0
        %4540 = vmatpush1.msra.mxu0 0.0
        %4541 = vmatprep.subr.mxu0 0.0
        %4542 = vmatpush1.msra.mxu0 0.0
        %4543 = vmatprep.subr.mxu0 0.0
        %4544 = vmatpush1.msra.mxu0 0.0
        %4545 = vmatprep.subr.mxu0 0.0
        %4546 = vmatpush1.msra.mxu0 0.0
        %4547 = vmatprep.subr.mxu0 0.0
        %4548 = vmatpush1.msra.mxu0 0.0
        %4549 = vmatprep.subr.mxu0 0.0
        %4550 = vmatpush1.msra.mxu0 0.0
        %4551 = vmatprep.subr.mxu0 0.0
        %4552 = vmatpush1.msra.mxu0 0.0
        %4553 = vmatprep.subr.mxu0 0.0
        %4554 = vmatpush1.msra.mxu0 0.0
        %4555 = vmatprep.subr.mxu0 0.0
        %4556 = vmatpush1.msra.mxu0 0.0
        %4557 = vmatprep.subr.mxu0 0.0
        %4558 = vmatpush1.msra.mxu0 0.0
        %4559 = vmatprep.mubr.f32.mxu0 0.0
        %4560 = vmatmul.mubr.f32.gmra.mrb[0].mxu0 %v3658
        %v4561 = vpop.f32.mrb[0].mxu0
        %v4562 = vadd.f32 0.0, %v4561
        %v4563 = vpop.f32.mrb[0].mxu0
        %v4564 = vadd.f32 0.0, %v4563
        %4565 = vmatprep.mubr.f32.mxu0 0.0
        %4566 = vmatmul.mubr.f32.gmra.mrb[0].mxu0 %v3661
        %v4567 = vpop.f32.mrb[0].mxu0
        %v4568 = vadd.f32 0.0, %v4567
        %v4569 = vpop.f32.mrb[0].mxu0
        %v4570 = vadd.f32 0.0, %v4569
        %4571 = vmatprep.mubr.f32.mxu0 0.0
        %4572 = vmatmul.mubr.f32.gmra.mrb[0].mxu0 %v3664
        %v4573 = vpop.f32.mrb[0].mxu0
        %v4574 = vadd.f32 0.0, %v4573
        %v4575 = vpop.f32.mrb[0].mxu0
        %v4576 = vadd.f32 0.0, %v4575
        %4577 = vmatprep.mubr.f32.mxu0 0.0
        %4578 = vmatmul.mubr.f32.gmra.mrb[0].mxu0 %v3667
        %v4579 = vpop.f32.mrb[0].mxu0
        %v4580 = vadd.f32 0.0, %v4579
        %v4581 = vpop.f32.mrb[0].mxu0
        %v4582 = vadd.f32 0.0, %v4581
        %4583 = vmatprep.mubr.f32.mxu0 0.0
        %4584 = vmatmul.mubr.f32.gmra.mrb[0].mxu0 %v3670
        %v4585 = vpop.f32.mrb[0].mxu0
        %v4586 = vadd.f32 0.0, %v4585
        %v4587 = vpop.f32.mrb[0].mxu0
        %v4588 = vadd.f32 0.0, %v4587
        %4589 = vmatprep.mubr.f32.mxu0 0.0
        %4590 = vmatmul.mubr.f32.gmra.mrb[0].mxu0 %v3673
        %v4591 = vpop.f32.mrb[0].mxu0
        %v4592 = vadd.f32 0.0, %v4591
        %v4593 = vpop.f32.mrb[0].mxu0
        %v4594 = vadd.f32 0.0, %v4593
        %4595 = vdwg.mxu0
        %4596 = vmatprep.subr.mxu0 0.0
        %4597 = vmatpush1.msra.mxu0 %v1141
        %4598 = vmatprep.subr.mxu0 0.0
        %4599 = vmatpush1.msra.mxu0 %v1144
        %4600 = vmatprep.subr.mxu0 0.0
        %4601 = vmatpush1.msra.mxu0 %v1147
        %4602 = vmatprep.subr.mxu0 0.0
        %4603 = vmatpush1.msra.mxu0 %v1150
        %4604 = vmatprep.subr.mxu0 0.0
        %4605 = vmatpush1.msra.mxu0 %v1153
        %4606 = vmatprep.subr.mxu0 0.0
        %4607 = vmatpush1.msra.mxu0 %v1156
        %4608 = vmatprep.subr.mxu0 0.0
        %4609 = vmatpush1.msra.mxu0 %v1159
        %4610 = vmatprep.subr.mxu0 0.0
        %4611 = vmatpush1.msra.mxu0 0.0
        %4612 = vmatprep.subr.mxu0 0.0
        %4613 = vmatpush1.msra.mxu0 0.0
        %4614 = vmatprep.subr.mxu0 0.0
        %4615 = vmatpush1.msra.mxu0 0.0
        %4616 = vmatprep.subr.mxu0 0.0
        %4617 = vmatpush1.msra.mxu0 0.0
        %4618 = vmatprep.subr.mxu0 0.0
        %4619 = vmatpush1.msra.mxu0 0.0
        %4620 = vmatprep.subr.mxu0 0.0
        %4621 = vmatpush1.msra.mxu0 0.0
        %4622 = vmatprep.subr.mxu0 0.0
        %4623 = vmatpush1.msra.mxu0 0.0
        %4624 = vmatprep.subr.mxu0 0.0
        %4625 = vmatpush1.msra.mxu0 0.0
        %4626 = vmatprep.subr.mxu0 0.0
        %4627 = vmatpush1.msra.mxu0 0.0
        %4628 = vmatprep.subr.mxu0 0.0
        %4629 = vmatpush1.msra.mxu0 0.0
        %4630 = vmatprep.subr.mxu0 0.0
        %4631 = vmatpush1.msra.mxu0 0.0
        %4632 = vmatprep.subr.mxu0 0.0
        %4633 = vmatpush1.msra.mxu0 0.0
        %4634 = vmatprep.subr.mxu0 0.0
        %4635 = vmatpush1.msra.mxu0 0.0
        %4636 = vmatprep.subr.mxu0 0.0
        %4637 = vmatpush1.msra.mxu0 0.0
        %4638 = vmatprep.subr.mxu0 0.0
        %4639 = vmatpush1.msra.mxu0 0.0
        %4640 = vmatprep.subr.mxu0 0.0
        %4641 = vmatpush1.msra.mxu0 0.0
        %4642 = vmatprep.subr.mxu0 0.0
        %4643 = vmatpush1.msra.mxu0 0.0
        %4644 = vmatprep.subr.mxu0 0.0
        %4645 = vmatpush1.msra.mxu0 0.0
        %4646 = vmatprep.subr.mxu0 0.0
        %4647 = vmatpush1.msra.mxu0 0.0
        %4648 = vmatprep.subr.mxu0 0.0
        %4649 = vmatpush1.msra.mxu0 0.0
        %4650 = vmatprep.subr.mxu0 0.0
        %4651 = vmatpush1.msra.mxu0 0.0
        %4652 = vmatprep.subr.mxu0 0.0
        %4653 = vmatpush1.msra.mxu0 0.0
        %4654 = vmatprep.subr.mxu0 0.0
        %4655 = vmatpush1.msra.mxu0 0.0
        %4656 = vmatprep.subr.mxu0 0.0
        %4657 = vmatpush1.msra.mxu0 0.0
        %4658 = vmatprep.subr.mxu0 0.0
        %4659 = vmatpush1.msra.mxu0 0.0
        %4660 = vmatprep.mubr.f32.mxu0 0.0
        %4661 = vmatmul.mubr.f32.gmra.mrb[0].mxu0 %v3658
        %v4662 = vpop.f32.mrb[0].mxu0
        %v4663 = vadd.f32 0.0, %v4662
        %v4664 = vpop.f32.mrb[0].mxu0
        %4665 = vmatprep.mubr.f32.mxu0 0.0
        %4666 = vmatmul.mubr.f32.gmra.mrb[0].mxu0 %v3661
        %v4667 = vpop.f32.mrb[0].mxu0
        %v4668 = vadd.f32 0.0, %v4667
        %v4669 = vpop.f32.mrb[0].mxu0
        %4670 = vmatprep.mubr.f32.mxu0 0.0
        %4671 = vmatmul.mubr.f32.gmra.mrb[0].mxu0 %v3664
        %v4672 = vpop.f32.mrb[0].mxu0
        %v4673 = vadd.f32 0.0, %v4672
        %v4674 = vpop.f32.mrb[0].mxu0
        %4675 = vmatprep.mubr.f32.mxu0 0.0
        %4676 = vmatmul.mubr.f32.gmra.mrb[0].mxu0 %v3667
        %v4677 = vpop.f32.mrb[0].mxu0
        %v4678 = vadd.f32 0.0, %v4677
        %v4679 = vpop.f32.mrb[0].mxu0
        %4680 = vmatprep.mubr.f32.mxu0 0.0
        %4681 = vmatmul.mubr.f32.gmra.mrb[0].mxu0 %v3670
        %v4682 = vpop.f32.mrb[0].mxu0
        %v4683 = vadd.f32 0.0, %v4682
        %v4684 = vpop.f32.mrb[0].mxu0
        %4685 = vmatprep.mubr.f32.mxu0 0.0
        %4686 = vmatmul.mubr.f32.gmra.mrb[0].mxu0 %v3673
        %v4687 = vpop.f32.mrb[0].mxu0
        %v4688 = vadd.f32 0.0, %v4687
        %v4689 = vpop.f32.mrb[0].mxu0
        %4690 = vdwg.mxu0
        %v4691 = vadd.f32 %v4477, %v4562
        %v4692 = vadd.f32 %v4478, %v4564
        %v4693 = vadd.f32 %v4479, %v4663
        %v4694 = vadd.f32 %v4480, %v4568
        %v4695 = vadd.f32 %v4481, %v4570
        %v4696 = vadd.f32 %v4482, %v4668
        %v4697 = vadd.f32 %v4483, %v4574
        %v4698 = vadd.f32 %v4484, %v4576
        %v4699 = vadd.f32 %v4485, %v4673
        %v4700 = vadd.f32 %v4486, %v4580
        %v4701 = vadd.f32 %v4487, %v4582
        %v4702 = vadd.f32 %v4488, %v4678
        %v4703 = vadd.f32 %v4489, %v4586
        %v4704 = vadd.f32 %v4490, %v4588
        %v4705 = vadd.f32 %v4491, %v4683
        %v4706 = vadd.f32 %v4492, %v4592
        %v4707 = vadd.f32 %v4493, %v4594
        %v4708 = vadd.f32 %v4494, %v4688
        %v4709 = vld [vmem:[%s1131 + $0x8] sm:$0xff]
        %v4710 = vld [vmem:[%s1131 + $0x10] sm:$0xff]
        %v4711 = vld [vmem:[%s1131 + $0x18] sm:$0xff]
        %v4712 = vld [vmem:[%s1131 + $0x20] sm:$0xff]
        %v4713 = vld [vmem:[%s1131 + $0x28] sm:$0xff]
        %v4714 = vld [vmem:[%s1131 + $0x30] sm:$0xff]
        %v4716 = vsel %vm441, %v4709, 0
        %v4719 = vsel %vm441, %v4710, 0
        %v4722 = vsel %vm441, %v4711, 0
        %v4725 = vsel %vm441, %v4712, 0
        %v4728 = vsel %vm441, %v4713, 0
        %v4731 = vsel %vm441, %v4714, 0
        %4733 = vmatprep.subr.mxu0 %v1400
        %4734 = vmatpush1.msra.mxu0 %v1399
        %4735 = vmatprep.subr.mxu0 %v1403
        %4736 = vmatpush1.msra.mxu0 %v1402
        %4737 = vmatprep.subr.mxu0 %v1406
        %4738 = vmatpush1.msra.mxu0 %v1405
        %4739 = vmatprep.subr.mxu0 %v1409
        %4740 = vmatpush1.msra.mxu0 %v1408
        %4741 = vmatprep.subr.mxu0 %v1412
        %4742 = vmatpush1.msra.mxu0 %v1411
        %4743 = vmatprep.subr.mxu0 %v1415
        %4744 = vmatpush1.msra.mxu0 %v1414
        %4745 = vmatprep.subr.mxu0 %v1418
        %4746 = vmatpush1.msra.mxu0 %v1417
        %4747 = vmatprep.subr.mxu0 0.0
        %4748 = vmatpush1.msra.mxu0 0.0
        %4749 = vmatprep.subr.mxu0 0.0
        %4750 = vmatpush1.msra.mxu0 0.0
        %4751 = vmatprep.subr.mxu0 0.0
        %4752 = vmatpush1.msra.mxu0 0.0
        %4753 = vmatprep.subr.mxu0 0.0
        %4754 = vmatpush1.msra.mxu0 0.0
        %4755 = vmatprep.subr.mxu0 0.0
        %4756 = vmatpush1.msra.mxu0 0.0
        %4757 = vmatprep.subr.mxu0 0.0
        %4758 = vmatpush1.msra.mxu0 0.0
        %4759 = vmatprep.subr.mxu0 0.0
        %4760 = vmatpush1.msra.mxu0 0.0
        %4761 = vmatprep.subr.mxu0 0.0
        %4762 = vmatpush1.msra.mxu0 0.0
        %4763 = vmatprep.subr.mxu0 0.0
        %4764 = vmatpush1.msra.mxu0 0.0
        %4765 = vmatprep.subr.mxu0 0.0
        %4766 = vmatpush1.msra.mxu0 0.0
        %4767 = vmatprep.subr.mxu0 0.0
        %4768 = vmatpush1.msra.mxu0 0.0
        %4769 = vmatprep.subr.mxu0 0.0
        %4770 = vmatpush1.msra.mxu0 0.0
        %4771 = vmatprep.subr.mxu0 0.0
        %4772 = vmatpush1.msra.mxu0 0.0
        %4773 = vmatprep.subr.mxu0 0.0
        %4774 = vmatpush1.msra.mxu0 0.0
        %4775 = vmatprep.subr.mxu0 0.0
        %4776 = vmatpush1.msra.mxu0 0.0
        %4777 = vmatprep.subr.mxu0 0.0
        %4778 = vmatpush1.msra.mxu0 0.0
        %4779 = vmatprep.subr.mxu0 0.0
        %4780 = vmatpush1.msra.mxu0 0.0
        %4781 = vmatprep.subr.mxu0 0.0
        %4782 = vmatpush1.msra.mxu0 0.0
        %4783 = vmatprep.subr.mxu0 0.0
        %4784 = vmatpush1.msra.mxu0 0.0
        %4785 = vmatprep.subr.mxu0 0.0
        %4786 = vmatpush1.msra.mxu0 0.0
        %4787 = vmatprep.subr.mxu0 0.0
        %4788 = vmatpush1.msra.mxu0 0.0
        %4789 = vmatprep.subr.mxu0 0.0
        %4790 = vmatpush1.msra.mxu0 0.0
        %4791 = vmatprep.subr.mxu0 0.0
        %4792 = vmatpush1.msra.mxu0 0.0
        %4793 = vmatprep.subr.mxu0 0.0
        %4794 = vmatpush1.msra.mxu0 0.0
        %4795 = vmatprep.subr.mxu0 0.0
        %4796 = vmatpush1.msra.mxu0 0.0
        %4797 = vmatprep.mubr.f32.mxu0 0.0
        %4798 = vmatmul.mubr.f32.gmra.mrb[0].mxu0 %v4716
        %v4799 = vpop.f32.mrb[0].mxu0
        %v4800 = vadd.f32 0.0, %v4799
        %v4801 = vpop.f32.mrb[0].mxu0
        %v4802 = vadd.f32 0.0, %v4801
        %4803 = vmatprep.mubr.f32.mxu0 0.0
        %4804 = vmatmul.mubr.f32.gmra.mrb[0].mxu0 %v4719
        %v4805 = vpop.f32.mrb[0].mxu0
        %v4806 = vadd.f32 0.0, %v4805
        %v4807 = vpop.f32.mrb[0].mxu0
        %v4808 = vadd.f32 0.0, %v4807
        %4809 = vmatprep.mubr.f32.mxu0 0.0
        %4810 = vmatmul.mubr.f32.gmra.mrb[0].mxu0 %v4722
        %v4811 = vpop.f32.mrb[0].mxu0
        %v4812 = vadd.f32 0.0, %v4811
        %v4813 = vpop.f32.mrb[0].mxu0
        %v4814 = vadd.f32 0.0, %v4813
        %4815 = vmatprep.mubr.f32.mxu0 0.0
        %4816 = vmatmul.mubr.f32.gmra.mrb[0].mxu0 %v4725
        %v4817 = vpop.f32.mrb[0].mxu0
        %v4818 = vadd.f32 0.0, %v4817
        %v4819 = vpop.f32.mrb[0].mxu0
        %v4820 = vadd.f32 0.0, %v4819
        %4821 = vmatprep.mubr.f32.mxu0 0.0
        %4822 = vmatmul.mubr.f32.gmra.mrb[0].mxu0 %v4728
        %v4823 = vpop.f32.mrb[0].mxu0
        %v4824 = vadd.f32 0.0, %v4823
        %v4825 = vpop.f32.mrb[0].mxu0
        %v4826 = vadd.f32 0.0, %v4825
        %4827 = vmatprep.mubr.f32.mxu0 0.0
        %4828 = vmatmul.mubr.f32.gmra.mrb[0].mxu0 %v4731
        %v4829 = vpop.f32.mrb[0].mxu0
        %v4830 = vadd.f32 0.0, %v4829
        %v4831 = vpop.f32.mrb[0].mxu0
        %v4832 = vadd.f32 0.0, %v4831
        %4833 = vdwg.mxu0
        %4834 = vmatprep.subr.mxu0 0.0
        %4835 = vmatpush1.msra.mxu0 %v1401
        %4836 = vmatprep.subr.mxu0 0.0
        %4837 = vmatpush1.msra.mxu0 %v1404
        %4838 = vmatprep.subr.mxu0 0.0
        %4839 = vmatpush1.msra.mxu0 %v1407
        %4840 = vmatprep.subr.mxu0 0.0
        %4841 = vmatpush1.msra.mxu0 %v1410
        %4842 = vmatprep.subr.mxu0 0.0
        %4843 = vmatpush1.msra.mxu0 %v1413
        %4844 = vmatprep.subr.mxu0 0.0
        %4845 = vmatpush1.msra.mxu0 %v1416
        %4846 = vmatprep.subr.mxu0 0.0
        %4847 = vmatpush1.msra.mxu0 %v1419
        %4848 = vmatprep.subr.mxu0 0.0
        %4849 = vmatpush1.msra.mxu0 0.0
        %4850 = vmatprep.subr.mxu0 0.0
        %4851 = vmatpush1.msra.mxu0 0.0
        %4852 = vmatprep.subr.mxu0 0.0
        %4853 = vmatpush1.msra.mxu0 0.0
        %4854 = vmatprep.subr.mxu0 0.0
        %4855 = vmatpush1.msra.mxu0 0.0
        %4856 = vmatprep.subr.mxu0 0.0
        %4857 = vmatpush1.msra.mxu0 0.0
        %4858 = vmatprep.subr.mxu0 0.0
        %4859 = vmatpush1.msra.mxu0 0.0
        %4860 = vmatprep.subr.mxu0 0.0
        %4861 = vmatpush1.msra.mxu0 0.0
        %4862 = vmatprep.subr.mxu0 0.0
        %4863 = vmatpush1.msra.mxu0 0.0
        %4864 = vmatprep.subr.mxu0 0.0
        %4865 = vmatpush1.msra.mxu0 0.0
        %4866 = vmatprep.subr.mxu0 0.0
        %4867 = vmatpush1.msra.mxu0 0.0
        %4868 = vmatprep.subr.mxu0 0.0
        %4869 = vmatpush1.msra.mxu0 0.0
        %4870 = vmatprep.subr.mxu0 0.0
        %4871 = vmatpush1.msra.mxu0 0.0
        %4872 = vmatprep.subr.mxu0 0.0
        %4873 = vmatpush1.msra.mxu0 0.0
        %4874 = vmatprep.subr.mxu0 0.0
        %4875 = vmatpush1.msra.mxu0 0.0
        %4876 = vmatprep.subr.mxu0 0.0
        %4877 = vmatpush1.msra.mxu0 0.0
        %4878 = vmatprep.subr.mxu0 0.0
        %4879 = vmatpush1.msra.mxu0 0.0
        %4880 = vmatprep.subr.mxu0 0.0
        %4881 = vmatpush1.msra.mxu0 0.0
        %4882 = vmatprep.subr.mxu0 0.0
        %4883 = vmatpush1.msra.mxu0 0.0
        %4884 = vmatprep.subr.mxu0 0.0
        %4885 = vmatpush1.msra.mxu0 0.0
        %4886 = vmatprep.subr.mxu0 0.0
        %4887 = vmatpush1.msra.mxu0 0.0
        %4888 = vmatprep.subr.mxu0 0.0
        %4889 = vmatpush1.msra.mxu0 0.0
        %4890 = vmatprep.subr.mxu0 0.0
        %4891 = vmatpush1.msra.mxu0 0.0
        %4892 = vmatprep.subr.mxu0 0.0
        %4893 = vmatpush1.msra.mxu0 0.0
        %4894 = vmatprep.subr.mxu0 0.0
        %4895 = vmatpush1.msra.mxu0 0.0
        %4896 = vmatprep.subr.mxu0 0.0
        %4897 = vmatpush1.msra.mxu0 0.0
        %4898 = vmatprep.mubr.f32.mxu0 0.0
        %4899 = vmatmul.mubr.f32.gmra.mrb[0].mxu0 %v4716
        %v4900 = vpop.f32.mrb[0].mxu0
        %v4901 = vadd.f32 0.0, %v4900
        %v4902 = vpop.f32.mrb[0].mxu0
        %4903 = vmatprep.mubr.f32.mxu0 0.0
        %4904 = vmatmul.mubr.f32.gmra.mrb[0].mxu0 %v4719
        %v4905 = vpop.f32.mrb[0].mxu0
        %v4906 = vadd.f32 0.0, %v4905
        %v4907 = vpop.f32.mrb[0].mxu0
        %4908 = vmatprep.mubr.f32.mxu0 0.0
        %4909 = vmatmul.mubr.f32.gmra.mrb[0].mxu0 %v4722
        %v4910 = vpop.f32.mrb[0].mxu0
        %v4911 = vadd.f32 0.0, %v4910
        %v4912 = vpop.f32.mrb[0].mxu0
        %4913 = vmatprep.mubr.f32.mxu0 0.0
        %4914 = vmatmul.mubr.f32.gmra.mrb[0].mxu0 %v4725
        %v4915 = vpop.f32.mrb[0].mxu0
        %v4916 = vadd.f32 0.0, %v4915
        %v4917 = vpop.f32.mrb[0].mxu0
        %4918 = vmatprep.mubr.f32.mxu0 0.0
        %4919 = vmatmul.mubr.f32.gmra.mrb[0].mxu0 %v4728
        %v4920 = vpop.f32.mrb[0].mxu0
        %v4921 = vadd.f32 0.0, %v4920
        %v4922 = vpop.f32.mrb[0].mxu0
        %4923 = vmatprep.mubr.f32.mxu0 0.0
        %4924 = vmatmul.mubr.f32.gmra.mrb[0].mxu0 %v4731
        %v4925 = vpop.f32.mrb[0].mxu0
        %v4926 = vadd.f32 0.0, %v4925
        %v4927 = vpop.f32.mrb[0].mxu0
        %4928 = vdwg.mxu0
        %v4929 = vadd.f32 %v4691, %v4800
        %v4930 = vadd.f32 %v4692, %v4802
        %v4931 = vadd.f32 %v4693, %v4901
        %v4932 = vadd.f32 %v4694, %v4806
        %v4933 = vadd.f32 %v4695, %v4808
        %v4934 = vadd.f32 %v4696, %v4906
        %v4935 = vadd.f32 %v4697, %v4812
        %v4936 = vadd.f32 %v4698, %v4814
        %v4937 = vadd.f32 %v4699, %v4911
        %v4938 = vadd.f32 %v4700, %v4818
        %v4939 = vadd.f32 %v4701, %v4820
        %v4940 = vadd.f32 %v4702, %v4916
        %v4941 = vadd.f32 %v4703, %v4824
        %v4942 = vadd.f32 %v4704, %v4826
        %v4943 = vadd.f32 %v4705, %v4921
        %v4944 = vadd.f32 %v4706, %v4830
        %v4945 = vadd.f32 %v4707, %v4832
        %v4946 = vadd.f32 %v4708, %v4926
        %v4947 = vmax.f32 %v3871, %v4929
        %v4948 = vmax.f32 %v3872, %v4930
        %v4949 = vmax.f32 %v3873, %v4931
        %v4950 = vmax.f32 %v3874, %v4932
        %v4951 = vmax.f32 %v3875, %v4933
        %v4952 = vmax.f32 %v3876, %v4934
        %v4953 = vmax.f32 %v3877, %v4935
        %v4954 = vmax.f32 %v3878, %v4936
        %v4955 = vmax.f32 %v3879, %v4937
        %v4956 = vmax.f32 %v3880, %v4938
        %v4957 = vmax.f32 %v3881, %v4939
        %v4958 = vmax.f32 %v3882, %v4940
        %v4959 = vmax.f32 %v3883, %v4941
        %v4960 = vmax.f32 %v3884, %v4942
        %v4961 = vmax.f32 %v3885, %v4943
        %v4962 = vmax.f32 %v3886, %v4944
        %v4963 = vmax.f32 %v3887, %v4945
        %v4964 = vmax.f32 %v3888, %v4946
        %4977 = vrot.lane.b32.xlu0 %v4948, 100
        %v4978 = vpop.permute.xlu0 %4977
        %4979 = vrot.lane.b32.xlu0 %v4949, 100
        %v4980 = vpop.permute.xlu0 %4979
        %4981 = vrot.lane.b32.xlu0 %v4951, 100
        %v4982 = vpop.permute.xlu0 %4981
        %4983 = vrot.lane.b32.xlu0 %v4952, 100
        %v4984 = vpop.permute.xlu0 %4983
        %4985 = vrot.lane.b32.xlu0 %v4954, 100
        %v4986 = vpop.permute.xlu0 %4985
        %4987 = vrot.lane.b32.xlu0 %v4955, 100
        %v4988 = vpop.permute.xlu0 %4987
        %4989 = vrot.lane.b32.xlu0 %v4957, 100
        %v4990 = vpop.permute.xlu0 %4989
        %4991 = vrot.lane.b32.xlu0 %v4958, 100
        %v4992 = vpop.permute.xlu0 %4991
        %4993 = vrot.lane.b32.xlu0 %v4960, 100
        %v4994 = vpop.permute.xlu0 %4993
        %4995 = vrot.lane.b32.xlu0 %v4961, 100
        %v4996 = vpop.permute.xlu0 %4995
        %4997 = vrot.lane.b32.xlu0 %v4963, 100
        %v4998 = vpop.permute.xlu0 %4997
        %4999 = vrot.lane.b32.xlu0 %v4964, 100
        %v5000 = vpop.permute.xlu0 %4999
        %v5001 = vsel %vm2764, %v4978, %v4980
        %v5002 = vsel %vm2764, %v4982, %v4984
        %v5003 = vsel %vm2764, %v4986, %v4988
        %v5004 = vsel %vm2764, %v4990, %v4992
        %v5005 = vsel %vm2764, %v4994, %v4996
        %v5006 = vsel %vm2764, %v4998, %v5000
        %v5019 = vmax.f32 %v4947, %v5001
        %v5020 = vmax.f32 %v4948, %v4980
        %v5021 = vmax.f32 %v4950, %v5002
        %v5022 = vmax.f32 %v4951, %v4984
        %v5023 = vmax.f32 %v4953, %v5003
        %v5024 = vmax.f32 %v4954, %v4988
        %v5025 = vmax.f32 %v4956, %v5004
        %v5026 = vmax.f32 %v4957, %v4992
        %v5027 = vmax.f32 %v4959, %v5005
        %v5028 = vmax.f32 %v4960, %v4996
        %v5029 = vmax.f32 %v4962, %v5006
        %v5030 = vmax.f32 %v4963, %v5000
        %v5031 = vadd.f32 %v5019, %v2800
        %v5032 = vadd.f32 %v5020, %v2804
        %v5033 = vadd.f32 %v5021, %v2800
        %v5034 = vadd.f32 %v5022, %v2804
        %v5035 = vadd.f32 %v5023, %v2800
        %v5036 = vadd.f32 %v5024, %v2804
        %v5037 = vadd.f32 %v5025, %v2800
        %v5038 = vadd.f32 %v5026, %v2804
        %v5039 = vadd.f32 %v5027, %v2800
        %v5040 = vadd.f32 %v5028, %v2804
        %v5041 = vadd.f32 %v5029, %v2800
        %v5042 = vadd.f32 %v5030, %v2804
        %v5043 = vmax.f32 %v5031, 0.0
        %v5044 = vmax.f32 %v5032, 0.0
        %v5045 = vmax.f32 %v5033, 0.0
        %v5046 = vmax.f32 %v5034, 0.0
        %v5047 = vmax.f32 %v5035, 0.0
        %v5048 = vmax.f32 %v5036, 0.0
        %v5049 = vmax.f32 %v5037, 0.0
        %v5050 = vmax.f32 %v5038, 0.0
        %v5051 = vmax.f32 %v5039, 0.0
        %v5052 = vmax.f32 %v5040, 0.0
        %v5053 = vmax.f32 %v5041, 0.0
        %v5054 = vmax.f32 %v5042, 0.0
        %v5055 = vld [vmem:[%s3] sm:$0xff]
        %v5056 = vld [vmem:[%s3 + $0x8] sm:$0xff]
        %v5057 = vld [vmem:[%s3 + $0x10] sm:$0xff]
        %v5058 = vld [vmem:[%s3 + $0x18] sm:$0xff]
        %v5059 = vld [vmem:[%s3 + $0x20] sm:$0xff]
        %v5060 = vld [vmem:[%s3 + $0x28] sm:$0xff]
        %v5061 = vld [vmem:[%s3 + $0x30] sm:$0xff]
        %v5062 = vld [vmem:[%s3 + $0x38] sm:$0xff]
        %v5063 = vld [vmem:[%s3 + $0x40] sm:$0xff]
        %v5064 = vld [vmem:[%s3 + $0x48] sm:$0xff]
        %v5065 = vld [vmem:[%s3 + $0x50] sm:$0xff]
        %v5066 = vld [vmem:[%s3 + $0x58] sm:$0xff]
        %v5067 = vld [vmem:[%s3 + $0x60] sm:$0xff]
        %v5068 = vld [vmem:[%s3 + $0x68] sm:$0xff]
        %v5069 = vld [vmem:[%s3 + $0x70] sm:$0xff]
        %v5070 = vld [vmem:[%s3 + $0x78] sm:$0xff]
        %v5071 = vld [vmem:[%s3 + $0x80] sm:$0xff]
        %v5072 = vld [vmem:[%s3 + $0x88] sm:$0xff]
        %v5073 = vld [vmem:[%s3 + $0x90] sm:$0xff]
        %v5074 = vld [vmem:[%s3 + $0x98] sm:$0xff]
        %v5075 = vld [vmem:[%s3 + $0xa0] sm:$0xff]
        %v5076 = vld [vmem:[%s3 + $0xa8] sm:$0xff]
        %v5077 = vld [vmem:[%s3 + $0xb0] sm:$0xff]
        %v5078 = vld [vmem:[%s3 + $0xb8] sm:$0xff]
        %v5079 = vld [vmem:[%s3 + $0xc0] sm:$0xff]
        %v5080 = vld [vmem:[%s3 + $0xc8] sm:$0xff]
        %v5081 = vld [vmem:[%s3 + $0xd0] sm:$0xff]
        %v5082 = vld [vmem:[%s3 + $0xd8] sm:$0xff]
        %v5083 = vld [vmem:[%s3 + $0xe0] sm:$0xff]
        %v5084 = vld [vmem:[%s3 + $0xe8] sm:$0xff]
        %v5085 = vld [vmem:[%s3 + $0xf0] sm:$0xff]
        %v5086 = vld [vmem:[%s3 + $0xf8] sm:$0xff]
        %v5087 = vld [vmem:[%s3 + $0x100] sm:$0xff]
        %v5088 = vld [vmem:[%s3 + $0x108] sm:$0xff]
        %v5089 = vld [vmem:[%s3 + $0x110] sm:$0xff]
        %v5090 = vld [vmem:[%s3 + $0x118] sm:$0xff]
        %v5091 = vld [vmem:[%s3 + $0x120] sm:$0xff]
        %v5092 = vld [vmem:[%s3 + $0x128] sm:$0xff]
        %v5093 = vld [vmem:[%s3 + $0x130] sm:$0xff]
        %v5094 = vld [vmem:[%s3 + $0x138] sm:$0xff]
        %v5095 = vld [vmem:[%s3 + $0x140] sm:$0xff]
        %v5096 = vld [vmem:[%s3 + $0x148] sm:$0xff]
        %v5097 = vld [vmem:[%s3 + $0x150] sm:$0xff]
        %v5098 = vld [vmem:[%s3 + $0x158] sm:$0xff]
        %v5099 = vld [vmem:[%s3 + $0x160] sm:$0xff]
        %v5100 = vld [vmem:[%s3 + $0x168] sm:$0xff]
        %v5101 = vld [vmem:[%s3 + $0x170] sm:$0xff]
        %v5102 = vld [vmem:[%s3 + $0x178] sm:$0xff]
        %v5103 = vld [vmem:[%s3 + $0x180] sm:$0xff]
        %v5104 = vld [vmem:[%s3 + $0x188] sm:$0xff]
        %v5105 = vld [vmem:[%s3 + $0x190] sm:$0xff]
        %v5106 = vld [vmem:[%s3 + $0x198] sm:$0xff]
        %v5107 = vld [vmem:[%s3 + $0x1a0] sm:$0xff]
        %v5108 = vld [vmem:[%s3 + $0x1a8] sm:$0xff]
        %v5109 = vld [vmem:[%s3 + $0x1b0] sm:$0xff]
        %v5110 = vld [vmem:[%s3 + $0x1b8] sm:$0xff]
        %v5111 = vld [vmem:[%s3 + $0x1c0] sm:$0xff]
        %v5112 = vld [vmem:[%s3 + $0x1c8] sm:$0xf]
        %v5113 = vld [vmem:[%s3 + $0x1d0] sm:$0xf]
        %v5114 = vld [vmem:[%s3 + $0x1d8] sm:$0xf]
        %s5115 = scalar_lea.vmem %s3, 480
        %v5116 = vld [vmem:[%s5115] sm:$0xff]
        %v5117 = vld [vmem:[%s5115 + $0x8] sm:$0xff]
        %v5118 = vld [vmem:[%s5115 + $0x10] sm:$0xff]
        %v5119 = vld [vmem:[%s5115 + $0x18] sm:$0xff]
        %v5120 = vld [vmem:[%s5115 + $0x20] sm:$0xff]
        %v5121 = vld [vmem:[%s5115 + $0x28] sm:$0xff]
        %v5122 = vld [vmem:[%s5115 + $0x30] sm:$0xff]
        %v5123 = vld [vmem:[%s5115 + $0x38] sm:$0xff]
        %v5124 = vld [vmem:[%s5115 + $0x40] sm:$0xff]
        %v5125 = vld [vmem:[%s5115 + $0x48] sm:$0xff]
        %v5126 = vld [vmem:[%s5115 + $0x50] sm:$0xff]
        %v5127 = vld [vmem:[%s5115 + $0x58] sm:$0xff]
        %v5128 = vld [vmem:[%s5115 + $0x60] sm:$0xff]
        %v5129 = vld [vmem:[%s5115 + $0x68] sm:$0xff]
        %v5130 = vld [vmem:[%s5115 + $0x70] sm:$0xff]
        %v5131 = vld [vmem:[%s5115 + $0x78] sm:$0xff]
        %v5132 = vld [vmem:[%s5115 + $0x80] sm:$0xff]
        %v5133 = vld [vmem:[%s5115 + $0x88] sm:$0xff]
        %v5134 = vld [vmem:[%s5115 + $0x90] sm:$0xff]
        %v5135 = vld [vmem:[%s5115 + $0x98] sm:$0xff]
        %v5136 = vld [vmem:[%s5115 + $0xa0] sm:$0xff]
        %v5137 = vld [vmem:[%s5115 + $0xa8] sm:$0xff]
        %v5138 = vld [vmem:[%s5115 + $0xb0] sm:$0xff]
        %v5139 = vld [vmem:[%s5115 + $0xb8] sm:$0xff]
        %v5140 = vld [vmem:[%s5115 + $0xc0] sm:$0xff]
        %v5141 = vld [vmem:[%s5115 + $0xc8] sm:$0xff]
        %v5142 = vld [vmem:[%s5115 + $0xd0] sm:$0xff]
        %v5143 = vld [vmem:[%s5115 + $0xd8] sm:$0xff]
        %v5144 = vld [vmem:[%s5115 + $0xe0] sm:$0xff]
        %v5145 = vld [vmem:[%s5115 + $0xe8] sm:$0xff]
        %v5146 = vld [vmem:[%s5115 + $0xf0] sm:$0xff]
        %v5147 = vld [vmem:[%s5115 + $0xf8] sm:$0xff]
        %v5148 = vld [vmem:[%s5115 + $0x100] sm:$0xff]
        %v5149 = vld [vmem:[%s5115 + $0x108] sm:$0xff]
        %v5150 = vld [vmem:[%s5115 + $0x110] sm:$0xff]
        %v5151 = vld [vmem:[%s5115 + $0x118] sm:$0xff]
        %v5152 = vld [vmem:[%s5115 + $0x120] sm:$0xff]
        %v5153 = vld [vmem:[%s5115 + $0x128] sm:$0xff]
        %v5154 = vld [vmem:[%s5115 + $0x130] sm:$0xff]
        %v5155 = vld [vmem:[%s5115 + $0x138] sm:$0xff]
        %v5156 = vld [vmem:[%s5115 + $0x140] sm:$0xff]
        %v5157 = vld [vmem:[%s5115 + $0x148] sm:$0xff]
        %v5158 = vld [vmem:[%s5115 + $0x150] sm:$0xff]
        %v5159 = vld [vmem:[%s5115 + $0x158] sm:$0xff]
        %v5160 = vld [vmem:[%s5115 + $0x160] sm:$0xff]
        %v5161 = vld [vmem:[%s5115 + $0x168] sm:$0xff]
        %v5162 = vld [vmem:[%s5115 + $0x170] sm:$0xff]
        %v5163 = vld [vmem:[%s5115 + $0x178] sm:$0xff]
        %v5164 = vld [vmem:[%s5115 + $0x180] sm:$0xff]
        %v5165 = vld [vmem:[%s5115 + $0x188] sm:$0xff]
        %v5166 = vld [vmem:[%s5115 + $0x190] sm:$0xff]
        %v5167 = vld [vmem:[%s5115 + $0x198] sm:$0xff]
        %v5168 = vld [vmem:[%s5115 + $0x1a0] sm:$0xff]
        %v5169 = vld [vmem:[%s5115 + $0x1a8] sm:$0xff]
        %v5170 = vld [vmem:[%s5115 + $0x1b0] sm:$0xff]
        %v5171 = vld [vmem:[%s5115 + $0x1b8] sm:$0xff]
        %v5172 = vld [vmem:[%s5115 + $0x1c0] sm:$0xff]
        %v5173 = vld [vmem:[%s5115 + $0x1c8] sm:$0xf]
        %v5174 = vld [vmem:[%s5115 + $0x1d0] sm:$0xf]
        %v5175 = vld [vmem:[%s5115 + $0x1d8] sm:$0xf]
        %vm5176 = vcmask 228352
        %v5178 = vsel %vm5176, %v5044, 0
        %v5181 = vsel %vm5176, %v5046, 0
        %v5184 = vsel %vm5176, %v5048, 0
        %v5187 = vsel %vm5176, %v5050, 0
        %vm5189 = vcmask 1043456
        %v5191 = vsel %vm5189, %v5173, 0
        %v5194 = vsel %vm5189, %v5174, 0
        %v5197 = vsel %vm5189, %v5175, 0
        %5199 = vmatprep.subr.mxu0 %v5117
        %5200 = vmatpush1.msra.mxu0 %v5116
        %5201 = vmatprep.subr.mxu0 %v5120
        %5202 = vmatpush1.msra.mxu0 %v5119
        %5203 = vmatprep.subr.mxu0 %v5123
        %5204 = vmatpush1.msra.mxu0 %v5122
        %5205 = vmatprep.subr.mxu0 %v5126
        %5206 = vmatpush1.msra.mxu0 %v5125
        %5207 = vmatprep.subr.mxu0 %v5129
        %5208 = vmatpush1.msra.mxu0 %v5128
        %5209 = vmatprep.subr.mxu0 %v5132
        %5210 = vmatpush1.msra.mxu0 %v5131
        %5211 = vmatprep.subr.mxu0 %v5135
        %5212 = vmatpush1.msra.mxu0 %v5134
        %5213 = vmatprep.subr.mxu0 %v5138
        %5214 = vmatpush1.msra.mxu0 %v5137
        %5215 = vmatprep.subr.mxu0 %v5141
        %5216 = vmatpush1.msra.mxu0 %v5140
        %5217 = vmatprep.subr.mxu0 %v5144
        %5218 = vmatpush1.msra.mxu0 %v5143
        %5219 = vmatprep.subr.mxu0 %v5147
        %5220 = vmatpush1.msra.mxu0 %v5146
        %5221 = vmatprep.subr.mxu0 %v5150
        %5222 = vmatpush1.msra.mxu0 %v5149
        %5223 = vmatprep.subr.mxu0 %v5153
        %5224 = vmatpush1.msra.mxu0 %v5152
        %5225 = vmatprep.subr.mxu0 %v5156
        %5226 = vmatpush1.msra.mxu0 %v5155
        %5227 = vmatprep.subr.mxu0 %v5159
        %5228 = vmatpush1.msra.mxu0 %v5158
        %5229 = vmatprep.subr.mxu0 %v5162
        %5230 = vmatpush1.msra.mxu0 %v5161
        %5231 = vmatprep.subr.mxu0 %v5165
        %5232 = vmatpush1.msra.mxu0 %v5164
        %5233 = vmatprep.subr.mxu0 %v5168
        %5234 = vmatpush1.msra.mxu0 %v5167
        %5235 = vmatprep.subr.mxu0 %v5171
        %5236 = vmatpush1.msra.mxu0 %v5170
        %5237 = vmatprep.subr.mxu0 %v5194
        %5238 = vmatpush1.msra.mxu0 %v5191
        %5239 = vmatprep.subr.mxu0 0.0
        %5240 = vmatpush1.msra.mxu0 0.0
        %5241 = vmatprep.subr.mxu0 0.0
        %5242 = vmatpush1.msra.mxu0 0.0
        %5243 = vmatprep.subr.mxu0 0.0
        %5244 = vmatpush1.msra.mxu0 0.0
        %5245 = vmatprep.subr.mxu0 0.0
        %5246 = vmatpush1.msra.mxu0 0.0
        %5247 = vmatprep.subr.mxu0 0.0
        %5248 = vmatpush1.msra.mxu0 0.0
        %5249 = vmatprep.subr.mxu0 0.0
        %5250 = vmatpush1.msra.mxu0 0.0
        %5251 = vmatprep.subr.mxu0 0.0
        %5252 = vmatpush1.msra.mxu0 0.0
        %5253 = vmatprep.subr.mxu0 0.0
        %5254 = vmatpush1.msra.mxu0 0.0
        %5255 = vmatprep.subr.mxu0 0.0
        %5256 = vmatpush1.msra.mxu0 0.0
        %5257 = vmatprep.subr.mxu0 0.0
        %5258 = vmatpush1.msra.mxu0 0.0
        %5259 = vmatprep.subr.mxu0 0.0
        %5260 = vmatpush1.msra.mxu0 0.0
        %5261 = vmatprep.subr.mxu0 0.0
        %5262 = vmatpush1.msra.mxu0 0.0
        %5263 = vmatprep.mubr.f32.mxu0 %v5178
        %5264 = vmatmul.mubr.f32.gmra.mrb[0].mxu0 %v5043
        %v5265 = vpop.f32.mrb[0].mxu0
        %v5266 = vadd.f32 0.0, %v5265
        %v5267 = vpop.f32.mrb[0].mxu0
        %v5268 = vadd.f32 0.0, %v5267
        %5269 = vmatprep.mubr.f32.mxu0 %v5181
        %5270 = vmatmul.mubr.f32.gmra.mrb[0].mxu0 %v5045
        %v5271 = vpop.f32.mrb[0].mxu0
        %v5272 = vadd.f32 0.0, %v5271
        %v5273 = vpop.f32.mrb[0].mxu0
        %v5274 = vadd.f32 0.0, %v5273
        %5275 = vmatprep.mubr.f32.mxu0 %v5184
        %5276 = vmatmul.mubr.f32.gmra.mrb[0].mxu0 %v5047
        %v5277 = vpop.f32.mrb[0].mxu0
        %v5278 = vadd.f32 0.0, %v5277
        %v5279 = vpop.f32.mrb[0].mxu0
        %v5280 = vadd.f32 0.0, %v5279
        %5281 = vmatprep.mubr.f32.mxu0 %v5187
        %5282 = vmatmul.mubr.f32.gmra.mrb[0].mxu0 %v5049
        %v5283 = vpop.f32.mrb[0].mxu0
        %v5284 = vadd.f32 0.0, %v5283
        %v5285 = vpop.f32.mrb[0].mxu0
        %v5286 = vadd.f32 0.0, %v5285
        %5287 = vdwg.mxu0
        %5288 = vmatprep.subr.mxu0 0.0
        %5289 = vmatpush1.msra.mxu0 %v5118
        %5290 = vmatprep.subr.mxu0 0.0
        %5291 = vmatpush1.msra.mxu0 %v5121
        %5292 = vmatprep.subr.mxu0 0.0
        %5293 = vmatpush1.msra.mxu0 %v5124
        %5294 = vmatprep.subr.mxu0 0.0
        %5295 = vmatpush1.msra.mxu0 %v5127
        %5296 = vmatprep.subr.mxu0 0.0
        %5297 = vmatpush1.msra.mxu0 %v5130
        %5298 = vmatprep.subr.mxu0 0.0
        %5299 = vmatpush1.msra.mxu0 %v5133
        %5300 = vmatprep.subr.mxu0 0.0
        %5301 = vmatpush1.msra.mxu0 %v5136
        %5302 = vmatprep.subr.mxu0 0.0
        %5303 = vmatpush1.msra.mxu0 %v5139
        %5304 = vmatprep.subr.mxu0 0.0
        %5305 = vmatpush1.msra.mxu0 %v5142
        %5306 = vmatprep.subr.mxu0 0.0
        %5307 = vmatpush1.msra.mxu0 %v5145
        %5308 = vmatprep.subr.mxu0 0.0
        %5309 = vmatpush1.msra.mxu0 %v5148
        %5310 = vmatprep.subr.mxu0 0.0
        %5311 = vmatpush1.msra.mxu0 %v5151
        %5312 = vmatprep.subr.mxu0 0.0
        %5313 = vmatpush1.msra.mxu0 %v5154
        %5314 = vmatprep.subr.mxu0 0.0
        %5315 = vmatpush1.msra.mxu0 %v5157
        %5316 = vmatprep.subr.mxu0 0.0
        %5317 = vmatpush1.msra.mxu0 %v5160
        %5318 = vmatprep.subr.mxu0 0.0
        %5319 = vmatpush1.msra.mxu0 %v5163
        %5320 = vmatprep.subr.mxu0 0.0
        %5321 = vmatpush1.msra.mxu0 %v5166
        %5322 = vmatprep.subr.mxu0 0.0
        %5323 = vmatpush1.msra.mxu0 %v5169
        %5324 = vmatprep.subr.mxu0 0.0
        %5325 = vmatpush1.msra.mxu0 %v5172
        %5326 = vmatprep.subr.mxu0 0.0
        %5327 = vmatpush1.msra.mxu0 %v5197
        %5328 = vmatprep.subr.mxu0 0.0
        %5329 = vmatpush1.msra.mxu0 0.0
        %5330 = vmatprep.subr.mxu0 0.0
        %5331 = vmatpush1.msra.mxu0 0.0
        %5332 = vmatprep.subr.mxu0 0.0
        %5333 = vmatpush1.msra.mxu0 0.0
        %5334 = vmatprep.subr.mxu0 0.0
        %5335 = vmatpush1.msra.mxu0 0.0
        %5336 = vmatprep.subr.mxu0 0.0
        %5337 = vmatpush1.msra.mxu0 0.0
        %5338 = vmatprep.subr.mxu0 0.0
        %5339 = vmatpush1.msra.mxu0 0.0
        %5340 = vmatprep.subr.mxu0 0.0
        %5341 = vmatpush1.msra.mxu0 0.0
        %5342 = vmatprep.subr.mxu0 0.0
        %5343 = vmatpush1.msra.mxu0 0.0
        %5344 = vmatprep.subr.mxu0 0.0
        %5345 = vmatpush1.msra.mxu0 0.0
        %5346 = vmatprep.subr.mxu0 0.0
        %5347 = vmatpush1.msra.mxu0 0.0
        %5348 = vmatprep.subr.mxu0 0.0
        %5349 = vmatpush1.msra.mxu0 0.0
        %5350 = vmatprep.subr.mxu0 0.0
        %5351 = vmatpush1.msra.mxu0 0.0
        %5352 = vmatprep.mubr.f32.mxu0 %v5178
        %5353 = vmatmul.mubr.f32.gmra.mrb[0].mxu0 %v5043
        %v5354 = vpop.f32.mrb[0].mxu0
        %v5355 = vadd.f32 0.0, %v5354
        %v5356 = vpop.f32.mrb[0].mxu0
        %5357 = vmatprep.mubr.f32.mxu0 %v5181
        %5358 = vmatmul.mubr.f32.gmra.mrb[0].mxu0 %v5045
        %v5359 = vpop.f32.mrb[0].mxu0
        %v5360 = vadd.f32 0.0, %v5359
        %v5361 = vpop.f32.mrb[0].mxu0
        %5362 = vmatprep.mubr.f32.mxu0 %v5184
        %5363 = vmatmul.mubr.f32.gmra.mrb[0].mxu0 %v5047
        %v5364 = vpop.f32.mrb[0].mxu0
        %v5365 = vadd.f32 0.0, %v5364
        %v5366 = vpop.f32.mrb[0].mxu0
        %5367 = vmatprep.mubr.f32.mxu0 %v5187
        %5368 = vmatmul.mubr.f32.gmra.mrb[0].mxu0 %v5049
        %v5369 = vpop.f32.mrb[0].mxu0
        %v5370 = vadd.f32 0.0, %v5369
        %v5371 = vpop.f32.mrb[0].mxu0
        %5372 = vdwg.mxu0
        %v5374 = vsel %vm5176, %v2820, 0
        %v5377 = vsel %vm5176, %v2822, 0
        %v5380 = vsel %vm5176, %v2824, 0
        %v5383 = vsel %vm5176, %v2826, 0
        %v5386 = vsel %vm5189, %v5112, 0
        %v5389 = vsel %vm5189, %v5113, 0
        %v5392 = vsel %vm5189, %v5114, 0
        %5394 = vmatprep.subr.mxu0 %v5056
        %5395 = vmatpush1.msra.mxu0 %v5055
        %5396 = vmatprep.subr.mxu0 %v5059
        %5397 = vmatpush1.msra.mxu0 %v5058
        %5398 = vmatprep.subr.mxu0 %v5062
        %5399 = vmatpush1.msra.mxu0 %v5061
        %5400 = vmatprep.subr.mxu0 %v5065
        %5401 = vmatpush1.msra.mxu0 %v5064
        %5402 = vmatprep.subr.mxu0 %v5068
        %5403 = vmatpush1.msra.mxu0 %v5067
        %5404 = vmatprep.subr.mxu0 %v5071
        %5405 = vmatpush1.msra.mxu0 %v5070
        %5406 = vmatprep.subr.mxu0 %v5074
        %5407 = vmatpush1.msra.mxu0 %v5073
        %5408 = vmatprep.subr.mxu0 %v5077
        %5409 = vmatpush1.msra.mxu0 %v5076
        %5410 = vmatprep.subr.mxu0 %v5080
        %5411 = vmatpush1.msra.mxu0 %v5079
        %5412 = vmatprep.subr.mxu0 %v5083
        %5413 = vmatpush1.msra.mxu0 %v5082
        %5414 = vmatprep.subr.mxu0 %v5086
        %5415 = vmatpush1.msra.mxu0 %v5085
        %5416 = vmatprep.subr.mxu0 %v5089
        %5417 = vmatpush1.msra.mxu0 %v5088
        %5418 = vmatprep.subr.mxu0 %v5092
        %5419 = vmatpush1.msra.mxu0 %v5091
        %5420 = vmatprep.subr.mxu0 %v5095
        %5421 = vmatpush1.msra.mxu0 %v5094
        %5422 = vmatprep.subr.mxu0 %v5098
        %5423 = vmatpush1.msra.mxu0 %v5097
        %5424 = vmatprep.subr.mxu0 %v5101
        %5425 = vmatpush1.msra.mxu0 %v5100
        %5426 = vmatprep.subr.mxu0 %v5104
        %5427 = vmatpush1.msra.mxu0 %v5103
        %5428 = vmatprep.subr.mxu0 %v5107
        %5429 = vmatpush1.msra.mxu0 %v5106
        %5430 = vmatprep.subr.mxu0 %v5110
        %5431 = vmatpush1.msra.mxu0 %v5109
        %5432 = vmatprep.subr.mxu0 %v5389
        %5433 = vmatpush1.msra.mxu0 %v5386
        %5434 = vmatprep.subr.mxu0 0.0
        %5435 = vmatpush1.msra.mxu0 0.0
        %5436 = vmatprep.subr.mxu0 0.0
        %5437 = vmatpush1.msra.mxu0 0.0
        %5438 = vmatprep.subr.mxu0 0.0
        %5439 = vmatpush1.msra.mxu0 0.0
        %5440 = vmatprep.subr.mxu0 0.0
        %5441 = vmatpush1.msra.mxu0 0.0
        %5442 = vmatprep.subr.mxu0 0.0
        %5443 = vmatpush1.msra.mxu0 0.0
        %5444 = vmatprep.subr.mxu0 0.0
        %5445 = vmatpush1.msra.mxu0 0.0
        %5446 = vmatprep.subr.mxu0 0.0
        %5447 = vmatpush1.msra.mxu0 0.0
        %5448 = vmatprep.subr.mxu0 0.0
        %5449 = vmatpush1.msra.mxu0 0.0
        %5450 = vmatprep.subr.mxu0 0.0
        %5451 = vmatpush1.msra.mxu0 0.0
        %5452 = vmatprep.subr.mxu0 0.0
        %5453 = vmatpush1.msra.mxu0 0.0
        %5454 = vmatprep.subr.mxu0 0.0
        %5455 = vmatpush1.msra.mxu0 0.0
        %5456 = vmatprep.subr.mxu0 0.0
        %5457 = vmatpush1.msra.mxu0 0.0
        %5458 = vmatprep.mubr.f32.mxu0 %v5374
        %5459 = vmatmul.mubr.f32.gmra.mrb[0].mxu0 %v2819
        %v5460 = vpop.f32.mrb[0].mxu0
        %v5461 = vadd.f32 %v5266, %v5460
        %v5462 = vpop.f32.mrb[0].mxu0
        %v5463 = vadd.f32 %v5268, %v5462
        %5464 = vmatprep.mubr.f32.mxu0 %v5377
        %5465 = vmatmul.mubr.f32.gmra.mrb[0].mxu0 %v2821
        %v5466 = vpop.f32.mrb[0].mxu0
        %v5467 = vadd.f32 %v5272, %v5466
        %v5468 = vpop.f32.mrb[0].mxu0
        %v5469 = vadd.f32 %v5274, %v5468
        %5470 = vmatprep.mubr.f32.mxu0 %v5380
        %5471 = vmatmul.mubr.f32.gmra.mrb[0].mxu0 %v2823
        %v5472 = vpop.f32.mrb[0].mxu0
        %v5473 = vadd.f32 %v5278, %v5472
        %v5474 = vpop.f32.mrb[0].mxu0
        %v5475 = vadd.f32 %v5280, %v5474
        %5476 = vmatprep.mubr.f32.mxu0 %v5383
        %5477 = vmatmul.mubr.f32.gmra.mrb[0].mxu0 %v2825
        %v5478 = vpop.f32.mrb[0].mxu0
        %v5479 = vadd.f32 %v5284, %v5478
        %v5480 = vpop.f32.mrb[0].mxu0
        %v5481 = vadd.f32 %v5286, %v5480
        %5482 = vdwg.mxu0
        %5483 = vmatprep.subr.mxu0 0.0
        %5484 = vmatpush1.msra.mxu0 %v5057
        %5485 = vmatprep.subr.mxu0 0.0
        %5486 = vmatpush1.msra.mxu0 %v5060
        %5487 = vmatprep.subr.mxu0 0.0
        %5488 = vmatpush1.msra.mxu0 %v5063
        %5489 = vmatprep.subr.mxu0 0.0
        %5490 = vmatpush1.msra.mxu0 %v5066
        %5491 = vmatprep.subr.mxu0 0.0
        %5492 = vmatpush1.msra.mxu0 %v5069
        %5493 = vmatprep.subr.mxu0 0.0
        %5494 = vmatpush1.msra.mxu0 %v5072
        %5495 = vmatprep.subr.mxu0 0.0
        %5496 = vmatpush1.msra.mxu0 %v5075
        %5497 = vmatprep.subr.mxu0 0.0
        %5498 = vmatpush1.msra.mxu0 %v5078
        %5499 = vmatprep.subr.mxu0 0.0
        %5500 = vmatpush1.msra.mxu0 %v5081
        %5501 = vmatprep.subr.mxu0 0.0
        %5502 = vmatpush1.msra.mxu0 %v5084
        %5503 = vmatprep.subr.mxu0 0.0
        %5504 = vmatpush1.msra.mxu0 %v5087
        %5505 = vmatprep.subr.mxu0 0.0
        %5506 = vmatpush1.msra.mxu0 %v5090
        %5507 = vmatprep.subr.mxu0 0.0
        %5508 = vmatpush1.msra.mxu0 %v5093
        %5509 = vmatprep.subr.mxu0 0.0
        %5510 = vmatpush1.msra.mxu0 %v5096
        %5511 = vmatprep.subr.mxu0 0.0
        %5512 = vmatpush1.msra.mxu0 %v5099
        %5513 = vmatprep.subr.mxu0 0.0
        %5514 = vmatpush1.msra.mxu0 %v5102
        %5515 = vmatprep.subr.mxu0 0.0
        %5516 = vmatpush1.msra.mxu0 %v5105
        %5517 = vmatprep.subr.mxu0 0.0
        %5518 = vmatpush1.msra.mxu0 %v5108
        %5519 = vmatprep.subr.mxu0 0.0
        %5520 = vmatpush1.msra.mxu0 %v5111
        %5521 = vmatprep.subr.mxu0 0.0
        %5522 = vmatpush1.msra.mxu0 %v5392
        %5523 = vmatprep.subr.mxu0 0.0
        %5524 = vmatpush1.msra.mxu0 0.0
        %5525 = vmatprep.subr.mxu0 0.0
        %5526 = vmatpush1.msra.mxu0 0.0
        %5527 = vmatprep.subr.mxu0 0.0
        %5528 = vmatpush1.msra.mxu0 0.0
        %5529 = vmatprep.subr.mxu0 0.0
        %5530 = vmatpush1.msra.mxu0 0.0
        %5531 = vmatprep.subr.mxu0 0.0
        %5532 = vmatpush1.msra.mxu0 0.0
        %5533 = vmatprep.subr.mxu0 0.0
        %5534 = vmatpush1.msra.mxu0 0.0
        %5535 = vmatprep.subr.mxu0 0.0
        %5536 = vmatpush1.msra.mxu0 0.0
        %5537 = vmatprep.subr.mxu0 0.0
        %5538 = vmatpush1.msra.mxu0 0.0
        %5539 = vmatprep.subr.mxu0 0.0
        %5540 = vmatpush1.msra.mxu0 0.0
        %5541 = vmatprep.subr.mxu0 0.0
        %5542 = vmatpush1.msra.mxu0 0.0
        %5543 = vmatprep.subr.mxu0 0.0
        %5544 = vmatpush1.msra.mxu0 0.0
        %5545 = vmatprep.subr.mxu0 0.0
        %5546 = vmatpush1.msra.mxu0 0.0
        %5547 = vmatprep.mubr.f32.mxu0 %v5374
        %5548 = vmatmul.mubr.f32.gmra.mrb[0].mxu0 %v2819
        %v5549 = vpop.f32.mrb[0].mxu0
        %v5550 = vadd.f32 %v5355, %v5549
        %v5551 = vpop.f32.mrb[0].mxu0
        %5552 = vmatprep.mubr.f32.mxu0 %v5377
        %5553 = vmatmul.mubr.f32.gmra.mrb[0].mxu0 %v2821
        %v5554 = vpop.f32.mrb[0].mxu0
        %v5555 = vadd.f32 %v5360, %v5554
        %v5556 = vpop.f32.mrb[0].mxu0
        %5557 = vmatprep.mubr.f32.mxu0 %v5380
        %5558 = vmatmul.mubr.f32.gmra.mrb[0].mxu0 %v2823
        %v5559 = vpop.f32.mrb[0].mxu0
        %v5560 = vadd.f32 %v5365, %v5559
        %v5561 = vpop.f32.mrb[0].mxu0
        %5562 = vmatprep.mubr.f32.mxu0 %v5383
        %5563 = vmatmul.mubr.f32.gmra.mrb[0].mxu0 %v2825
        %v5564 = vpop.f32.mrb[0].mxu0
        %v5565 = vadd.f32 %v5370, %v5564
        %v5566 = vpop.f32.mrb[0].mxu0
        %5567 = vdwg.mxu0
        %s5568 = scalar_lea.vmem %s3, 960
        %v5569 = vld [vmem:[%s5568] sm:$0xff]
        %v5570 = vld [vmem:[%s5568 + $0x8] sm:$0xff]
        %v5571 = vld [vmem:[%s5568 + $0x10] sm:$0xff]
        %v5572 = vld [vmem:[%s5568 + $0x18] sm:$0xff]
        %v5573 = vld [vmem:[%s5568 + $0x20] sm:$0xff]
        %v5574 = vld [vmem:[%s5568 + $0x28] sm:$0xff]
        %v5575 = vld [vmem:[%s5568 + $0x30] sm:$0xff]
        %v5576 = vld [vmem:[%s5568 + $0x38] sm:$0xff]
        %v5577 = vld [vmem:[%s5568 + $0x40] sm:$0xff]
        %v5578 = vld [vmem:[%s5568 + $0x48] sm:$0xff]
        %v5579 = vld [vmem:[%s5568 + $0x50] sm:$0xff]
        %v5580 = vld [vmem:[%s5568 + $0x58] sm:$0xff]
        %v5581 = vld [vmem:[%s5568 + $0x60] sm:$0xff]
        %v5582 = vld [vmem:[%s5568 + $0x68] sm:$0xff]
        %v5583 = vld [vmem:[%s5568 + $0x70] sm:$0xff]
        %v5584 = vld [vmem:[%s5568 + $0x78] sm:$0xff]
        %v5585 = vld [vmem:[%s5568 + $0x80] sm:$0xff]
        %v5586 = vld [vmem:[%s5568 + $0x88] sm:$0xff]
        %v5587 = vld [vmem:[%s5568 + $0x90] sm:$0xff]
        %v5588 = vld [vmem:[%s5568 + $0x98] sm:$0xff]
        %v5589 = vld [vmem:[%s5568 + $0xa0] sm:$0xff]
        %v5590 = vld [vmem:[%s5568 + $0xa8] sm:$0xff]
        %v5591 = vld [vmem:[%s5568 + $0xb0] sm:$0xff]
        %v5592 = vld [vmem:[%s5568 + $0xb8] sm:$0xff]
        %v5593 = vld [vmem:[%s5568 + $0xc0] sm:$0xff]
        %v5594 = vld [vmem:[%s5568 + $0xc8] sm:$0xff]
        %v5595 = vld [vmem:[%s5568 + $0xd0] sm:$0xff]
        %v5596 = vld [vmem:[%s5568 + $0xd8] sm:$0xff]
        %v5597 = vld [vmem:[%s5568 + $0xe0] sm:$0xff]
        %v5598 = vld [vmem:[%s5568 + $0xe8] sm:$0xff]
        %v5599 = vld [vmem:[%s5568 + $0xf0] sm:$0xff]
        %v5600 = vld [vmem:[%s5568 + $0xf8] sm:$0xff]
        %v5601 = vld [vmem:[%s5568 + $0x100] sm:$0xff]
        %v5602 = vld [vmem:[%s5568 + $0x108] sm:$0xff]
        %v5603 = vld [vmem:[%s5568 + $0x110] sm:$0xff]
        %v5604 = vld [vmem:[%s5568 + $0x118] sm:$0xff]
        %v5605 = vld [vmem:[%s5568 + $0x120] sm:$0xff]
        %v5606 = vld [vmem:[%s5568 + $0x128] sm:$0xff]
        %v5607 = vld [vmem:[%s5568 + $0x130] sm:$0xff]
        %v5608 = vld [vmem:[%s5568 + $0x138] sm:$0xff]
        %v5609 = vld [vmem:[%s5568 + $0x140] sm:$0xff]
        %v5610 = vld [vmem:[%s5568 + $0x148] sm:$0xff]
        %v5611 = vld [vmem:[%s5568 + $0x150] sm:$0xff]
        %v5612 = vld [vmem:[%s5568 + $0x158] sm:$0xff]
        %v5613 = vld [vmem:[%s5568 + $0x160] sm:$0xff]
        %v5614 = vld [vmem:[%s5568 + $0x168] sm:$0xff]
        %v5615 = vld [vmem:[%s5568 + $0x170] sm:$0xff]
        %v5616 = vld [vmem:[%s5568 + $0x178] sm:$0xff]
        %v5617 = vld [vmem:[%s5568 + $0x180] sm:$0xff]
        %v5618 = vld [vmem:[%s5568 + $0x188] sm:$0xff]
        %v5619 = vld [vmem:[%s5568 + $0x190] sm:$0xff]
        %v5620 = vld [vmem:[%s5568 + $0x198] sm:$0xff]
        %v5621 = vld [vmem:[%s5568 + $0x1a0] sm:$0xff]
        %v5622 = vld [vmem:[%s5568 + $0x1a8] sm:$0xff]
        %v5623 = vld [vmem:[%s5568 + $0x1b0] sm:$0xff]
        %v5624 = vld [vmem:[%s5568 + $0x1b8] sm:$0xff]
        %v5625 = vld [vmem:[%s5568 + $0x1c0] sm:$0xff]
        %v5626 = vld [vmem:[%s5568 + $0x1c8] sm:$0xf]
        %v5627 = vld [vmem:[%s5568 + $0x1d0] sm:$0xf]
        %v5628 = vld [vmem:[%s5568 + $0x1d8] sm:$0xf]
        %v5630 = vsel %vm5176, %v2828, 0
        %v5633 = vsel %vm5189, %v5626, 0
        %v5636 = vsel %vm5189, %v5627, 0
        %v5639 = vsel %vm5189, %v5628, 0
        %5641 = vmatprep.subr.mxu0 %v5570
        %5642 = vmatpush1.msra.mxu0 %v5569
        %5643 = vmatprep.subr.mxu0 %v5573
        %5644 = vmatpush1.msra.mxu0 %v5572
        %5645 = vmatprep.subr.mxu0 %v5576
        %5646 = vmatpush1.msra.mxu0 %v5575
        %5647 = vmatprep.subr.mxu0 %v5579
        %5648 = vmatpush1.msra.mxu0 %v5578
        %5649 = vmatprep.subr.mxu0 %v5582
        %5650 = vmatpush1.msra.mxu0 %v5581
        %5651 = vmatprep.subr.mxu0 %v5585
        %5652 = vmatpush1.msra.mxu0 %v5584
        %5653 = vmatprep.subr.mxu0 %v5588
        %5654 = vmatpush1.msra.mxu0 %v5587
        %5655 = vmatprep.subr.mxu0 %v5591
        %5656 = vmatpush1.msra.mxu0 %v5590
        %5657 = vmatprep.subr.mxu0 %v5594
        %5658 = vmatpush1.msra.mxu0 %v5593
        %5659 = vmatprep.subr.mxu0 %v5597
        %5660 = vmatpush1.msra.mxu0 %v5596
        %5661 = vmatprep.subr.mxu0 %v5600
        %5662 = vmatpush1.msra.mxu0 %v5599
        %5663 = vmatprep.subr.mxu0 %v5603
        %5664 = vmatpush1.msra.mxu0 %v5602
        %5665 = vmatprep.subr.mxu0 %v5606
        %5666 = vmatpush1.msra.mxu0 %v5605
        %5667 = vmatprep.subr.mxu0 %v5609
        %5668 = vmatpush1.msra.mxu0 %v5608
        %5669 = vmatprep.subr.mxu0 %v5612
        %5670 = vmatpush1.msra.mxu0 %v5611
        %5671 = vmatprep.subr.mxu0 %v5615
        %5672 = vmatpush1.msra.mxu0 %v5614
        %5673 = vmatprep.subr.mxu0 %v5618
        %5674 = vmatpush1.msra.mxu0 %v5617
        %5675 = vmatprep.subr.mxu0 %v5621
        %5676 = vmatpush1.msra.mxu0 %v5620
        %5677 = vmatprep.subr.mxu0 %v5624
        %5678 = vmatpush1.msra.mxu0 %v5623
        %5679 = vmatprep.subr.mxu0 %v5636
        %5680 = vmatpush1.msra.mxu0 %v5633
        %5681 = vmatprep.subr.mxu0 0.0
        %5682 = vmatpush1.msra.mxu0 0.0
        %5683 = vmatprep.subr.mxu0 0.0
        %5684 = vmatpush1.msra.mxu0 0.0
        %5685 = vmatprep.subr.mxu0 0.0
        %5686 = vmatpush1.msra.mxu0 0.0
        %5687 = vmatprep.subr.mxu0 0.0
        %5688 = vmatpush1.msra.mxu0 0.0
        %5689 = vmatprep.subr.mxu0 0.0
        %5690 = vmatpush1.msra.mxu0 0.0
        %5691 = vmatprep.subr.mxu0 0.0
        %5692 = vmatpush1.msra.mxu0 0.0
        %5693 = vmatprep.subr.mxu0 0.0
        %5694 = vmatpush1.msra.mxu0 0.0
        %5695 = vmatprep.subr.mxu0 0.0
        %5696 = vmatpush1.msra.mxu0 0.0
        %5697 = vmatprep.subr.mxu0 0.0
        %5698 = vmatpush1.msra.mxu0 0.0
        %5699 = vmatprep.subr.mxu0 0.0
        %5700 = vmatpush1.msra.mxu0 0.0
        %5701 = vmatprep.subr.mxu0 0.0
        %5702 = vmatpush1.msra.mxu0 0.0
        %5703 = vmatprep.subr.mxu0 0.0
        %5704 = vmatpush1.msra.mxu0 0.0
        %5705 = vmatprep.mubr.f32.mxu0 %v5377
        %5706 = vmatmul.mubr.f32.gmra.mrb[0].mxu0 %v2821
        %v5707 = vpop.f32.mrb[0].mxu0
        %v5708 = vadd.f32 0.0, %v5707
        %v5709 = vpop.f32.mrb[0].mxu0
        %v5710 = vadd.f32 0.0, %v5709
        %5711 = vmatprep.mubr.f32.mxu0 %v5380
        %5712 = vmatmul.mubr.f32.gmra.mrb[0].mxu0 %v2823
        %v5713 = vpop.f32.mrb[0].mxu0
        %v5714 = vadd.f32 0.0, %v5713
        %v5715 = vpop.f32.mrb[0].mxu0
        %v5716 = vadd.f32 0.0, %v5715
        %5717 = vmatprep.mubr.f32.mxu0 %v5383
        %5718 = vmatmul.mubr.f32.gmra.mrb[0].mxu0 %v2825
        %v5719 = vpop.f32.mrb[0].mxu0
        %v5720 = vadd.f32 0.0, %v5719
        %v5721 = vpop.f32.mrb[0].mxu0
        %v5722 = vadd.f32 0.0, %v5721
        %5723 = vmatprep.mubr.f32.mxu0 %v5630
        %5724 = vmatmul.mubr.f32.gmra.mrb[0].mxu0 %v2827
        %v5725 = vpop.f32.mrb[0].mxu0
        %v5726 = vadd.f32 0.0, %v5725
        %v5727 = vpop.f32.mrb[0].mxu0
        %v5728 = vadd.f32 0.0, %v5727
        %5729 = vdwg.mxu0
        %5730 = vmatprep.subr.mxu0 0.0
        %5731 = vmatpush1.msra.mxu0 %v5571
        %5732 = vmatprep.subr.mxu0 0.0
        %5733 = vmatpush1.msra.mxu0 %v5574
        %5734 = vmatprep.subr.mxu0 0.0
        %5735 = vmatpush1.msra.mxu0 %v5577
        %5736 = vmatprep.subr.mxu0 0.0
        %5737 = vmatpush1.msra.mxu0 %v5580
        %5738 = vmatprep.subr.mxu0 0.0
        %5739 = vmatpush1.msra.mxu0 %v5583
        %5740 = vmatprep.subr.mxu0 0.0
        %5741 = vmatpush1.msra.mxu0 %v5586
        %5742 = vmatprep.subr.mxu0 0.0
        %5743 = vmatpush1.msra.mxu0 %v5589
        %5744 = vmatprep.subr.mxu0 0.0
        %5745 = vmatpush1.msra.mxu0 %v5592
        %5746 = vmatprep.subr.mxu0 0.0
        %5747 = vmatpush1.msra.mxu0 %v5595
        %5748 = vmatprep.subr.mxu0 0.0
        %5749 = vmatpush1.msra.mxu0 %v5598
        %5750 = vmatprep.subr.mxu0 0.0
        %5751 = vmatpush1.msra.mxu0 %v5601
        %5752 = vmatprep.subr.mxu0 0.0
        %5753 = vmatpush1.msra.mxu0 %v5604
        %5754 = vmatprep.subr.mxu0 0.0
        %5755 = vmatpush1.msra.mxu0 %v5607
        %5756 = vmatprep.subr.mxu0 0.0
        %5757 = vmatpush1.msra.mxu0 %v5610
        %5758 = vmatprep.subr.mxu0 0.0
        %5759 = vmatpush1.msra.mxu0 %v5613
        %5760 = vmatprep.subr.mxu0 0.0
        %5761 = vmatpush1.msra.mxu0 %v5616
        %5762 = vmatprep.subr.mxu0 0.0
        %5763 = vmatpush1.msra.mxu0 %v5619
        %5764 = vmatprep.subr.mxu0 0.0
        %5765 = vmatpush1.msra.mxu0 %v5622
        %5766 = vmatprep.subr.mxu0 0.0
        %5767 = vmatpush1.msra.mxu0 %v5625
        %5768 = vmatprep.subr.mxu0 0.0
        %5769 = vmatpush1.msra.mxu0 %v5639
        %5770 = vmatprep.subr.mxu0 0.0
        %5771 = vmatpush1.msra.mxu0 0.0
        %5772 = vmatprep.subr.mxu0 0.0
        %5773 = vmatpush1.msra.mxu0 0.0
        %5774 = vmatprep.subr.mxu0 0.0
        %5775 = vmatpush1.msra.mxu0 0.0
        %5776 = vmatprep.subr.mxu0 0.0
        %5777 = vmatpush1.msra.mxu0 0.0
        %5778 = vmatprep.subr.mxu0 0.0
        %5779 = vmatpush1.msra.mxu0 0.0
        %5780 = vmatprep.subr.mxu0 0.0
        %5781 = vmatpush1.msra.mxu0 0.0
        %5782 = vmatprep.subr.mxu0 0.0
        %5783 = vmatpush1.msra.mxu0 0.0
        %5784 = vmatprep.subr.mxu0 0.0
        %5785 = vmatpush1.msra.mxu0 0.0
        %5786 = vmatprep.subr.mxu0 0.0
        %5787 = vmatpush1.msra.mxu0 0.0
        %5788 = vmatprep.subr.mxu0 0.0
        %5789 = vmatpush1.msra.mxu0 0.0
        %5790 = vmatprep.subr.mxu0 0.0
        %5791 = vmatpush1.msra.mxu0 0.0
        %5792 = vmatprep.subr.mxu0 0.0
        %5793 = vmatpush1.msra.mxu0 0.0
        %5794 = vmatprep.mubr.f32.mxu0 %v5377
        %5795 = vmatmul.mubr.f32.gmra.mrb[0].mxu0 %v2821
        %v5796 = vpop.f32.mrb[0].mxu0
        %v5797 = vadd.f32 0.0, %v5796
        %v5798 = vpop.f32.mrb[0].mxu0
        %5799 = vmatprep.mubr.f32.mxu0 %v5380
        %5800 = vmatmul.mubr.f32.gmra.mrb[0].mxu0 %v2823
        %v5801 = vpop.f32.mrb[0].mxu0
        %v5802 = vadd.f32 0.0, %v5801
        %v5803 = vpop.f32.mrb[0].mxu0
        %5804 = vmatprep.mubr.f32.mxu0 %v5383
        %5805 = vmatmul.mubr.f32.gmra.mrb[0].mxu0 %v2825
        %v5806 = vpop.f32.mrb[0].mxu0
        %v5807 = vadd.f32 0.0, %v5806
        %v5808 = vpop.f32.mrb[0].mxu0
        %5809 = vmatprep.mubr.f32.mxu0 %v5630
        %5810 = vmatmul.mubr.f32.gmra.mrb[0].mxu0 %v2827
        %v5811 = vpop.f32.mrb[0].mxu0
        %v5812 = vadd.f32 0.0, %v5811
        %v5813 = vpop.f32.mrb[0].mxu0
        %5814 = vdwg.mxu0
        %v5815 = vadd.f32 %v5461, %v5708
        %v5816 = vadd.f32 %v5463, %v5710
        %v5817 = vadd.f32 %v5550, %v5797
        %v5818 = vadd.f32 %v5467, %v5714
        %v5819 = vadd.f32 %v5469, %v5716
        %v5820 = vadd.f32 %v5555, %v5802
        %v5821 = vadd.f32 %v5473, %v5720
        %v5822 = vadd.f32 %v5475, %v5722
        %v5823 = vadd.f32 %v5560, %v5807
        %v5824 = vadd.f32 %v5479, %v5726
        %v5825 = vadd.f32 %v5481, %v5728
        %v5826 = vadd.f32 %v5565, %v5812
        %s5827 = scalar_lea.vmem %s3, 1440
        %v5828 = vld [vmem:[%s5827] sm:$0xff]
        %v5829 = vld [vmem:[%s5827 + $0x8] sm:$0xff]
        %v5830 = vld [vmem:[%s5827 + $0x10] sm:$0xff]
        %v5831 = vld [vmem:[%s5827 + $0x18] sm:$0xff]
        %v5832 = vld [vmem:[%s5827 + $0x20] sm:$0xff]
        %v5833 = vld [vmem:[%s5827 + $0x28] sm:$0xff]
        %v5834 = vld [vmem:[%s5827 + $0x30] sm:$0xff]
        %v5835 = vld [vmem:[%s5827 + $0x38] sm:$0xff]
        %v5836 = vld [vmem:[%s5827 + $0x40] sm:$0xff]
        %v5837 = vld [vmem:[%s5827 + $0x48] sm:$0xff]
        %v5838 = vld [vmem:[%s5827 + $0x50] sm:$0xff]
        %v5839 = vld [vmem:[%s5827 + $0x58] sm:$0xff]
        %v5840 = vld [vmem:[%s5827 + $0x60] sm:$0xff]
        %v5841 = vld [vmem:[%s5827 + $0x68] sm:$0xff]
        %v5842 = vld [vmem:[%s5827 + $0x70] sm:$0xff]
        %v5843 = vld [vmem:[%s5827 + $0x78] sm:$0xff]
        %v5844 = vld [vmem:[%s5827 + $0x80] sm:$0xff]
        %v5845 = vld [vmem:[%s5827 + $0x88] sm:$0xff]
        %v5846 = vld [vmem:[%s5827 + $0x90] sm:$0xff]
        %v5847 = vld [vmem:[%s5827 + $0x98] sm:$0xff]
        %v5848 = vld [vmem:[%s5827 + $0xa0] sm:$0xff]
        %v5849 = vld [vmem:[%s5827 + $0xa8] sm:$0xff]
        %v5850 = vld [vmem:[%s5827 + $0xb0] sm:$0xff]
        %v5851 = vld [vmem:[%s5827 + $0xb8] sm:$0xff]
        %v5852 = vld [vmem:[%s5827 + $0xc0] sm:$0xff]
        %v5853 = vld [vmem:[%s5827 + $0xc8] sm:$0xff]
        %v5854 = vld [vmem:[%s5827 + $0xd0] sm:$0xff]
        %v5855 = vld [vmem:[%s5827 + $0xd8] sm:$0xff]
        %v5856 = vld [vmem:[%s5827 + $0xe0] sm:$0xff]
        %v5857 = vld [vmem:[%s5827 + $0xe8] sm:$0xff]
        %v5858 = vld [vmem:[%s5827 + $0xf0] sm:$0xff]
        %v5859 = vld [vmem:[%s5827 + $0xf8] sm:$0xff]
        %v5860 = vld [vmem:[%s5827 + $0x100] sm:$0xff]
        %v5861 = vld [vmem:[%s5827 + $0x108] sm:$0xff]
        %v5862 = vld [vmem:[%s5827 + $0x110] sm:$0xff]
        %v5863 = vld [vmem:[%s5827 + $0x118] sm:$0xff]
        %v5864 = vld [vmem:[%s5827 + $0x120] sm:$0xff]
        %v5865 = vld [vmem:[%s5827 + $0x128] sm:$0xff]
        %v5866 = vld [vmem:[%s5827 + $0x130] sm:$0xff]
        %v5867 = vld [vmem:[%s5827 + $0x138] sm:$0xff]
        %v5868 = vld [vmem:[%s5827 + $0x140] sm:$0xff]
        %v5869 = vld [vmem:[%s5827 + $0x148] sm:$0xff]
        %v5870 = vld [vmem:[%s5827 + $0x150] sm:$0xff]
        %v5871 = vld [vmem:[%s5827 + $0x158] sm:$0xff]
        %v5872 = vld [vmem:[%s5827 + $0x160] sm:$0xff]
        %v5873 = vld [vmem:[%s5827 + $0x168] sm:$0xff]
        %v5874 = vld [vmem:[%s5827 + $0x170] sm:$0xff]
        %v5875 = vld [vmem:[%s5827 + $0x178] sm:$0xff]
        %v5876 = vld [vmem:[%s5827 + $0x180] sm:$0xff]
        %v5877 = vld [vmem:[%s5827 + $0x188] sm:$0xff]
        %v5878 = vld [vmem:[%s5827 + $0x190] sm:$0xff]
        %v5879 = vld [vmem:[%s5827 + $0x198] sm:$0xff]
        %v5880 = vld [vmem:[%s5827 + $0x1a0] sm:$0xff]
        %v5881 = vld [vmem:[%s5827 + $0x1a8] sm:$0xff]
        %v5882 = vld [vmem:[%s5827 + $0x1b0] sm:$0xff]
        %v5883 = vld [vmem:[%s5827 + $0x1b8] sm:$0xff]
        %v5884 = vld [vmem:[%s5827 + $0x1c0] sm:$0xff]
        %v5885 = vld [vmem:[%s5827 + $0x1c8] sm:$0xf]
        %v5886 = vld [vmem:[%s5827 + $0x1d0] sm:$0xf]
        %v5887 = vld [vmem:[%s5827 + $0x1d8] sm:$0xf]
        %v5889 = vsel %vm5176, %v5052, 0
        %v5892 = vsel %vm5189, %v5885, 0
        %v5895 = vsel %vm5189, %v5886, 0
        %v5898 = vsel %vm5189, %v5887, 0
        %5900 = vmatprep.subr.mxu0 %v5829
        %5901 = vmatpush1.msra.mxu0 %v5828
        %5902 = vmatprep.subr.mxu0 %v5832
        %5903 = vmatpush1.msra.mxu0 %v5831
        %5904 = vmatprep.subr.mxu0 %v5835
        %5905 = vmatpush1.msra.mxu0 %v5834
        %5906 = vmatprep.subr.mxu0 %v5838
        %5907 = vmatpush1.msra.mxu0 %v5837
        %5908 = vmatprep.subr.mxu0 %v5841
        %5909 = vmatpush1.msra.mxu0 %v5840
        %5910 = vmatprep.subr.mxu0 %v5844
        %5911 = vmatpush1.msra.mxu0 %v5843
        %5912 = vmatprep.subr.mxu0 %v5847
        %5913 = vmatpush1.msra.mxu0 %v5846
        %5914 = vmatprep.subr.mxu0 %v5850
        %5915 = vmatpush1.msra.mxu0 %v5849
        %5916 = vmatprep.subr.mxu0 %v5853
        %5917 = vmatpush1.msra.mxu0 %v5852
        %5918 = vmatprep.subr.mxu0 %v5856
        %5919 = vmatpush1.msra.mxu0 %v5855
        %5920 = vmatprep.subr.mxu0 %v5859
        %5921 = vmatpush1.msra.mxu0 %v5858
        %5922 = vmatprep.subr.mxu0 %v5862
        %5923 = vmatpush1.msra.mxu0 %v5861
        %5924 = vmatprep.subr.mxu0 %v5865
        %5925 = vmatpush1.msra.mxu0 %v5864
        %5926 = vmatprep.subr.mxu0 %v5868
        %5927 = vmatpush1.msra.mxu0 %v5867
        %5928 = vmatprep.subr.mxu0 %v5871
        %5929 = vmatpush1.msra.mxu0 %v5870
        %5930 = vmatprep.subr.mxu0 %v5874
        %5931 = vmatpush1.msra.mxu0 %v5873
        %5932 = vmatprep.subr.mxu0 %v5877
        %5933 = vmatpush1.msra.mxu0 %v5876
        %5934 = vmatprep.subr.mxu0 %v5880
        %5935 = vmatpush1.msra.mxu0 %v5879
        %5936 = vmatprep.subr.mxu0 %v5883
        %5937 = vmatpush1.msra.mxu0 %v5882
        %5938 = vmatprep.subr.mxu0 %v5895
        %5939 = vmatpush1.msra.mxu0 %v5892
        %5940 = vmatprep.subr.mxu0 0.0
        %5941 = vmatpush1.msra.mxu0 0.0
        %5942 = vmatprep.subr.mxu0 0.0
        %5943 = vmatpush1.msra.mxu0 0.0
        %5944 = vmatprep.subr.mxu0 0.0
        %5945 = vmatpush1.msra.mxu0 0.0
        %5946 = vmatprep.subr.mxu0 0.0
        %5947 = vmatpush1.msra.mxu0 0.0
        %5948 = vmatprep.subr.mxu0 0.0
        %5949 = vmatpush1.msra.mxu0 0.0
        %5950 = vmatprep.subr.mxu0 0.0
        %5951 = vmatpush1.msra.mxu0 0.0
        %5952 = vmatprep.subr.mxu0 0.0
        %5953 = vmatpush1.msra.mxu0 0.0
        %5954 = vmatprep.subr.mxu0 0.0
        %5955 = vmatpush1.msra.mxu0 0.0
        %5956 = vmatprep.subr.mxu0 0.0
        %5957 = vmatpush1.msra.mxu0 0.0
        %5958 = vmatprep.subr.mxu0 0.0
        %5959 = vmatpush1.msra.mxu0 0.0
        %5960 = vmatprep.subr.mxu0 0.0
        %5961 = vmatpush1.msra.mxu0 0.0
        %5962 = vmatprep.subr.mxu0 0.0
        %5963 = vmatpush1.msra.mxu0 0.0
        %5964 = vmatprep.mubr.f32.mxu0 %v5181
        %5965 = vmatmul.mubr.f32.gmra.mrb[0].mxu0 %v5045
        %v5966 = vpop.f32.mrb[0].mxu0
        %v5967 = vadd.f32 0.0, %v5966
        %v5968 = vpop.f32.mrb[0].mxu0
        %v5969 = vadd.f32 0.0, %v5968
        %5970 = vmatprep.mubr.f32.mxu0 %v5184
        %5971 = vmatmul.mubr.f32.gmra.mrb[0].mxu0 %v5047
        %v5972 = vpop.f32.mrb[0].mxu0
        %v5973 = vadd.f32 0.0, %v5972
        %v5974 = vpop.f32.mrb[0].mxu0
        %v5975 = vadd.f32 0.0, %v5974
        %5976 = vmatprep.mubr.f32.mxu0 %v5187
        %5977 = vmatmul.mubr.f32.gmra.mrb[0].mxu0 %v5049
        %v5978 = vpop.f32.mrb[0].mxu0
        %v5979 = vadd.f32 0.0, %v5978
        %v5980 = vpop.f32.mrb[0].mxu0
        %v5981 = vadd.f32 0.0, %v5980
        %5982 = vmatprep.mubr.f32.mxu0 %v5889
        %5983 = vmatmul.mubr.f32.gmra.mrb[0].mxu0 %v5051
        %v5984 = vpop.f32.mrb[0].mxu0
        %v5985 = vadd.f32 0.0, %v5984
        %v5986 = vpop.f32.mrb[0].mxu0
        %v5987 = vadd.f32 0.0, %v5986
        %5988 = vdwg.mxu0
        %5989 = vmatprep.subr.mxu0 0.0
        %5990 = vmatpush1.msra.mxu0 %v5830
        %5991 = vmatprep.subr.mxu0 0.0
        %5992 = vmatpush1.msra.mxu0 %v5833
        %5993 = vmatprep.subr.mxu0 0.0
        %5994 = vmatpush1.msra.mxu0 %v5836
        %5995 = vmatprep.subr.mxu0 0.0
        %5996 = vmatpush1.msra.mxu0 %v5839
        %5997 = vmatprep.subr.mxu0 0.0
        %5998 = vmatpush1.msra.mxu0 %v5842
        %5999 = vmatprep.subr.mxu0 0.0
        %6000 = vmatpush1.msra.mxu0 %v5845
        %6001 = vmatprep.subr.mxu0 0.0
        %6002 = vmatpush1.msra.mxu0 %v5848
        %6003 = vmatprep.subr.mxu0 0.0
        %6004 = vmatpush1.msra.mxu0 %v5851
        %6005 = vmatprep.subr.mxu0 0.0
        %6006 = vmatpush1.msra.mxu0 %v5854
        %6007 = vmatprep.subr.mxu0 0.0
        %6008 = vmatpush1.msra.mxu0 %v5857
        %6009 = vmatprep.subr.mxu0 0.0
        %6010 = vmatpush1.msra.mxu0 %v5860
        %6011 = vmatprep.subr.mxu0 0.0
        %6012 = vmatpush1.msra.mxu0 %v5863
        %6013 = vmatprep.subr.mxu0 0.0
        %6014 = vmatpush1.msra.mxu0 %v5866
        %6015 = vmatprep.subr.mxu0 0.0
        %6016 = vmatpush1.msra.mxu0 %v5869
        %6017 = vmatprep.subr.mxu0 0.0
        %6018 = vmatpush1.msra.mxu0 %v5872
        %6019 = vmatprep.subr.mxu0 0.0
        %6020 = vmatpush1.msra.mxu0 %v5875
        %6021 = vmatprep.subr.mxu0 0.0
        %6022 = vmatpush1.msra.mxu0 %v5878
        %6023 = vmatprep.subr.mxu0 0.0
        %6024 = vmatpush1.msra.mxu0 %v5881
        %6025 = vmatprep.subr.mxu0 0.0
        %6026 = vmatpush1.msra.mxu0 %v5884
        %6027 = vmatprep.subr.mxu0 0.0
        %6028 = vmatpush1.msra.mxu0 %v5898
        %6029 = vmatprep.subr.mxu0 0.0
        %6030 = vmatpush1.msra.mxu0 0.0
        %6031 = vmatprep.subr.mxu0 0.0
        %6032 = vmatpush1.msra.mxu0 0.0
        %6033 = vmatprep.subr.mxu0 0.0
        %6034 = vmatpush1.msra.mxu0 0.0
        %6035 = vmatprep.subr.mxu0 0.0
        %6036 = vmatpush1.msra.mxu0 0.0
        %6037 = vmatprep.subr.mxu0 0.0
        %6038 = vmatpush1.msra.mxu0 0.0
        %6039 = vmatprep.subr.mxu0 0.0
        %6040 = vmatpush1.msra.mxu0 0.0
        %6041 = vmatprep.subr.mxu0 0.0
        %6042 = vmatpush1.msra.mxu0 0.0
        %6043 = vmatprep.subr.mxu0 0.0
        %6044 = vmatpush1.msra.mxu0 0.0
        %6045 = vmatprep.subr.mxu0 0.0
        %6046 = vmatpush1.msra.mxu0 0.0
        %6047 = vmatprep.subr.mxu0 0.0
        %6048 = vmatpush1.msra.mxu0 0.0
        %6049 = vmatprep.subr.mxu0 0.0
        %6050 = vmatpush1.msra.mxu0 0.0
        %6051 = vmatprep.subr.mxu0 0.0
        %6052 = vmatpush1.msra.mxu0 0.0
        %6053 = vmatprep.mubr.f32.mxu0 %v5181
        %6054 = vmatmul.mubr.f32.gmra.mrb[0].mxu0 %v5045
        %v6055 = vpop.f32.mrb[0].mxu0
        %v6056 = vadd.f32 0.0, %v6055
        %v6057 = vpop.f32.mrb[0].mxu0
        %6058 = vmatprep.mubr.f32.mxu0 %v5184
        %6059 = vmatmul.mubr.f32.gmra.mrb[0].mxu0 %v5047
        %v6060 = vpop.f32.mrb[0].mxu0
        %v6061 = vadd.f32 0.0, %v6060
        %v6062 = vpop.f32.mrb[0].mxu0
        %6063 = vmatprep.mubr.f32.mxu0 %v5187
        %6064 = vmatmul.mubr.f32.gmra.mrb[0].mxu0 %v5049
        %v6065 = vpop.f32.mrb[0].mxu0
        %v6066 = vadd.f32 0.0, %v6065
        %v6067 = vpop.f32.mrb[0].mxu0
        %6068 = vmatprep.mubr.f32.mxu0 %v5889
        %6069 = vmatmul.mubr.f32.gmra.mrb[0].mxu0 %v5051
        %v6070 = vpop.f32.mrb[0].mxu0
        %v6071 = vadd.f32 0.0, %v6070
        %v6072 = vpop.f32.mrb[0].mxu0
        %6073 = vdwg.mxu0
        %v6074 = vadd.f32 %v5815, %v5967
        %v6075 = vadd.f32 %v5816, %v5969
        %v6076 = vadd.f32 %v5817, %v6056
        %v6077 = vadd.f32 %v5818, %v5973
        %v6078 = vadd.f32 %v5819, %v5975
        %v6079 = vadd.f32 %v5820, %v6061
        %v6080 = vadd.f32 %v5821, %v5979
        %v6081 = vadd.f32 %v5822, %v5981
        %v6082 = vadd.f32 %v5823, %v6066
        %v6083 = vadd.f32 %v5824, %v5985
        %v6084 = vadd.f32 %v5825, %v5987
        %v6085 = vadd.f32 %v5826, %v6071
        %s6086 = scalar_lea.vmem %s3, 1920
        %v6087 = vld [vmem:[%s6086] sm:$0xff]
        %v6088 = vld [vmem:[%s6086 + $0x8] sm:$0xff]
        %v6089 = vld [vmem:[%s6086 + $0x10] sm:$0xff]
        %v6090 = vld [vmem:[%s6086 + $0x18] sm:$0xff]
        %v6091 = vld [vmem:[%s6086 + $0x20] sm:$0xff]
        %v6092 = vld [vmem:[%s6086 + $0x28] sm:$0xff]
        %v6093 = vld [vmem:[%s6086 + $0x30] sm:$0xff]
        %v6094 = vld [vmem:[%s6086 + $0x38] sm:$0xff]
        %v6095 = vld [vmem:[%s6086 + $0x40] sm:$0xff]
        %v6096 = vld [vmem:[%s6086 + $0x48] sm:$0xff]
        %v6097 = vld [vmem:[%s6086 + $0x50] sm:$0xff]
        %v6098 = vld [vmem:[%s6086 + $0x58] sm:$0xff]
        %v6099 = vld [vmem:[%s6086 + $0x60] sm:$0xff]
        %v6100 = vld [vmem:[%s6086 + $0x68] sm:$0xff]
        %v6101 = vld [vmem:[%s6086 + $0x70] sm:$0xff]
        %v6102 = vld [vmem:[%s6086 + $0x78] sm:$0xff]
        %v6103 = vld [vmem:[%s6086 + $0x80] sm:$0xff]
        %v6104 = vld [vmem:[%s6086 + $0x88] sm:$0xff]
        %v6105 = vld [vmem:[%s6086 + $0x90] sm:$0xff]
        %v6106 = vld [vmem:[%s6086 + $0x98] sm:$0xff]
        %v6107 = vld [vmem:[%s6086 + $0xa0] sm:$0xff]
        %v6108 = vld [vmem:[%s6086 + $0xa8] sm:$0xff]
        %v6109 = vld [vmem:[%s6086 + $0xb0] sm:$0xff]
        %v6110 = vld [vmem:[%s6086 + $0xb8] sm:$0xff]
        %v6111 = vld [vmem:[%s6086 + $0xc0] sm:$0xff]
        %v6112 = vld [vmem:[%s6086 + $0xc8] sm:$0xff]
        %v6113 = vld [vmem:[%s6086 + $0xd0] sm:$0xff]
        %v6114 = vld [vmem:[%s6086 + $0xd8] sm:$0xff]
        %v6115 = vld [vmem:[%s6086 + $0xe0] sm:$0xff]
        %v6116 = vld [vmem:[%s6086 + $0xe8] sm:$0xff]
        %v6117 = vld [vmem:[%s6086 + $0xf0] sm:$0xff]
        %v6118 = vld [vmem:[%s6086 + $0xf8] sm:$0xff]
        %v6119 = vld [vmem:[%s6086 + $0x100] sm:$0xff]
        %v6120 = vld [vmem:[%s6086 + $0x108] sm:$0xff]
        %v6121 = vld [vmem:[%s6086 + $0x110] sm:$0xff]
        %v6122 = vld [vmem:[%s6086 + $0x118] sm:$0xff]
        %v6123 = vld [vmem:[%s6086 + $0x120] sm:$0xff]
        %v6124 = vld [vmem:[%s6086 + $0x128] sm:$0xff]
        %v6125 = vld [vmem:[%s6086 + $0x130] sm:$0xff]
        %v6126 = vld [vmem:[%s6086 + $0x138] sm:$0xff]
        %v6127 = vld [vmem:[%s6086 + $0x140] sm:$0xff]
        %v6128 = vld [vmem:[%s6086 + $0x148] sm:$0xff]
        %v6129 = vld [vmem:[%s6086 + $0x150] sm:$0xff]
        %v6130 = vld [vmem:[%s6086 + $0x158] sm:$0xff]
        %v6131 = vld [vmem:[%s6086 + $0x160] sm:$0xff]
        %v6132 = vld [vmem:[%s6086 + $0x168] sm:$0xff]
        %v6133 = vld [vmem:[%s6086 + $0x170] sm:$0xff]
        %v6134 = vld [vmem:[%s6086 + $0x178] sm:$0xff]
        %v6135 = vld [vmem:[%s6086 + $0x180] sm:$0xff]
        %v6136 = vld [vmem:[%s6086 + $0x188] sm:$0xff]
        %v6137 = vld [vmem:[%s6086 + $0x190] sm:$0xff]
        %v6138 = vld [vmem:[%s6086 + $0x198] sm:$0xff]
        %v6139 = vld [vmem:[%s6086 + $0x1a0] sm:$0xff]
        %v6140 = vld [vmem:[%s6086 + $0x1a8] sm:$0xff]
        %v6141 = vld [vmem:[%s6086 + $0x1b0] sm:$0xff]
        %v6142 = vld [vmem:[%s6086 + $0x1b8] sm:$0xff]
        %v6143 = vld [vmem:[%s6086 + $0x1c0] sm:$0xff]
        %v6144 = vld [vmem:[%s6086 + $0x1c8] sm:$0xf]
        %v6145 = vld [vmem:[%s6086 + $0x1d0] sm:$0xf]
        %v6146 = vld [vmem:[%s6086 + $0x1d8] sm:$0xf]
        %v6148 = vsel %vm5176, %v2830, 0
        %v6151 = vsel %vm5189, %v6144, 0
        %v6154 = vsel %vm5189, %v6145, 0
        %v6157 = vsel %vm5189, %v6146, 0
        %6159 = vmatprep.subr.mxu0 %v6088
        %6160 = vmatpush1.msra.mxu0 %v6087
        %6161 = vmatprep.subr.mxu0 %v6091
        %6162 = vmatpush1.msra.mxu0 %v6090
        %6163 = vmatprep.subr.mxu0 %v6094
        %6164 = vmatpush1.msra.mxu0 %v6093
        %6165 = vmatprep.subr.mxu0 %v6097
        %6166 = vmatpush1.msra.mxu0 %v6096
        %6167 = vmatprep.subr.mxu0 %v6100
        %6168 = vmatpush1.msra.mxu0 %v6099
        %6169 = vmatprep.subr.mxu0 %v6103
        %6170 = vmatpush1.msra.mxu0 %v6102
        %6171 = vmatprep.subr.mxu0 %v6106
        %6172 = vmatpush1.msra.mxu0 %v6105
        %6173 = vmatprep.subr.mxu0 %v6109
        %6174 = vmatpush1.msra.mxu0 %v6108
        %6175 = vmatprep.subr.mxu0 %v6112
        %6176 = vmatpush1.msra.mxu0 %v6111
        %6177 = vmatprep.subr.mxu0 %v6115
        %6178 = vmatpush1.msra.mxu0 %v6114
        %6179 = vmatprep.subr.mxu0 %v6118
        %6180 = vmatpush1.msra.mxu0 %v6117
        %6181 = vmatprep.subr.mxu0 %v6121
        %6182 = vmatpush1.msra.mxu0 %v6120
        %6183 = vmatprep.subr.mxu0 %v6124
        %6184 = vmatpush1.msra.mxu0 %v6123
        %6185 = vmatprep.subr.mxu0 %v6127
        %6186 = vmatpush1.msra.mxu0 %v6126
        %6187 = vmatprep.subr.mxu0 %v6130
        %6188 = vmatpush1.msra.mxu0 %v6129
        %6189 = vmatprep.subr.mxu0 %v6133
        %6190 = vmatpush1.msra.mxu0 %v6132
        %6191 = vmatprep.subr.mxu0 %v6136
        %6192 = vmatpush1.msra.mxu0 %v6135
        %6193 = vmatprep.subr.mxu0 %v6139
        %6194 = vmatpush1.msra.mxu0 %v6138
        %6195 = vmatprep.subr.mxu0 %v6142
        %6196 = vmatpush1.msra.mxu0 %v6141
        %6197 = vmatprep.subr.mxu0 %v6154
        %6198 = vmatpush1.msra.mxu0 %v6151
        %6199 = vmatprep.subr.mxu0 0.0
        %6200 = vmatpush1.msra.mxu0 0.0
        %6201 = vmatprep.subr.mxu0 0.0
        %6202 = vmatpush1.msra.mxu0 0.0
        %6203 = vmatprep.subr.mxu0 0.0
        %6204 = vmatpush1.msra.mxu0 0.0
        %6205 = vmatprep.subr.mxu0 0.0
        %6206 = vmatpush1.msra.mxu0 0.0
        %6207 = vmatprep.subr.mxu0 0.0
        %6208 = vmatpush1.msra.mxu0 0.0
        %6209 = vmatprep.subr.mxu0 0.0
        %6210 = vmatpush1.msra.mxu0 0.0
        %6211 = vmatprep.subr.mxu0 0.0
        %6212 = vmatpush1.msra.mxu0 0.0
        %6213 = vmatprep.subr.mxu0 0.0
        %6214 = vmatpush1.msra.mxu0 0.0
        %6215 = vmatprep.subr.mxu0 0.0
        %6216 = vmatpush1.msra.mxu0 0.0
        %6217 = vmatprep.subr.mxu0 0.0
        %6218 = vmatpush1.msra.mxu0 0.0
        %6219 = vmatprep.subr.mxu0 0.0
        %6220 = vmatpush1.msra.mxu0 0.0
        %6221 = vmatprep.subr.mxu0 0.0
        %6222 = vmatpush1.msra.mxu0 0.0
        %6223 = vmatprep.mubr.f32.mxu0 %v5380
        %6224 = vmatmul.mubr.f32.gmra.mrb[0].mxu0 %v2823
        %v6225 = vpop.f32.mrb[0].mxu0
        %v6226 = vadd.f32 0.0, %v6225
        %v6227 = vpop.f32.mrb[0].mxu0
        %v6228 = vadd.f32 0.0, %v6227
        %6229 = vmatprep.mubr.f32.mxu0 %v5383
        %6230 = vmatmul.mubr.f32.gmra.mrb[0].mxu0 %v2825
        %v6231 = vpop.f32.mrb[0].mxu0
        %v6232 = vadd.f32 0.0, %v6231
        %v6233 = vpop.f32.mrb[0].mxu0
        %v6234 = vadd.f32 0.0, %v6233
        %6235 = vmatprep.mubr.f32.mxu0 %v5630
        %6236 = vmatmul.mubr.f32.gmra.mrb[0].mxu0 %v2827
        %v6237 = vpop.f32.mrb[0].mxu0
        %v6238 = vadd.f32 0.0, %v6237
        %v6239 = vpop.f32.mrb[0].mxu0
        %v6240 = vadd.f32 0.0, %v6239
        %6241 = vmatprep.mubr.f32.mxu0 %v6148
        %6242 = vmatmul.mubr.f32.gmra.mrb[0].mxu0 %v2829
        %v6243 = vpop.f32.mrb[0].mxu0
        %v6244 = vadd.f32 0.0, %v6243
        %v6245 = vpop.f32.mrb[0].mxu0
        %v6246 = vadd.f32 0.0, %v6245
        %6247 = vdwg.mxu0
        %6248 = vmatprep.subr.mxu0 0.0
        %6249 = vmatpush1.msra.mxu0 %v6089
        %6250 = vmatprep.subr.mxu0 0.0
        %6251 = vmatpush1.msra.mxu0 %v6092
        %6252 = vmatprep.subr.mxu0 0.0
        %6253 = vmatpush1.msra.mxu0 %v6095
        %6254 = vmatprep.subr.mxu0 0.0
        %6255 = vmatpush1.msra.mxu0 %v6098
        %6256 = vmatprep.subr.mxu0 0.0
        %6257 = vmatpush1.msra.mxu0 %v6101
        %6258 = vmatprep.subr.mxu0 0.0
        %6259 = vmatpush1.msra.mxu0 %v6104
        %6260 = vmatprep.subr.mxu0 0.0
        %6261 = vmatpush1.msra.mxu0 %v6107
        %6262 = vmatprep.subr.mxu0 0.0
        %6263 = vmatpush1.msra.mxu0 %v6110
        %6264 = vmatprep.subr.mxu0 0.0
        %6265 = vmatpush1.msra.mxu0 %v6113
        %6266 = vmatprep.subr.mxu0 0.0
        %6267 = vmatpush1.msra.mxu0 %v6116
        %6268 = vmatprep.subr.mxu0 0.0
        %6269 = vmatpush1.msra.mxu0 %v6119
        %6270 = vmatprep.subr.mxu0 0.0
        %6271 = vmatpush1.msra.mxu0 %v6122
        %6272 = vmatprep.subr.mxu0 0.0
        %6273 = vmatpush1.msra.mxu0 %v6125
        %6274 = vmatprep.subr.mxu0 0.0
        %6275 = vmatpush1.msra.mxu0 %v6128
        %6276 = vmatprep.subr.mxu0 0.0
        %6277 = vmatpush1.msra.mxu0 %v6131
        %6278 = vmatprep.subr.mxu0 0.0
        %6279 = vmatpush1.msra.mxu0 %v6134
        %6280 = vmatprep.subr.mxu0 0.0
        %6281 = vmatpush1.msra.mxu0 %v6137
        %6282 = vmatprep.subr.mxu0 0.0
        %6283 = vmatpush1.msra.mxu0 %v6140
        %6284 = vmatprep.subr.mxu0 0.0
        %6285 = vmatpush1.msra.mxu0 %v6143
        %6286 = vmatprep.subr.mxu0 0.0
        %6287 = vmatpush1.msra.mxu0 %v6157
        %6288 = vmatprep.subr.mxu0 0.0
        %6289 = vmatpush1.msra.mxu0 0.0
        %6290 = vmatprep.subr.mxu0 0.0
        %6291 = vmatpush1.msra.mxu0 0.0
        %6292 = vmatprep.subr.mxu0 0.0
        %6293 = vmatpush1.msra.mxu0 0.0
        %6294 = vmatprep.subr.mxu0 0.0
        %6295 = vmatpush1.msra.mxu0 0.0
        %6296 = vmatprep.subr.mxu0 0.0
        %6297 = vmatpush1.msra.mxu0 0.0
        %6298 = vmatprep.subr.mxu0 0.0
        %6299 = vmatpush1.msra.mxu0 0.0
        %6300 = vmatprep.subr.mxu0 0.0
        %6301 = vmatpush1.msra.mxu0 0.0
        %6302 = vmatprep.subr.mxu0 0.0
        %6303 = vmatpush1.msra.mxu0 0.0
        %6304 = vmatprep.subr.mxu0 0.0
        %6305 = vmatpush1.msra.mxu0 0.0
        %6306 = vmatprep.subr.mxu0 0.0
        %6307 = vmatpush1.msra.mxu0 0.0
        %6308 = vmatprep.subr.mxu0 0.0
        %6309 = vmatpush1.msra.mxu0 0.0
        %6310 = vmatprep.subr.mxu0 0.0
        %6311 = vmatpush1.msra.mxu0 0.0
        %6312 = vmatprep.mubr.f32.mxu0 %v5380
        %6313 = vmatmul.mubr.f32.gmra.mrb[0].mxu0 %v2823
        %v6314 = vpop.f32.mrb[0].mxu0
        %v6315 = vadd.f32 0.0, %v6314
        %v6316 = vpop.f32.mrb[0].mxu0
        %6317 = vmatprep.mubr.f32.mxu0 %v5383
        %6318 = vmatmul.mubr.f32.gmra.mrb[0].mxu0 %v2825
        %v6319 = vpop.f32.mrb[0].mxu0
        %v6320 = vadd.f32 0.0, %v6319
        %v6321 = vpop.f32.mrb[0].mxu0
        %6322 = vmatprep.mubr.f32.mxu0 %v5630
        %6323 = vmatmul.mubr.f32.gmra.mrb[0].mxu0 %v2827
        %v6324 = vpop.f32.mrb[0].mxu0
        %v6325 = vadd.f32 0.0, %v6324
        %v6326 = vpop.f32.mrb[0].mxu0
        %6327 = vmatprep.mubr.f32.mxu0 %v6148
        %6328 = vmatmul.mubr.f32.gmra.mrb[0].mxu0 %v2829
        %v6329 = vpop.f32.mrb[0].mxu0
        %v6330 = vadd.f32 0.0, %v6329
        %v6331 = vpop.f32.mrb[0].mxu0
        %6332 = vdwg.mxu0
        %v6333 = vadd.f32 %v6074, %v6226
        %v6334 = vadd.f32 %v6075, %v6228
        %v6335 = vadd.f32 %v6076, %v6315
        %v6336 = vadd.f32 %v6077, %v6232
        %v6337 = vadd.f32 %v6078, %v6234
        %v6338 = vadd.f32 %v6079, %v6320
        %v6339 = vadd.f32 %v6080, %v6238
        %v6340 = vadd.f32 %v6081, %v6240
        %v6341 = vadd.f32 %v6082, %v6325
        %v6342 = vadd.f32 %v6083, %v6244
        %v6343 = vadd.f32 %v6084, %v6246
        %v6344 = vadd.f32 %v6085, %v6330
        %6345 = vmatprep.subr.mxu0 %v5117
        %6346 = vmatpush1.msra.mxu0 %v5116
        %6347 = vmatprep.subr.mxu0 %v5120
        %6348 = vmatpush1.msra.mxu0 %v5119
        %6349 = vmatprep.subr.mxu0 %v5123
        %6350 = vmatpush1.msra.mxu0 %v5122
        %6351 = vmatprep.subr.mxu0 %v5126
        %6352 = vmatpush1.msra.mxu0 %v5125
        %6353 = vmatprep.subr.mxu0 %v5129
        %6354 = vmatpush1.msra.mxu0 %v5128
        %6355 = vmatprep.subr.mxu0 %v5132
        %6356 = vmatpush1.msra.mxu0 %v5131
        %6357 = vmatprep.subr.mxu0 %v5135
        %6358 = vmatpush1.msra.mxu0 %v5134
        %6359 = vmatprep.subr.mxu0 %v5138
        %6360 = vmatpush1.msra.mxu0 %v5137
        %6361 = vmatprep.subr.mxu0 %v5141
        %6362 = vmatpush1.msra.mxu0 %v5140
        %6363 = vmatprep.subr.mxu0 %v5144
        %6364 = vmatpush1.msra.mxu0 %v5143
        %6365 = vmatprep.subr.mxu0 %v5147
        %6366 = vmatpush1.msra.mxu0 %v5146
        %6367 = vmatprep.subr.mxu0 %v5150
        %6368 = vmatpush1.msra.mxu0 %v5149
        %6369 = vmatprep.subr.mxu0 %v5153
        %6370 = vmatpush1.msra.mxu0 %v5152
        %6371 = vmatprep.subr.mxu0 %v5156
        %6372 = vmatpush1.msra.mxu0 %v5155
        %6373 = vmatprep.subr.mxu0 %v5159
        %6374 = vmatpush1.msra.mxu0 %v5158
        %6375 = vmatprep.subr.mxu0 %v5162
        %6376 = vmatpush1.msra.mxu0 %v5161
        %6377 = vmatprep.subr.mxu0 %v5165
        %6378 = vmatpush1.msra.mxu0 %v5164
        %6379 = vmatprep.subr.mxu0 %v5168
        %6380 = vmatpush1.msra.mxu0 %v5167
        %6381 = vmatprep.subr.mxu0 %v5171
        %6382 = vmatpush1.msra.mxu0 %v5170
        %6383 = vmatprep.subr.mxu0 %v5194
        %6384 = vmatpush1.msra.mxu0 %v5191
        %6385 = vmatprep.subr.mxu0 0.0
        %6386 = vmatpush1.msra.mxu0 0.0
        %6387 = vmatprep.subr.mxu0 0.0
        %6388 = vmatpush1.msra.mxu0 0.0
        %6389 = vmatprep.subr.mxu0 0.0
        %6390 = vmatpush1.msra.mxu0 0.0
        %6391 = vmatprep.subr.mxu0 0.0
        %6392 = vmatpush1.msra.mxu0 0.0
        %6393 = vmatprep.subr.mxu0 0.0
        %6394 = vmatpush1.msra.mxu0 0.0
        %6395 = vmatprep.subr.mxu0 0.0
        %6396 = vmatpush1.msra.mxu0 0.0
        %6397 = vmatprep.subr.mxu0 0.0
        %6398 = vmatpush1.msra.mxu0 0.0
        %6399 = vmatprep.subr.mxu0 0.0
        %6400 = vmatpush1.msra.mxu0 0.0
        %6401 = vmatprep.subr.mxu0 0.0
        %6402 = vmatpush1.msra.mxu0 0.0
        %6403 = vmatprep.subr.mxu0 0.0
        %6404 = vmatpush1.msra.mxu0 0.0
        %6405 = vmatprep.subr.mxu0 0.0
        %6406 = vmatpush1.msra.mxu0 0.0
        %6407 = vmatprep.subr.mxu0 0.0
        %6408 = vmatpush1.msra.mxu0 0.0
        %6409 = vmatprep.mubr.f32.mxu0 %v5377
        %6410 = vmatmul.mubr.f32.gmra.mrb[0].mxu0 %v2821
        %v6411 = vpop.f32.mrb[0].mxu0
        %v6412 = vadd.f32 0.0, %v6411
        %v6413 = vpop.f32.mrb[0].mxu0
        %v6414 = vadd.f32 0.0, %v6413
        %6415 = vmatprep.mubr.f32.mxu0 %v5380
        %6416 = vmatmul.mubr.f32.gmra.mrb[0].mxu0 %v2823
        %v6417 = vpop.f32.mrb[0].mxu0
        %v6418 = vadd.f32 0.0, %v6417
        %v6419 = vpop.f32.mrb[0].mxu0
        %v6420 = vadd.f32 0.0, %v6419
        %6421 = vmatprep.mubr.f32.mxu0 %v5383
        %6422 = vmatmul.mubr.f32.gmra.mrb[0].mxu0 %v2825
        %v6423 = vpop.f32.mrb[0].mxu0
        %v6424 = vadd.f32 0.0, %v6423
        %v6425 = vpop.f32.mrb[0].mxu0
        %v6426 = vadd.f32 0.0, %v6425
        %6427 = vmatprep.mubr.f32.mxu0 %v5630
        %6428 = vmatmul.mubr.f32.gmra.mrb[0].mxu0 %v2827
        %v6429 = vpop.f32.mrb[0].mxu0
        %v6430 = vadd.f32 0.0, %v6429
        %v6431 = vpop.f32.mrb[0].mxu0
        %v6432 = vadd.f32 0.0, %v6431
        %6433 = vdwg.mxu0
        %6434 = vmatprep.subr.mxu0 0.0
        %6435 = vmatpush1.msra.mxu0 %v5118
        %6436 = vmatprep.subr.mxu0 0.0
        %6437 = vmatpush1.msra.mxu0 %v5121
        %6438 = vmatprep.subr.mxu0 0.0
        %6439 = vmatpush1.msra.mxu0 %v5124
        %6440 = vmatprep.subr.mxu0 0.0
        %6441 = vmatpush1.msra.mxu0 %v5127
        %6442 = vmatprep.subr.mxu0 0.0
        %6443 = vmatpush1.msra.mxu0 %v5130
        %6444 = vmatprep.subr.mxu0 0.0
        %6445 = vmatpush1.msra.mxu0 %v5133
        %6446 = vmatprep.subr.mxu0 0.0
        %6447 = vmatpush1.msra.mxu0 %v5136
        %6448 = vmatprep.subr.mxu0 0.0
        %6449 = vmatpush1.msra.mxu0 %v5139
        %6450 = vmatprep.subr.mxu0 0.0
        %6451 = vmatpush1.msra.mxu0 %v5142
        %6452 = vmatprep.subr.mxu0 0.0
        %6453 = vmatpush1.msra.mxu0 %v5145
        %6454 = vmatprep.subr.mxu0 0.0
        %6455 = vmatpush1.msra.mxu0 %v5148
        %6456 = vmatprep.subr.mxu0 0.0
        %6457 = vmatpush1.msra.mxu0 %v5151
        %6458 = vmatprep.subr.mxu0 0.0
        %6459 = vmatpush1.msra.mxu0 %v5154
        %6460 = vmatprep.subr.mxu0 0.0
        %6461 = vmatpush1.msra.mxu0 %v5157
        %6462 = vmatprep.subr.mxu0 0.0
        %6463 = vmatpush1.msra.mxu0 %v5160
        %6464 = vmatprep.subr.mxu0 0.0
        %6465 = vmatpush1.msra.mxu0 %v5163
        %6466 = vmatprep.subr.mxu0 0.0
        %6467 = vmatpush1.msra.mxu0 %v5166
        %6468 = vmatprep.subr.mxu0 0.0
        %6469 = vmatpush1.msra.mxu0 %v5169
        %6470 = vmatprep.subr.mxu0 0.0
        %6471 = vmatpush1.msra.mxu0 %v5172
        %6472 = vmatprep.subr.mxu0 0.0
        %6473 = vmatpush1.msra.mxu0 %v5197
        %6474 = vmatprep.subr.mxu0 0.0
        %6475 = vmatpush1.msra.mxu0 0.0
        %6476 = vmatprep.subr.mxu0 0.0
        %6477 = vmatpush1.msra.mxu0 0.0
        %6478 = vmatprep.subr.mxu0 0.0
        %6479 = vmatpush1.msra.mxu0 0.0
        %6480 = vmatprep.subr.mxu0 0.0
        %6481 = vmatpush1.msra.mxu0 0.0
        %6482 = vmatprep.subr.mxu0 0.0
        %6483 = vmatpush1.msra.mxu0 0.0
        %6484 = vmatprep.subr.mxu0 0.0
        %6485 = vmatpush1.msra.mxu0 0.0
        %6486 = vmatprep.subr.mxu0 0.0
        %6487 = vmatpush1.msra.mxu0 0.0
        %6488 = vmatprep.subr.mxu0 0.0
        %6489 = vmatpush1.msra.mxu0 0.0
        %6490 = vmatprep.subr.mxu0 0.0
        %6491 = vmatpush1.msra.mxu0 0.0
        %6492 = vmatprep.subr.mxu0 0.0
        %6493 = vmatpush1.msra.mxu0 0.0
        %6494 = vmatprep.subr.mxu0 0.0
        %6495 = vmatpush1.msra.mxu0 0.0
        %6496 = vmatprep.subr.mxu0 0.0
        %6497 = vmatpush1.msra.mxu0 0.0
        %6498 = vmatprep.mubr.f32.mxu0 %v5377
        %6499 = vmatmul.mubr.f32.gmra.mrb[0].mxu0 %v2821
        %v6500 = vpop.f32.mrb[0].mxu0
        %v6501 = vadd.f32 0.0, %v6500
        %v6502 = vpop.f32.mrb[0].mxu0
        %6503 = vmatprep.mubr.f32.mxu0 %v5380
        %6504 = vmatmul.mubr.f32.gmra.mrb[0].mxu0 %v2823
        %v6505 = vpop.f32.mrb[0].mxu0
        %v6506 = vadd.f32 0.0, %v6505
        %v6507 = vpop.f32.mrb[0].mxu0
        %6508 = vmatprep.mubr.f32.mxu0 %v5383
        %6509 = vmatmul.mubr.f32.gmra.mrb[0].mxu0 %v2825
        %v6510 = vpop.f32.mrb[0].mxu0
        %v6511 = vadd.f32 0.0, %v6510
        %v6512 = vpop.f32.mrb[0].mxu0
        %6513 = vmatprep.mubr.f32.mxu0 %v5630
        %6514 = vmatmul.mubr.f32.gmra.mrb[0].mxu0 %v2827
        %v6515 = vpop.f32.mrb[0].mxu0
        %v6516 = vadd.f32 0.0, %v6515
        %v6517 = vpop.f32.mrb[0].mxu0
        %6518 = vdwg.mxu0
        %6519 = vmatprep.subr.mxu0 %v5056
        %6520 = vmatpush1.msra.mxu0 %v5055
        %6521 = vmatprep.subr.mxu0 %v5059
        %6522 = vmatpush1.msra.mxu0 %v5058
        %6523 = vmatprep.subr.mxu0 %v5062
        %6524 = vmatpush1.msra.mxu0 %v5061
        %6525 = vmatprep.subr.mxu0 %v5065
        %6526 = vmatpush1.msra.mxu0 %v5064
        %6527 = vmatprep.subr.mxu0 %v5068
        %6528 = vmatpush1.msra.mxu0 %v5067
        %6529 = vmatprep.subr.mxu0 %v5071
        %6530 = vmatpush1.msra.mxu0 %v5070
        %6531 = vmatprep.subr.mxu0 %v5074
        %6532 = vmatpush1.msra.mxu0 %v5073
        %6533 = vmatprep.subr.mxu0 %v5077
        %6534 = vmatpush1.msra.mxu0 %v5076
        %6535 = vmatprep.subr.mxu0 %v5080
        %6536 = vmatpush1.msra.mxu0 %v5079
        %6537 = vmatprep.subr.mxu0 %v5083
        %6538 = vmatpush1.msra.mxu0 %v5082
        %6539 = vmatprep.subr.mxu0 %v5086
        %6540 = vmatpush1.msra.mxu0 %v5085
        %6541 = vmatprep.subr.mxu0 %v5089
        %6542 = vmatpush1.msra.mxu0 %v5088
        %6543 = vmatprep.subr.mxu0 %v5092
        %6544 = vmatpush1.msra.mxu0 %v5091
        %6545 = vmatprep.subr.mxu0 %v5095
        %6546 = vmatpush1.msra.mxu0 %v5094
        %6547 = vmatprep.subr.mxu0 %v5098
        %6548 = vmatpush1.msra.mxu0 %v5097
        %6549 = vmatprep.subr.mxu0 %v5101
        %6550 = vmatpush1.msra.mxu0 %v5100
        %6551 = vmatprep.subr.mxu0 %v5104
        %6552 = vmatpush1.msra.mxu0 %v5103
        %6553 = vmatprep.subr.mxu0 %v5107
        %6554 = vmatpush1.msra.mxu0 %v5106
        %6555 = vmatprep.subr.mxu0 %v5110
        %6556 = vmatpush1.msra.mxu0 %v5109
        %6557 = vmatprep.subr.mxu0 %v5389
        %6558 = vmatpush1.msra.mxu0 %v5386
        %6559 = vmatprep.subr.mxu0 0.0
        %6560 = vmatpush1.msra.mxu0 0.0
        %6561 = vmatprep.subr.mxu0 0.0
        %6562 = vmatpush1.msra.mxu0 0.0
        %6563 = vmatprep.subr.mxu0 0.0
        %6564 = vmatpush1.msra.mxu0 0.0
        %6565 = vmatprep.subr.mxu0 0.0
        %6566 = vmatpush1.msra.mxu0 0.0
        %6567 = vmatprep.subr.mxu0 0.0
        %6568 = vmatpush1.msra.mxu0 0.0
        %6569 = vmatprep.subr.mxu0 0.0
        %6570 = vmatpush1.msra.mxu0 0.0
        %6571 = vmatprep.subr.mxu0 0.0
        %6572 = vmatpush1.msra.mxu0 0.0
        %6573 = vmatprep.subr.mxu0 0.0
        %6574 = vmatpush1.msra.mxu0 0.0
        %6575 = vmatprep.subr.mxu0 0.0
        %6576 = vmatpush1.msra.mxu0 0.0
        %6577 = vmatprep.subr.mxu0 0.0
        %6578 = vmatpush1.msra.mxu0 0.0
        %6579 = vmatprep.subr.mxu0 0.0
        %6580 = vmatpush1.msra.mxu0 0.0
        %6581 = vmatprep.subr.mxu0 0.0
        %6582 = vmatpush1.msra.mxu0 0.0
        %6583 = vmatprep.mubr.f32.mxu0 %v5178
        %6584 = vmatmul.mubr.f32.gmra.mrb[0].mxu0 %v5043
        %v6585 = vpop.f32.mrb[0].mxu0
        %v6586 = vadd.f32 %v6412, %v6585
        %v6587 = vpop.f32.mrb[0].mxu0
        %v6588 = vadd.f32 %v6414, %v6587
        %6589 = vmatprep.mubr.f32.mxu0 %v5181
        %6590 = vmatmul.mubr.f32.gmra.mrb[0].mxu0 %v5045
        %v6591 = vpop.f32.mrb[0].mxu0
        %v6592 = vadd.f32 %v6418, %v6591
        %v6593 = vpop.f32.mrb[0].mxu0
        %v6594 = vadd.f32 %v6420, %v6593
        %6595 = vmatprep.mubr.f32.mxu0 %v5184
        %6596 = vmatmul.mubr.f32.gmra.mrb[0].mxu0 %v5047
        %v6597 = vpop.f32.mrb[0].mxu0
        %v6598 = vadd.f32 %v6424, %v6597
        %v6599 = vpop.f32.mrb[0].mxu0
        %v6600 = vadd.f32 %v6426, %v6599
        %6601 = vmatprep.mubr.f32.mxu0 %v5187
        %6602 = vmatmul.mubr.f32.gmra.mrb[0].mxu0 %v5049
        %v6603 = vpop.f32.mrb[0].mxu0
        %v6604 = vadd.f32 %v6430, %v6603
        %v6605 = vpop.f32.mrb[0].mxu0
        %v6606 = vadd.f32 %v6432, %v6605
        %6607 = vdwg.mxu0
        %6608 = vmatprep.subr.mxu0 0.0
        %6609 = vmatpush1.msra.mxu0 %v5057
        %6610 = vmatprep.subr.mxu0 0.0
        %6611 = vmatpush1.msra.mxu0 %v5060
        %6612 = vmatprep.subr.mxu0 0.0
        %6613 = vmatpush1.msra.mxu0 %v5063
        %6614 = vmatprep.subr.mxu0 0.0
        %6615 = vmatpush1.msra.mxu0 %v5066
        %6616 = vmatprep.subr.mxu0 0.0
        %6617 = vmatpush1.msra.mxu0 %v5069
        %6618 = vmatprep.subr.mxu0 0.0
        %6619 = vmatpush1.msra.mxu0 %v5072
        %6620 = vmatprep.subr.mxu0 0.0
        %6621 = vmatpush1.msra.mxu0 %v5075
        %6622 = vmatprep.subr.mxu0 0.0
        %6623 = vmatpush1.msra.mxu0 %v5078
        %6624 = vmatprep.subr.mxu0 0.0
        %6625 = vmatpush1.msra.mxu0 %v5081
        %6626 = vmatprep.subr.mxu0 0.0
        %6627 = vmatpush1.msra.mxu0 %v5084
        %6628 = vmatprep.subr.mxu0 0.0
        %6629 = vmatpush1.msra.mxu0 %v5087
        %6630 = vmatprep.subr.mxu0 0.0
        %6631 = vmatpush1.msra.mxu0 %v5090
        %6632 = vmatprep.subr.mxu0 0.0
        %6633 = vmatpush1.msra.mxu0 %v5093
        %6634 = vmatprep.subr.mxu0 0.0
        %6635 = vmatpush1.msra.mxu0 %v5096
        %6636 = vmatprep.subr.mxu0 0.0
        %6637 = vmatpush1.msra.mxu0 %v5099
        %6638 = vmatprep.subr.mxu0 0.0
        %6639 = vmatpush1.msra.mxu0 %v5102
        %6640 = vmatprep.subr.mxu0 0.0
        %6641 = vmatpush1.msra.mxu0 %v5105
        %6642 = vmatprep.subr.mxu0 0.0
        %6643 = vmatpush1.msra.mxu0 %v5108
        %6644 = vmatprep.subr.mxu0 0.0
        %6645 = vmatpush1.msra.mxu0 %v5111
        %6646 = vmatprep.subr.mxu0 0.0
        %6647 = vmatpush1.msra.mxu0 %v5392
        %6648 = vmatprep.subr.mxu0 0.0
        %6649 = vmatpush1.msra.mxu0 0.0
        %6650 = vmatprep.subr.mxu0 0.0
        %6651 = vmatpush1.msra.mxu0 0.0
        %6652 = vmatprep.subr.mxu0 0.0
        %6653 = vmatpush1.msra.mxu0 0.0
        %6654 = vmatprep.subr.mxu0 0.0
        %6655 = vmatpush1.msra.mxu0 0.0
        %6656 = vmatprep.subr.mxu0 0.0
        %6657 = vmatpush1.msra.mxu0 0.0
        %6658 = vmatprep.subr.mxu0 0.0
        %6659 = vmatpush1.msra.mxu0 0.0
        %6660 = vmatprep.subr.mxu0 0.0
        %6661 = vmatpush1.msra.mxu0 0.0
        %6662 = vmatprep.subr.mxu0 0.0
        %6663 = vmatpush1.msra.mxu0 0.0
        %6664 = vmatprep.subr.mxu0 0.0
        %6665 = vmatpush1.msra.mxu0 0.0
        %6666 = vmatprep.subr.mxu0 0.0
        %6667 = vmatpush1.msra.mxu0 0.0
        %6668 = vmatprep.subr.mxu0 0.0
        %6669 = vmatpush1.msra.mxu0 0.0
        %6670 = vmatprep.subr.mxu0 0.0
        %6671 = vmatpush1.msra.mxu0 0.0
        %6672 = vmatprep.mubr.f32.mxu0 %v5178
        %6673 = vmatmul.mubr.f32.gmra.mrb[0].mxu0 %v5043
        %v6674 = vpop.f32.mrb[0].mxu0
        %v6675 = vadd.f32 %v6501, %v6674
        %v6676 = vpop.f32.mrb[0].mxu0
        %6677 = vmatprep.mubr.f32.mxu0 %v5181
        %6678 = vmatmul.mubr.f32.gmra.mrb[0].mxu0 %v5045
        %v6679 = vpop.f32.mrb[0].mxu0
        %v6680 = vadd.f32 %v6506, %v6679
        %v6681 = vpop.f32.mrb[0].mxu0
        %6682 = vmatprep.mubr.f32.mxu0 %v5184
        %6683 = vmatmul.mubr.f32.gmra.mrb[0].mxu0 %v5047
        %v6684 = vpop.f32.mrb[0].mxu0
        %v6685 = vadd.f32 %v6511, %v6684
        %v6686 = vpop.f32.mrb[0].mxu0
        %6687 = vmatprep.mubr.f32.mxu0 %v5187
        %6688 = vmatmul.mubr.f32.gmra.mrb[0].mxu0 %v5049
        %v6689 = vpop.f32.mrb[0].mxu0
        %v6690 = vadd.f32 %v6516, %v6689
        %v6691 = vpop.f32.mrb[0].mxu0
        %6692 = vdwg.mxu0
        %6693 = vmatprep.subr.mxu0 %v5570
        %6694 = vmatpush1.msra.mxu0 %v5569
        %6695 = vmatprep.subr.mxu0 %v5573
        %6696 = vmatpush1.msra.mxu0 %v5572
        %6697 = vmatprep.subr.mxu0 %v5576
        %6698 = vmatpush1.msra.mxu0 %v5575
        %6699 = vmatprep.subr.mxu0 %v5579
        %6700 = vmatpush1.msra.mxu0 %v5578
        %6701 = vmatprep.subr.mxu0 %v5582
        %6702 = vmatpush1.msra.mxu0 %v5581
        %6703 = vmatprep.subr.mxu0 %v5585
        %6704 = vmatpush1.msra.mxu0 %v5584
        %6705 = vmatprep.subr.mxu0 %v5588
        %6706 = vmatpush1.msra.mxu0 %v5587
        %6707 = vmatprep.subr.mxu0 %v5591
        %6708 = vmatpush1.msra.mxu0 %v5590
        %6709 = vmatprep.subr.mxu0 %v5594
        %6710 = vmatpush1.msra.mxu0 %v5593
        %6711 = vmatprep.subr.mxu0 %v5597
        %6712 = vmatpush1.msra.mxu0 %v5596
        %6713 = vmatprep.subr.mxu0 %v5600
        %6714 = vmatpush1.msra.mxu0 %v5599
        %6715 = vmatprep.subr.mxu0 %v5603
        %6716 = vmatpush1.msra.mxu0 %v5602
        %6717 = vmatprep.subr.mxu0 %v5606
        %6718 = vmatpush1.msra.mxu0 %v5605
        %6719 = vmatprep.subr.mxu0 %v5609
        %6720 = vmatpush1.msra.mxu0 %v5608
        %6721 = vmatprep.subr.mxu0 %v5612
        %6722 = vmatpush1.msra.mxu0 %v5611
        %6723 = vmatprep.subr.mxu0 %v5615
        %6724 = vmatpush1.msra.mxu0 %v5614
        %6725 = vmatprep.subr.mxu0 %v5618
        %6726 = vmatpush1.msra.mxu0 %v5617
        %6727 = vmatprep.subr.mxu0 %v5621
        %6728 = vmatpush1.msra.mxu0 %v5620
        %6729 = vmatprep.subr.mxu0 %v5624
        %6730 = vmatpush1.msra.mxu0 %v5623
        %6731 = vmatprep.subr.mxu0 %v5636
        %6732 = vmatpush1.msra.mxu0 %v5633
        %6733 = vmatprep.subr.mxu0 0.0
        %6734 = vmatpush1.msra.mxu0 0.0
        %6735 = vmatprep.subr.mxu0 0.0
        %6736 = vmatpush1.msra.mxu0 0.0
        %6737 = vmatprep.subr.mxu0 0.0
        %6738 = vmatpush1.msra.mxu0 0.0
        %6739 = vmatprep.subr.mxu0 0.0
        %6740 = vmatpush1.msra.mxu0 0.0
        %6741 = vmatprep.subr.mxu0 0.0
        %6742 = vmatpush1.msra.mxu0 0.0
        %6743 = vmatprep.subr.mxu0 0.0
        %6744 = vmatpush1.msra.mxu0 0.0
        %6745 = vmatprep.subr.mxu0 0.0
        %6746 = vmatpush1.msra.mxu0 0.0
        %6747 = vmatprep.subr.mxu0 0.0
        %6748 = vmatpush1.msra.mxu0 0.0
        %6749 = vmatprep.subr.mxu0 0.0
        %6750 = vmatpush1.msra.mxu0 0.0
        %6751 = vmatprep.subr.mxu0 0.0
        %6752 = vmatpush1.msra.mxu0 0.0
        %6753 = vmatprep.subr.mxu0 0.0
        %6754 = vmatpush1.msra.mxu0 0.0
        %6755 = vmatprep.subr.mxu0 0.0
        %6756 = vmatpush1.msra.mxu0 0.0
        %6757 = vmatprep.mubr.f32.mxu0 %v5181
        %6758 = vmatmul.mubr.f32.gmra.mrb[0].mxu0 %v5045
        %v6759 = vpop.f32.mrb[0].mxu0
        %v6760 = vadd.f32 0.0, %v6759
        %v6761 = vpop.f32.mrb[0].mxu0
        %v6762 = vadd.f32 0.0, %v6761
        %6763 = vmatprep.mubr.f32.mxu0 %v5184
        %6764 = vmatmul.mubr.f32.gmra.mrb[0].mxu0 %v5047
        %v6765 = vpop.f32.mrb[0].mxu0
        %v6766 = vadd.f32 0.0, %v6765
        %v6767 = vpop.f32.mrb[0].mxu0
        %v6768 = vadd.f32 0.0, %v6767
        %6769 = vmatprep.mubr.f32.mxu0 %v5187
        %6770 = vmatmul.mubr.f32.gmra.mrb[0].mxu0 %v5049
        %v6771 = vpop.f32.mrb[0].mxu0
        %v6772 = vadd.f32 0.0, %v6771
        %v6773 = vpop.f32.mrb[0].mxu0
        %v6774 = vadd.f32 0.0, %v6773
        %6775 = vmatprep.mubr.f32.mxu0 %v5889
        %6776 = vmatmul.mubr.f32.gmra.mrb[0].mxu0 %v5051
        %v6777 = vpop.f32.mrb[0].mxu0
        %v6778 = vadd.f32 0.0, %v6777
        %v6779 = vpop.f32.mrb[0].mxu0
        %v6780 = vadd.f32 0.0, %v6779
        %6781 = vdwg.mxu0
        %6782 = vmatprep.subr.mxu0 0.0
        %6783 = vmatpush1.msra.mxu0 %v5571
        %6784 = vmatprep.subr.mxu0 0.0
        %6785 = vmatpush1.msra.mxu0 %v5574
        %6786 = vmatprep.subr.mxu0 0.0
        %6787 = vmatpush1.msra.mxu0 %v5577
        %6788 = vmatprep.subr.mxu0 0.0
        %6789 = vmatpush1.msra.mxu0 %v5580
        %6790 = vmatprep.subr.mxu0 0.0
        %6791 = vmatpush1.msra.mxu0 %v5583
        %6792 = vmatprep.subr.mxu0 0.0
        %6793 = vmatpush1.msra.mxu0 %v5586
        %6794 = vmatprep.subr.mxu0 0.0
        %6795 = vmatpush1.msra.mxu0 %v5589
        %6796 = vmatprep.subr.mxu0 0.0
        %6797 = vmatpush1.msra.mxu0 %v5592
        %6798 = vmatprep.subr.mxu0 0.0
        %6799 = vmatpush1.msra.mxu0 %v5595
        %6800 = vmatprep.subr.mxu0 0.0
        %6801 = vmatpush1.msra.mxu0 %v5598
        %6802 = vmatprep.subr.mxu0 0.0
        %6803 = vmatpush1.msra.mxu0 %v5601
        %6804 = vmatprep.subr.mxu0 0.0
        %6805 = vmatpush1.msra.mxu0 %v5604
        %6806 = vmatprep.subr.mxu0 0.0
        %6807 = vmatpush1.msra.mxu0 %v5607
        %6808 = vmatprep.subr.mxu0 0.0
        %6809 = vmatpush1.msra.mxu0 %v5610
        %6810 = vmatprep.subr.mxu0 0.0
        %6811 = vmatpush1.msra.mxu0 %v5613
        %6812 = vmatprep.subr.mxu0 0.0
        %6813 = vmatpush1.msra.mxu0 %v5616
        %6814 = vmatprep.subr.mxu0 0.0
        %6815 = vmatpush1.msra.mxu0 %v5619
        %6816 = vmatprep.subr.mxu0 0.0
        %6817 = vmatpush1.msra.mxu0 %v5622
        %6818 = vmatprep.subr.mxu0 0.0
        %6819 = vmatpush1.msra.mxu0 %v5625
        %6820 = vmatprep.subr.mxu0 0.0
        %6821 = vmatpush1.msra.mxu0 %v5639
        %6822 = vmatprep.subr.mxu0 0.0
        %6823 = vmatpush1.msra.mxu0 0.0
        %6824 = vmatprep.subr.mxu0 0.0
        %6825 = vmatpush1.msra.mxu0 0.0
        %6826 = vmatprep.subr.mxu0 0.0
        %6827 = vmatpush1.msra.mxu0 0.0
        %6828 = vmatprep.subr.mxu0 0.0
        %6829 = vmatpush1.msra.mxu0 0.0
        %6830 = vmatprep.subr.mxu0 0.0
        %6831 = vmatpush1.msra.mxu0 0.0
        %6832 = vmatprep.subr.mxu0 0.0
        %6833 = vmatpush1.msra.mxu0 0.0
        %6834 = vmatprep.subr.mxu0 0.0
        %6835 = vmatpush1.msra.mxu0 0.0
        %6836 = vmatprep.subr.mxu0 0.0
        %6837 = vmatpush1.msra.mxu0 0.0
        %6838 = vmatprep.subr.mxu0 0.0
        %6839 = vmatpush1.msra.mxu0 0.0
        %6840 = vmatprep.subr.mxu0 0.0
        %6841 = vmatpush1.msra.mxu0 0.0
        %6842 = vmatprep.subr.mxu0 0.0
        %6843 = vmatpush1.msra.mxu0 0.0
        %6844 = vmatprep.subr.mxu0 0.0
        %6845 = vmatpush1.msra.mxu0 0.0
        %6846 = vmatprep.mubr.f32.mxu0 %v5181
        %6847 = vmatmul.mubr.f32.gmra.mrb[0].mxu0 %v5045
        %v6848 = vpop.f32.mrb[0].mxu0
        %v6849 = vadd.f32 0.0, %v6848
        %v6850 = vpop.f32.mrb[0].mxu0
        %6851 = vmatprep.mubr.f32.mxu0 %v5184
        %6852 = vmatmul.mubr.f32.gmra.mrb[0].mxu0 %v5047
        %v6853 = vpop.f32.mrb[0].mxu0
        %v6854 = vadd.f32 0.0, %v6853
        %v6855 = vpop.f32.mrb[0].mxu0
        %6856 = vmatprep.mubr.f32.mxu0 %v5187
        %6857 = vmatmul.mubr.f32.gmra.mrb[0].mxu0 %v5049
        %v6858 = vpop.f32.mrb[0].mxu0
        %v6859 = vadd.f32 0.0, %v6858
        %v6860 = vpop.f32.mrb[0].mxu0
        %6861 = vmatprep.mubr.f32.mxu0 %v5889
        %6862 = vmatmul.mubr.f32.gmra.mrb[0].mxu0 %v5051
        %v6863 = vpop.f32.mrb[0].mxu0
        %v6864 = vadd.f32 0.0, %v6863
        %v6865 = vpop.f32.mrb[0].mxu0
        %6866 = vdwg.mxu0
        %v6867 = vadd.f32 %v6586, %v6760
        %v6868 = vadd.f32 %v6588, %v6762
        %v6869 = vadd.f32 %v6675, %v6849
        %v6870 = vadd.f32 %v6592, %v6766
        %v6871 = vadd.f32 %v6594, %v6768
        %v6872 = vadd.f32 %v6680, %v6854
        %v6873 = vadd.f32 %v6598, %v6772
        %v6874 = vadd.f32 %v6600, %v6774
        %v6875 = vadd.f32 %v6685, %v6859
        %v6876 = vadd.f32 %v6604, %v6778
        %v6877 = vadd.f32 %v6606, %v6780
        %v6878 = vadd.f32 %v6690, %v6864
        %6879 = vmatprep.subr.mxu0 %v5829
        %6880 = vmatpush1.msra.mxu0 %v5828
        %6881 = vmatprep.subr.mxu0 %v5832
        %6882 = vmatpush1.msra.mxu0 %v5831
        %6883 = vmatprep.subr.mxu0 %v5835
        %6884 = vmatpush1.msra.mxu0 %v5834
        %6885 = vmatprep.subr.mxu0 %v5838
        %6886 = vmatpush1.msra.mxu0 %v5837
        %6887 = vmatprep.subr.mxu0 %v5841
        %6888 = vmatpush1.msra.mxu0 %v5840
        %6889 = vmatprep.subr.mxu0 %v5844
        %6890 = vmatpush1.msra.mxu0 %v5843
        %6891 = vmatprep.subr.mxu0 %v5847
        %6892 = vmatpush1.msra.mxu0 %v5846
        %6893 = vmatprep.subr.mxu0 %v5850
        %6894 = vmatpush1.msra.mxu0 %v5849
        %6895 = vmatprep.subr.mxu0 %v5853
        %6896 = vmatpush1.msra.mxu0 %v5852
        %6897 = vmatprep.subr.mxu0 %v5856
        %6898 = vmatpush1.msra.mxu0 %v5855
        %6899 = vmatprep.subr.mxu0 %v5859
        %6900 = vmatpush1.msra.mxu0 %v5858
        %6901 = vmatprep.subr.mxu0 %v5862
        %6902 = vmatpush1.msra.mxu0 %v5861
        %6903 = vmatprep.subr.mxu0 %v5865
        %6904 = vmatpush1.msra.mxu0 %v5864
        %6905 = vmatprep.subr.mxu0 %v5868
        %6906 = vmatpush1.msra.mxu0 %v5867
        %6907 = vmatprep.subr.mxu0 %v5871
        %6908 = vmatpush1.msra.mxu0 %v5870
        %6909 = vmatprep.subr.mxu0 %v5874
        %6910 = vmatpush1.msra.mxu0 %v5873
        %6911 = vmatprep.subr.mxu0 %v5877
        %6912 = vmatpush1.msra.mxu0 %v5876
        %6913 = vmatprep.subr.mxu0 %v5880
        %6914 = vmatpush1.msra.mxu0 %v5879
        %6915 = vmatprep.subr.mxu0 %v5883
        %6916 = vmatpush1.msra.mxu0 %v5882
        %6917 = vmatprep.subr.mxu0 %v5895
        %6918 = vmatpush1.msra.mxu0 %v5892
        %6919 = vmatprep.subr.mxu0 0.0
        %6920 = vmatpush1.msra.mxu0 0.0
        %6921 = vmatprep.subr.mxu0 0.0
        %6922 = vmatpush1.msra.mxu0 0.0
        %6923 = vmatprep.subr.mxu0 0.0
        %6924 = vmatpush1.msra.mxu0 0.0
        %6925 = vmatprep.subr.mxu0 0.0
        %6926 = vmatpush1.msra.mxu0 0.0
        %6927 = vmatprep.subr.mxu0 0.0
        %6928 = vmatpush1.msra.mxu0 0.0
        %6929 = vmatprep.subr.mxu0 0.0
        %6930 = vmatpush1.msra.mxu0 0.0
        %6931 = vmatprep.subr.mxu0 0.0
        %6932 = vmatpush1.msra.mxu0 0.0
        %6933 = vmatprep.subr.mxu0 0.0
        %6934 = vmatpush1.msra.mxu0 0.0
        %6935 = vmatprep.subr.mxu0 0.0
        %6936 = vmatpush1.msra.mxu0 0.0
        %6937 = vmatprep.subr.mxu0 0.0
        %6938 = vmatpush1.msra.mxu0 0.0
        %6939 = vmatprep.subr.mxu0 0.0
        %6940 = vmatpush1.msra.mxu0 0.0
        %6941 = vmatprep.subr.mxu0 0.0
        %6942 = vmatpush1.msra.mxu0 0.0
        %6943 = vmatprep.mubr.f32.mxu0 %v5380
        %6944 = vmatmul.mubr.f32.gmra.mrb[0].mxu0 %v2823
        %v6945 = vpop.f32.mrb[0].mxu0
        %v6946 = vadd.f32 0.0, %v6945
        %v6947 = vpop.f32.mrb[0].mxu0
        %v6948 = vadd.f32 0.0, %v6947
        %6949 = vmatprep.mubr.f32.mxu0 %v5383
        %6950 = vmatmul.mubr.f32.gmra.mrb[0].mxu0 %v2825
        %v6951 = vpop.f32.mrb[0].mxu0
        %v6952 = vadd.f32 0.0, %v6951
        %v6953 = vpop.f32.mrb[0].mxu0
        %v6954 = vadd.f32 0.0, %v6953
        %6955 = vmatprep.mubr.f32.mxu0 %v5630
        %6956 = vmatmul.mubr.f32.gmra.mrb[0].mxu0 %v2827
        %v6957 = vpop.f32.mrb[0].mxu0
        %v6958 = vadd.f32 0.0, %v6957
        %v6959 = vpop.f32.mrb[0].mxu0
        %v6960 = vadd.f32 0.0, %v6959
        %6961 = vmatprep.mubr.f32.mxu0 %v6148
        %6962 = vmatmul.mubr.f32.gmra.mrb[0].mxu0 %v2829
        %v6963 = vpop.f32.mrb[0].mxu0
        %v6964 = vadd.f32 0.0, %v6963
        %v6965 = vpop.f32.mrb[0].mxu0
        %v6966 = vadd.f32 0.0, %v6965
        %6967 = vdwg.mxu0
        %6968 = vmatprep.subr.mxu0 0.0
        %6969 = vmatpush1.msra.mxu0 %v5830
        %6970 = vmatprep.subr.mxu0 0.0
        %6971 = vmatpush1.msra.mxu0 %v5833
        %6972 = vmatprep.subr.mxu0 0.0
        %6973 = vmatpush1.msra.mxu0 %v5836
        %6974 = vmatprep.subr.mxu0 0.0
        %6975 = vmatpush1.msra.mxu0 %v5839
        %6976 = vmatprep.subr.mxu0 0.0
        %6977 = vmatpush1.msra.mxu0 %v5842
        %6978 = vmatprep.subr.mxu0 0.0
        %6979 = vmatpush1.msra.mxu0 %v5845
        %6980 = vmatprep.subr.mxu0 0.0
        %6981 = vmatpush1.msra.mxu0 %v5848
        %6982 = vmatprep.subr.mxu0 0.0
        %6983 = vmatpush1.msra.mxu0 %v5851
        %6984 = vmatprep.subr.mxu0 0.0
        %6985 = vmatpush1.msra.mxu0 %v5854
        %6986 = vmatprep.subr.mxu0 0.0
        %6987 = vmatpush1.msra.mxu0 %v5857
        %6988 = vmatprep.subr.mxu0 0.0
        %6989 = vmatpush1.msra.mxu0 %v5860
        %6990 = vmatprep.subr.mxu0 0.0
        %6991 = vmatpush1.msra.mxu0 %v5863
        %6992 = vmatprep.subr.mxu0 0.0
        %6993 = vmatpush1.msra.mxu0 %v5866
        %6994 = vmatprep.subr.mxu0 0.0
        %6995 = vmatpush1.msra.mxu0 %v5869
        %6996 = vmatprep.subr.mxu0 0.0
        %6997 = vmatpush1.msra.mxu0 %v5872
        %6998 = vmatprep.subr.mxu0 0.0
        %6999 = vmatpush1.msra.mxu0 %v5875
        %7000 = vmatprep.subr.mxu0 0.0
        %7001 = vmatpush1.msra.mxu0 %v5878
        %7002 = vmatprep.subr.mxu0 0.0
        %7003 = vmatpush1.msra.mxu0 %v5881
        %7004 = vmatprep.subr.mxu0 0.0
        %7005 = vmatpush1.msra.mxu0 %v5884
        %7006 = vmatprep.subr.mxu0 0.0
        %7007 = vmatpush1.msra.mxu0 %v5898
        %7008 = vmatprep.subr.mxu0 0.0
        %7009 = vmatpush1.msra.mxu0 0.0
        %7010 = vmatprep.subr.mxu0 0.0
        %7011 = vmatpush1.msra.mxu0 0.0
        %7012 = vmatprep.subr.mxu0 0.0
        %7013 = vmatpush1.msra.mxu0 0.0
        %7014 = vmatprep.subr.mxu0 0.0
        %7015 = vmatpush1.msra.mxu0 0.0
        %7016 = vmatprep.subr.mxu0 0.0
        %7017 = vmatpush1.msra.mxu0 0.0
        %7018 = vmatprep.subr.mxu0 0.0
        %7019 = vmatpush1.msra.mxu0 0.0
        %7020 = vmatprep.subr.mxu0 0.0
        %7021 = vmatpush1.msra.mxu0 0.0
        %7022 = vmatprep.subr.mxu0 0.0
        %7023 = vmatpush1.msra.mxu0 0.0
        %7024 = vmatprep.subr.mxu0 0.0
        %7025 = vmatpush1.msra.mxu0 0.0
        %7026 = vmatprep.subr.mxu0 0.0
        %7027 = vmatpush1.msra.mxu0 0.0
        %7028 = vmatprep.subr.mxu0 0.0
        %7029 = vmatpush1.msra.mxu0 0.0
        %7030 = vmatprep.subr.mxu0 0.0
        %7031 = vmatpush1.msra.mxu0 0.0
        %7032 = vmatprep.mubr.f32.mxu0 %v5380
        %7033 = vmatmul.mubr.f32.gmra.mrb[0].mxu0 %v2823
        %v7034 = vpop.f32.mrb[0].mxu0
        %v7035 = vadd.f32 0.0, %v7034
        %v7036 = vpop.f32.mrb[0].mxu0
        %7037 = vmatprep.mubr.f32.mxu0 %v5383
        %7038 = vmatmul.mubr.f32.gmra.mrb[0].mxu0 %v2825
        %v7039 = vpop.f32.mrb[0].mxu0
        %v7040 = vadd.f32 0.0, %v7039
        %v7041 = vpop.f32.mrb[0].mxu0
        %7042 = vmatprep.mubr.f32.mxu0 %v5630
        %7043 = vmatmul.mubr.f32.gmra.mrb[0].mxu0 %v2827
        %v7044 = vpop.f32.mrb[0].mxu0
        %v7045 = vadd.f32 0.0, %v7044
        %v7046 = vpop.f32.mrb[0].mxu0
        %7047 = vmatprep.mubr.f32.mxu0 %v6148
        %7048 = vmatmul.mubr.f32.gmra.mrb[0].mxu0 %v2829
        %v7049 = vpop.f32.mrb[0].mxu0
        %v7050 = vadd.f32 0.0, %v7049
        %v7051 = vpop.f32.mrb[0].mxu0
        %7052 = vdwg.mxu0
        %v7053 = vadd.f32 %v6867, %v6946
        %v7054 = vadd.f32 %v6868, %v6948
        %v7055 = vadd.f32 %v6869, %v7035
        %v7056 = vadd.f32 %v6870, %v6952
        %v7057 = vadd.f32 %v6871, %v6954
        %v7058 = vadd.f32 %v6872, %v7040
        %v7059 = vadd.f32 %v6873, %v6958
        %v7060 = vadd.f32 %v6874, %v6960
        %v7061 = vadd.f32 %v6875, %v7045
        %v7062 = vadd.f32 %v6876, %v6964
        %v7063 = vadd.f32 %v6877, %v6966
        %v7064 = vadd.f32 %v6878, %v7050
        %v7066 = vsel %vm5176, %v5054, 0
        %7068 = vmatprep.subr.mxu0 %v6088
        %7069 = vmatpush1.msra.mxu0 %v6087
        %7070 = vmatprep.subr.mxu0 %v6091
        %7071 = vmatpush1.msra.mxu0 %v6090
        %7072 = vmatprep.subr.mxu0 %v6094
        %7073 = vmatpush1.msra.mxu0 %v6093
        %7074 = vmatprep.subr.mxu0 %v6097
        %7075 = vmatpush1.msra.mxu0 %v6096
        %7076 = vmatprep.subr.mxu0 %v6100
        %7077 = vmatpush1.msra.mxu0 %v6099
        %7078 = vmatprep.subr.mxu0 %v6103
        %7079 = vmatpush1.msra.mxu0 %v6102
        %7080 = vmatprep.subr.mxu0 %v6106
        %7081 = vmatpush1.msra.mxu0 %v6105
        %7082 = vmatprep.subr.mxu0 %v6109
        %7083 = vmatpush1.msra.mxu0 %v6108
        %7084 = vmatprep.subr.mxu0 %v6112
        %7085 = vmatpush1.msra.mxu0 %v6111
        %7086 = vmatprep.subr.mxu0 %v6115
        %7087 = vmatpush1.msra.mxu0 %v6114
        %7088 = vmatprep.subr.mxu0 %v6118
        %7089 = vmatpush1.msra.mxu0 %v6117
        %7090 = vmatprep.subr.mxu0 %v6121
        %7091 = vmatpush1.msra.mxu0 %v6120
        %7092 = vmatprep.subr.mxu0 %v6124
        %7093 = vmatpush1.msra.mxu0 %v6123
        %7094 = vmatprep.subr.mxu0 %v6127
        %7095 = vmatpush1.msra.mxu0 %v6126
        %7096 = vmatprep.subr.mxu0 %v6130
        %7097 = vmatpush1.msra.mxu0 %v6129
        %7098 = vmatprep.subr.mxu0 %v6133
        %7099 = vmatpush1.msra.mxu0 %v6132
        %7100 = vmatprep.subr.mxu0 %v6136
        %7101 = vmatpush1.msra.mxu0 %v6135
        %7102 = vmatprep.subr.mxu0 %v6139
        %7103 = vmatpush1.msra.mxu0 %v6138
        %7104 = vmatprep.subr.mxu0 %v6142
        %7105 = vmatpush1.msra.mxu0 %v6141
        %7106 = vmatprep.subr.mxu0 %v6154
        %7107 = vmatpush1.msra.mxu0 %v6151
        %7108 = vmatprep.subr.mxu0 0.0
        %7109 = vmatpush1.msra.mxu0 0.0
        %7110 = vmatprep.subr.mxu0 0.0
        %7111 = vmatpush1.msra.mxu0 0.0
        %7112 = vmatprep.subr.mxu0 0.0
        %7113 = vmatpush1.msra.mxu0 0.0
        %7114 = vmatprep.subr.mxu0 0.0
        %7115 = vmatpush1.msra.mxu0 0.0
        %7116 = vmatprep.subr.mxu0 0.0
        %7117 = vmatpush1.msra.mxu0 0.0
        %7118 = vmatprep.subr.mxu0 0.0
        %7119 = vmatpush1.msra.mxu0 0.0
        %7120 = vmatprep.subr.mxu0 0.0
        %7121 = vmatpush1.msra.mxu0 0.0
        %7122 = vmatprep.subr.mxu0 0.0
        %7123 = vmatpush1.msra.mxu0 0.0
        %7124 = vmatprep.subr.mxu0 0.0
        %7125 = vmatpush1.msra.mxu0 0.0
        %7126 = vmatprep.subr.mxu0 0.0
        %7127 = vmatpush1.msra.mxu0 0.0
        %7128 = vmatprep.subr.mxu0 0.0
        %7129 = vmatpush1.msra.mxu0 0.0
        %7130 = vmatprep.subr.mxu0 0.0
        %7131 = vmatpush1.msra.mxu0 0.0
        %7132 = vmatprep.mubr.f32.mxu0 %v5184
        %7133 = vmatmul.mubr.f32.gmra.mrb[0].mxu0 %v5047
        %v7134 = vpop.f32.mrb[0].mxu0
        %v7135 = vadd.f32 0.0, %v7134
        %v7136 = vpop.f32.mrb[0].mxu0
        %v7137 = vadd.f32 0.0, %v7136
        %7138 = vmatprep.mubr.f32.mxu0 %v5187
        %7139 = vmatmul.mubr.f32.gmra.mrb[0].mxu0 %v5049
        %v7140 = vpop.f32.mrb[0].mxu0
        %v7141 = vadd.f32 0.0, %v7140
        %v7142 = vpop.f32.mrb[0].mxu0
        %v7143 = vadd.f32 0.0, %v7142
        %7144 = vmatprep.mubr.f32.mxu0 %v5889
        %7145 = vmatmul.mubr.f32.gmra.mrb[0].mxu0 %v5051
        %v7146 = vpop.f32.mrb[0].mxu0
        %v7147 = vadd.f32 0.0, %v7146
        %v7148 = vpop.f32.mrb[0].mxu0
        %v7149 = vadd.f32 0.0, %v7148
        %7150 = vmatprep.mubr.f32.mxu0 %v7066
        %7151 = vmatmul.mubr.f32.gmra.mrb[0].mxu0 %v5053
        %v7152 = vpop.f32.mrb[0].mxu0
        %v7153 = vadd.f32 0.0, %v7152
        %v7154 = vpop.f32.mrb[0].mxu0
        %v7155 = vadd.f32 0.0, %v7154
        %7156 = vdwg.mxu0
        %7157 = vmatprep.subr.mxu0 0.0
        %7158 = vmatpush1.msra.mxu0 %v6089
        %7159 = vmatprep.subr.mxu0 0.0
        %7160 = vmatpush1.msra.mxu0 %v6092
        %7161 = vmatprep.subr.mxu0 0.0
        %7162 = vmatpush1.msra.mxu0 %v6095
        %7163 = vmatprep.subr.mxu0 0.0
        %7164 = vmatpush1.msra.mxu0 %v6098
        %7165 = vmatprep.subr.mxu0 0.0
        %7166 = vmatpush1.msra.mxu0 %v6101
        %7167 = vmatprep.subr.mxu0 0.0
        %7168 = vmatpush1.msra.mxu0 %v6104
        %7169 = vmatprep.subr.mxu0 0.0
        %7170 = vmatpush1.msra.mxu0 %v6107
        %7171 = vmatprep.subr.mxu0 0.0
        %7172 = vmatpush1.msra.mxu0 %v6110
        %7173 = vmatprep.subr.mxu0 0.0
        %7174 = vmatpush1.msra.mxu0 %v6113
        %7175 = vmatprep.subr.mxu0 0.0
        %7176 = vmatpush1.msra.mxu0 %v6116
        %7177 = vmatprep.subr.mxu0 0.0
        %7178 = vmatpush1.msra.mxu0 %v6119
        %7179 = vmatprep.subr.mxu0 0.0
        %7180 = vmatpush1.msra.mxu0 %v6122
        %7181 = vmatprep.subr.mxu0 0.0
        %7182 = vmatpush1.msra.mxu0 %v6125
        %7183 = vmatprep.subr.mxu0 0.0
        %7184 = vmatpush1.msra.mxu0 %v6128
        %7185 = vmatprep.subr.mxu0 0.0
        %7186 = vmatpush1.msra.mxu0 %v6131
        %7187 = vmatprep.subr.mxu0 0.0
        %7188 = vmatpush1.msra.mxu0 %v6134
        %7189 = vmatprep.subr.mxu0 0.0
        %7190 = vmatpush1.msra.mxu0 %v6137
        %7191 = vmatprep.subr.mxu0 0.0
        %7192 = vmatpush1.msra.mxu0 %v6140
        %7193 = vmatprep.subr.mxu0 0.0
        %7194 = vmatpush1.msra.mxu0 %v6143
        %7195 = vmatprep.subr.mxu0 0.0
        %7196 = vmatpush1.msra.mxu0 %v6157
        %7197 = vmatprep.subr.mxu0 0.0
        %7198 = vmatpush1.msra.mxu0 0.0
        %7199 = vmatprep.subr.mxu0 0.0
        %7200 = vmatpush1.msra.mxu0 0.0
        %7201 = vmatprep.subr.mxu0 0.0
        %7202 = vmatpush1.msra.mxu0 0.0
        %7203 = vmatprep.subr.mxu0 0.0
        %7204 = vmatpush1.msra.mxu0 0.0
        %7205 = vmatprep.subr.mxu0 0.0
        %7206 = vmatpush1.msra.mxu0 0.0
        %7207 = vmatprep.subr.mxu0 0.0
        %7208 = vmatpush1.msra.mxu0 0.0
        %7209 = vmatprep.subr.mxu0 0.0
        %7210 = vmatpush1.msra.mxu0 0.0
        %7211 = vmatprep.subr.mxu0 0.0
        %7212 = vmatpush1.msra.mxu0 0.0
        %7213 = vmatprep.subr.mxu0 0.0
        %7214 = vmatpush1.msra.mxu0 0.0
        %7215 = vmatprep.subr.mxu0 0.0
        %7216 = vmatpush1.msra.mxu0 0.0
        %7217 = vmatprep.subr.mxu0 0.0
        %7218 = vmatpush1.msra.mxu0 0.0
        %7219 = vmatprep.subr.mxu0 0.0
        %7220 = vmatpush1.msra.mxu0 0.0
        %7221 = vmatprep.mubr.f32.mxu0 %v5184
        %7222 = vmatmul.mubr.f32.gmra.mrb[0].mxu0 %v5047
        %v7223 = vpop.f32.mrb[0].mxu0
        %v7224 = vadd.f32 0.0, %v7223
        %v7225 = vpop.f32.mrb[0].mxu0
        %7226 = vmatprep.mubr.f32.mxu0 %v5187
        %7227 = vmatmul.mubr.f32.gmra.mrb[0].mxu0 %v5049
        %v7228 = vpop.f32.mrb[0].mxu0
        %v7229 = vadd.f32 0.0, %v7228
        %v7230 = vpop.f32.mrb[0].mxu0
        %7231 = vmatprep.mubr.f32.mxu0 %v5889
        %7232 = vmatmul.mubr.f32.gmra.mrb[0].mxu0 %v5051
        %v7233 = vpop.f32.mrb[0].mxu0
        %v7234 = vadd.f32 0.0, %v7233
        %v7235 = vpop.f32.mrb[0].mxu0
        %7236 = vmatprep.mubr.f32.mxu0 %v7066
        %7237 = vmatmul.mubr.f32.gmra.mrb[0].mxu0 %v5053
        %v7238 = vpop.f32.mrb[0].mxu0
        %v7239 = vadd.f32 0.0, %v7238
        %v7240 = vpop.f32.mrb[0].mxu0
        %7241 = vdwg.mxu0
        %v7242 = vadd.f32 %v7053, %v7135
        %v7243 = vadd.f32 %v7054, %v7137
        %v7244 = vadd.f32 %v7055, %v7224
        %v7245 = vadd.f32 %v7056, %v7141
        %v7246 = vadd.f32 %v7057, %v7143
        %v7247 = vadd.f32 %v7058, %v7229
        %v7248 = vadd.f32 %v7059, %v7147
        %v7249 = vadd.f32 %v7060, %v7149
        %v7250 = vadd.f32 %v7061, %v7234
        %v7251 = vadd.f32 %v7062, %v7153
        %v7252 = vadd.f32 %v7063, %v7155
        %v7253 = vadd.f32 %v7064, %v7239
        %v7254 = vmax.f32 %v6333, %v7242
        %v7255 = vmax.f32 %v6334, %v7243
        %v7256 = vmax.f32 %v6335, %v7244
        %v7257 = vmax.f32 %v6336, %v7245
        %v7258 = vmax.f32 %v6337, %v7246
        %v7259 = vmax.f32 %v6338, %v7247
        %v7260 = vmax.f32 %v6339, %v7248
        %v7261 = vmax.f32 %v6340, %v7249
        %v7262 = vmax.f32 %v6341, %v7250
        %v7263 = vmax.f32 %v6342, %v7251
        %v7264 = vmax.f32 %v6343, %v7252
        %v7265 = vmax.f32 %v6344, %v7253
        %7274 = vrot.lane.b32.xlu0 %v7255, 80
        %v7275 = vpop.permute.xlu0 %7274
        %7276 = vrot.lane.b32.xlu0 %v7256, 80
        %v7277 = vpop.permute.xlu0 %7276
        %7278 = vrot.lane.b32.xlu0 %v7258, 80
        %v7279 = vpop.permute.xlu0 %7278
        %7280 = vrot.lane.b32.xlu0 %v7259, 80
        %v7281 = vpop.permute.xlu0 %7280
        %7282 = vrot.lane.b32.xlu0 %v7261, 80
        %v7283 = vpop.permute.xlu0 %7282
        %7284 = vrot.lane.b32.xlu0 %v7262, 80
        %v7285 = vpop.permute.xlu0 %7284
        %7286 = vrot.lane.b32.xlu0 %v7264, 80
        %v7287 = vpop.permute.xlu0 %7286
        %7288 = vrot.lane.b32.xlu0 %v7265, 80
        %v7289 = vpop.permute.xlu0 %7288
        %vm7290 = vcmask 654336
        %v7291 = vsel %vm7290, %v7275, %v7277
        %v7292 = vsel %vm7290, %v7279, %v7281
        %v7293 = vsel %vm7290, %v7283, %v7285
        %v7294 = vsel %vm7290, %v7287, %v7289
        %v7303 = vmax.f32 %v7254, %v7291
        %v7304 = vmax.f32 %v7255, %v7277
        %v7305 = vmax.f32 %v7257, %v7292
        %v7306 = vmax.f32 %v7258, %v7281
        %v7307 = vmax.f32 %v7260, %v7293
        %v7308 = vmax.f32 %v7261, %v7285
        %v7309 = vmax.f32 %v7263, %v7294
        %v7310 = vmax.f32 %v7264, %v7289
        %v7311 = vld [vmem:[%s4] sm:$0x3]
        %v7313 = vlaneseq
        %v7314 = vshrl.u32 %v7313, 7
        %v7315 = vsub.s32 0, %v7314
        %v7316 = vrot.slane %v7311, %v7315
        %v7317 = vlaneseq
        %v7318 = vshrl.u32 %v7317, 7
        %v7319 = vsub.s32 1, %v7318
        %v7320 = vrot.slane %v7311, %v7319
        %v7323 = vadd.f32 %v7303, %v7316
        %v7324 = vadd.f32 %v7304, %v7320
        %v7325 = vadd.f32 %v7305, %v7316
        %v7326 = vadd.f32 %v7306, %v7320
        %v7327 = vadd.f32 %v7307, %v7316
        %v7328 = vadd.f32 %v7308, %v7320
        %v7329 = vadd.f32 %v7309, %v7316
        %v7330 = vadd.f32 %v7310, %v7320
        %v7331 = vmax.f32 %v7323, 0.0
        %v7332 = vmax.f32 %v7324, 0.0
        %v7333 = vmax.f32 %v7325, 0.0
        %v7334 = vmax.f32 %v7326, 0.0
        %v7335 = vmax.f32 %v7327, 0.0
        %v7336 = vmax.f32 %v7328, 0.0
        %v7337 = vmax.f32 %v7329, 0.0
        %v7338 = vmax.f32 %v7330, 0.0
        %v7339 = vld [vmem:[%s5] sm:$0xff]
        %v7340 = vld [vmem:[%s5 + $0x8] sm:$0xff]
        %v7341 = vld [vmem:[%s5 + $0x10] sm:$0xff]
        %v7342 = vld [vmem:[%s5 + $0x18] sm:$0xff]
        %v7343 = vld [vmem:[%s5 + $0x20] sm:$0xff]
        %v7344 = vld [vmem:[%s5 + $0x28] sm:$0xff]
        %v7345 = vld [vmem:[%s5 + $0x30] sm:$0xff]
        %v7346 = vld [vmem:[%s5 + $0x38] sm:$0xff]
        %v7347 = vld [vmem:[%s5 + $0x40] sm:$0xff]
        %v7348 = vld [vmem:[%s5 + $0x48] sm:$0xff]
        %v7349 = vld [vmem:[%s5 + $0x50] sm:$0xff]
        %v7350 = vld [vmem:[%s5 + $0x58] sm:$0xff]
        %v7351 = vld [vmem:[%s5 + $0x60] sm:$0xff]
        %v7352 = vld [vmem:[%s5 + $0x68] sm:$0xff]
        %v7353 = vld [vmem:[%s5 + $0x70] sm:$0xff]
        %v7354 = vld [vmem:[%s5 + $0x78] sm:$0xff]
        %v7355 = vld [vmem:[%s5 + $0x80] sm:$0xff]
        %v7356 = vld [vmem:[%s5 + $0x88] sm:$0xff]
        %v7357 = vld [vmem:[%s5 + $0x90] sm:$0xff]
        %v7358 = vld [vmem:[%s5 + $0x98] sm:$0xff]
        %v7359 = vld [vmem:[%s5 + $0xa0] sm:$0xff]
        %v7360 = vld [vmem:[%s5 + $0xa8] sm:$0xff]
        %s7361 = scalar_lea.vmem %s5, 176
        %v7362 = vld [vmem:[%s7361] sm:$0xff]
        %v7363 = vld [vmem:[%s7361 + $0x8] sm:$0xff]
        %v7364 = vld [vmem:[%s7361 + $0x10] sm:$0xff]
        %v7365 = vld [vmem:[%s7361 + $0x18] sm:$0xff]
        %v7366 = vld [vmem:[%s7361 + $0x20] sm:$0xff]
        %v7367 = vld [vmem:[%s7361 + $0x28] sm:$0xff]
        %v7368 = vld [vmem:[%s7361 + $0x30] sm:$0xff]
        %v7369 = vld [vmem:[%s7361 + $0x38] sm:$0xff]
        %v7370 = vld [vmem:[%s7361 + $0x40] sm:$0xff]
        %v7371 = vld [vmem:[%s7361 + $0x48] sm:$0xff]
        %v7372 = vld [vmem:[%s7361 + $0x50] sm:$0xff]
        %v7373 = vld [vmem:[%s7361 + $0x58] sm:$0xff]
        %v7374 = vld [vmem:[%s7361 + $0x60] sm:$0xff]
        %v7375 = vld [vmem:[%s7361 + $0x68] sm:$0xff]
        %v7376 = vld [vmem:[%s7361 + $0x70] sm:$0xff]
        %v7377 = vld [vmem:[%s7361 + $0x78] sm:$0xff]
        %v7378 = vld [vmem:[%s7361 + $0x80] sm:$0xff]
        %v7379 = vld [vmem:[%s7361 + $0x88] sm:$0xff]
        %v7380 = vld [vmem:[%s7361 + $0x90] sm:$0xff]
        %v7381 = vld [vmem:[%s7361 + $0x98] sm:$0xff]
        %v7382 = vld [vmem:[%s7361 + $0xa0] sm:$0xff]
        %v7383 = vld [vmem:[%s7361 + $0xa8] sm:$0xff]
        %vm7384 = vcmask 392192
        %v7386 = vsel %vm7384, %v7334, 0
        %7388 = vmatprep.subr.mxu0 0.0
        %7389 = vmatpush1.msra.mxu0 %v7362
        %7390 = vmatprep.subr.mxu0 0.0
        %7391 = vmatpush1.msra.mxu0 %v7363
        %7392 = vmatprep.subr.mxu0 0.0
        %7393 = vmatpush1.msra.mxu0 %v7364
        %7394 = vmatprep.subr.mxu0 0.0
        %7395 = vmatpush1.msra.mxu0 %v7365
        %7396 = vmatprep.subr.mxu0 0.0
        %7397 = vmatpush1.msra.mxu0 %v7366
        %7398 = vmatprep.subr.mxu0 0.0
        %7399 = vmatpush1.msra.mxu0 %v7367
        %7400 = vmatprep.subr.mxu0 0.0
        %7401 = vmatpush1.msra.mxu0 %v7368
        %7402 = vmatprep.subr.mxu0 0.0
        %7403 = vmatpush1.msra.mxu0 %v7369
        %7404 = vmatprep.subr.mxu0 0.0
        %7405 = vmatpush1.msra.mxu0 %v7370
        %7406 = vmatprep.subr.mxu0 0.0
        %7407 = vmatpush1.msra.mxu0 %v7371
        %7408 = vmatprep.subr.mxu0 0.0
        %7409 = vmatpush1.msra.mxu0 %v7372
        %7410 = vmatprep.subr.mxu0 0.0
        %7411 = vmatpush1.msra.mxu0 %v7373
        %7412 = vmatprep.subr.mxu0 0.0
        %7413 = vmatpush1.msra.mxu0 %v7374
        %7414 = vmatprep.subr.mxu0 0.0
        %7415 = vmatpush1.msra.mxu0 %v7375
        %7416 = vmatprep.subr.mxu0 0.0
        %7417 = vmatpush1.msra.mxu0 %v7376
        %7418 = vmatprep.subr.mxu0 0.0
        %7419 = vmatpush1.msra.mxu0 %v7377
        %7420 = vmatprep.subr.mxu0 0.0
        %7421 = vmatpush1.msra.mxu0 %v7378
        %7422 = vmatprep.subr.mxu0 0.0
        %7423 = vmatpush1.msra.mxu0 %v7379
        %7424 = vmatprep.subr.mxu0 0.0
        %7425 = vmatpush1.msra.mxu0 %v7380
        %7426 = vmatprep.subr.mxu0 0.0
        %7427 = vmatpush1.msra.mxu0 %v7381
        %7428 = vmatprep.subr.mxu0 0.0
        %7429 = vmatpush1.msra.mxu0 %v7382
        %7430 = vmatprep.subr.mxu0 0.0
        %7431 = vmatpush1.msra.mxu0 %v7383
        %7432 = vmatprep.subr.mxu0 0.0
        %7433 = vmatpush1.msra.mxu0 0.0
        %7434 = vmatprep.subr.mxu0 0.0
        %7435 = vmatpush1.msra.mxu0 0.0
        %7436 = vmatprep.subr.mxu0 0.0
        %7437 = vmatpush1.msra.mxu0 0.0
        %7438 = vmatprep.subr.mxu0 0.0
        %7439 = vmatpush1.msra.mxu0 0.0
        %7440 = vmatprep.subr.mxu0 0.0
        %7441 = vmatpush1.msra.mxu0 0.0
        %7442 = vmatprep.subr.mxu0 0.0
        %7443 = vmatpush1.msra.mxu0 0.0
        %7444 = vmatprep.subr.mxu0 0.0
        %7445 = vmatpush1.msra.mxu0 0.0
        %7446 = vmatprep.subr.mxu0 0.0
        %7447 = vmatpush1.msra.mxu0 0.0
        %7448 = vmatprep.subr.mxu0 0.0
        %7449 = vmatpush1.msra.mxu0 0.0
        %7450 = vmatprep.subr.mxu0 0.0
        %7451 = vmatpush1.msra.mxu0 0.0
        %7452 = vmatprep.mubr.f32.mxu0 %v7386
        %7453 = vmatmul.mubr.f32.gmra.mrb[0].mxu0 %v7333
        %v7454 = vpop.f32.mrb[0].mxu0
        %v7455 = vadd.f32 0.0, %v7454
        %v7456 = vpop.f32.mrb[0].mxu0
        %7457 = vdwg.mxu0
        %v7459 = vsel %vm7384, %v7332, 0
        %7461 = vmatprep.subr.mxu0 0.0
        %7462 = vmatpush1.msra.mxu0 %v7339
        %7463 = vmatprep.subr.mxu0 0.0
        %7464 = vmatpush1.msra.mxu0 %v7340
        %7465 = vmatprep.subr.mxu0 0.0
        %7466 = vmatpush1.msra.mxu0 %v7341
        %7467 = vmatprep.subr.mxu0 0.0
        %7468 = vmatpush1.msra.mxu0 %v7342
        %7469 = vmatprep.subr.mxu0 0.0
        %7470 = vmatpush1.msra.mxu0 %v7343
        %7471 = vmatprep.subr.mxu0 0.0
        %7472 = vmatpush1.msra.mxu0 %v7344
        %7473 = vmatprep.subr.mxu0 0.0
        %7474 = vmatpush1.msra.mxu0 %v7345
        %7475 = vmatprep.subr.mxu0 0.0
        %7476 = vmatpush1.msra.mxu0 %v7346
        %7477 = vmatprep.subr.mxu0 0.0
        %7478 = vmatpush1.msra.mxu0 %v7347
        %7479 = vmatprep.subr.mxu0 0.0
        %7480 = vmatpush1.msra.mxu0 %v7348
        %7481 = vmatprep.subr.mxu0 0.0
        %7482 = vmatpush1.msra.mxu0 %v7349
        %7483 = vmatprep.subr.mxu0 0.0
        %7484 = vmatpush1.msra.mxu0 %v7350
        %7485 = vmatprep.subr.mxu0 0.0
        %7486 = vmatpush1.msra.mxu0 %v7351
        %7487 = vmatprep.subr.mxu0 0.0
        %7488 = vmatpush1.msra.mxu0 %v7352
        %7489 = vmatprep.subr.mxu0 0.0
        %7490 = vmatpush1.msra.mxu0 %v7353
        %7491 = vmatprep.subr.mxu0 0.0
        %7492 = vmatpush1.msra.mxu0 %v7354
        %7493 = vmatprep.subr.mxu0 0.0
        %7494 = vmatpush1.msra.mxu0 %v7355
        %7495 = vmatprep.subr.mxu0 0.0
        %7496 = vmatpush1.msra.mxu0 %v7356
        %7497 = vmatprep.subr.mxu0 0.0
        %7498 = vmatpush1.msra.mxu0 %v7357
        %7499 = vmatprep.subr.mxu0 0.0
        %7500 = vmatpush1.msra.mxu0 %v7358
        %7501 = vmatprep.subr.mxu0 0.0
        %7502 = vmatpush1.msra.mxu0 %v7359
        %7503 = vmatprep.subr.mxu0 0.0
        %7504 = vmatpush1.msra.mxu0 %v7360
        %7505 = vmatprep.subr.mxu0 0.0
        %7506 = vmatpush1.msra.mxu0 0.0
        %7507 = vmatprep.subr.mxu0 0.0
        %7508 = vmatpush1.msra.mxu0 0.0
        %7509 = vmatprep.subr.mxu0 0.0
        %7510 = vmatpush1.msra.mxu0 0.0
        %7511 = vmatprep.subr.mxu0 0.0
        %7512 = vmatpush1.msra.mxu0 0.0
        %7513 = vmatprep.subr.mxu0 0.0
        %7514 = vmatpush1.msra.mxu0 0.0
        %7515 = vmatprep.subr.mxu0 0.0
        %7516 = vmatpush1.msra.mxu0 0.0
        %7517 = vmatprep.subr.mxu0 0.0
        %7518 = vmatpush1.msra.mxu0 0.0
        %7519 = vmatprep.subr.mxu0 0.0
        %7520 = vmatpush1.msra.mxu0 0.0
        %7521 = vmatprep.subr.mxu0 0.0
        %7522 = vmatpush1.msra.mxu0 0.0
        %7523 = vmatprep.subr.mxu0 0.0
        %7524 = vmatpush1.msra.mxu0 0.0
        %7525 = vmatprep.mubr.f32.mxu0 %v7459
        %7526 = vmatmul.mubr.f32.gmra.mrb[0].mxu0 %v7331
        %v7527 = vpop.f32.mrb[0].mxu0
        %v7528 = vadd.f32 %v7455, %v7527
        %v7529 = vpop.f32.mrb[0].mxu0
        %7530 = vdwg.mxu0
        %s7531 = scalar_lea.vmem %s5, 352
        %v7532 = vld [vmem:[%s7531] sm:$0xff]
        %v7533 = vld [vmem:[%s7531 + $0x8] sm:$0xff]
        %v7534 = vld [vmem:[%s7531 + $0x10] sm:$0xff]
        %v7535 = vld [vmem:[%s7531 + $0x18] sm:$0xff]
        %v7536 = vld [vmem:[%s7531 + $0x20] sm:$0xff]
        %v7537 = vld [vmem:[%s7531 + $0x28] sm:$0xff]
        %v7538 = vld [vmem:[%s7531 + $0x30] sm:$0xff]
        %v7539 = vld [vmem:[%s7531 + $0x38] sm:$0xff]
        %v7540 = vld [vmem:[%s7531 + $0x40] sm:$0xff]
        %v7541 = vld [vmem:[%s7531 + $0x48] sm:$0xff]
        %v7542 = vld [vmem:[%s7531 + $0x50] sm:$0xff]
        %v7543 = vld [vmem:[%s7531 + $0x58] sm:$0xff]
        %v7544 = vld [vmem:[%s7531 + $0x60] sm:$0xff]
        %v7545 = vld [vmem:[%s7531 + $0x68] sm:$0xff]
        %v7546 = vld [vmem:[%s7531 + $0x70] sm:$0xff]
        %v7547 = vld [vmem:[%s7531 + $0x78] sm:$0xff]
        %v7548 = vld [vmem:[%s7531 + $0x80] sm:$0xff]
        %v7549 = vld [vmem:[%s7531 + $0x88] sm:$0xff]
        %v7550 = vld [vmem:[%s7531 + $0x90] sm:$0xff]
        %v7551 = vld [vmem:[%s7531 + $0x98] sm:$0xff]
        %v7552 = vld [vmem:[%s7531 + $0xa0] sm:$0xff]
        %v7553 = vld [vmem:[%s7531 + $0xa8] sm:$0xff]
        %v7555 = vsel %vm7384, %v7336, 0
        %7557 = vmatprep.subr.mxu0 0.0
        %7558 = vmatpush1.msra.mxu0 %v7532
        %7559 = vmatprep.subr.mxu0 0.0
        %7560 = vmatpush1.msra.mxu0 %v7533
        %7561 = vmatprep.subr.mxu0 0.0
        %7562 = vmatpush1.msra.mxu0 %v7534
        %7563 = vmatprep.subr.mxu0 0.0
        %7564 = vmatpush1.msra.mxu0 %v7535
        %7565 = vmatprep.subr.mxu0 0.0
        %7566 = vmatpush1.msra.mxu0 %v7536
        %7567 = vmatprep.subr.mxu0 0.0
        %7568 = vmatpush1.msra.mxu0 %v7537
        %7569 = vmatprep.subr.mxu0 0.0
        %7570 = vmatpush1.msra.mxu0 %v7538
        %7571 = vmatprep.subr.mxu0 0.0
        %7572 = vmatpush1.msra.mxu0 %v7539
        %7573 = vmatprep.subr.mxu0 0.0
        %7574 = vmatpush1.msra.mxu0 %v7540
        %7575 = vmatprep.subr.mxu0 0.0
        %7576 = vmatpush1.msra.mxu0 %v7541
        %7577 = vmatprep.subr.mxu0 0.0
        %7578 = vmatpush1.msra.mxu0 %v7542
        %7579 = vmatprep.subr.mxu0 0.0
        %7580 = vmatpush1.msra.mxu0 %v7543
        %7581 = vmatprep.subr.mxu0 0.0
        %7582 = vmatpush1.msra.mxu0 %v7544
        %7583 = vmatprep.subr.mxu0 0.0
        %7584 = vmatpush1.msra.mxu0 %v7545
        %7585 = vmatprep.subr.mxu0 0.0
        %7586 = vmatpush1.msra.mxu0 %v7546
        %7587 = vmatprep.subr.mxu0 0.0
        %7588 = vmatpush1.msra.mxu0 %v7547
        %7589 = vmatprep.subr.mxu0 0.0
        %7590 = vmatpush1.msra.mxu0 %v7548
        %7591 = vmatprep.subr.mxu0 0.0
        %7592 = vmatpush1.msra.mxu0 %v7549
        %7593 = vmatprep.subr.mxu0 0.0
        %7594 = vmatpush1.msra.mxu0 %v7550
        %7595 = vmatprep.subr.mxu0 0.0
        %7596 = vmatpush1.msra.mxu0 %v7551
        %7597 = vmatprep.subr.mxu0 0.0
        %7598 = vmatpush1.msra.mxu0 %v7552
        %7599 = vmatprep.subr.mxu0 0.0
        %7600 = vmatpush1.msra.mxu0 %v7553
        %7601 = vmatprep.subr.mxu0 0.0
        %7602 = vmatpush1.msra.mxu0 0.0
        %7603 = vmatprep.subr.mxu0 0.0
        %7604 = vmatpush1.msra.mxu0 0.0
        %7605 = vmatprep.subr.mxu0 0.0
        %7606 = vmatpush1.msra.mxu0 0.0
        %7607 = vmatprep.subr.mxu0 0.0
        %7608 = vmatpush1.msra.mxu0 0.0
        %7609 = vmatprep.subr.mxu0 0.0
        %7610 = vmatpush1.msra.mxu0 0.0
        %7611 = vmatprep.subr.mxu0 0.0
        %7612 = vmatpush1.msra.mxu0 0.0
        %7613 = vmatprep.subr.mxu0 0.0
        %7614 = vmatpush1.msra.mxu0 0.0
        %7615 = vmatprep.subr.mxu0 0.0
        %7616 = vmatpush1.msra.mxu0 0.0
        %7617 = vmatprep.subr.mxu0 0.0
        %7618 = vmatpush1.msra.mxu0 0.0
        %7619 = vmatprep.subr.mxu0 0.0
        %7620 = vmatpush1.msra.mxu0 0.0
        %7621 = vmatprep.mubr.f32.mxu0 %v7555
        %7622 = vmatmul.mubr.f32.gmra.mrb[0].mxu0 %v7335
        %v7623 = vpop.f32.mrb[0].mxu0
        %v7624 = vadd.f32 0.0, %v7623
        %v7625 = vpop.f32.mrb[0].mxu0
        %7626 = vdwg.mxu0
        %v7627 = vadd.f32 %v7528, %v7624
        %s7628 = scalar_lea.vmem %s5, 528
        %v7629 = vld [vmem:[%s7628] sm:$0xff]
        %v7630 = vld [vmem:[%s7628 + $0x8] sm:$0xff]
        %v7631 = vld [vmem:[%s7628 + $0x10] sm:$0xff]
        %v7632 = vld [vmem:[%s7628 + $0x18] sm:$0xff]
        %v7633 = vld [vmem:[%s7628 + $0x20] sm:$0xff]
        %v7634 = vld [vmem:[%s7628 + $0x28] sm:$0xff]
        %v7635 = vld [vmem:[%s7628 + $0x30] sm:$0xff]
        %v7636 = vld [vmem:[%s7628 + $0x38] sm:$0xff]
        %v7637 = vld [vmem:[%s7628 + $0x40] sm:$0xff]
        %v7638 = vld [vmem:[%s7628 + $0x48] sm:$0xff]
        %v7639 = vld [vmem:[%s7628 + $0x50] sm:$0xff]
        %v7640 = vld [vmem:[%s7628 + $0x58] sm:$0xff]
        %v7641 = vld [vmem:[%s7628 + $0x60] sm:$0xff]
        %v7642 = vld [vmem:[%s7628 + $0x68] sm:$0xff]
        %v7643 = vld [vmem:[%s7628 + $0x70] sm:$0xff]
        %v7644 = vld [vmem:[%s7628 + $0x78] sm:$0xff]
        %v7645 = vld [vmem:[%s7628 + $0x80] sm:$0xff]
        %v7646 = vld [vmem:[%s7628 + $0x88] sm:$0xff]
        %v7647 = vld [vmem:[%s7628 + $0x90] sm:$0xff]
        %v7648 = vld [vmem:[%s7628 + $0x98] sm:$0xff]
        %v7649 = vld [vmem:[%s7628 + $0xa0] sm:$0xff]
        %v7650 = vld [vmem:[%s7628 + $0xa8] sm:$0xff]
        %v7652 = vsel %vm7384, %v7338, 0
        %7654 = vmatprep.subr.mxu0 0.0
        %7655 = vmatpush1.msra.mxu0 %v7629
        %7656 = vmatprep.subr.mxu0 0.0
        %7657 = vmatpush1.msra.mxu0 %v7630
        %7658 = vmatprep.subr.mxu0 0.0
        %7659 = vmatpush1.msra.mxu0 %v7631
        %7660 = vmatprep.subr.mxu0 0.0
        %7661 = vmatpush1.msra.mxu0 %v7632
        %7662 = vmatprep.subr.mxu0 0.0
        %7663 = vmatpush1.msra.mxu0 %v7633
        %7664 = vmatprep.subr.mxu0 0.0
        %7665 = vmatpush1.msra.mxu0 %v7634
        %7666 = vmatprep.subr.mxu0 0.0
        %7667 = vmatpush1.msra.mxu0 %v7635
        %7668 = vmatprep.subr.mxu0 0.0
        %7669 = vmatpush1.msra.mxu0 %v7636
        %7670 = vmatprep.subr.mxu0 0.0
        %7671 = vmatpush1.msra.mxu0 %v7637
        %7672 = vmatprep.subr.mxu0 0.0
        %7673 = vmatpush1.msra.mxu0 %v7638
        %7674 = vmatprep.subr.mxu0 0.0
        %7675 = vmatpush1.msra.mxu0 %v7639
        %7676 = vmatprep.subr.mxu0 0.0
        %7677 = vmatpush1.msra.mxu0 %v7640
        %7678 = vmatprep.subr.mxu0 0.0
        %7679 = vmatpush1.msra.mxu0 %v7641
        %7680 = vmatprep.subr.mxu0 0.0
        %7681 = vmatpush1.msra.mxu0 %v7642
        %7682 = vmatprep.subr.mxu0 0.0
        %7683 = vmatpush1.msra.mxu0 %v7643
        %7684 = vmatprep.subr.mxu0 0.0
        %7685 = vmatpush1.msra.mxu0 %v7644
        %7686 = vmatprep.subr.mxu0 0.0
        %7687 = vmatpush1.msra.mxu0 %v7645
        %7688 = vmatprep.subr.mxu0 0.0
        %7689 = vmatpush1.msra.mxu0 %v7646
        %7690 = vmatprep.subr.mxu0 0.0
        %7691 = vmatpush1.msra.mxu0 %v7647
        %7692 = vmatprep.subr.mxu0 0.0
        %7693 = vmatpush1.msra.mxu0 %v7648
        %7694 = vmatprep.subr.mxu0 0.0
        %7695 = vmatpush1.msra.mxu0 %v7649
        %7696 = vmatprep.subr.mxu0 0.0
        %7697 = vmatpush1.msra.mxu0 %v7650
        %7698 = vmatprep.subr.mxu0 0.0
        %7699 = vmatpush1.msra.mxu0 0.0
        %7700 = vmatprep.subr.mxu0 0.0
        %7701 = vmatpush1.msra.mxu0 0.0
        %7702 = vmatprep.subr.mxu0 0.0
        %7703 = vmatpush1.msra.mxu0 0.0
        %7704 = vmatprep.subr.mxu0 0.0
        %7705 = vmatpush1.msra.mxu0 0.0
        %7706 = vmatprep.subr.mxu0 0.0
        %7707 = vmatpush1.msra.mxu0 0.0
        %7708 = vmatprep.subr.mxu0 0.0
        %7709 = vmatpush1.msra.mxu0 0.0
        %7710 = vmatprep.subr.mxu0 0.0
        %7711 = vmatpush1.msra.mxu0 0.0
        %7712 = vmatprep.subr.mxu0 0.0
        %7713 = vmatpush1.msra.mxu0 0.0
        %7714 = vmatprep.subr.mxu0 0.0
        %7715 = vmatpush1.msra.mxu0 0.0
        %7716 = vmatprep.subr.mxu0 0.0
        %7717 = vmatpush1.msra.mxu0 0.0
        %7718 = vmatprep.mubr.f32.mxu0 %v7652
        %7719 = vmatmul.mubr.f32.gmra.mrb[0].mxu0 %v7337
        %v7720 = vpop.f32.mrb[0].mxu0
        %v7721 = vadd.f32 0.0, %v7720
        %v7722 = vpop.f32.mrb[0].mxu0
        %7723 = vdwg.mxu0
        %v7724 = vadd.f32 %v7627, %v7721
        %v7725 = vld [vmem:[%s6] sm:$0x1]
        %v7727 = vlaneseq
        %v7728 = vshrl.u32 %v7727, 7
        %v7729 = vsub.s32 0, %v7728
        %v7730 = vrot.slane %v7725, %v7729
        %v7732 = vadd.f32 %v7724, %v7730
        %v7733 = vmax.f32 %v7732, 0.0
        %v7734 = vld [vmem:[%s7] sm:$0xff]
        %v7735 = vld [vmem:[%s7 + $0x8] sm:$0xff]
        %v7736 = vld [vmem:[%s7 + $0x10] sm:$0xff]
        %v7737 = vld [vmem:[%s7 + $0x18] sm:$0xff]
        %v7738 = vld [vmem:[%s7 + $0x20] sm:$0xff]
        %v7739 = vld [vmem:[%s7 + $0x28] sm:$0xff]
        %v7740 = vld [vmem:[%s7 + $0x30] sm:$0xff]
        %v7741 = vld [vmem:[%s7 + $0x38] sm:$0xff]
        %v7742 = vld [vmem:[%s7 + $0x40] sm:$0xff]
        %v7743 = vld [vmem:[%s7 + $0x48] sm:$0xff]
        %v7744 = vld [vmem:[%s7 + $0x50] sm:$0xff]
        %v7745 = vld [vmem:[%s7 + $0x58] sm:$0xff]
        %v7746 = vld [vmem:[%s7 + $0x60] sm:$0xff]
        %v7747 = vld [vmem:[%s7 + $0x68] sm:$0xff]
        %v7748 = vld [vmem:[%s7 + $0x70] sm:$0xff]
        %v7749 = vld [vmem:[%s8] sm:$0x1]
        %v7751 = vlaneseq
        %v7752 = vshrl.u32 %v7751, 7
        %v7753 = vsub.s32 0, %v7752
        %v7754 = vrot.slane %v7749, %v7753
        %vm7756 = vcmask 982016
        %v7758 = vsel %vm7756, %v7733, 0
        %7760 = vmatprep.subr.mxu0 0.0
        %7761 = vmatpush1.msra.mxu0 %v7734
        %7762 = vmatprep.subr.mxu0 0.0
        %7763 = vmatpush1.msra.mxu0 %v7735
        %7764 = vmatprep.subr.mxu0 0.0
        %7765 = vmatpush1.msra.mxu0 %v7736
        %7766 = vmatprep.subr.mxu0 0.0
        %7767 = vmatpush1.msra.mxu0 %v7737
        %7768 = vmatprep.subr.mxu0 0.0
        %7769 = vmatpush1.msra.mxu0 %v7738
        %7770 = vmatprep.subr.mxu0 0.0
        %7771 = vmatpush1.msra.mxu0 %v7739
        %7772 = vmatprep.subr.mxu0 0.0
        %7773 = vmatpush1.msra.mxu0 %v7740
        %7774 = vmatprep.subr.mxu0 0.0
        %7775 = vmatpush1.msra.mxu0 %v7741
        %7776 = vmatprep.subr.mxu0 0.0
        %7777 = vmatpush1.msra.mxu0 %v7742
        %7778 = vmatprep.subr.mxu0 0.0
        %7779 = vmatpush1.msra.mxu0 %v7743
        %7780 = vmatprep.subr.mxu0 0.0
        %7781 = vmatpush1.msra.mxu0 %v7744
        %7782 = vmatprep.subr.mxu0 0.0
        %7783 = vmatpush1.msra.mxu0 %v7745
        %7784 = vmatprep.subr.mxu0 0.0
        %7785 = vmatpush1.msra.mxu0 %v7746
        %7786 = vmatprep.subr.mxu0 0.0
        %7787 = vmatpush1.msra.mxu0 %v7747
        %7788 = vmatprep.subr.mxu0 0.0
        %7789 = vmatpush1.msra.mxu0 %v7748
        %7790 = vmatprep.subr.mxu0 0.0
        %7791 = vmatpush1.msra.mxu0 0.0
        %7792 = vmatprep.subr.mxu0 0.0
        %7793 = vmatpush1.msra.mxu0 0.0
        %7794 = vmatprep.subr.mxu0 0.0
        %7795 = vmatpush1.msra.mxu0 0.0
        %7796 = vmatprep.subr.mxu0 0.0
        %7797 = vmatpush1.msra.mxu0 0.0
        %7798 = vmatprep.subr.mxu0 0.0
        %7799 = vmatpush1.msra.mxu0 0.0
        %7800 = vmatprep.subr.mxu0 0.0
        %7801 = vmatpush1.msra.mxu0 0.0
        %7802 = vmatprep.subr.mxu0 0.0
        %7803 = vmatpush1.msra.mxu0 0.0
        %7804 = vmatprep.subr.mxu0 0.0
        %7805 = vmatpush1.msra.mxu0 0.0
        %7806 = vmatprep.subr.mxu0 0.0
        %7807 = vmatpush1.msra.mxu0 0.0
        %7808 = vmatprep.subr.mxu0 0.0
        %7809 = vmatpush1.msra.mxu0 0.0
        %7810 = vmatprep.subr.mxu0 0.0
        %7811 = vmatpush1.msra.mxu0 0.0
        %7812 = vmatprep.subr.mxu0 0.0
        %7813 = vmatpush1.msra.mxu0 0.0
        %7814 = vmatprep.subr.mxu0 0.0
        %7815 = vmatpush1.msra.mxu0 0.0
        %7816 = vmatprep.subr.mxu0 0.0
        %7817 = vmatpush1.msra.mxu0 0.0
        %7818 = vmatprep.subr.mxu0 0.0
        %7819 = vmatpush1.msra.mxu0 0.0
        %7820 = vmatprep.subr.mxu0 0.0
        %7821 = vmatpush1.msra.mxu0 0.0
        %7822 = vmatprep.subr.mxu0 0.0
        %7823 = vmatpush1.msra.mxu0 0.0
        %7824 = vmatprep.mubr.f32.mxu0 0.0
        %7825 = vmatmul.mubr.f32.gmra.mrb[0].mxu0 %v7758
        %v7826 = vpop.f32.mrb[0].mxu0
        %v7827 = vadd.f32 %v7754, %v7826
        %v7828 = vpop.f32.mrb[0].mxu0
        %7829 = vdwg.mxu0
        %v7830 = vmax.f32 %v7827, 0.0
        %v7831 = vld [vmem:[%s9] sm:$0xff]
        %v7832 = vld [vmem:[%s9 + $0x8] sm:$0xff]
        %v7833 = vld [vmem:[%s9 + $0x10] sm:$0xff]
        %v7834 = vld [vmem:[%s9 + $0x18] sm:$0xff]
        %v7835 = vld [vmem:[%s9 + $0x20] sm:$0xff]
        %v7836 = vld [vmem:[%s9 + $0x28] sm:$0xff]
        %v7837 = vld [vmem:[%s9 + $0x30] sm:$0xff]
        %v7838 = vld [vmem:[%s9 + $0x38] sm:$0xff]
        %v7839 = vld [vmem:[%s9 + $0x40] sm:$0xff]
        %v7840 = vld [vmem:[%s9 + $0x48] sm:$0xff]
        %v7841 = vld [vmem:[%s9 + $0x50] sm:$0xf]
        %v7842 = vld [vmem:[%s10] sm:$0x1]
        %v7844 = vlaneseq
        %v7845 = vshrl.u32 %v7844, 7
        %v7846 = vsub.s32 0, %v7845
        %v7847 = vrot.slane %v7842, %v7846
        %vm7849 = vcmask 687104
        %v7851 = vsel %vm7849, %v7830, 0
        %v7854 = vsel %vm5189, %v7841, 0
        %7856 = vmatprep.subr.mxu0 0.0
        %7857 = vmatpush1.msra.mxu0 %v7831
        %7858 = vmatprep.subr.mxu0 0.0
        %7859 = vmatpush1.msra.mxu0 %v7832
        %7860 = vmatprep.subr.mxu0 0.0
        %7861 = vmatpush1.msra.mxu0 %v7833
        %7862 = vmatprep.subr.mxu0 0.0
        %7863 = vmatpush1.msra.mxu0 %v7834
        %7864 = vmatprep.subr.mxu0 0.0
        %7865 = vmatpush1.msra.mxu0 %v7835
        %7866 = vmatprep.subr.mxu0 0.0
        %7867 = vmatpush1.msra.mxu0 %v7836
        %7868 = vmatprep.subr.mxu0 0.0
        %7869 = vmatpush1.msra.mxu0 %v7837
        %7870 = vmatprep.subr.mxu0 0.0
        %7871 = vmatpush1.msra.mxu0 %v7838
        %7872 = vmatprep.subr.mxu0 0.0
        %7873 = vmatpush1.msra.mxu0 %v7839
        %7874 = vmatprep.subr.mxu0 0.0
        %7875 = vmatpush1.msra.mxu0 %v7840
        %7876 = vmatprep.subr.mxu0 0.0
        %7877 = vmatpush1.msra.mxu0 %v7854
        %7878 = vmatprep.subr.mxu0 0.0
        %7879 = vmatpush1.msra.mxu0 0.0
        %7880 = vmatprep.subr.mxu0 0.0
        %7881 = vmatpush1.msra.mxu0 0.0
        %7882 = vmatprep.subr.mxu0 0.0
        %7883 = vmatpush1.msra.mxu0 0.0
        %7884 = vmatprep.subr.mxu0 0.0
        %7885 = vmatpush1.msra.mxu0 0.0
        %7886 = vmatprep.subr.mxu0 0.0
        %7887 = vmatpush1.msra.mxu0 0.0
        %7888 = vmatprep.subr.mxu0 0.0
        %7889 = vmatpush1.msra.mxu0 0.0
        %7890 = vmatprep.subr.mxu0 0.0
        %7891 = vmatpush1.msra.mxu0 0.0
        %7892 = vmatprep.subr.mxu0 0.0
        %7893 = vmatpush1.msra.mxu0 0.0
        %7894 = vmatprep.subr.mxu0 0.0
        %7895 = vmatpush1.msra.mxu0 0.0
        %7896 = vmatprep.subr.mxu0 0.0
        %7897 = vmatpush1.msra.mxu0 0.0
        %7898 = vmatprep.subr.mxu0 0.0
        %7899 = vmatpush1.msra.mxu0 0.0
        %7900 = vmatprep.subr.mxu0 0.0
        %7901 = vmatpush1.msra.mxu0 0.0
        %7902 = vmatprep.subr.mxu0 0.0
        %7903 = vmatpush1.msra.mxu0 0.0
        %7904 = vmatprep.subr.mxu0 0.0
        %7905 = vmatpush1.msra.mxu0 0.0
        %7906 = vmatprep.subr.mxu0 0.0
        %7907 = vmatpush1.msra.mxu0 0.0
        %7908 = vmatprep.subr.mxu0 0.0
        %7909 = vmatpush1.msra.mxu0 0.0
        %7910 = vmatprep.subr.mxu0 0.0
        %7911 = vmatpush1.msra.mxu0 0.0
        %7912 = vmatprep.subr.mxu0 0.0
        %7913 = vmatpush1.msra.mxu0 0.0
        %7914 = vmatprep.subr.mxu0 0.0
        %7915 = vmatpush1.msra.mxu0 0.0
        %7916 = vmatprep.subr.mxu0 0.0
        %7917 = vmatpush1.msra.mxu0 0.0
        %7918 = vmatprep.subr.mxu0 0.0
        %7919 = vmatpush1.msra.mxu0 0.0
        %7920 = vmatprep.mubr.f32.mxu0 0.0
        %7921 = vmatmul.mubr.f32.gmra.mrb[0].mxu0 %v7851
        %v7922 = vpop.f32.mrb[0].mxu0
        %v7923 = vadd.f32 %v7847, %v7922
        %v7924 = vpop.f32.mrb[0].mxu0
        %7925 = vdwg.mxu0
        %vm7926 = vcmask 154624
        %v7927 = vsel %vm7926, %v7923, -inf
        %7928 = vmax.xlane.f32.xlu0 %v7927
        %v7929 = vpop.xlane.xlu0 %7928
        %v7930 = vsub.f32 %v7923, %v7929
        %v7931 = vmul.f32 %v7930, 1.442695
        %v7932 = vpow.pop %v7931
        %v7933 = vsel %vm7926, %v7932, 0.0
        %7934 = vadd.xlane.f32.xlu0 %v7933
        %v7935 = vpop.xlane.xlu0 %7934
        %v7936 = vlog2.pop %v7935
        %v7937 = vmul.f32 %v7936, 0.6931472
        %v7938 = vsub.f32 %v7930, %v7937
        %7939 = vst.msk [vmem:[%s379] sm:$0xff] %vm7926, %v7938
        %s7940 = sand.u32 %s269, 1
        %s7941 = scalar_lea.sflag [#allocation3], %s7940
        %s7942 = sand.u32 %s269, 1
        %s7943 = smul.addr %s7942, 8
        %s7944 = scalar_lea.vmem [#allocation2], %s7943
        // Predicated region
        $region65: #{net_forward.1} parent=63 // pred_check
          %p7945 = pneg %p279
        $region66: #{net_forward.1} parent=63 // pred_check_branch
          %7947 = sbr.rel (%p7945) target = $region68
        $region67: #{net_forward.1} parent=63 // pred_region
          %s7949 = ssub.s32 128, 128
          %7950 = vsyncadd %s7941, %s7949
          %s7951 = smul.addr %s25, 128
          %s7952 = scalar_lea.hbm %s11, %s7951
          %s7954 = sshll.u32 %s7944, 4
          %s7955 = int_to_ptr.vmem [resolvable:$true] %s7954
          %7957 = dma.vmem_to_hbm [thread:$0]  %s7955, 128, %s7952, %s7941
        $region68: #{net_forward.1} parent=63 // pred_fallthru
          _
      $region64: #{net_forward.1} parent=5 // pred_fallthru
        _
      %p7958 = scmp.le.s32.totalorder 2, %s20
      // Predicated region
      $region69: #{net_forward.1} parent=5 // pred_check
        %p7959 = pneg %p7958
      $region70: #{net_forward.1} parent=5 // pred_check_branch
        %7961 = sbr.rel (%p7959) target = $region72
      $region71: #{net_forward.1} parent=5 // pred_region
        %s7962 = ssub.s32 %s20, 2
        // Predicated region
        $region73: #{net_forward.1} parent=71 // pred_check
          %p7963 = pneg %p285
        $region74: #{net_forward.1} parent=71 // pred_check_branch
          %7965 = sbr.rel (%p7963) target = $region76
        $region75: #{net_forward.1} parent=71 // pred_region
          %s7966 = sand.u32 %s270, 1
          %s7967 = scalar_lea.sflag [#allocation3], %s7966
          %s7968 = sand.u32 %s270, 1
          %s7969 = smul.addr %s7968, 8
          %s7970 = scalar_lea.vmem [#allocation2], %s7969
          %7971 = dma.done %s7967, 128
        $region76: #{net_forward.1} parent=71 // pred_fallthru
          _
      $region72: #{net_forward.1} parent=5 // pred_fallthru
        _
    $region6: #{net_forward.1} parent=1 // loop_footer
      %s24 = sadd.s32 1, %s20
    $region7: #{net_forward.1} parent=1 // loop_footer_branch
      %19 = sbr.rel target = $region3
    $region8: #{net_forward.1} parent=1 // loop_exit
      _
    %7972 = vsyncpa [#allocation3], 1
    %s7973 = scalar_lea.sflag [#allocation3], 1
    %7974 = vsyncpa %s7973, 1

</llo_original>
